<compile_context>
chip_gen: v7x
topology: tpu7x:2x2x1
jax: 0.10.0
libtpu: 0.0.40
codegen_flags: <defaults>
</compile_context>

<pallas_src>
import jax
import jax.numpy as jnp
import numpy as np
from jax.experimental import pallas as pl
from jax.experimental.pallas import tpu as pltpu

BOARD = (8, 8)                               # Othello board size
ACTION_SIZE = BOARD[0] * BOARD[1] + 1        # 65
PI_PAD = 128                                 # lane-dense padded logit width
V_COL = ACTION_SIZE                          # slab column that carries tanh(v)
NUM_CHANNELS = 32                            # small stand-in for num_channels=512
FC1_IN = NUM_CHANNELS * (BOARD[0] - 4) * (BOARD[1] - 4)   # 512
BN_EPS = 1e-5
NEG_BIG = -1e9                               # finite -inf stand-in for padded logits


# ----------------------------------------------------------------------------
# Host-side weight lowering: 3x3 conv taps -> per-tap-row band-Toeplitz weights
# with the horizontal ('same') zero padding folded in, so each conv is three
# accumulating (nb*8, wi*cin) x (wi*cin, wo*cout) MXU dots in-kernel.
# ----------------------------------------------------------------------------
def _band_toeplitz(w, wi, wo, pad):
    """w: (3, 3, cin, cout) taps (== torch weight.transpose(2, 3, 1, 0)).

    Returns (3, wi*cin, wo*cout) with
      T[ky, (j, ci), (ow, co)] = w[ky, j - ow + pad, ci, co]
    for 0 <= j - ow + pad <= 2 and 0 <= j < wi (out-of-range = structural zero,
    i.e. the horizontal zero padding is folded into the weight).
    """
    _, _, cin, cout = w.shape
    t = np.zeros((3, wi, cin, wo, cout), np.float32)
    for ky in range(3):
        for ow in range(wo):
            for kx in range(3):
                j = ow + kx - pad
                if 0 <= j < wi:
                    t[ky, j, :, ow, :] = w[ky, kx, :, :]
    return t.reshape(3, wi * cin, wo * cout)


# ----------------------------------------------------------------------------
# Fused forward kernel: conv1..4 (+BN+ReLU) -> fc1 (+BN) -> fc2 -> fc3 (with
# BN2 folded) -> log_softmax, plus v = tanh(fc4(pi)) packed into column V_COL.
# One batch block per grid step.
# ----------------------------------------------------------------------------
def _fused_kernel(x_ref,
                  t1_ref, sc1_ref, sh1_ref,
                  t2_ref, sc2_ref, sh2_ref,
                  t3_ref, sc3_ref, sh3_ref,
                  t4_ref, sc4_ref, sh4_ref,
                  wf1_ref, scf1_ref, shf1_ref,
                  wf2_ref, wf3_ref, bf3_ref, w4r_ref, b4_ref,
                  out_ref):
    nb = x_ref.shape[0]
    C = NUM_CHANNELS
    f32 = jnp.float32
    bf16 = jnp.bfloat16

    def pad_rows(a, top, bottom):
        # zero-pad the H (sublane) axis of a (nb, h, w*cin) channels-minor image.
        k = a.shape[2]
        parts = []
        if top:
            parts.append(jnp.zeros((nb, top, k), f32))
        parts.append(a)
        if bottom:
            parts.append(jnp.zeros((nb, bottom, k), f32))
        return jnp.concatenate(parts, axis=1)

    def band_conv(h10, t_ref, sc_ref, sh_ref):
        # h10: (nb, 10, wi*cin).  Three accumulating MXU band dots + folded
        # BN + ReLU.  Always produces 8 output rows per board (rows past the
        # valid output height are throwaway), so every reshape stays aligned
        # to the (8, 128) f32 tile.
        k = h10.shape[2]
        acc = None
        for ky in range(3):
            band = h10[:, ky:ky + 8, :].reshape(nb * 8, k).astype(bf16)
            y = jnp.dot(band, t_ref[ky], preferred_element_type=f32)
            acc = y if acc is None else acc + y
        return jnp.maximum(acc * sc_ref[...] + sh_ref[...], 0.0)

    # conv stack (BN folded, ReLU); rows are (n, h), lanes are (w, c).
    h = band_conv(pad_rows(x_ref[...], 1, 1), t1_ref, sc1_ref, sh1_ref)       # (nb*8, 256)
    h = band_conv(pad_rows(h.reshape(nb, 8, 8 * C), 1, 1),
                  t2_ref, sc2_ref, sh2_ref)                                    # (nb*8, 256)
    h = band_conv(pad_rows(h.reshape(nb, 8, 8 * C), 0, 2),
                  t3_ref, sc3_ref, sh3_ref)                                    # rows 0..5 valid, (nb*8, 192)
    h = band_conv(pad_rows(h.reshape(nb, 8, 6 * C), 0, 2),
                  t4_ref, sc4_ref, sh4_ref)                                    # rows 0..3 valid, (nb*8, 128)

    # fc1 + fc_bn1 (dropout = identity in eval).  The (h, w, c) flatten of the
    # 4 valid rows is 4 accumulating K=4*C dots (wf1 rows were pre-permuted
    # host-side from torch's (c, h, w) flatten order, so no activation
    # transpose is needed).
    h4 = h.reshape(nb, 8, 4 * C)
    acc = None
    for hrow in range(4):
        piece = h4[:, hrow, :].astype(bf16)                        # (nb, 4*C)
        wrow = wf1_ref[hrow * 4 * C:(hrow + 1) * 4 * C, :]         # (4*C, 1024)
        y = jnp.dot(piece, wrow, preferred_element_type=f32)
        acc = y if acc is None else acc + y
    s = acc * scf1_ref[...] + shf1_ref[...]

    # fc2 (dropout = identity in eval).  fc_bn2 + fc2's bias are folded into
    # wf3/bf3 host-side (no ReLU between fc_bn2 and fc3 in the reference), so
    # the raw matmul feeds fc3 directly.
    s = jnp.dot(s.astype(bf16), wf2_ref[...], preferred_element_type=f32)

    # fc3 -> padded logits (cols >= ACTION_SIZE have weight 0 and bias -1e9).
    pi = jnp.dot(s.astype(bf16), wf3_ref[...],
                 preferred_element_type=f32) + bf3_ref[...]        # (nb, 128)

    # value head v = tanh(fc4(pi)): K=65, N=1 is a bad MXU shape -> VPU
    # multiply + lane reduction (padded pi columns carry zero fc4 weight).
    v = jnp.tanh(jnp.sum(pi * w4r_ref[...], axis=-1, keepdims=True)
                 + b4_ref[...])                                    # (nb, 1)

    # log_softmax over the 65 real logits (padded columns exp to exactly 0),
    # then pack tanh(v) into spare column V_COL so the store is ONE unmasked
    # lane-dense (nb, 128) slab (no separate masked (nb, 1) writeback).
    m = jnp.max(pi, axis=-1, keepdims=True)
    lse = jnp.log(jnp.sum(jnp.exp(pi - m), axis=-1, keepdims=True)) + m
    out = pi - lse
    lane = jax.lax.broadcasted_iota(jnp.int32, out.shape, 1)
    out_ref[...] = jnp.where(lane == V_COL, v, out)


_PARAM_ORDER = ["t1", "sc1", "sh1", "t2", "sc2", "sh2", "t3", "sc3", "sh3",
                "t4", "sc4", "sh4", "wf1", "scf1", "shf1", "wf2", "wf3",
                "bf3", "w4r", "b4"]


def _round_up(x, m):
    return ((x + m - 1) // m) * m


def _const_index_map(ndim):
    return lambda i: (0,) * ndim


def othello_forward(params, boards, block_n=128):
    """boards: (n, 8, 8) (or any shape reshapable to it).  Returns
    (log_pi (n, 65), v (n, 1))."""
    n = boards.shape[0]
    x = boards.reshape(n, BOARD[0], BOARD[1]).astype(jnp.float32)

    # Batch block: default 128 fills the MXU M dim (use 256 on v6e and bump the
    # VMEM limit accordingly); clamped to the 8-rounded batch so tiny batches
    # don't pad all the way to 128.
    # TODO(synk): on v7x pick block_n so the grid has >= 2 "parallel" steps for
    #             the two TensorCores once real batch sizes are known.
    block_n = _round_up(max(8, min(block_n, _round_up(n, 8))), 8)
    n_blocks = -(-n // block_n)
    n_pad = n_blocks * block_n
    if n_pad != n:
        x = jnp.concatenate(
            [x, jnp.zeros((n_pad - n, BOARD[0], BOARD[1]), jnp.float32)], axis=0)

    weights = [params[k] for k in _PARAM_ORDER]
    in_specs = [pl.BlockSpec((block_n, BOARD[0], BOARD[1]), lambda i: (i, 0, 0))]
    # Grid-invariant weights (~3 MB bf16 total at NUM_CHANNELS=32): whole-array
    # blocks with a constant index_map.
    in_specs += [pl.BlockSpec(w.shape, _const_index_map(w.ndim)) for w in weights]

    out = pl.pallas_call(
        _fused_kernel,
        out_shape=jax.ShapeDtypeStruct((n_pad, PI_PAD), jnp.float32),
        grid=(n_blocks,),
        in_specs=in_specs,
        out_specs=pl.BlockSpec((block_n, PI_PAD), lambda i: (i, 0)),
        compiler_params=pltpu.CompilerParams(
            dimension_semantics=("parallel",),
            vmem_limit_bytes=32 * 1024 * 1024),
    )(x, *weights)

    return out[:n, :ACTION_SIZE], out[:n, V_COL:V_COL + 1]


# ----------------------------------------------------------------------------
# Deterministic synthetic parameters, stored directly in the kernel's folded
# layout (BN running stats + biases folded; fc_bn2 folded into fc3).
# ----------------------------------------------------------------------------
def init_params(key):
    C = NUM_CHANNELS
    counter = [0]

    def nrm(shape, s):
        counter[0] += 1
        return s * jax.random.normal(jax.random.fold_in(key, counter[0]),
                                     shape, jnp.float32)

    def bn_fold(cout, bias):
        gamma = 1.0 + nrm((cout,), 0.1)
        beta = nrm((cout,), 0.05)
        mean = nrm((cout,), 0.01)
        var = 1.0 + jnp.abs(nrm((cout,), 0.1))
        scale = gamma / jnp.sqrt(var + BN_EPS)
        shift = beta - mean * scale + scale * bias     # layer bias folded in
        return scale, shift

    p = {}

    def conv_block(cin, wi, wo, pad):
        # Taps generated directly as (ky, kx, cin, cout); real torch weights
        # would be w_torch.transpose(2, 3, 1, 0).
        w = nrm((3, 3, cin, C), 0.1)
        scale, shift = bn_fold(C, nrm((C,), 0.05))
        t = jnp.asarray(_band_toeplitz(np.asarray(w), wi, wo, pad), jnp.bfloat16)
        return t, jnp.tile(scale, wo)[None, :], jnp.tile(shift, wo)[None, :]

    p["t1"], p["sc1"], p["sh1"] = conv_block(1, 8, 8, 1)   # conv1 ('same')
    p["t2"], p["sc2"], p["sh2"] = conv_block(C, 8, 8, 1)   # conv2 ('same')
    p["t3"], p["sc3"], p["sh3"] = conv_block(C, 8, 6, 0)   # conv3 (valid)
    p["t4"], p["sc4"], p["sh4"] = conv_block(C, 6, 4, 0)   # conv4 (valid)

    # fc1: rows generated in PyTorch's (c, h, w) flatten order, then permuted
    # to the kernel's (h, w, c) flatten order (so no activation transpose).
    hw = BOARD[0] - 4
    w1_chw = np.asarray(nrm((FC1_IN, 1024), 0.05))
    perm = np.arange(FC1_IN).reshape(C, hw, hw).transpose(1, 2, 0).reshape(-1)
    p["wf1"] = jnp.asarray(w1_chw[perm], jnp.bfloat16)
    sc1f, sh1f = bn_fold(1024, nrm((1024,), 0.05))
    p["scf1"], p["shf1"] = sc1f[None, :], sh1f[None, :]

    # fc2; fc_bn2 (with fc2 bias absorbed) is folded into fc3 below (valid: no
    # ReLU between fc_bn2 and fc3 in the reference forward).
    p["wf2"] = nrm((1024, 512), 0.05).astype(jnp.bfloat16)
    sc2f, sh2f = bn_fold(512, nrm((512,), 0.05))

    # fc3 with fc_bn2 folded, padded 65 -> 128 (padded cols: weight 0, bias -1e9).
    w3 = nrm((512, ACTION_SIZE), 0.05)
    b3 = nrm((ACTION_SIZE,), 0.05)
    w3_eff = w3 * sc2f[:, None]
    b3_eff = b3 + sh2f @ w3
    p["wf3"] = (jnp.zeros((512, PI_PAD), jnp.float32)
                .at[:, :ACTION_SIZE].set(w3_eff).astype(jnp.bfloat16))
    p["bf3"] = (jnp.full((1, PI_PAD), NEG_BIG, jnp.float32)
                .at[0, :ACTION_SIZE].set(b3_eff))

    # fc4 (action_size -> 1): stored as a zero-padded lane row for the VPU path.
    p["w4r"] = (jnp.zeros((1, PI_PAD), jnp.float32)
                .at[0, :ACTION_SIZE].set(nrm((ACTION_SIZE,), 0.05)))
    p["b4"] = nrm((1, 1), 0.05)
    return p


if __name__ == "__main__":
    key = jax.random.PRNGKey(0)
    kp, kx = jax.random.split(key)
    params = init_params(kp)
    boards = jax.random.normal(kx, (16, BOARD[0], BOARD[1]), jnp.float32)

    fwd = jax.jit(othello_forward)
    log_pi, v = fwd(params, boards)
    jax.block_until_ready((log_pi, v))

    assert log_pi.shape == (16, ACTION_SIZE) and v.shape == (16, 1)
    assert bool(jnp.all(jnp.isfinite(log_pi))) and bool(jnp.all(jnp.isfinite(v)))
    # log_softmax rows must exponentiate to ~1; tanh output bounded by 1.
    assert bool(jnp.allclose(jnp.sum(jnp.exp(log_pi), axis=-1), 1.0, atol=1e-2))
    assert bool(jnp.all(jnp.abs(v) <= 1.0))
    print("KERNEL_OK")
</pallas_src>

<mosaic_0001>
module attributes {stable_mosaic.version = 11 : i64} {
  func.func @_fused_kernel(%arg0: i32, %arg1: memref<16x8x8xf32, #tpu.memory_space<vmem>>, %arg2: memref<3x8x256xbf16, #tpu.memory_space<vmem>>, %arg3: memref<1x256xf32, #tpu.memory_space<vmem>>, %arg4: memref<1x256xf32, #tpu.memory_space<vmem>>, %arg5: memref<3x256x256xbf16, #tpu.memory_space<vmem>>, %arg6: memref<1x256xf32, #tpu.memory_space<vmem>>, %arg7: memref<1x256xf32, #tpu.memory_space<vmem>>, %arg8: memref<3x256x192xbf16, #tpu.memory_space<vmem>>, %arg9: memref<1x192xf32, #tpu.memory_space<vmem>>, %arg10: memref<1x192xf32, #tpu.memory_space<vmem>>, %arg11: memref<3x192x128xbf16, #tpu.memory_space<vmem>>, %arg12: memref<1x128xf32, #tpu.memory_space<vmem>>, %arg13: memref<1x128xf32, #tpu.memory_space<vmem>>, %arg14: memref<512x1024xbf16, #tpu.memory_space<vmem>>, %arg15: memref<1x1024xf32, #tpu.memory_space<vmem>>, %arg16: memref<1x1024xf32, #tpu.memory_space<vmem>>, %arg17: memref<1024x512xbf16, #tpu.memory_space<vmem>>, %arg18: memref<512x128xbf16, #tpu.memory_space<vmem>>, %arg19: memref<1x128xf32, #tpu.memory_space<vmem>>, %arg20: memref<1x128xf32, #tpu.memory_space<vmem>>, %arg21: memref<1x1xf32, #tpu.memory_space<vmem>>, %arg22: memref<16x128xf32, #tpu.memory_space<vmem>>) attributes {dimension_semantics = [#tpu.dimension_semantics<parallel>], iteration_bounds = array<i64: 1>, scalar_prefetch = 0 : i64, scratch_operands = 0 : i64, tpu.core_type = #tpu.core_type<tc>, window_params = [{transform_indices = @transform_0, window_bounds = array<i64: 16, 8, 8>}, {pipeline_mode = #tpu.pipeline_mode<synchronous>, transform_indices = @transform_1, window_bounds = array<i64: 3, 8, 256>}, {pipeline_mode = #tpu.pipeline_mode<synchronous>, transform_indices = @transform_2, window_bounds = array<i64: 1, 256>}, {pipeline_mode = #tpu.pipeline_mode<synchronous>, transform_indices = @transform_3, window_bounds = array<i64: 1, 256>}, {pipeline_mode = #tpu.pipeline_mode<synchronous>, transform_indices = @transform_4, window_bounds = array<i64: 3, 256, 256>}, {pipeline_mode = #tpu.pipeline_mode<synchronous>, transform_indices = @transform_5, window_bounds = array<i64: 1, 256>}, {pipeline_mode = #tpu.pipeline_mode<synchronous>, transform_indices = @transform_6, window_bounds = array<i64: 1, 256>}, {pipeline_mode = #tpu.pipeline_mode<synchronous>, transform_indices = @transform_7, window_bounds = array<i64: 3, 256, 192>}, {pipeline_mode = #tpu.pipeline_mode<synchronous>, transform_indices = @transform_8, window_bounds = array<i64: 1, 192>}, {pipeline_mode = #tpu.pipeline_mode<synchronous>, transform_indices = @transform_9, window_bounds = array<i64: 1, 192>}, {pipeline_mode = #tpu.pipeline_mode<synchronous>, transform_indices = @transform_10, window_bounds = array<i64: 3, 192, 128>}, {pipeline_mode = #tpu.pipeline_mode<synchronous>, transform_indices = @transform_11, window_bounds = array<i64: 1, 128>}, {pipeline_mode = #tpu.pipeline_mode<synchronous>, transform_indices = @transform_12, window_bounds = array<i64: 1, 128>}, {pipeline_mode = #tpu.pipeline_mode<synchronous>, transform_indices = @transform_13, window_bounds = array<i64: 512, 1024>}, {pipeline_mode = #tpu.pipeline_mode<synchronous>, transform_indices = @transform_14, window_bounds = array<i64: 1, 1024>}, {pipeline_mode = #tpu.pipeline_mode<synchronous>, transform_indices = @transform_15, window_bounds = array<i64: 1, 1024>}, {pipeline_mode = #tpu.pipeline_mode<synchronous>, transform_indices = @transform_16, window_bounds = array<i64: 1024, 512>}, {pipeline_mode = #tpu.pipeline_mode<synchronous>, transform_indices = @transform_17, window_bounds = array<i64: 512, 128>}, {pipeline_mode = #tpu.pipeline_mode<synchronous>, transform_indices = @transform_18, window_bounds = array<i64: 1, 128>}, {pipeline_mode = #tpu.pipeline_mode<synchronous>, transform_indices = @transform_19, window_bounds = array<i64: 1, 128>}, {pipeline_mode = #tpu.pipeline_mode<synchronous>, transform_indices = @transform_20, window_bounds = array<i64: 1, 1>}, {transform_indices = @transform_21, window_bounds = array<i64: 16, 128>}]} {
    %c0 = arith.constant 0 : index
    %c0_0 = arith.constant 0 : index
    %c0_1 = arith.constant 0 : index
    %0 = vector.load %arg1[%c0, %c0_0, %c0_1] : memref<16x8x8xf32, #tpu.memory_space<vmem>>, vector<16x8x8xf32>
    %cst = arith.constant 0.000000e+00 : f32
    %1 = vector.broadcast %cst : f32 to vector<16x1x8xf32>
    %cst_2 = arith.constant 0.000000e+00 : f32
    %2 = vector.broadcast %cst_2 : f32 to vector<16x1x8xf32>
    %3 = tpu.concatenate %1, %0, %2 in 1 : vector<16x1x8xf32>, vector<16x8x8xf32>, vector<16x1x8xf32> -> vector<16x10x8xf32>
    %4 = vector.extract_strided_slice %3 {offsets = [0, 0, 0], sizes = [16, 8, 8], strides = [1, 1, 1]} : vector<16x10x8xf32> to vector<16x8x8xf32>
    %5 = vector.shape_cast %4 : vector<16x8x8xf32> to vector<128x8xf32>
    %6 = arith.truncf %5 : vector<128x8xf32> to vector<128x8xbf16>
    %c0_3 = arith.constant 0 : index
    %c0_4 = arith.constant 0 : index
    %c0_5 = arith.constant 0 : index
    %7 = vector.load %arg2[%c0_3, %c0_4, %c0_5] : memref<3x8x256xbf16, #tpu.memory_space<vmem>>, vector<1x8x256xbf16>
    %8 = vector.shape_cast %7 : vector<1x8x256xbf16> to vector<8x256xbf16>
    %cst_6 = arith.constant dense<0.000000e+00> : vector<128x256xf32>
    %9 = tpu.matmul %6, %8, %cst_6 {dimension_numbers = #tpu.dot_dimension_numbers<[1], [0], [0], [1], [0, 0, 1, 1], [], []>} : vector<128x8xbf16>, vector<8x256xbf16>, vector<128x256xf32> -> vector<128x256xf32>
    %10 = vector.extract_strided_slice %3 {offsets = [0, 1, 0], sizes = [16, 8, 8], strides = [1, 1, 1]} : vector<16x10x8xf32> to vector<16x8x8xf32>
    %11 = vector.shape_cast %10 : vector<16x8x8xf32> to vector<128x8xf32>
    %12 = arith.truncf %11 : vector<128x8xf32> to vector<128x8xbf16>
    %c1 = arith.constant 1 : index
    %c0_7 = arith.constant 0 : index
    %c0_8 = arith.constant 0 : index
    %13 = vector.load %arg2[%c1, %c0_7, %c0_8] : memref<3x8x256xbf16, #tpu.memory_space<vmem>>, vector<1x8x256xbf16>
    %14 = vector.shape_cast %13 : vector<1x8x256xbf16> to vector<8x256xbf16>
    %cst_9 = arith.constant dense<0.000000e+00> : vector<128x256xf32>
    %15 = tpu.matmul %12, %14, %cst_9 {dimension_numbers = #tpu.dot_dimension_numbers<[1], [0], [0], [1], [0, 0, 1, 1], [], []>} : vector<128x8xbf16>, vector<8x256xbf16>, vector<128x256xf32> -> vector<128x256xf32>
    %16 = arith.addf %9, %15 : vector<128x256xf32>
    %17 = vector.extract_strided_slice %3 {offsets = [0, 2, 0], sizes = [16, 8, 8], strides = [1, 1, 1]} : vector<16x10x8xf32> to vector<16x8x8xf32>
    %18 = vector.shape_cast %17 : vector<16x8x8xf32> to vector<128x8xf32>
    %19 = arith.truncf %18 : vector<128x8xf32> to vector<128x8xbf16>
    %c2 = arith.constant 2 : index
    %c0_10 = arith.constant 0 : index
    %c0_11 = arith.constant 0 : index
    %20 = vector.load %arg2[%c2, %c0_10, %c0_11] : memref<3x8x256xbf16, #tpu.memory_space<vmem>>, vector<1x8x256xbf16>
    %21 = vector.shape_cast %20 : vector<1x8x256xbf16> to vector<8x256xbf16>
    %cst_12 = arith.constant dense<0.000000e+00> : vector<128x256xf32>
    %22 = tpu.matmul %19, %21, %cst_12 {dimension_numbers = #tpu.dot_dimension_numbers<[1], [0], [0], [1], [0, 0, 1, 1], [], []>} : vector<128x8xbf16>, vector<8x256xbf16>, vector<128x256xf32> -> vector<128x256xf32>
    %23 = arith.addf %16, %22 : vector<128x256xf32>
    %c0_13 = arith.constant 0 : index
    %c0_14 = arith.constant 0 : index
    %24 = vector.load %arg3[%c0_13, %c0_14] : memref<1x256xf32, #tpu.memory_space<vmem>>, vector<1x256xf32>
    %25 = vector.broadcast %24 : vector<1x256xf32> to vector<128x256xf32>
    %26 = arith.mulf %23, %25 : vector<128x256xf32>
    %c0_15 = arith.constant 0 : index
    %c0_16 = arith.constant 0 : index
    %27 = vector.load %arg4[%c0_15, %c0_16] : memref<1x256xf32, #tpu.memory_space<vmem>>, vector<1x256xf32>
    %28 = vector.broadcast %27 : vector<1x256xf32> to vector<128x256xf32>
    %29 = arith.addf %26, %28 : vector<128x256xf32>
    %cst_17 = arith.constant 0.000000e+00 : f32
    %30 = vector.broadcast %cst_17 : f32 to vector<128x256xf32>
    %31 = arith.maximumf %29, %30 : vector<128x256xf32>
    %32 = vector.shape_cast %31 : vector<128x256xf32> to vector<16x8x256xf32>
    %cst_18 = arith.constant 0.000000e+00 : f32
    %33 = vector.broadcast %cst_18 : f32 to vector<16x1x256xf32>
    %cst_19 = arith.constant 0.000000e+00 : f32
    %34 = vector.broadcast %cst_19 : f32 to vector<16x1x256xf32>
    %35 = tpu.concatenate %33, %32, %34 in 1 : vector<16x1x256xf32>, vector<16x8x256xf32>, vector<16x1x256xf32> -> vector<16x10x256xf32>
    %36 = vector.extract_strided_slice %35 {offsets = [0, 0, 0], sizes = [16, 8, 256], strides = [1, 1, 1]} : vector<16x10x256xf32> to vector<16x8x256xf32>
    %37 = vector.shape_cast %36 : vector<16x8x256xf32> to vector<128x256xf32>
    %38 = arith.truncf %37 : vector<128x256xf32> to vector<128x256xbf16>
    %c0_20 = arith.constant 0 : index
    %c0_21 = arith.constant 0 : index
    %c0_22 = arith.constant 0 : index
    %39 = vector.load %arg5[%c0_20, %c0_21, %c0_22] : memref<3x256x256xbf16, #tpu.memory_space<vmem>>, vector<1x256x256xbf16>
    %40 = vector.shape_cast %39 : vector<1x256x256xbf16> to vector<256x256xbf16>
    %cst_23 = arith.constant dense<0.000000e+00> : vector<128x256xf32>
    %41 = tpu.matmul %38, %40, %cst_23 {dimension_numbers = #tpu.dot_dimension_numbers<[1], [0], [0], [1], [0, 0, 1, 1], [], []>} : vector<128x256xbf16>, vector<256x256xbf16>, vector<128x256xf32> -> vector<128x256xf32>
    %42 = vector.extract_strided_slice %35 {offsets = [0, 1, 0], sizes = [16, 8, 256], strides = [1, 1, 1]} : vector<16x10x256xf32> to vector<16x8x256xf32>
    %43 = vector.shape_cast %42 : vector<16x8x256xf32> to vector<128x256xf32>
    %44 = arith.truncf %43 : vector<128x256xf32> to vector<128x256xbf16>
    %c1_24 = arith.constant 1 : index
    %c0_25 = arith.constant 0 : index
    %c0_26 = arith.constant 0 : index
    %45 = vector.load %arg5[%c1_24, %c0_25, %c0_26] : memref<3x256x256xbf16, #tpu.memory_space<vmem>>, vector<1x256x256xbf16>
    %46 = vector.shape_cast %45 : vector<1x256x256xbf16> to vector<256x256xbf16>
    %cst_27 = arith.constant dense<0.000000e+00> : vector<128x256xf32>
    %47 = tpu.matmul %44, %46, %cst_27 {dimension_numbers = #tpu.dot_dimension_numbers<[1], [0], [0], [1], [0, 0, 1, 1], [], []>} : vector<128x256xbf16>, vector<256x256xbf16>, vector<128x256xf32> -> vector<128x256xf32>
    %48 = arith.addf %41, %47 : vector<128x256xf32>
    %49 = vector.extract_strided_slice %35 {offsets = [0, 2, 0], sizes = [16, 8, 256], strides = [1, 1, 1]} : vector<16x10x256xf32> to vector<16x8x256xf32>
    %50 = vector.shape_cast %49 : vector<16x8x256xf32> to vector<128x256xf32>
    %51 = arith.truncf %50 : vector<128x256xf32> to vector<128x256xbf16>
    %c2_28 = arith.constant 2 : index
    %c0_29 = arith.constant 0 : index
    %c0_30 = arith.constant 0 : index
    %52 = vector.load %arg5[%c2_28, %c0_29, %c0_30] : memref<3x256x256xbf16, #tpu.memory_space<vmem>>, vector<1x256x256xbf16>
    %53 = vector.shape_cast %52 : vector<1x256x256xbf16> to vector<256x256xbf16>
    %cst_31 = arith.constant dense<0.000000e+00> : vector<128x256xf32>
    %54 = tpu.matmul %51, %53, %cst_31 {dimension_numbers = #tpu.dot_dimension_numbers<[1], [0], [0], [1], [0, 0, 1, 1], [], []>} : vector<128x256xbf16>, vector<256x256xbf16>, vector<128x256xf32> -> vector<128x256xf32>
    %55 = arith.addf %48, %54 : vector<128x256xf32>
    %c0_32 = arith.constant 0 : index
    %c0_33 = arith.constant 0 : index
    %56 = vector.load %arg6[%c0_32, %c0_33] : memref<1x256xf32, #tpu.memory_space<vmem>>, vector<1x256xf32>
    %57 = vector.broadcast %56 : vector<1x256xf32> to vector<128x256xf32>
    %58 = arith.mulf %55, %57 : vector<128x256xf32>
    %c0_34 = arith.constant 0 : index
    %c0_35 = arith.constant 0 : index
    %59 = vector.load %arg7[%c0_34, %c0_35] : memref<1x256xf32, #tpu.memory_space<vmem>>, vector<1x256xf32>
    %60 = vector.broadcast %59 : vector<1x256xf32> to vector<128x256xf32>
    %61 = arith.addf %58, %60 : vector<128x256xf32>
    %cst_36 = arith.constant 0.000000e+00 : f32
    %62 = vector.broadcast %cst_36 : f32 to vector<128x256xf32>
    %63 = arith.maximumf %61, %62 : vector<128x256xf32>
    %64 = vector.shape_cast %63 : vector<128x256xf32> to vector<16x8x256xf32>
    %cst_37 = arith.constant 0.000000e+00 : f32
    %65 = vector.broadcast %cst_37 : f32 to vector<16x2x256xf32>
    %66 = tpu.concatenate %64, %65 in 1 : vector<16x8x256xf32>, vector<16x2x256xf32> -> vector<16x10x256xf32>
    %67 = vector.extract_strided_slice %66 {offsets = [0, 0, 0], sizes = [16, 8, 256], strides = [1, 1, 1]} : vector<16x10x256xf32> to vector<16x8x256xf32>
    %68 = vector.shape_cast %67 : vector<16x8x256xf32> to vector<128x256xf32>
    %69 = arith.truncf %68 : vector<128x256xf32> to vector<128x256xbf16>
    %c0_38 = arith.constant 0 : index
    %c0_39 = arith.constant 0 : index
    %c0_40 = arith.constant 0 : index
    %70 = vector.load %arg8[%c0_38, %c0_39, %c0_40] : memref<3x256x192xbf16, #tpu.memory_space<vmem>>, vector<1x256x192xbf16>
    %71 = vector.shape_cast %70 : vector<1x256x192xbf16> to vector<256x192xbf16>
    %cst_41 = arith.constant dense<0.000000e+00> : vector<128x192xf32>
    %72 = tpu.matmul %69, %71, %cst_41 {dimension_numbers = #tpu.dot_dimension_numbers<[1], [0], [0], [1], [0, 0, 1, 1], [], []>} : vector<128x256xbf16>, vector<256x192xbf16>, vector<128x192xf32> -> vector<128x192xf32>
    %73 = vector.extract_strided_slice %66 {offsets = [0, 1, 0], sizes = [16, 8, 256], strides = [1, 1, 1]} : vector<16x10x256xf32> to vector<16x8x256xf32>
    %74 = vector.shape_cast %73 : vector<16x8x256xf32> to vector<128x256xf32>
    %75 = arith.truncf %74 : vector<128x256xf32> to vector<128x256xbf16>
    %c1_42 = arith.constant 1 : index
    %c0_43 = arith.constant 0 : index
    %c0_44 = arith.constant 0 : index
    %76 = vector.load %arg8[%c1_42, %c0_43, %c0_44] : memref<3x256x192xbf16, #tpu.memory_space<vmem>>, vector<1x256x192xbf16>
    %77 = vector.shape_cast %76 : vector<1x256x192xbf16> to vector<256x192xbf16>
    %cst_45 = arith.constant dense<0.000000e+00> : vector<128x192xf32>
    %78 = tpu.matmul %75, %77, %cst_45 {dimension_numbers = #tpu.dot_dimension_numbers<[1], [0], [0], [1], [0, 0, 1, 1], [], []>} : vector<128x256xbf16>, vector<256x192xbf16>, vector<128x192xf32> -> vector<128x192xf32>
    %79 = arith.addf %72, %78 : vector<128x192xf32>
    %80 = vector.extract_strided_slice %66 {offsets = [0, 2, 0], sizes = [16, 8, 256], strides = [1, 1, 1]} : vector<16x10x256xf32> to vector<16x8x256xf32>
    %81 = vector.shape_cast %80 : vector<16x8x256xf32> to vector<128x256xf32>
    %82 = arith.truncf %81 : vector<128x256xf32> to vector<128x256xbf16>
    %c2_46 = arith.constant 2 : index
    %c0_47 = arith.constant 0 : index
    %c0_48 = arith.constant 0 : index
    %83 = vector.load %arg8[%c2_46, %c0_47, %c0_48] : memref<3x256x192xbf16, #tpu.memory_space<vmem>>, vector<1x256x192xbf16>
    %84 = vector.shape_cast %83 : vector<1x256x192xbf16> to vector<256x192xbf16>
    %cst_49 = arith.constant dense<0.000000e+00> : vector<128x192xf32>
    %85 = tpu.matmul %82, %84, %cst_49 {dimension_numbers = #tpu.dot_dimension_numbers<[1], [0], [0], [1], [0, 0, 1, 1], [], []>} : vector<128x256xbf16>, vector<256x192xbf16>, vector<128x192xf32> -> vector<128x192xf32>
    %86 = arith.addf %79, %85 : vector<128x192xf32>
    %c0_50 = arith.constant 0 : index
    %c0_51 = arith.constant 0 : index
    %87 = vector.load %arg9[%c0_50, %c0_51] : memref<1x192xf32, #tpu.memory_space<vmem>>, vector<1x192xf32>
    %88 = vector.broadcast %87 : vector<1x192xf32> to vector<128x192xf32>
    %89 = arith.mulf %86, %88 : vector<128x192xf32>
    %c0_52 = arith.constant 0 : index
    %c0_53 = arith.constant 0 : index
    %90 = vector.load %arg10[%c0_52, %c0_53] : memref<1x192xf32, #tpu.memory_space<vmem>>, vector<1x192xf32>
    %91 = vector.broadcast %90 : vector<1x192xf32> to vector<128x192xf32>
    %92 = arith.addf %89, %91 : vector<128x192xf32>
    %cst_54 = arith.constant 0.000000e+00 : f32
    %93 = vector.broadcast %cst_54 : f32 to vector<128x192xf32>
    %94 = arith.maximumf %92, %93 : vector<128x192xf32>
    %95 = vector.shape_cast %94 : vector<128x192xf32> to vector<16x8x192xf32>
    %cst_55 = arith.constant 0.000000e+00 : f32
    %96 = vector.broadcast %cst_55 : f32 to vector<16x2x192xf32>
    %97 = tpu.concatenate %95, %96 in 1 : vector<16x8x192xf32>, vector<16x2x192xf32> -> vector<16x10x192xf32>
    %98 = vector.extract_strided_slice %97 {offsets = [0, 0, 0], sizes = [16, 8, 192], strides = [1, 1, 1]} : vector<16x10x192xf32> to vector<16x8x192xf32>
    %99 = vector.shape_cast %98 : vector<16x8x192xf32> to vector<128x192xf32>
    %100 = arith.truncf %99 : vector<128x192xf32> to vector<128x192xbf16>
    %c0_56 = arith.constant 0 : index
    %c0_57 = arith.constant 0 : index
    %c0_58 = arith.constant 0 : index
    %101 = vector.load %arg11[%c0_56, %c0_57, %c0_58] : memref<3x192x128xbf16, #tpu.memory_space<vmem>>, vector<1x192x128xbf16>
    %102 = vector.shape_cast %101 : vector<1x192x128xbf16> to vector<192x128xbf16>
    %cst_59 = arith.constant dense<0.000000e+00> : vector<128x128xf32>
    %103 = tpu.matmul %100, %102, %cst_59 {dimension_numbers = #tpu.dot_dimension_numbers<[1], [0], [0], [1], [0, 0, 1, 1], [], []>} : vector<128x192xbf16>, vector<192x128xbf16>, vector<128x128xf32> -> vector<128x128xf32>
    %104 = vector.extract_strided_slice %97 {offsets = [0, 1, 0], sizes = [16, 8, 192], strides = [1, 1, 1]} : vector<16x10x192xf32> to vector<16x8x192xf32>
    %105 = vector.shape_cast %104 : vector<16x8x192xf32> to vector<128x192xf32>
    %106 = arith.truncf %105 : vector<128x192xf32> to vector<128x192xbf16>
    %c1_60 = arith.constant 1 : index
    %c0_61 = arith.constant 0 : index
    %c0_62 = arith.constant 0 : index
    %107 = vector.load %arg11[%c1_60, %c0_61, %c0_62] : memref<3x192x128xbf16, #tpu.memory_space<vmem>>, vector<1x192x128xbf16>
    %108 = vector.shape_cast %107 : vector<1x192x128xbf16> to vector<192x128xbf16>
    %cst_63 = arith.constant dense<0.000000e+00> : vector<128x128xf32>
    %109 = tpu.matmul %106, %108, %cst_63 {dimension_numbers = #tpu.dot_dimension_numbers<[1], [0], [0], [1], [0, 0, 1, 1], [], []>} : vector<128x192xbf16>, vector<192x128xbf16>, vector<128x128xf32> -> vector<128x128xf32>
    %110 = arith.addf %103, %109 : vector<128x128xf32>
    %111 = vector.extract_strided_slice %97 {offsets = [0, 2, 0], sizes = [16, 8, 192], strides = [1, 1, 1]} : vector<16x10x192xf32> to vector<16x8x192xf32>
    %112 = vector.shape_cast %111 : vector<16x8x192xf32> to vector<128x192xf32>
    %113 = arith.truncf %112 : vector<128x192xf32> to vector<128x192xbf16>
    %c2_64 = arith.constant 2 : index
    %c0_65 = arith.constant 0 : index
    %c0_66 = arith.constant 0 : index
    %114 = vector.load %arg11[%c2_64, %c0_65, %c0_66] : memref<3x192x128xbf16, #tpu.memory_space<vmem>>, vector<1x192x128xbf16>
    %115 = vector.shape_cast %114 : vector<1x192x128xbf16> to vector<192x128xbf16>
    %cst_67 = arith.constant dense<0.000000e+00> : vector<128x128xf32>
    %116 = tpu.matmul %113, %115, %cst_67 {dimension_numbers = #tpu.dot_dimension_numbers<[1], [0], [0], [1], [0, 0, 1, 1], [], []>} : vector<128x192xbf16>, vector<192x128xbf16>, vector<128x128xf32> -> vector<128x128xf32>
    %117 = arith.addf %110, %116 : vector<128x128xf32>
    %c0_68 = arith.constant 0 : index
    %c0_69 = arith.constant 0 : index
    %118 = vector.load %arg12[%c0_68, %c0_69] : memref<1x128xf32, #tpu.memory_space<vmem>>, vector<1x128xf32>
    %119 = vector.broadcast %118 : vector<1x128xf32> to vector<128x128xf32>
    %120 = arith.mulf %117, %119 : vector<128x128xf32>
    %c0_70 = arith.constant 0 : index
    %c0_71 = arith.constant 0 : index
    %121 = vector.load %arg13[%c0_70, %c0_71] : memref<1x128xf32, #tpu.memory_space<vmem>>, vector<1x128xf32>
    %122 = vector.broadcast %121 : vector<1x128xf32> to vector<128x128xf32>
    %123 = arith.addf %120, %122 : vector<128x128xf32>
    %cst_72 = arith.constant 0.000000e+00 : f32
    %124 = vector.broadcast %cst_72 : f32 to vector<128x128xf32>
    %125 = arith.maximumf %123, %124 : vector<128x128xf32>
    %126 = vector.shape_cast %125 : vector<128x128xf32> to vector<16x8x128xf32>
    %127 = vector.extract_strided_slice %126 {offsets = [0, 0, 0], sizes = [16, 1, 128], strides = [1, 1, 1]} : vector<16x8x128xf32> to vector<16x1x128xf32>
    %128 = vector.shape_cast %127 : vector<16x1x128xf32> to vector<16x128xf32>
    %129 = arith.truncf %128 : vector<16x128xf32> to vector<16x128xbf16>
    %c0_73 = arith.constant 0 : index
    %c0_74 = arith.constant 0 : index
    %130 = vector.load %arg14[%c0_73, %c0_74] : memref<512x1024xbf16, #tpu.memory_space<vmem>>, vector<128x1024xbf16>
    %cst_75 = arith.constant dense<0.000000e+00> : vector<16x1024xf32>
    %131 = tpu.matmul %129, %130, %cst_75 {dimension_numbers = #tpu.dot_dimension_numbers<[1], [0], [0], [1], [0, 0, 1, 1], [], []>} : vector<16x128xbf16>, vector<128x1024xbf16>, vector<16x1024xf32> -> vector<16x1024xf32>
    %132 = vector.extract_strided_slice %126 {offsets = [0, 1, 0], sizes = [16, 1, 128], strides = [1, 1, 1]} : vector<16x8x128xf32> to vector<16x1x128xf32>
    %133 = vector.shape_cast %132 : vector<16x1x128xf32> to vector<16x128xf32>
    %134 = arith.truncf %133 : vector<16x128xf32> to vector<16x128xbf16>
    %c128 = arith.constant 128 : index
    %c0_76 = arith.constant 0 : index
    %135 = vector.load %arg14[%c128, %c0_76] : memref<512x1024xbf16, #tpu.memory_space<vmem>>, vector<128x1024xbf16>
    %cst_77 = arith.constant dense<0.000000e+00> : vector<16x1024xf32>
    %136 = tpu.matmul %134, %135, %cst_77 {dimension_numbers = #tpu.dot_dimension_numbers<[1], [0], [0], [1], [0, 0, 1, 1], [], []>} : vector<16x128xbf16>, vector<128x1024xbf16>, vector<16x1024xf32> -> vector<16x1024xf32>
    %137 = arith.addf %131, %136 : vector<16x1024xf32>
    %138 = vector.extract_strided_slice %126 {offsets = [0, 2, 0], sizes = [16, 1, 128], strides = [1, 1, 1]} : vector<16x8x128xf32> to vector<16x1x128xf32>
    %139 = vector.shape_cast %138 : vector<16x1x128xf32> to vector<16x128xf32>
    %140 = arith.truncf %139 : vector<16x128xf32> to vector<16x128xbf16>
    %c256 = arith.constant 256 : index
    %c0_78 = arith.constant 0 : index
    %141 = vector.load %arg14[%c256, %c0_78] : memref<512x1024xbf16, #tpu.memory_space<vmem>>, vector<128x1024xbf16>
    %cst_79 = arith.constant dense<0.000000e+00> : vector<16x1024xf32>
    %142 = tpu.matmul %140, %141, %cst_79 {dimension_numbers = #tpu.dot_dimension_numbers<[1], [0], [0], [1], [0, 0, 1, 1], [], []>} : vector<16x128xbf16>, vector<128x1024xbf16>, vector<16x1024xf32> -> vector<16x1024xf32>
    %143 = arith.addf %137, %142 : vector<16x1024xf32>
    %144 = vector.extract_strided_slice %126 {offsets = [0, 3, 0], sizes = [16, 1, 128], strides = [1, 1, 1]} : vector<16x8x128xf32> to vector<16x1x128xf32>
    %145 = vector.shape_cast %144 : vector<16x1x128xf32> to vector<16x128xf32>
    %146 = arith.truncf %145 : vector<16x128xf32> to vector<16x128xbf16>
    %c384 = arith.constant 384 : index
    %c0_80 = arith.constant 0 : index
    %147 = vector.load %arg14[%c384, %c0_80] : memref<512x1024xbf16, #tpu.memory_space<vmem>>, vector<128x1024xbf16>
    %cst_81 = arith.constant dense<0.000000e+00> : vector<16x1024xf32>
    %148 = tpu.matmul %146, %147, %cst_81 {dimension_numbers = #tpu.dot_dimension_numbers<[1], [0], [0], [1], [0, 0, 1, 1], [], []>} : vector<16x128xbf16>, vector<128x1024xbf16>, vector<16x1024xf32> -> vector<16x1024xf32>
    %149 = arith.addf %143, %148 : vector<16x1024xf32>
    %c0_82 = arith.constant 0 : index
    %c0_83 = arith.constant 0 : index
    %150 = vector.load %arg15[%c0_82, %c0_83] : memref<1x1024xf32, #tpu.memory_space<vmem>>, vector<1x1024xf32>
    %151 = vector.broadcast %150 : vector<1x1024xf32> to vector<16x1024xf32>
    %152 = arith.mulf %149, %151 : vector<16x1024xf32>
    %c0_84 = arith.constant 0 : index
    %c0_85 = arith.constant 0 : index
    %153 = vector.load %arg16[%c0_84, %c0_85] : memref<1x1024xf32, #tpu.memory_space<vmem>>, vector<1x1024xf32>
    %154 = vector.broadcast %153 : vector<1x1024xf32> to vector<16x1024xf32>
    %155 = arith.addf %152, %154 : vector<16x1024xf32>
    %156 = arith.truncf %155 : vector<16x1024xf32> to vector<16x1024xbf16>
    %c0_86 = arith.constant 0 : index
    %c0_87 = arith.constant 0 : index
    %157 = vector.load %arg17[%c0_86, %c0_87] : memref<1024x512xbf16, #tpu.memory_space<vmem>>, vector<1024x512xbf16>
    %cst_88 = arith.constant dense<0.000000e+00> : vector<16x512xf32>
    %158 = tpu.matmul %156, %157, %cst_88 {dimension_numbers = #tpu.dot_dimension_numbers<[1], [0], [0], [1], [0, 0, 1, 1], [], []>} : vector<16x1024xbf16>, vector<1024x512xbf16>, vector<16x512xf32> -> vector<16x512xf32>
    %159 = arith.truncf %158 : vector<16x512xf32> to vector<16x512xbf16>
    %c0_89 = arith.constant 0 : index
    %c0_90 = arith.constant 0 : index
    %160 = vector.load %arg18[%c0_89, %c0_90] : memref<512x128xbf16, #tpu.memory_space<vmem>>, vector<512x128xbf16>
    %cst_91 = arith.constant dense<0.000000e+00> : vector<16x128xf32>
    %161 = tpu.matmul %159, %160, %cst_91 {dimension_numbers = #tpu.dot_dimension_numbers<[1], [0], [0], [1], [0, 0, 1, 1], [], []>} : vector<16x512xbf16>, vector<512x128xbf16>, vector<16x128xf32> -> vector<16x128xf32>
    %c0_92 = arith.constant 0 : index
    %c0_93 = arith.constant 0 : index
    %162 = vector.load %arg19[%c0_92, %c0_93] : memref<1x128xf32, #tpu.memory_space<vmem>>, vector<1x128xf32>
    %163 = vector.broadcast %162 : vector<1x128xf32> to vector<16x128xf32>
    %164 = arith.addf %161, %163 : vector<16x128xf32>
    %c0_94 = arith.constant 0 : index
    %c0_95 = arith.constant 0 : index
    %165 = vector.load %arg20[%c0_94, %c0_95] : memref<1x128xf32, #tpu.memory_space<vmem>>, vector<1x128xf32>
    %166 = vector.broadcast %165 : vector<1x128xf32> to vector<16x128xf32>
    %167 = arith.mulf %164, %166 : vector<16x128xf32>
    %cst_96 = arith.constant dense<0.000000e+00> : vector<16xf32>
    %168 = vector.multi_reduction <add>, %167, %cst_96 [1] : vector<16x128xf32> to vector<16xf32>
    %169 = vector.shape_cast %168 : vector<16xf32> to vector<16x1xf32>
    %c0_97 = arith.constant 0 : index
    %c0_98 = arith.constant 0 : index
    %170 = vector.load %arg21[%c0_97, %c0_98] : memref<1x1xf32, #tpu.memory_space<vmem>>, vector<1x1xf32>
    %171 = vector.broadcast %170 : vector<1x1xf32> to vector<16x1xf32>
    %172 = arith.addf %169, %171 : vector<16x1xf32>
    %173 = math.tanh %172 : vector<16x1xf32>
    %cst_99 = arith.constant dense<0xFF800000> : vector<16xf32>
    %174 = vector.multi_reduction <maximumf>, %164, %cst_99 [1] : vector<16x128xf32> to vector<16xf32>
    %175 = vector.shape_cast %174 : vector<16xf32> to vector<16x1xf32>
    %176 = vector.broadcast %175 : vector<16x1xf32> to vector<16x128xf32>
    %177 = arith.subf %164, %176 : vector<16x128xf32>
    %178 = math.exp %177 : vector<16x128xf32>
    %cst_100 = arith.constant dense<0.000000e+00> : vector<16xf32>
    %179 = vector.multi_reduction <add>, %178, %cst_100 [1] : vector<16x128xf32> to vector<16xf32>
    %180 = vector.shape_cast %179 : vector<16xf32> to vector<16x1xf32>
    %181 = math.log %180 : vector<16x1xf32>
    %182 = arith.addf %181, %175 : vector<16x1xf32>
    %183 = vector.broadcast %182 : vector<16x1xf32> to vector<16x128xf32>
    %184 = arith.subf %164, %183 : vector<16x128xf32>
    %185 = tpu.iota {dimensions = array<i32: 1>} : vector<16x128xi32>
    %c65_i32 = arith.constant 65 : i32
    %186 = vector.broadcast %c65_i32 : i32 to vector<16x128xi32>
    %187 = arith.cmpi eq, %185, %186 : vector<16x128xi32>
    %188 = vector.shape_cast %173 : vector<16x1xf32> to vector<16x1xf32>
    %189 = vector.broadcast %188 : vector<16x1xf32> to vector<16x128xf32>
    %190 = arith.select %187, %189, %184 : vector<16x128xi1>, vector<16x128xf32>
    %c0_101 = arith.constant 0 : index
    %c0_102 = arith.constant 0 : index
    %191 = vector.load %arg22[%c0_101, %c0_102] : memref<16x128xf32, #tpu.memory_space<vmem>>, vector<16x128xf32>
    tpu.vector_store %arg22[%c0_101, %c0_102], %190 {strides = array<i32>} : memref<16x128xf32, #tpu.memory_space<vmem>>, vector<16x128xf32>,
    return
  }
  func.func @transform_0(%arg0: i32) -> (i32, i32, i32) {
    %c0_i32 = arith.constant 0 : i32
    %c0_i32_0 = arith.constant 0 : i32
    %c0_i32_1 = arith.constant 0 : i32
    return %arg0, %c0_i32, %c0_i32_0 : i32, i32, i32
  }
  func.func @transform_1(%arg0: i32) -> (i32, i32, i32) {
    %c0_i32 = arith.constant 0 : i32
    %c0_i32_0 = arith.constant 0 : i32
    %c0_i32_1 = arith.constant 0 : i32
    %c0_i32_2 = arith.constant 0 : i32
    return %c0_i32, %c0_i32_0, %c0_i32_1 : i32, i32, i32
  }
  func.func @transform_2(%arg0: i32) -> (i32, i32) {
    %c0_i32 = arith.constant 0 : i32
    %c0_i32_0 = arith.constant 0 : i32
    %c0_i32_1 = arith.constant 0 : i32
    return %c0_i32, %c0_i32_0 : i32, i32
  }
  func.func @transform_3(%arg0: i32) -> (i32, i32) {
    %c0_i32 = arith.constant 0 : i32
    %c0_i32_0 = arith.constant 0 : i32
    %c0_i32_1 = arith.constant 0 : i32
    return %c0_i32, %c0_i32_0 : i32, i32
  }
  func.func @transform_4(%arg0: i32) -> (i32, i32, i32) {
    %c0_i32 = arith.constant 0 : i32
    %c0_i32_0 = arith.constant 0 : i32
    %c0_i32_1 = arith.constant 0 : i32
    %c0_i32_2 = arith.constant 0 : i32
    return %c0_i32, %c0_i32_0, %c0_i32_1 : i32, i32, i32
  }
  func.func @transform_5(%arg0: i32) -> (i32, i32) {
    %c0_i32 = arith.constant 0 : i32
    %c0_i32_0 = arith.constant 0 : i32
    %c0_i32_1 = arith.constant 0 : i32
    return %c0_i32, %c0_i32_0 : i32, i32
  }
  func.func @transform_6(%arg0: i32) -> (i32, i32) {
    %c0_i32 = arith.constant 0 : i32
    %c0_i32_0 = arith.constant 0 : i32
    %c0_i32_1 = arith.constant 0 : i32
    return %c0_i32, %c0_i32_0 : i32, i32
  }
  func.func @transform_7(%arg0: i32) -> (i32, i32, i32) {
    %c0_i32 = arith.constant 0 : i32
    %c0_i32_0 = arith.constant 0 : i32
    %c0_i32_1 = arith.constant 0 : i32
    %c0_i32_2 = arith.constant 0 : i32
    return %c0_i32, %c0_i32_0, %c0_i32_1 : i32, i32, i32
  }
  func.func @transform_8(%arg0: i32) -> (i32, i32) {
    %c0_i32 = arith.constant 0 : i32
    %c0_i32_0 = arith.constant 0 : i32
    %c0_i32_1 = arith.constant 0 : i32
    return %c0_i32, %c0_i32_0 : i32, i32
  }
  func.func @transform_9(%arg0: i32) -> (i32, i32) {
    %c0_i32 = arith.constant 0 : i32
    %c0_i32_0 = arith.constant 0 : i32
    %c0_i32_1 = arith.constant 0 : i32
    return %c0_i32, %c0_i32_0 : i32, i32
  }
  func.func @transform_10(%arg0: i32) -> (i32, i32, i32) {
    %c0_i32 = arith.constant 0 : i32
    %c0_i32_0 = arith.constant 0 : i32
    %c0_i32_1 = arith.constant 0 : i32
    %c0_i32_2 = arith.constant 0 : i32
    return %c0_i32, %c0_i32_0, %c0_i32_1 : i32, i32, i32
  }
  func.func @transform_11(%arg0: i32) -> (i32, i32) {
    %c0_i32 = arith.constant 0 : i32
    %c0_i32_0 = arith.constant 0 : i32
    %c0_i32_1 = arith.constant 0 : i32
    return %c0_i32, %c0_i32_0 : i32, i32
  }
  func.func @transform_12(%arg0: i32) -> (i32, i32) {
    %c0_i32 = arith.constant 0 : i32
    %c0_i32_0 = arith.constant 0 : i32
    %c0_i32_1 = arith.constant 0 : i32
    return %c0_i32, %c0_i32_0 : i32, i32
  }
  func.func @transform_13(%arg0: i32) -> (i32, i32) {
    %c0_i32 = arith.constant 0 : i32
    %c0_i32_0 = arith.constant 0 : i32
    %c0_i32_1 = arith.constant 0 : i32
    return %c0_i32, %c0_i32_0 : i32, i32
  }
  func.func @transform_14(%arg0: i32) -> (i32, i32) {
    %c0_i32 = arith.constant 0 : i32
    %c0_i32_0 = arith.constant 0 : i32
    %c0_i32_1 = arith.constant 0 : i32
    return %c0_i32, %c0_i32_0 : i32, i32
  }
  func.func @transform_15(%arg0: i32) -> (i32, i32) {
    %c0_i32 = arith.constant 0 : i32
    %c0_i32_0 = arith.constant 0 : i32
    %c0_i32_1 = arith.constant 0 : i32
    return %c0_i32, %c0_i32_0 : i32, i32
  }
  func.func @transform_16(%arg0: i32) -> (i32, i32) {
    %c0_i32 = arith.constant 0 : i32
    %c0_i32_0 = arith.constant 0 : i32
    %c0_i32_1 = arith.constant 0 : i32
    return %c0_i32, %c0_i32_0 : i32, i32
  }
  func.func @transform_17(%arg0: i32) -> (i32, i32) {
    %c0_i32 = arith.constant 0 : i32
    %c0_i32_0 = arith.constant 0 : i32
    %c0_i32_1 = arith.constant 0 : i32
    return %c0_i32, %c0_i32_0 : i32, i32
  }
  func.func @transform_18(%arg0: i32) -> (i32, i32) {
    %c0_i32 = arith.constant 0 : i32
    %c0_i32_0 = arith.constant 0 : i32
    %c0_i32_1 = arith.constant 0 : i32
    return %c0_i32, %c0_i32_0 : i32, i32
  }
  func.func @transform_19(%arg0: i32) -> (i32, i32) {
    %c0_i32 = arith.constant 0 : i32
    %c0_i32_0 = arith.constant 0 : i32
    %c0_i32_1 = arith.constant 0 : i32
    return %c0_i32, %c0_i32_0 : i32, i32
  }
  func.func @transform_20(%arg0: i32) -> (i32, i32) {
    %c0_i32 = arith.constant 0 : i32
    %c0_i32_0 = arith.constant 0 : i32
    %c0_i32_1 = arith.constant 0 : i32
    return %c0_i32, %c0_i32_0 : i32, i32
  }
  func.func @transform_21(%arg0: i32) -> (i32, i32) {
    %c0_i32 = arith.constant 0 : i32
    %c0_i32_0 = arith.constant 0 : i32
    return %arg0, %c0_i32 : i32, i32
  }
}

</mosaic_0001>

<llo_original>
// kernel: othello_forward.1
$region0: #{othello_forward.1}
  #allocation0 [shape = 'u32[]', space=smem, size = 0x4, offset = 0x4, fixed_abs, tag = 'smem constant byte address 0x4 - core index']
  #allocation1 [shape = 'u32[144,128]{1,0:T(1,128)}', space=vmem, size = 0x12000, scoped, tag = 'internal scratch']
  #allocation2 [shape = 'f32[1,1]{1,0:T(1,128)S(1)}', space=vmem, size = 0x200, scoped, tag = 'scoped memory for othello_forward.1']
  %s0 = inlined_call_operand.vmem [shape: f32[16,8,8], index: 0, kind: input, shape index: {}]
  %s1 = inlined_call_operand.vmem [shape: bf16[3,8,256], index: 1, kind: input, shape index: {}]
  %s2 = inlined_call_operand.vmem [shape: f32[1,256], index: 2, kind: input, shape index: {}]
  %s3 = inlined_call_operand.vmem [shape: f32[1,256], index: 3, kind: input, shape index: {}]
  %s4 = inlined_call_operand.vmem [shape: bf16[3,256,256], index: 4, kind: input, shape index: {}]
  %s5 = inlined_call_operand.vmem [shape: f32[1,256], index: 5, kind: input, shape index: {}]
  %s6 = inlined_call_operand.vmem [shape: f32[1,256], index: 6, kind: input, shape index: {}]
  %s7 = inlined_call_operand.vmem [shape: bf16[3,256,192], index: 7, kind: input, shape index: {}]
  %s8 = inlined_call_operand.vmem [shape: f32[1,192], index: 8, kind: input, shape index: {}]
  %s9 = inlined_call_operand.vmem [shape: f32[1,192], index: 9, kind: input, shape index: {}]
  %s10 = inlined_call_operand.vmem [shape: bf16[3,192,128], index: 10, kind: input, shape index: {}]
  %s11 = inlined_call_operand.vmem [shape: f32[1,128], index: 11, kind: input, shape index: {}]
  %s12 = inlined_call_operand.vmem [shape: f32[1,128], index: 12, kind: input, shape index: {}]
  %s13 = inlined_call_operand.hbm [shape: bf16[512,1024], index: 13, kind: input, shape index: {}]
  %s14 = inlined_call_operand.vmem [shape: f32[1,1024], index: 14, kind: input, shape index: {}]
  %s15 = inlined_call_operand.vmem [shape: f32[1,1024], index: 15, kind: input, shape index: {}]
  %s16 = inlined_call_operand.hbm [shape: bf16[1024,512], index: 16, kind: input, shape index: {}]
  %s17 = inlined_call_operand.vmem [shape: bf16[512,128], index: 17, kind: input, shape index: {}]
  %s18 = inlined_call_operand.vmem [shape: f32[1,128], index: 18, kind: input, shape index: {}]
  %s19 = inlined_call_operand.vmem [shape: f32[1,128], index: 19, kind: input, shape index: {}]
  %s20 = inlined_call_operand.<no memory space> [shape: f32[1,1], index: 20, kind: input, shape index: {}]
  %s21 = inlined_call_operand.vmem [shape: f32[16,128], index: 21, kind: output, shape index: {}]
  %s22 = sld [smem:[#allocation0]]
  $region102: #{othello_forward.1} parent=0
    _
  %s24 = ssub.s32 1, %s22
  %s25 = scalar_select 0, %s24, %s22
  %v26 = vstv %s20
  %27 = vst [vmem:[#allocation2] sm:$0x1] %v26
  $region1: #{othello_forward.1} parent=0
    #allocation3 [shape = 'u8[1048576]{0}', space=vmem, size = 0x100000, scoped, tag = 'input window, operand 13, single buffered']
    #allocation4 [shape = 's32[1]{0}', space=sflag, size = 0x4, scoped, tag = 'scoped memory for othello_forward.1']
    #allocation5 [shape = 'u8[1048576]{0}', space=vmem, size = 0x100000, scoped, tag = 'input window, operand 16, single buffered']
    #allocation6 [shape = 's32[1]{0}', space=sflag, size = 0x4, scoped, tag = 'scoped memory for othello_forward.1']
    %28 = vsyncpa [#allocation4], 0
    %29 = vsyncpa [#allocation6], 0
    // Predicated region
    $region2: #{othello_forward.1} parent=1 // pred_check
      _
    $region3: #{othello_forward.1} parent=1 // pred_check_branch
      %31 = sbr.rel (0) target = $region5
    $region4: #{othello_forward.1} parent=1 // pred_region
      _
    $region5: #{othello_forward.1} parent=1 // pred_fallthru
      _
    // Predicated region
    $region6: #{othello_forward.1} parent=1 // pred_check
      _
    $region7: #{othello_forward.1} parent=1 // pred_check_branch
      %33 = sbr.rel (0) target = $region9
    $region8: #{othello_forward.1} parent=1 // pred_region
      _
    $region9: #{othello_forward.1} parent=1 // pred_fallthru
      _
    // Predicated region
    $region10: #{othello_forward.1} parent=1 // pred_check
      _
    $region11: #{othello_forward.1} parent=1 // pred_check_branch
      %35 = sbr.rel (0) target = $region13
    $region12: #{othello_forward.1} parent=1 // pred_region
      _
    $region13: #{othello_forward.1} parent=1 // pred_fallthru
      _
    // Predicated region
    $region14: #{othello_forward.1} parent=1 // pred_check
      _
    $region15: #{othello_forward.1} parent=1 // pred_check_branch
      %37 = sbr.rel (0) target = $region17
    $region16: #{othello_forward.1} parent=1 // pred_region
      _
    $region17: #{othello_forward.1} parent=1 // pred_fallthru
      _
    // Predicated region
    $region18: #{othello_forward.1} parent=1 // pred_check
      _
    $region19: #{othello_forward.1} parent=1 // pred_check_branch
      %39 = sbr.rel (0) target = $region21
    $region20: #{othello_forward.1} parent=1 // pred_region
      _
    $region21: #{othello_forward.1} parent=1 // pred_fallthru
      _
    // Predicated region
    $region22: #{othello_forward.1} parent=1 // pred_check
      _
    $region23: #{othello_forward.1} parent=1 // pred_check_branch
      %41 = sbr.rel (0) target = $region25
    $region24: #{othello_forward.1} parent=1 // pred_region
      _
    $region25: #{othello_forward.1} parent=1 // pred_fallthru
      _
    // Predicated region
    $region26: #{othello_forward.1} parent=1 // pred_check
      _
    $region27: #{othello_forward.1} parent=1 // pred_check_branch
      %43 = sbr.rel (0) target = $region29
    $region28: #{othello_forward.1} parent=1 // pred_region
      _
    $region29: #{othello_forward.1} parent=1 // pred_fallthru
      _
    // Predicated region
    $region30: #{othello_forward.1} parent=1 // pred_check
      _
    $region31: #{othello_forward.1} parent=1 // pred_check_branch
      %45 = sbr.rel (0) target = $region33
    $region32: #{othello_forward.1} parent=1 // pred_region
      _
    $region33: #{othello_forward.1} parent=1 // pred_fallthru
      _
    // Predicated region
    $region34: #{othello_forward.1} parent=1 // pred_check
      _
    $region35: #{othello_forward.1} parent=1 // pred_check_branch
      %47 = sbr.rel (0) target = $region37
    $region36: #{othello_forward.1} parent=1 // pred_region
      _
    $region37: #{othello_forward.1} parent=1 // pred_fallthru
      _
    // Predicated region
    $region38: #{othello_forward.1} parent=1 // pred_check
      _
    $region39: #{othello_forward.1} parent=1 // pred_check_branch
      %49 = sbr.rel (0) target = $region41
    $region40: #{othello_forward.1} parent=1 // pred_region
      _
    $region41: #{othello_forward.1} parent=1 // pred_fallthru
      _
    // Predicated region
    $region42: #{othello_forward.1} parent=1 // pred_check
      _
    $region43: #{othello_forward.1} parent=1 // pred_check_branch
      %51 = sbr.rel (0) target = $region45
    $region44: #{othello_forward.1} parent=1 // pred_region
      _
    $region45: #{othello_forward.1} parent=1 // pred_fallthru
      _
    // Predicated region
    $region46: #{othello_forward.1} parent=1 // pred_check
      _
    $region47: #{othello_forward.1} parent=1 // pred_check_branch
      %53 = sbr.rel (0) target = $region49
    $region48: #{othello_forward.1} parent=1 // pred_region
      _
    $region49: #{othello_forward.1} parent=1 // pred_fallthru
      _
    // Predicated region
    $region50: #{othello_forward.1} parent=1 // pred_check
      _
    $region51: #{othello_forward.1} parent=1 // pred_check_branch
      %55 = sbr.rel (0) target = $region53
    $region52: #{othello_forward.1} parent=1 // pred_region
      _
    $region53: #{othello_forward.1} parent=1 // pred_fallthru
      _
    // Predicated region
    $region54: #{othello_forward.1} parent=1 // pred_check
      _
    $region55: #{othello_forward.1} parent=1 // pred_check_branch
      %57 = sbr.rel (0) target = $region57
    $region56: #{othello_forward.1} parent=1 // pred_region
      %s59 = ssub.s32 32768, 32768
      %60 = vsyncadd [#allocation4], %s59
      %s61 = sshll.u32 [#allocation3], 4
      %s62 = int_to_ptr.vmem [resolvable:$true] %s61
      %67 = dma.hbm_to_vmem [thread:$0]  %s13, 32768, %s62, [#allocation4], 512, 512, 32
    $region57: #{othello_forward.1} parent=1 // pred_fallthru
      _
    // Predicated region
    $region58: #{othello_forward.1} parent=1 // pred_check
      _
    $region59: #{othello_forward.1} parent=1 // pred_check_branch
      %69 = sbr.rel (0) target = $region61
    $region60: #{othello_forward.1} parent=1 // pred_region
      _
    $region61: #{othello_forward.1} parent=1 // pred_fallthru
      _
    // Predicated region
    $region62: #{othello_forward.1} parent=1 // pred_check
      _
    $region63: #{othello_forward.1} parent=1 // pred_check_branch
      %71 = sbr.rel (0) target = $region65
    $region64: #{othello_forward.1} parent=1 // pred_region
      _
    $region65: #{othello_forward.1} parent=1 // pred_fallthru
      _
    // Predicated region
    $region66: #{othello_forward.1} parent=1 // pred_check
      _
    $region67: #{othello_forward.1} parent=1 // pred_check_branch
      %73 = sbr.rel (0) target = $region69
    $region68: #{othello_forward.1} parent=1 // pred_region
      %s75 = ssub.s32 32768, 32768
      %76 = vsyncadd [#allocation6], %s75
      %s77 = sshll.u32 [#allocation5], 4
      %s78 = int_to_ptr.vmem [resolvable:$true] %s77
      %83 = dma.hbm_to_vmem [thread:$0]  %s16, 32768, %s78, [#allocation6], 256, 256, 16
    $region69: #{othello_forward.1} parent=1 // pred_fallthru
      _
    // Predicated region
    $region70: #{othello_forward.1} parent=1 // pred_check
      _
    $region71: #{othello_forward.1} parent=1 // pred_check_branch
      %85 = sbr.rel (0) target = $region73
    $region72: #{othello_forward.1} parent=1 // pred_region
      _
    $region73: #{othello_forward.1} parent=1 // pred_fallthru
      _
    // Predicated region
    $region74: #{othello_forward.1} parent=1 // pred_check
      _
    $region75: #{othello_forward.1} parent=1 // pred_check_branch
      %87 = sbr.rel (0) target = $region77
    $region76: #{othello_forward.1} parent=1 // pred_region
      _
    $region77: #{othello_forward.1} parent=1 // pred_fallthru
      _
    // Predicated region
    $region78: #{othello_forward.1} parent=1 // pred_check
      _
    $region79: #{othello_forward.1} parent=1 // pred_check_branch
      %89 = sbr.rel (0) target = $region81
    $region80: #{othello_forward.1} parent=1 // pred_region
      _
    $region81: #{othello_forward.1} parent=1 // pred_fallthru
      _
    // Predicated region
    $region82: #{othello_forward.1} parent=1 // pred_check
      _
    $region83: #{othello_forward.1} parent=1 // pred_check_branch
      %91 = sbr.rel (0) target = $region85
    $region84: #{othello_forward.1} parent=1 // pred_region
      _
    $region85: #{othello_forward.1} parent=1 // pred_fallthru
      _
    // Predicated region
    $region86: #{othello_forward.1} parent=1 // pred_check
      _
    $region87: #{othello_forward.1} parent=1 // pred_check_branch
      %93 = sbr.rel (0) target = $region89
    $region88: #{othello_forward.1} parent=1 // pred_region
      %94 = dma.done [#allocation4], 32768
    $region89: #{othello_forward.1} parent=1 // pred_fallthru
      _
    // Predicated region
    $region90: #{othello_forward.1} parent=1 // pred_check
      _
    $region91: #{othello_forward.1} parent=1 // pred_check_branch
      %96 = sbr.rel (0) target = $region93
    $region92: #{othello_forward.1} parent=1 // pred_region
      %97 = dma.done [#allocation6], 32768
    $region93: #{othello_forward.1} parent=1 // pred_fallthru
      _
    %v99 = vld [vmem:[%s0] sm:$0xff]
    %v100 = vld [vmem:[%s0 + $0x8] sm:$0xff]
    %v101 = vld [vmem:[%s0 + $0x10] sm:$0xff]
    %v102 = vld [vmem:[%s0 + $0x18] sm:$0xff]
    %v103 = vld [vmem:[%s0 + $0x20] sm:$0xff]
    %v104 = vld [vmem:[%s0 + $0x28] sm:$0xff]
    %v105 = vld [vmem:[%s0 + $0x30] sm:$0xff]
    %v106 = vld [vmem:[%s0 + $0x38] sm:$0xff]
    %v107 = vld [vmem:[%s0 + $0x40] sm:$0xff]
    %v108 = vld [vmem:[%s0 + $0x48] sm:$0xff]
    %v109 = vld [vmem:[%s0 + $0x50] sm:$0xff]
    %v110 = vld [vmem:[%s0 + $0x58] sm:$0xff]
    %v111 = vld [vmem:[%s0 + $0x60] sm:$0xff]
    %v112 = vld [vmem:[%s0 + $0x68] sm:$0xff]
    %v113 = vld [vmem:[%s0 + $0x70] sm:$0xff]
    %v114 = vld [vmem:[%s0 + $0x78] sm:$0xff]
    %v131 = vrot.slane %v99, 7
    %v132 = vrot.slane %v100, 7
    %v133 = vrot.slane %v101, 7
    %v134 = vrot.slane %v102, 7
    %v135 = vrot.slane %v103, 7
    %v136 = vrot.slane %v104, 7
    %v137 = vrot.slane %v105, 7
    %v138 = vrot.slane %v106, 7
    %v139 = vrot.slane %v107, 7
    %v140 = vrot.slane %v108, 7
    %v141 = vrot.slane %v109, 7
    %v142 = vrot.slane %v110, 7
    %v143 = vrot.slane %v111, 7
    %v144 = vrot.slane %v112, 7
    %v145 = vrot.slane %v113, 7
    %v146 = vrot.slane %v114, 7
    %vm163 = vcmask 1040384
    %v164 = vsel %vm163, 0.0, %v131
    %v165 = vsel %vm163, 0.0, %v132
    %v166 = vsel %vm163, 0.0, %v133
    %v167 = vsel %vm163, 0.0, %v134
    %v168 = vsel %vm163, 0.0, %v135
    %v169 = vsel %vm163, 0.0, %v136
    %v170 = vsel %vm163, 0.0, %v137
    %v171 = vsel %vm163, 0.0, %v138
    %v172 = vsel %vm163, 0.0, %v139
    %v173 = vsel %vm163, 0.0, %v140
    %v174 = vsel %vm163, 0.0, %v141
    %v175 = vsel %vm163, 0.0, %v142
    %v176 = vsel %vm163, 0.0, %v143
    %v177 = vsel %vm163, 0.0, %v144
    %v178 = vsel %vm163, 0.0, %v145
    %v179 = vsel %vm163, 0.0, %v146
    %v180 = vsel %vm163, %v131, 0.0
    %v181 = vsel %vm163, %v132, 0.0
    %v182 = vsel %vm163, %v133, 0.0
    %v183 = vsel %vm163, %v134, 0.0
    %v184 = vsel %vm163, %v135, 0.0
    %v185 = vsel %vm163, %v136, 0.0
    %v186 = vsel %vm163, %v137, 0.0
    %v187 = vsel %vm163, %v138, 0.0
    %v188 = vsel %vm163, %v139, 0.0
    %v189 = vsel %vm163, %v140, 0.0
    %v190 = vsel %vm163, %v141, 0.0
    %v191 = vsel %vm163, %v142, 0.0
    %v192 = vsel %vm163, %v143, 0.0
    %v193 = vsel %vm163, %v144, 0.0
    %v194 = vsel %vm163, %v145, 0.0
    %v195 = vsel %vm163, %v146, 0.0
    %v196 = vpack.c.bf16 %v165, %v164
    %v197 = vpack.c.bf16 %v167, %v166
    %v198 = vpack.c.bf16 %v169, %v168
    %v199 = vpack.c.bf16 %v171, %v170
    %v200 = vpack.c.bf16 %v173, %v172
    %v201 = vpack.c.bf16 %v175, %v174
    %v202 = vpack.c.bf16 %v177, %v176
    %v203 = vpack.c.bf16 %v179, %v178
    %v204 = vld [vmem:[%s1] sm:$0xff]
    %vm237 = vcmask 1046528
    %v238 = vrot.slane %v164, 1
    %v239 = vrot.slane %v180, 1
    %v240 = vsel %vm237, %v238, %v239
    %v241 = vrot.slane %v165, 1
    %v242 = vrot.slane %v181, 1
    %v243 = vsel %vm237, %v241, %v242
    %v244 = vrot.slane %v166, 1
    %v245 = vrot.slane %v182, 1
    %v246 = vsel %vm237, %v244, %v245
    %v247 = vrot.slane %v167, 1
    %v248 = vrot.slane %v183, 1
    %v249 = vsel %vm237, %v247, %v248
    %v250 = vrot.slane %v168, 1
    %v251 = vrot.slane %v184, 1
    %v252 = vsel %vm237, %v250, %v251
    %v253 = vrot.slane %v169, 1
    %v254 = vrot.slane %v185, 1
    %v255 = vsel %vm237, %v253, %v254
    %v256 = vrot.slane %v170, 1
    %v257 = vrot.slane %v186, 1
    %v258 = vsel %vm237, %v256, %v257
    %v259 = vrot.slane %v171, 1
    %v260 = vrot.slane %v187, 1
    %v261 = vsel %vm237, %v259, %v260
    %v262 = vrot.slane %v172, 1
    %v263 = vrot.slane %v188, 1
    %v264 = vsel %vm237, %v262, %v263
    %v265 = vrot.slane %v173, 1
    %v266 = vrot.slane %v189, 1
    %v267 = vsel %vm237, %v265, %v266
    %v268 = vrot.slane %v174, 1
    %v269 = vrot.slane %v190, 1
    %v270 = vsel %vm237, %v268, %v269
    %v271 = vrot.slane %v175, 1
    %v272 = vrot.slane %v191, 1
    %v273 = vsel %vm237, %v271, %v272
    %v274 = vrot.slane %v176, 1
    %v275 = vrot.slane %v192, 1
    %v276 = vsel %vm237, %v274, %v275
    %v277 = vrot.slane %v177, 1
    %v278 = vrot.slane %v193, 1
    %v279 = vsel %vm237, %v277, %v278
    %v280 = vrot.slane %v178, 1
    %v281 = vrot.slane %v194, 1
    %v282 = vsel %vm237, %v280, %v281
    %v283 = vrot.slane %v179, 1
    %v284 = vrot.slane %v195, 1
    %v285 = vsel %vm237, %v283, %v284
    %v302 = vpack.c.bf16 %v243, %v240
    %v303 = vpack.c.bf16 %v249, %v246
    %v304 = vpack.c.bf16 %v255, %v252
    %v305 = vpack.c.bf16 %v261, %v258
    %v306 = vpack.c.bf16 %v267, %v264
    %v307 = vpack.c.bf16 %v273, %v270
    %v308 = vpack.c.bf16 %v279, %v276
    %v309 = vpack.c.bf16 %v285, %v282
    %s310 = scalar_lea.vmem %s1, 8
    %v311 = vld [vmem:[%s310] sm:$0xff]
    %v313 = vunpack.c.l.b16 %v311
    %v314 = vunpack.c.h.b16 %v311
    %v315 = vpack.c.b16 %v313, %v313
    %v316 = vpack.c.b16 %v314, %v314
    %vm317 = vcmask 64512
    %v319 = vsel %vm317, %v302, 0
    %v322 = vsel %vm317, %v303, 0
    %v325 = vsel %vm317, %v304, 0
    %v328 = vsel %vm317, %v305, 0
    %v331 = vsel %vm317, %v306, 0
    %v334 = vsel %vm317, %v307, 0
    %v337 = vsel %vm317, %v308, 0
    %v340 = vsel %vm317, %v309, 0
    %vm342 = vcmask 1043456
    %v344 = vsel %vm342, %v315, 0
    %v347 = vsel %vm342, %v316, 0
    %349 = vmatprep.subr.bf16.mxu0 %v347
    %350 = vmatpush1.bf16.msra.mxu0 %v344
    %351 = vmatprep.subr.bf16.mxu0 0
    %352 = vmatpush1.bf16.msra.mxu0 0
    %353 = vmatprep.subr.bf16.mxu0 0
    %354 = vmatpush1.bf16.msra.mxu0 0
    %355 = vmatprep.subr.bf16.mxu0 0
    %356 = vmatpush1.bf16.msra.mxu0 0
    %357 = vmatprep.subr.bf16.mxu0 0
    %358 = vmatpush1.bf16.msra.mxu0 0
    %359 = vmatprep.subr.bf16.mxu0 0
    %360 = vmatpush1.bf16.msra.mxu0 0
    %361 = vmatprep.subr.bf16.mxu0 0
    %362 = vmatpush1.bf16.msra.mxu0 0
    %363 = vmatprep.subr.bf16.mxu0 0
    %364 = vmatpush1.bf16.msra.mxu0 0
    %365 = vmatprep.subr.bf16.mxu0 0
    %366 = vmatpush1.bf16.msra.mxu0 0
    %367 = vmatprep.subr.bf16.mxu0 0
    %368 = vmatpush1.bf16.msra.mxu0 0
    %369 = vmatprep.subr.bf16.mxu0 0
    %370 = vmatpush1.bf16.msra.mxu0 0
    %371 = vmatprep.subr.bf16.mxu0 0
    %372 = vmatpush1.bf16.msra.mxu0 0
    %373 = vmatprep.subr.bf16.mxu0 0
    %374 = vmatpush1.bf16.msra.mxu0 0
    %375 = vmatprep.subr.bf16.mxu0 0
    %376 = vmatpush1.bf16.msra.mxu0 0
    %377 = vmatprep.subr.bf16.mxu0 0
    %378 = vmatpush1.bf16.msra.mxu0 0
    %379 = vmatprep.subr.bf16.mxu0 0
    %380 = vmatpush1.bf16.msra.mxu0 0
    %381 = vmatprep.mubr.bf16.mxu0 0
    %382 = vmatmul.mubr.bf16.gmra.mrb[0].mxu0 %v319
    %v383 = vpop.f32.mrb[0].mxu0
    %v384 = vadd.f32 0.0, %v383
    %v385 = vpop.f32.mrb[0].mxu0
    %v386 = vadd.f32 0.0, %v385
    %v387 = vpop.f32.mrb[0].mxu0
    %v388 = vadd.f32 0.0, %v387
    %v389 = vpop.f32.mrb[0].mxu0
    %v390 = vadd.f32 0.0, %v389
    %391 = vmatprep.mubr.bf16.mxu0 0
    %392 = vmatmul.mubr.bf16.gmra.mrb[0].mxu0 %v322
    %v393 = vpop.f32.mrb[0].mxu0
    %v394 = vadd.f32 0.0, %v393
    %v395 = vpop.f32.mrb[0].mxu0
    %v396 = vadd.f32 0.0, %v395
    %v397 = vpop.f32.mrb[0].mxu0
    %v398 = vadd.f32 0.0, %v397
    %v399 = vpop.f32.mrb[0].mxu0
    %v400 = vadd.f32 0.0, %v399
    %401 = vmatprep.mubr.bf16.mxu0 0
    %402 = vmatmul.mubr.bf16.gmra.mrb[0].mxu0 %v325
    %v403 = vpop.f32.mrb[0].mxu0
    %v404 = vadd.f32 0.0, %v403
    %v405 = vpop.f32.mrb[0].mxu0
    %v406 = vadd.f32 0.0, %v405
    %v407 = vpop.f32.mrb[0].mxu0
    %v408 = vadd.f32 0.0, %v407
    %v409 = vpop.f32.mrb[0].mxu0
    %v410 = vadd.f32 0.0, %v409
    %411 = vmatprep.mubr.bf16.mxu0 0
    %412 = vmatmul.mubr.bf16.gmra.mrb[0].mxu0 %v328
    %v413 = vpop.f32.mrb[0].mxu0
    %v414 = vadd.f32 0.0, %v413
    %v415 = vpop.f32.mrb[0].mxu0
    %v416 = vadd.f32 0.0, %v415
    %v417 = vpop.f32.mrb[0].mxu0
    %v418 = vadd.f32 0.0, %v417
    %v419 = vpop.f32.mrb[0].mxu0
    %v420 = vadd.f32 0.0, %v419
    %421 = vmatprep.mubr.bf16.mxu0 0
    %422 = vmatmul.mubr.bf16.gmra.mrb[0].mxu0 %v331
    %v423 = vpop.f32.mrb[0].mxu0
    %v424 = vadd.f32 0.0, %v423
    %v425 = vpop.f32.mrb[0].mxu0
    %v426 = vadd.f32 0.0, %v425
    %v427 = vpop.f32.mrb[0].mxu0
    %v428 = vadd.f32 0.0, %v427
    %v429 = vpop.f32.mrb[0].mxu0
    %v430 = vadd.f32 0.0, %v429
    %431 = vmatprep.mubr.bf16.mxu0 0
    %432 = vmatmul.mubr.bf16.gmra.mrb[0].mxu0 %v334
    %v433 = vpop.f32.mrb[0].mxu0
    %v434 = vadd.f32 0.0, %v433
    %v435 = vpop.f32.mrb[0].mxu0
    %v436 = vadd.f32 0.0, %v435
    %v437 = vpop.f32.mrb[0].mxu0
    %v438 = vadd.f32 0.0, %v437
    %v439 = vpop.f32.mrb[0].mxu0
    %v440 = vadd.f32 0.0, %v439
    %441 = vmatprep.mubr.bf16.mxu0 0
    %442 = vmatmul.mubr.bf16.gmra.mrb[0].mxu0 %v337
    %v443 = vpop.f32.mrb[0].mxu0
    %v444 = vadd.f32 0.0, %v443
    %v445 = vpop.f32.mrb[0].mxu0
    %v446 = vadd.f32 0.0, %v445
    %v447 = vpop.f32.mrb[0].mxu0
    %v448 = vadd.f32 0.0, %v447
    %v449 = vpop.f32.mrb[0].mxu0
    %v450 = vadd.f32 0.0, %v449
    %451 = vmatprep.mubr.bf16.mxu0 0
    %452 = vmatmul.mubr.bf16.gmra.mrb[0].mxu0 %v340
    %v453 = vpop.f32.mrb[0].mxu0
    %v454 = vadd.f32 0.0, %v453
    %v455 = vpop.f32.mrb[0].mxu0
    %v456 = vadd.f32 0.0, %v455
    %v457 = vpop.f32.mrb[0].mxu0
    %v458 = vadd.f32 0.0, %v457
    %v459 = vpop.f32.mrb[0].mxu0
    %v460 = vadd.f32 0.0, %v459
    %461 = vdwg.mxu0
    %v463 = vunpack.c.l.b16 %v204
    %v464 = vunpack.c.h.b16 %v204
    %v465 = vpack.c.b16 %v463, %v463
    %v466 = vpack.c.b16 %v464, %v464
    %v468 = vsel %vm317, %v196, 0
    %v471 = vsel %vm317, %v197, 0
    %v474 = vsel %vm317, %v198, 0
    %v477 = vsel %vm317, %v199, 0
    %v480 = vsel %vm317, %v200, 0
    %v483 = vsel %vm317, %v201, 0
    %v486 = vsel %vm317, %v202, 0
    %v489 = vsel %vm317, %v203, 0
    %v492 = vsel %vm342, %v465, 0
    %v495 = vsel %vm342, %v466, 0
    %497 = vmatprep.subr.bf16.mxu0 %v495
    %498 = vmatpush1.bf16.msra.mxu0 %v492
    %499 = vmatprep.subr.bf16.mxu0 0
    %500 = vmatpush1.bf16.msra.mxu0 0
    %501 = vmatprep.subr.bf16.mxu0 0
    %502 = vmatpush1.bf16.msra.mxu0 0
    %503 = vmatprep.subr.bf16.mxu0 0
    %504 = vmatpush1.bf16.msra.mxu0 0
    %505 = vmatprep.subr.bf16.mxu0 0
    %506 = vmatpush1.bf16.msra.mxu0 0
    %507 = vmatprep.subr.bf16.mxu0 0
    %508 = vmatpush1.bf16.msra.mxu0 0
    %509 = vmatprep.subr.bf16.mxu0 0
    %510 = vmatpush1.bf16.msra.mxu0 0
    %511 = vmatprep.subr.bf16.mxu0 0
    %512 = vmatpush1.bf16.msra.mxu0 0
    %513 = vmatprep.subr.bf16.mxu0 0
    %514 = vmatpush1.bf16.msra.mxu0 0
    %515 = vmatprep.subr.bf16.mxu0 0
    %516 = vmatpush1.bf16.msra.mxu0 0
    %517 = vmatprep.subr.bf16.mxu0 0
    %518 = vmatpush1.bf16.msra.mxu0 0
    %519 = vmatprep.subr.bf16.mxu0 0
    %520 = vmatpush1.bf16.msra.mxu0 0
    %521 = vmatprep.subr.bf16.mxu0 0
    %522 = vmatpush1.bf16.msra.mxu0 0
    %523 = vmatprep.subr.bf16.mxu0 0
    %524 = vmatpush1.bf16.msra.mxu0 0
    %525 = vmatprep.subr.bf16.mxu0 0
    %526 = vmatpush1.bf16.msra.mxu0 0
    %527 = vmatprep.subr.bf16.mxu0 0
    %528 = vmatpush1.bf16.msra.mxu0 0
    %529 = vmatprep.mubr.bf16.mxu0 0
    %530 = vmatmul.mubr.bf16.gmra.mrb[0].mxu0 %v468
    %v531 = vpop.f32.mrb[0].mxu0
    %v532 = vadd.f32 %v384, %v531
    %v533 = vpop.f32.mrb[0].mxu0
    %v534 = vadd.f32 %v386, %v533
    %v535 = vpop.f32.mrb[0].mxu0
    %v536 = vadd.f32 %v388, %v535
    %v537 = vpop.f32.mrb[0].mxu0
    %v538 = vadd.f32 %v390, %v537
    %539 = vmatprep.mubr.bf16.mxu0 0
    %540 = vmatmul.mubr.bf16.gmra.mrb[0].mxu0 %v471
    %v541 = vpop.f32.mrb[0].mxu0
    %v542 = vadd.f32 %v394, %v541
    %v543 = vpop.f32.mrb[0].mxu0
    %v544 = vadd.f32 %v396, %v543
    %v545 = vpop.f32.mrb[0].mxu0
    %v546 = vadd.f32 %v398, %v545
    %v547 = vpop.f32.mrb[0].mxu0
    %v548 = vadd.f32 %v400, %v547
    %549 = vmatprep.mubr.bf16.mxu0 0
    %550 = vmatmul.mubr.bf16.gmra.mrb[0].mxu0 %v474
    %v551 = vpop.f32.mrb[0].mxu0
    %v552 = vadd.f32 %v404, %v551
    %v553 = vpop.f32.mrb[0].mxu0
    %v554 = vadd.f32 %v406, %v553
    %v555 = vpop.f32.mrb[0].mxu0
    %v556 = vadd.f32 %v408, %v555
    %v557 = vpop.f32.mrb[0].mxu0
    %v558 = vadd.f32 %v410, %v557
    %559 = vmatprep.mubr.bf16.mxu0 0
    %560 = vmatmul.mubr.bf16.gmra.mrb[0].mxu0 %v477
    %v561 = vpop.f32.mrb[0].mxu0
    %v562 = vadd.f32 %v414, %v561
    %v563 = vpop.f32.mrb[0].mxu0
    %v564 = vadd.f32 %v416, %v563
    %v565 = vpop.f32.mrb[0].mxu0
    %v566 = vadd.f32 %v418, %v565
    %v567 = vpop.f32.mrb[0].mxu0
    %v568 = vadd.f32 %v420, %v567
    %569 = vmatprep.mubr.bf16.mxu0 0
    %570 = vmatmul.mubr.bf16.gmra.mrb[0].mxu0 %v480
    %v571 = vpop.f32.mrb[0].mxu0
    %v572 = vadd.f32 %v424, %v571
    %v573 = vpop.f32.mrb[0].mxu0
    %v574 = vadd.f32 %v426, %v573
    %v575 = vpop.f32.mrb[0].mxu0
    %v576 = vadd.f32 %v428, %v575
    %v577 = vpop.f32.mrb[0].mxu0
    %v578 = vadd.f32 %v430, %v577
    %579 = vmatprep.mubr.bf16.mxu0 0
    %580 = vmatmul.mubr.bf16.gmra.mrb[0].mxu0 %v483
    %v581 = vpop.f32.mrb[0].mxu0
    %v582 = vadd.f32 %v434, %v581
    %v583 = vpop.f32.mrb[0].mxu0
    %v584 = vadd.f32 %v436, %v583
    %v585 = vpop.f32.mrb[0].mxu0
    %v586 = vadd.f32 %v438, %v585
    %v587 = vpop.f32.mrb[0].mxu0
    %v588 = vadd.f32 %v440, %v587
    %589 = vmatprep.mubr.bf16.mxu0 0
    %590 = vmatmul.mubr.bf16.gmra.mrb[0].mxu0 %v486
    %v591 = vpop.f32.mrb[0].mxu0
    %v592 = vadd.f32 %v444, %v591
    %v593 = vpop.f32.mrb[0].mxu0
    %v594 = vadd.f32 %v446, %v593
    %v595 = vpop.f32.mrb[0].mxu0
    %v596 = vadd.f32 %v448, %v595
    %v597 = vpop.f32.mrb[0].mxu0
    %v598 = vadd.f32 %v450, %v597
    %599 = vmatprep.mubr.bf16.mxu0 0
    %600 = vmatmul.mubr.bf16.gmra.mrb[0].mxu0 %v489
    %v601 = vpop.f32.mrb[0].mxu0
    %v602 = vadd.f32 %v454, %v601
    %v603 = vpop.f32.mrb[0].mxu0
    %v604 = vadd.f32 %v456, %v603
    %v605 = vpop.f32.mrb[0].mxu0
    %v606 = vadd.f32 %v458, %v605
    %v607 = vpop.f32.mrb[0].mxu0
    %v608 = vadd.f32 %v460, %v607
    %609 = vdwg.mxu0
    %vm610 = vcmask 1045504
    %v611 = vrot.slane %v164, 2
    %v612 = vrot.slane %v180, 2
    %v613 = vsel %vm610, %v611, %v612
    %v614 = vrot.slane %v165, 2
    %v615 = vrot.slane %v181, 2
    %v616 = vsel %vm610, %v614, %v615
    %v617 = vrot.slane %v166, 2
    %v618 = vrot.slane %v182, 2
    %v619 = vsel %vm610, %v617, %v618
    %v620 = vrot.slane %v167, 2
    %v621 = vrot.slane %v183, 2
    %v622 = vsel %vm610, %v620, %v621
    %v623 = vrot.slane %v168, 2
    %v624 = vrot.slane %v184, 2
    %v625 = vsel %vm610, %v623, %v624
    %v626 = vrot.slane %v169, 2
    %v627 = vrot.slane %v185, 2
    %v628 = vsel %vm610, %v626, %v627
    %v629 = vrot.slane %v170, 2
    %v630 = vrot.slane %v186, 2
    %v631 = vsel %vm610, %v629, %v630
    %v632 = vrot.slane %v171, 2
    %v633 = vrot.slane %v187, 2
    %v634 = vsel %vm610, %v632, %v633
    %v635 = vrot.slane %v172, 2
    %v636 = vrot.slane %v188, 2
    %v637 = vsel %vm610, %v635, %v636
    %v638 = vrot.slane %v173, 2
    %v639 = vrot.slane %v189, 2
    %v640 = vsel %vm610, %v638, %v639
    %v641 = vrot.slane %v174, 2
    %v642 = vrot.slane %v190, 2
    %v643 = vsel %vm610, %v641, %v642
    %v644 = vrot.slane %v175, 2
    %v645 = vrot.slane %v191, 2
    %v646 = vsel %vm610, %v644, %v645
    %v647 = vrot.slane %v176, 2
    %v648 = vrot.slane %v192, 2
    %v649 = vsel %vm610, %v647, %v648
    %v650 = vrot.slane %v177, 2
    %v651 = vrot.slane %v193, 2
    %v652 = vsel %vm610, %v650, %v651
    %v653 = vrot.slane %v178, 2
    %v654 = vrot.slane %v194, 2
    %v655 = vsel %vm610, %v653, %v654
    %v656 = vrot.slane %v179, 2
    %v657 = vrot.slane %v195, 2
    %v658 = vsel %vm610, %v656, %v657
    %v675 = vpack.c.bf16 %v616, %v613
    %v676 = vpack.c.bf16 %v622, %v619
    %v677 = vpack.c.bf16 %v628, %v625
    %v678 = vpack.c.bf16 %v634, %v631
    %v679 = vpack.c.bf16 %v640, %v637
    %v680 = vpack.c.bf16 %v646, %v643
    %v681 = vpack.c.bf16 %v652, %v649
    %v682 = vpack.c.bf16 %v658, %v655
    %s683 = scalar_lea.vmem %s1, 16
    %v684 = vld [vmem:[%s683] sm:$0xff]
    %v686 = vunpack.c.l.b16 %v684
    %v687 = vunpack.c.h.b16 %v684
    %v688 = vpack.c.b16 %v686, %v686
    %v689 = vpack.c.b16 %v687, %v687
    %v691 = vsel %vm317, %v675, 0
    %v694 = vsel %vm317, %v676, 0
    %v697 = vsel %vm317, %v677, 0
    %v700 = vsel %vm317, %v678, 0
    %v703 = vsel %vm317, %v679, 0
    %v706 = vsel %vm317, %v680, 0
    %v709 = vsel %vm317, %v681, 0
    %v712 = vsel %vm317, %v682, 0
    %v715 = vsel %vm342, %v688, 0
    %v718 = vsel %vm342, %v689, 0
    %720 = vmatprep.subr.bf16.mxu0 %v718
    %721 = vmatpush1.bf16.msra.mxu0 %v715
    %722 = vmatprep.subr.bf16.mxu0 0
    %723 = vmatpush1.bf16.msra.mxu0 0
    %724 = vmatprep.subr.bf16.mxu0 0
    %725 = vmatpush1.bf16.msra.mxu0 0
    %726 = vmatprep.subr.bf16.mxu0 0
    %727 = vmatpush1.bf16.msra.mxu0 0
    %728 = vmatprep.subr.bf16.mxu0 0
    %729 = vmatpush1.bf16.msra.mxu0 0
    %730 = vmatprep.subr.bf16.mxu0 0
    %731 = vmatpush1.bf16.msra.mxu0 0
    %732 = vmatprep.subr.bf16.mxu0 0
    %733 = vmatpush1.bf16.msra.mxu0 0
    %734 = vmatprep.subr.bf16.mxu0 0
    %735 = vmatpush1.bf16.msra.mxu0 0
    %736 = vmatprep.subr.bf16.mxu0 0
    %737 = vmatpush1.bf16.msra.mxu0 0
    %738 = vmatprep.subr.bf16.mxu0 0
    %739 = vmatpush1.bf16.msra.mxu0 0
    %740 = vmatprep.subr.bf16.mxu0 0
    %741 = vmatpush1.bf16.msra.mxu0 0
    %742 = vmatprep.subr.bf16.mxu0 0
    %743 = vmatpush1.bf16.msra.mxu0 0
    %744 = vmatprep.subr.bf16.mxu0 0
    %745 = vmatpush1.bf16.msra.mxu0 0
    %746 = vmatprep.subr.bf16.mxu0 0
    %747 = vmatpush1.bf16.msra.mxu0 0
    %748 = vmatprep.subr.bf16.mxu0 0
    %749 = vmatpush1.bf16.msra.mxu0 0
    %750 = vmatprep.subr.bf16.mxu0 0
    %751 = vmatpush1.bf16.msra.mxu0 0
    %752 = vmatprep.mubr.bf16.mxu0 0
    %753 = vmatmul.mubr.bf16.gmra.mrb[0].mxu0 %v691
    %v754 = vpop.f32.mrb[0].mxu0
    %v755 = vadd.f32 0.0, %v754
    %v756 = vpop.f32.mrb[0].mxu0
    %v757 = vadd.f32 0.0, %v756
    %v758 = vpop.f32.mrb[0].mxu0
    %v759 = vadd.f32 0.0, %v758
    %v760 = vpop.f32.mrb[0].mxu0
    %v761 = vadd.f32 0.0, %v760
    %762 = vmatprep.mubr.bf16.mxu0 0
    %763 = vmatmul.mubr.bf16.gmra.mrb[0].mxu0 %v694
    %v764 = vpop.f32.mrb[0].mxu0
    %v765 = vadd.f32 0.0, %v764
    %v766 = vpop.f32.mrb[0].mxu0
    %v767 = vadd.f32 0.0, %v766
    %v768 = vpop.f32.mrb[0].mxu0
    %v769 = vadd.f32 0.0, %v768
    %v770 = vpop.f32.mrb[0].mxu0
    %v771 = vadd.f32 0.0, %v770
    %772 = vmatprep.mubr.bf16.mxu0 0
    %773 = vmatmul.mubr.bf16.gmra.mrb[0].mxu0 %v697
    %v774 = vpop.f32.mrb[0].mxu0
    %v775 = vadd.f32 0.0, %v774
    %v776 = vpop.f32.mrb[0].mxu0
    %v777 = vadd.f32 0.0, %v776
    %v778 = vpop.f32.mrb[0].mxu0
    %v779 = vadd.f32 0.0, %v778
    %v780 = vpop.f32.mrb[0].mxu0
    %v781 = vadd.f32 0.0, %v780
    %782 = vmatprep.mubr.bf16.mxu0 0
    %783 = vmatmul.mubr.bf16.gmra.mrb[0].mxu0 %v700
    %v784 = vpop.f32.mrb[0].mxu0
    %v785 = vadd.f32 0.0, %v784
    %v786 = vpop.f32.mrb[0].mxu0
    %v787 = vadd.f32 0.0, %v786
    %v788 = vpop.f32.mrb[0].mxu0
    %v789 = vadd.f32 0.0, %v788
    %v790 = vpop.f32.mrb[0].mxu0
    %v791 = vadd.f32 0.0, %v790
    %792 = vmatprep.mubr.bf16.mxu0 0
    %793 = vmatmul.mubr.bf16.gmra.mrb[0].mxu0 %v703
    %v794 = vpop.f32.mrb[0].mxu0
    %v795 = vadd.f32 0.0, %v794
    %v796 = vpop.f32.mrb[0].mxu0
    %v797 = vadd.f32 0.0, %v796
    %v798 = vpop.f32.mrb[0].mxu0
    %v799 = vadd.f32 0.0, %v798
    %v800 = vpop.f32.mrb[0].mxu0
    %v801 = vadd.f32 0.0, %v800
    %802 = vmatprep.mubr.bf16.mxu0 0
    %803 = vmatmul.mubr.bf16.gmra.mrb[0].mxu0 %v706
    %v804 = vpop.f32.mrb[0].mxu0
    %v805 = vadd.f32 0.0, %v804
    %v806 = vpop.f32.mrb[0].mxu0
    %v807 = vadd.f32 0.0, %v806
    %v808 = vpop.f32.mrb[0].mxu0
    %v809 = vadd.f32 0.0, %v808
    %v810 = vpop.f32.mrb[0].mxu0
    %v811 = vadd.f32 0.0, %v810
    %812 = vmatprep.mubr.bf16.mxu0 0
    %813 = vmatmul.mubr.bf16.gmra.mrb[0].mxu0 %v709
    %v814 = vpop.f32.mrb[0].mxu0
    %v815 = vadd.f32 0.0, %v814
    %v816 = vpop.f32.mrb[0].mxu0
    %v817 = vadd.f32 0.0, %v816
    %v818 = vpop.f32.mrb[0].mxu0
    %v819 = vadd.f32 0.0, %v818
    %v820 = vpop.f32.mrb[0].mxu0
    %v821 = vadd.f32 0.0, %v820
    %822 = vmatprep.mubr.bf16.mxu0 0
    %823 = vmatmul.mubr.bf16.gmra.mrb[0].mxu0 %v712
    %v824 = vpop.f32.mrb[0].mxu0
    %v825 = vadd.f32 0.0, %v824
    %v826 = vpop.f32.mrb[0].mxu0
    %v827 = vadd.f32 0.0, %v826
    %v828 = vpop.f32.mrb[0].mxu0
    %v829 = vadd.f32 0.0, %v828
    %v830 = vpop.f32.mrb[0].mxu0
    %v831 = vadd.f32 0.0, %v830
    %832 = vdwg.mxu0
    %v833 = vadd.f32 %v532, %v755
    %v834 = vadd.f32 %v534, %v757
    %v835 = vadd.f32 %v536, %v759
    %v836 = vadd.f32 %v538, %v761
    %v837 = vadd.f32 %v542, %v765
    %v838 = vadd.f32 %v544, %v767
    %v839 = vadd.f32 %v546, %v769
    %v840 = vadd.f32 %v548, %v771
    %v841 = vadd.f32 %v552, %v775
    %v842 = vadd.f32 %v554, %v777
    %v843 = vadd.f32 %v556, %v779
    %v844 = vadd.f32 %v558, %v781
    %v845 = vadd.f32 %v562, %v785
    %v846 = vadd.f32 %v564, %v787
    %v847 = vadd.f32 %v566, %v789
    %v848 = vadd.f32 %v568, %v791
    %v849 = vadd.f32 %v572, %v795
    %v850 = vadd.f32 %v574, %v797
    %v851 = vadd.f32 %v576, %v799
    %v852 = vadd.f32 %v578, %v801
    %v853 = vadd.f32 %v582, %v805
    %v854 = vadd.f32 %v584, %v807
    %v855 = vadd.f32 %v586, %v809
    %v856 = vadd.f32 %v588, %v811
    %v857 = vadd.f32 %v592, %v815
    %v858 = vadd.f32 %v594, %v817
    %v859 = vadd.f32 %v596, %v819
    %v860 = vadd.f32 %v598, %v821
    %v861 = vadd.f32 %v602, %v825
    %v862 = vadd.f32 %v604, %v827
    %v863 = vadd.f32 %v606, %v829
    %v864 = vadd.f32 %v608, %v831
    %v865 = vld [vmem:[%s2] sm:$0x3]
    %v867 = vlaneseq
    %v868 = vshrl.u32 %v867, 7
    %v869 = vsub.s32 0, %v868
    %v870 = vrot.slane %v865, %v869
    %v871 = vlaneseq
    %v872 = vshrl.u32 %v871, 7
    %v873 = vsub.s32 1, %v872
    %v874 = vrot.slane %v865, %v873
    %v877 = vmul.f32 %v833, %v870
    %v878 = vmul.f32 %v834, %v874
    %v879 = vmul.f32 %v835, %v870
    %v880 = vmul.f32 %v836, %v874
    %v881 = vmul.f32 %v837, %v870
    %v882 = vmul.f32 %v838, %v874
    %v883 = vmul.f32 %v839, %v870
    %v884 = vmul.f32 %v840, %v874
    %v885 = vmul.f32 %v841, %v870
    %v886 = vmul.f32 %v842, %v874
    %v887 = vmul.f32 %v843, %v870
    %v888 = vmul.f32 %v844, %v874
    %v889 = vmul.f32 %v845, %v870
    %v890 = vmul.f32 %v846, %v874
    %v891 = vmul.f32 %v847, %v870
    %v892 = vmul.f32 %v848, %v874
    %v893 = vmul.f32 %v849, %v870
    %v894 = vmul.f32 %v850, %v874
    %v895 = vmul.f32 %v851, %v870
    %v896 = vmul.f32 %v852, %v874
    %v897 = vmul.f32 %v853, %v870
    %v898 = vmul.f32 %v854, %v874
    %v899 = vmul.f32 %v855, %v870
    %v900 = vmul.f32 %v856, %v874
    %v901 = vmul.f32 %v857, %v870
    %v902 = vmul.f32 %v858, %v874
    %v903 = vmul.f32 %v859, %v870
    %v904 = vmul.f32 %v860, %v874
    %v905 = vmul.f32 %v861, %v870
    %v906 = vmul.f32 %v862, %v874
    %v907 = vmul.f32 %v863, %v870
    %v908 = vmul.f32 %v864, %v874
    %v909 = vld [vmem:[%s3] sm:$0x3]
    %v911 = vlaneseq
    %v912 = vshrl.u32 %v911, 7
    %v913 = vsub.s32 0, %v912
    %v914 = vrot.slane %v909, %v913
    %v915 = vlaneseq
    %v916 = vshrl.u32 %v915, 7
    %v917 = vsub.s32 1, %v916
    %v918 = vrot.slane %v909, %v917
    %v921 = vadd.f32 %v877, %v914
    %v922 = vadd.f32 %v878, %v918
    %v923 = vadd.f32 %v879, %v914
    %v924 = vadd.f32 %v880, %v918
    %v925 = vadd.f32 %v881, %v914
    %v926 = vadd.f32 %v882, %v918
    %v927 = vadd.f32 %v883, %v914
    %v928 = vadd.f32 %v884, %v918
    %v929 = vadd.f32 %v885, %v914
    %v930 = vadd.f32 %v886, %v918
    %v931 = vadd.f32 %v887, %v914
    %v932 = vadd.f32 %v888, %v918
    %v933 = vadd.f32 %v889, %v914
    %v934 = vadd.f32 %v890, %v918
    %v935 = vadd.f32 %v891, %v914
    %v936 = vadd.f32 %v892, %v918
    %v937 = vadd.f32 %v893, %v914
    %v938 = vadd.f32 %v894, %v918
    %v939 = vadd.f32 %v895, %v914
    %v940 = vadd.f32 %v896, %v918
    %v941 = vadd.f32 %v897, %v914
    %v942 = vadd.f32 %v898, %v918
    %v943 = vadd.f32 %v899, %v914
    %v944 = vadd.f32 %v900, %v918
    %v945 = vadd.f32 %v901, %v914
    %v946 = vadd.f32 %v902, %v918
    %v947 = vadd.f32 %v903, %v914
    %v948 = vadd.f32 %v904, %v918
    %v949 = vadd.f32 %v905, %v914
    %v950 = vadd.f32 %v906, %v918
    %v951 = vadd.f32 %v907, %v914
    %v952 = vadd.f32 %v908, %v918
    %v953 = vmax.f32 %v921, 0.0
    %v954 = vmax.f32 %v922, 0.0
    %v955 = vmax.f32 %v923, 0.0
    %v956 = vmax.f32 %v924, 0.0
    %v957 = vmax.f32 %v925, 0.0
    %v958 = vmax.f32 %v926, 0.0
    %v959 = vmax.f32 %v927, 0.0
    %v960 = vmax.f32 %v928, 0.0
    %v961 = vmax.f32 %v929, 0.0
    %v962 = vmax.f32 %v930, 0.0
    %v963 = vmax.f32 %v931, 0.0
    %v964 = vmax.f32 %v932, 0.0
    %v965 = vmax.f32 %v933, 0.0
    %v966 = vmax.f32 %v934, 0.0
    %v967 = vmax.f32 %v935, 0.0
    %v968 = vmax.f32 %v936, 0.0
    %v969 = vmax.f32 %v937, 0.0
    %v970 = vmax.f32 %v938, 0.0
    %v971 = vmax.f32 %v939, 0.0
    %v972 = vmax.f32 %v940, 0.0
    %v973 = vmax.f32 %v941, 0.0
    %v974 = vmax.f32 %v942, 0.0
    %v975 = vmax.f32 %v943, 0.0
    %v976 = vmax.f32 %v944, 0.0
    %v977 = vmax.f32 %v945, 0.0
    %v978 = vmax.f32 %v946, 0.0
    %v979 = vmax.f32 %v947, 0.0
    %v980 = vmax.f32 %v948, 0.0
    %v981 = vmax.f32 %v949, 0.0
    %v982 = vmax.f32 %v950, 0.0
    %v983 = vmax.f32 %v951, 0.0
    %v984 = vmax.f32 %v952, 0.0
    %v1017 = vrot.slane %v953, 7
    %v1018 = vrot.slane %v954, 7
    %v1019 = vrot.slane %v955, 7
    %v1020 = vrot.slane %v956, 7
    %v1021 = vrot.slane %v957, 7
    %v1022 = vrot.slane %v958, 7
    %v1023 = vrot.slane %v959, 7
    %v1024 = vrot.slane %v960, 7
    %v1025 = vrot.slane %v961, 7
    %v1026 = vrot.slane %v962, 7
    %v1027 = vrot.slane %v963, 7
    %v1028 = vrot.slane %v964, 7
    %v1029 = vrot.slane %v965, 7
    %v1030 = vrot.slane %v966, 7
    %v1031 = vrot.slane %v967, 7
    %v1032 = vrot.slane %v968, 7
    %v1033 = vrot.slane %v969, 7
    %v1034 = vrot.slane %v970, 7
    %v1035 = vrot.slane %v971, 7
    %v1036 = vrot.slane %v972, 7
    %v1037 = vrot.slane %v973, 7
    %v1038 = vrot.slane %v974, 7
    %v1039 = vrot.slane %v975, 7
    %v1040 = vrot.slane %v976, 7
    %v1041 = vrot.slane %v977, 7
    %v1042 = vrot.slane %v978, 7
    %v1043 = vrot.slane %v979, 7
    %v1044 = vrot.slane %v980, 7
    %v1045 = vrot.slane %v981, 7
    %v1046 = vrot.slane %v982, 7
    %v1047 = vrot.slane %v983, 7
    %v1048 = vrot.slane %v984, 7
    %v1081 = vsel %vm163, 0.0, %v1017
    %v1082 = vsel %vm163, 0.0, %v1018
    %v1083 = vsel %vm163, 0.0, %v1019
    %v1084 = vsel %vm163, 0.0, %v1020
    %v1085 = vsel %vm163, 0.0, %v1021
    %v1086 = vsel %vm163, 0.0, %v1022
    %v1087 = vsel %vm163, 0.0, %v1023
    %v1088 = vsel %vm163, 0.0, %v1024
    %v1089 = vsel %vm163, 0.0, %v1025
    %v1090 = vsel %vm163, 0.0, %v1026
    %v1091 = vsel %vm163, 0.0, %v1027
    %v1092 = vsel %vm163, 0.0, %v1028
    %v1093 = vsel %vm163, 0.0, %v1029
    %v1094 = vsel %vm163, 0.0, %v1030
    %v1095 = vsel %vm163, 0.0, %v1031
    %v1096 = vsel %vm163, 0.0, %v1032
    %v1097 = vsel %vm163, 0.0, %v1033
    %v1098 = vsel %vm163, 0.0, %v1034
    %v1099 = vsel %vm163, 0.0, %v1035
    %v1100 = vsel %vm163, 0.0, %v1036
    %v1101 = vsel %vm163, 0.0, %v1037
    %v1102 = vsel %vm163, 0.0, %v1038
    %v1103 = vsel %vm163, 0.0, %v1039
    %v1104 = vsel %vm163, 0.0, %v1040
    %v1105 = vsel %vm163, 0.0, %v1041
    %v1106 = vsel %vm163, 0.0, %v1042
    %v1107 = vsel %vm163, 0.0, %v1043
    %v1108 = vsel %vm163, 0.0, %v1044
    %v1109 = vsel %vm163, 0.0, %v1045
    %v1110 = vsel %vm163, 0.0, %v1046
    %v1111 = vsel %vm163, 0.0, %v1047
    %v1112 = vsel %vm163, 0.0, %v1048
    %v1113 = vsel %vm163, %v1017, 0.0
    %v1114 = vsel %vm163, %v1018, 0.0
    %v1115 = vsel %vm163, %v1019, 0.0
    %v1116 = vsel %vm163, %v1020, 0.0
    %v1117 = vsel %vm163, %v1021, 0.0
    %v1118 = vsel %vm163, %v1022, 0.0
    %v1119 = vsel %vm163, %v1023, 0.0
    %v1120 = vsel %vm163, %v1024, 0.0
    %v1121 = vsel %vm163, %v1025, 0.0
    %v1122 = vsel %vm163, %v1026, 0.0
    %v1123 = vsel %vm163, %v1027, 0.0
    %v1124 = vsel %vm163, %v1028, 0.0
    %v1125 = vsel %vm163, %v1029, 0.0
    %v1126 = vsel %vm163, %v1030, 0.0
    %v1127 = vsel %vm163, %v1031, 0.0
    %v1128 = vsel %vm163, %v1032, 0.0
    %v1129 = vsel %vm163, %v1033, 0.0
    %v1130 = vsel %vm163, %v1034, 0.0
    %v1131 = vsel %vm163, %v1035, 0.0
    %v1132 = vsel %vm163, %v1036, 0.0
    %v1133 = vsel %vm163, %v1037, 0.0
    %v1134 = vsel %vm163, %v1038, 0.0
    %v1135 = vsel %vm163, %v1039, 0.0
    %v1136 = vsel %vm163, %v1040, 0.0
    %v1137 = vsel %vm163, %v1041, 0.0
    %v1138 = vsel %vm163, %v1042, 0.0
    %v1139 = vsel %vm163, %v1043, 0.0
    %v1140 = vsel %vm163, %v1044, 0.0
    %v1141 = vsel %vm163, %v1045, 0.0
    %v1142 = vsel %vm163, %v1046, 0.0
    %v1143 = vsel %vm163, %v1047, 0.0
    %v1144 = vsel %vm163, %v1048, 0.0
    %v1145 = vpack.c.bf16 %v1083, %v1081
    %v1146 = vpack.c.bf16 %v1084, %v1082
    %v1147 = vpack.c.bf16 %v1087, %v1085
    %v1148 = vpack.c.bf16 %v1088, %v1086
    %v1149 = vpack.c.bf16 %v1091, %v1089
    %v1150 = vpack.c.bf16 %v1092, %v1090
    %v1151 = vpack.c.bf16 %v1095, %v1093
    %v1152 = vpack.c.bf16 %v1096, %v1094
    %v1153 = vpack.c.bf16 %v1099, %v1097
    %v1154 = vpack.c.bf16 %v1100, %v1098
    %v1155 = vpack.c.bf16 %v1103, %v1101
    %v1156 = vpack.c.bf16 %v1104, %v1102
    %v1157 = vpack.c.bf16 %v1107, %v1105
    %v1158 = vpack.c.bf16 %v1108, %v1106
    %v1159 = vpack.c.bf16 %v1111, %v1109
    %v1160 = vpack.c.bf16 %v1112, %v1110
    %v1161 = vld [vmem:[%s4] sm:$0xff]
    %v1162 = vld [vmem:[%s4 + $0x8] sm:$0xff]
    %v1163 = vld [vmem:[%s4 + $0x10] sm:$0xff]
    %v1164 = vld [vmem:[%s4 + $0x18] sm:$0xff]
    %v1165 = vld [vmem:[%s4 + $0x20] sm:$0xff]
    %v1166 = vld [vmem:[%s4 + $0x28] sm:$0xff]
    %v1167 = vld [vmem:[%s4 + $0x30] sm:$0xff]
    %v1168 = vld [vmem:[%s4 + $0x38] sm:$0xff]
    %v1169 = vld [vmem:[%s4 + $0x40] sm:$0xff]
    %v1170 = vld [vmem:[%s4 + $0x48] sm:$0xff]
    %v1171 = vld [vmem:[%s4 + $0x50] sm:$0xff]
    %v1172 = vld [vmem:[%s4 + $0x58] sm:$0xff]
    %v1173 = vld [vmem:[%s4 + $0x60] sm:$0xff]
    %v1174 = vld [vmem:[%s4 + $0x68] sm:$0xff]
    %v1175 = vld [vmem:[%s4 + $0x70] sm:$0xff]
    %v1176 = vld [vmem:[%s4 + $0x78] sm:$0xff]
    %v1177 = vld [vmem:[%s4 + $0x80] sm:$0xff]
    %v1178 = vld [vmem:[%s4 + $0x88] sm:$0xff]
    %v1179 = vld [vmem:[%s4 + $0x90] sm:$0xff]
    %v1180 = vld [vmem:[%s4 + $0x98] sm:$0xff]
    %v1181 = vld [vmem:[%s4 + $0xa0] sm:$0xff]
    %v1182 = vld [vmem:[%s4 + $0xa8] sm:$0xff]
    %v1183 = vld [vmem:[%s4 + $0xb0] sm:$0xff]
    %v1184 = vld [vmem:[%s4 + $0xb8] sm:$0xff]
    %v1185 = vld [vmem:[%s4 + $0xc0] sm:$0xff]
    %v1186 = vld [vmem:[%s4 + $0xc8] sm:$0xff]
    %v1187 = vld [vmem:[%s4 + $0xd0] sm:$0xff]
    %v1188 = vld [vmem:[%s4 + $0xd8] sm:$0xff]
    %v1189 = vld [vmem:[%s4 + $0xe0] sm:$0xff]
    %v1190 = vld [vmem:[%s4 + $0xe8] sm:$0xff]
    %v1191 = vld [vmem:[%s4 + $0xf0] sm:$0xff]
    %v1192 = vld [vmem:[%s4 + $0xf8] sm:$0xff]
    %v1257 = vrot.slane %v1081, 1
    %v1258 = vrot.slane %v1113, 1
    %v1259 = vsel %vm237, %v1257, %v1258
    %v1260 = vrot.slane %v1082, 1
    %v1261 = vrot.slane %v1114, 1
    %v1262 = vsel %vm237, %v1260, %v1261
    %v1263 = vrot.slane %v1083, 1
    %v1264 = vrot.slane %v1115, 1
    %v1265 = vsel %vm237, %v1263, %v1264
    %v1266 = vrot.slane %v1084, 1
    %v1267 = vrot.slane %v1116, 1
    %v1268 = vsel %vm237, %v1266, %v1267
    %v1269 = vrot.slane %v1085, 1
    %v1270 = vrot.slane %v1117, 1
    %v1271 = vsel %vm237, %v1269, %v1270
    %v1272 = vrot.slane %v1086, 1
    %v1273 = vrot.slane %v1118, 1
    %v1274 = vsel %vm237, %v1272, %v1273
    %v1275 = vrot.slane %v1087, 1
    %v1276 = vrot.slane %v1119, 1
    %v1277 = vsel %vm237, %v1275, %v1276
    %v1278 = vrot.slane %v1088, 1
    %v1279 = vrot.slane %v1120, 1
    %v1280 = vsel %vm237, %v1278, %v1279
    %v1281 = vrot.slane %v1089, 1
    %v1282 = vrot.slane %v1121, 1
    %v1283 = vsel %vm237, %v1281, %v1282
    %v1284 = vrot.slane %v1090, 1
    %v1285 = vrot.slane %v1122, 1
    %v1286 = vsel %vm237, %v1284, %v1285
    %v1287 = vrot.slane %v1091, 1
    %v1288 = vrot.slane %v1123, 1
    %v1289 = vsel %vm237, %v1287, %v1288
    %v1290 = vrot.slane %v1092, 1
    %v1291 = vrot.slane %v1124, 1
    %v1292 = vsel %vm237, %v1290, %v1291
    %v1293 = vrot.slane %v1093, 1
    %v1294 = vrot.slane %v1125, 1
    %v1295 = vsel %vm237, %v1293, %v1294
    %v1296 = vrot.slane %v1094, 1
    %v1297 = vrot.slane %v1126, 1
    %v1298 = vsel %vm237, %v1296, %v1297
    %v1299 = vrot.slane %v1095, 1
    %v1300 = vrot.slane %v1127, 1
    %v1301 = vsel %vm237, %v1299, %v1300
    %v1302 = vrot.slane %v1096, 1
    %v1303 = vrot.slane %v1128, 1
    %v1304 = vsel %vm237, %v1302, %v1303
    %v1305 = vrot.slane %v1097, 1
    %v1306 = vrot.slane %v1129, 1
    %v1307 = vsel %vm237, %v1305, %v1306
    %v1308 = vrot.slane %v1098, 1
    %v1309 = vrot.slane %v1130, 1
    %v1310 = vsel %vm237, %v1308, %v1309
    %v1311 = vrot.slane %v1099, 1
    %v1312 = vrot.slane %v1131, 1
    %v1313 = vsel %vm237, %v1311, %v1312
    %v1314 = vrot.slane %v1100, 1
    %v1315 = vrot.slane %v1132, 1
    %v1316 = vsel %vm237, %v1314, %v1315
    %v1317 = vrot.slane %v1101, 1
    %v1318 = vrot.slane %v1133, 1
    %v1319 = vsel %vm237, %v1317, %v1318
    %v1320 = vrot.slane %v1102, 1
    %v1321 = vrot.slane %v1134, 1
    %v1322 = vsel %vm237, %v1320, %v1321
    %v1323 = vrot.slane %v1103, 1
    %v1324 = vrot.slane %v1135, 1
    %v1325 = vsel %vm237, %v1323, %v1324
    %v1326 = vrot.slane %v1104, 1
    %v1327 = vrot.slane %v1136, 1
    %v1328 = vsel %vm237, %v1326, %v1327
    %v1329 = vrot.slane %v1105, 1
    %v1330 = vrot.slane %v1137, 1
    %v1331 = vsel %vm237, %v1329, %v1330
    %v1332 = vrot.slane %v1106, 1
    %v1333 = vrot.slane %v1138, 1
    %v1334 = vsel %vm237, %v1332, %v1333
    %v1335 = vrot.slane %v1107, 1
    %v1336 = vrot.slane %v1139, 1
    %v1337 = vsel %vm237, %v1335, %v1336
    %v1338 = vrot.slane %v1108, 1
    %v1339 = vrot.slane %v1140, 1
    %v1340 = vsel %vm237, %v1338, %v1339
    %v1341 = vrot.slane %v1109, 1
    %v1342 = vrot.slane %v1141, 1
    %v1343 = vsel %vm237, %v1341, %v1342
    %v1344 = vrot.slane %v1110, 1
    %v1345 = vrot.slane %v1142, 1
    %v1346 = vsel %vm237, %v1344, %v1345
    %v1347 = vrot.slane %v1111, 1
    %v1348 = vrot.slane %v1143, 1
    %v1349 = vsel %vm237, %v1347, %v1348
    %v1350 = vrot.slane %v1112, 1
    %v1351 = vrot.slane %v1144, 1
    %v1352 = vsel %vm237, %v1350, %v1351
    %v1385 = vpack.c.bf16 %v1265, %v1259
    %v1386 = vpack.c.bf16 %v1268, %v1262
    %v1387 = vpack.c.bf16 %v1277, %v1271
    %v1388 = vpack.c.bf16 %v1280, %v1274
    %v1389 = vpack.c.bf16 %v1289, %v1283
    %v1390 = vpack.c.bf16 %v1292, %v1286
    %v1391 = vpack.c.bf16 %v1301, %v1295
    %v1392 = vpack.c.bf16 %v1304, %v1298
    %v1393 = vpack.c.bf16 %v1313, %v1307
    %v1394 = vpack.c.bf16 %v1316, %v1310
    %v1395 = vpack.c.bf16 %v1325, %v1319
    %v1396 = vpack.c.bf16 %v1328, %v1322
    %v1397 = vpack.c.bf16 %v1337, %v1331
    %v1398 = vpack.c.bf16 %v1340, %v1334
    %v1399 = vpack.c.bf16 %v1349, %v1343
    %v1400 = vpack.c.bf16 %v1352, %v1346
    %s1401 = scalar_lea.vmem %s4, 256
    %v1402 = vld [vmem:[%s1401] sm:$0xff]
    %v1403 = vld [vmem:[%s1401 + $0x8] sm:$0xff]
    %v1404 = vld [vmem:[%s1401 + $0x10] sm:$0xff]
    %v1405 = vld [vmem:[%s1401 + $0x18] sm:$0xff]
    %v1406 = vld [vmem:[%s1401 + $0x20] sm:$0xff]
    %v1407 = vld [vmem:[%s1401 + $0x28] sm:$0xff]
    %v1408 = vld [vmem:[%s1401 + $0x30] sm:$0xff]
    %v1409 = vld [vmem:[%s1401 + $0x38] sm:$0xff]
    %v1410 = vld [vmem:[%s1401 + $0x40] sm:$0xff]
    %v1411 = vld [vmem:[%s1401 + $0x48] sm:$0xff]
    %v1412 = vld [vmem:[%s1401 + $0x50] sm:$0xff]
    %v1413 = vld [vmem:[%s1401 + $0x58] sm:$0xff]
    %v1414 = vld [vmem:[%s1401 + $0x60] sm:$0xff]
    %v1415 = vld [vmem:[%s1401 + $0x68] sm:$0xff]
    %v1416 = vld [vmem:[%s1401 + $0x70] sm:$0xff]
    %v1417 = vld [vmem:[%s1401 + $0x78] sm:$0xff]
    %v1418 = vld [vmem:[%s1401 + $0x80] sm:$0xff]
    %v1419 = vld [vmem:[%s1401 + $0x88] sm:$0xff]
    %v1420 = vld [vmem:[%s1401 + $0x90] sm:$0xff]
    %v1421 = vld [vmem:[%s1401 + $0x98] sm:$0xff]
    %v1422 = vld [vmem:[%s1401 + $0xa0] sm:$0xff]
    %v1423 = vld [vmem:[%s1401 + $0xa8] sm:$0xff]
    %v1424 = vld [vmem:[%s1401 + $0xb0] sm:$0xff]
    %v1425 = vld [vmem:[%s1401 + $0xb8] sm:$0xff]
    %v1426 = vld [vmem:[%s1401 + $0xc0] sm:$0xff]
    %v1427 = vld [vmem:[%s1401 + $0xc8] sm:$0xff]
    %v1428 = vld [vmem:[%s1401 + $0xd0] sm:$0xff]
    %v1429 = vld [vmem:[%s1401 + $0xd8] sm:$0xff]
    %v1430 = vld [vmem:[%s1401 + $0xe0] sm:$0xff]
    %v1431 = vld [vmem:[%s1401 + $0xe8] sm:$0xff]
    %v1432 = vld [vmem:[%s1401 + $0xf0] sm:$0xff]
    %v1433 = vld [vmem:[%s1401 + $0xf8] sm:$0xff]
    %v1466 = vunpack.c.l.b16 %v1402
    %v1467 = vunpack.c.h.b16 %v1402
    %v1468 = vunpack.c.l.b16 %v1403
    %v1469 = vunpack.c.h.b16 %v1403
    %v1470 = vunpack.c.l.b16 %v1404
    %v1471 = vunpack.c.h.b16 %v1404
    %v1472 = vunpack.c.l.b16 %v1405
    %v1473 = vunpack.c.h.b16 %v1405
    %v1474 = vunpack.c.l.b16 %v1406
    %v1475 = vunpack.c.h.b16 %v1406
    %v1476 = vunpack.c.l.b16 %v1407
    %v1477 = vunpack.c.h.b16 %v1407
    %v1478 = vunpack.c.l.b16 %v1408
    %v1479 = vunpack.c.h.b16 %v1408
    %v1480 = vunpack.c.l.b16 %v1409
    %v1481 = vunpack.c.h.b16 %v1409
    %v1482 = vunpack.c.l.b16 %v1410
    %v1483 = vunpack.c.h.b16 %v1410
    %v1484 = vunpack.c.l.b16 %v1411
    %v1485 = vunpack.c.h.b16 %v1411
    %v1486 = vunpack.c.l.b16 %v1412
    %v1487 = vunpack.c.h.b16 %v1412
    %v1488 = vunpack.c.l.b16 %v1413
    %v1489 = vunpack.c.h.b16 %v1413
    %v1490 = vunpack.c.l.b16 %v1414
    %v1491 = vunpack.c.h.b16 %v1414
    %v1492 = vunpack.c.l.b16 %v1415
    %v1493 = vunpack.c.h.b16 %v1415
    %v1494 = vunpack.c.l.b16 %v1416
    %v1495 = vunpack.c.h.b16 %v1416
    %v1496 = vunpack.c.l.b16 %v1417
    %v1497 = vunpack.c.h.b16 %v1417
    %v1498 = vunpack.c.l.b16 %v1418
    %v1499 = vunpack.c.h.b16 %v1418
    %v1500 = vunpack.c.l.b16 %v1419
    %v1501 = vunpack.c.h.b16 %v1419
    %v1502 = vunpack.c.l.b16 %v1420
    %v1503 = vunpack.c.h.b16 %v1420
    %v1504 = vunpack.c.l.b16 %v1421
    %v1505 = vunpack.c.h.b16 %v1421
    %v1506 = vunpack.c.l.b16 %v1422
    %v1507 = vunpack.c.h.b16 %v1422
    %v1508 = vunpack.c.l.b16 %v1423
    %v1509 = vunpack.c.h.b16 %v1423
    %v1510 = vunpack.c.l.b16 %v1424
    %v1511 = vunpack.c.h.b16 %v1424
    %v1512 = vunpack.c.l.b16 %v1425
    %v1513 = vunpack.c.h.b16 %v1425
    %v1514 = vunpack.c.l.b16 %v1426
    %v1515 = vunpack.c.h.b16 %v1426
    %v1516 = vunpack.c.l.b16 %v1427
    %v1517 = vunpack.c.h.b16 %v1427
    %v1518 = vunpack.c.l.b16 %v1428
    %v1519 = vunpack.c.h.b16 %v1428
    %v1520 = vunpack.c.l.b16 %v1429
    %v1521 = vunpack.c.h.b16 %v1429
    %v1522 = vunpack.c.l.b16 %v1430
    %v1523 = vunpack.c.h.b16 %v1430
    %v1524 = vunpack.c.l.b16 %v1431
    %v1525 = vunpack.c.h.b16 %v1431
    %v1526 = vunpack.c.l.b16 %v1432
    %v1527 = vunpack.c.h.b16 %v1432
    %v1528 = vunpack.c.l.b16 %v1433
    %v1529 = vunpack.c.h.b16 %v1433
    %v1530 = vpack.c.b16 %v1468, %v1466
    %v1531 = vpack.c.b16 %v1469, %v1467
    %v1532 = vpack.c.b16 %v1472, %v1470
    %v1533 = vpack.c.b16 %v1473, %v1471
    %v1534 = vpack.c.b16 %v1476, %v1474
    %v1535 = vpack.c.b16 %v1477, %v1475
    %v1536 = vpack.c.b16 %v1480, %v1478
    %v1537 = vpack.c.b16 %v1481, %v1479
    %v1538 = vpack.c.b16 %v1484, %v1482
    %v1539 = vpack.c.b16 %v1485, %v1483
    %v1540 = vpack.c.b16 %v1488, %v1486
    %v1541 = vpack.c.b16 %v1489, %v1487
    %v1542 = vpack.c.b16 %v1492, %v1490
    %v1543 = vpack.c.b16 %v1493, %v1491
    %v1544 = vpack.c.b16 %v1496, %v1494
    %v1545 = vpack.c.b16 %v1497, %v1495
    %v1546 = vpack.c.b16 %v1500, %v1498
    %v1547 = vpack.c.b16 %v1501, %v1499
    %v1548 = vpack.c.b16 %v1504, %v1502
    %v1549 = vpack.c.b16 %v1505, %v1503
    %v1550 = vpack.c.b16 %v1508, %v1506
    %v1551 = vpack.c.b16 %v1509, %v1507
    %v1552 = vpack.c.b16 %v1512, %v1510
    %v1553 = vpack.c.b16 %v1513, %v1511
    %v1554 = vpack.c.b16 %v1516, %v1514
    %v1555 = vpack.c.b16 %v1517, %v1515
    %v1556 = vpack.c.b16 %v1520, %v1518
    %v1557 = vpack.c.b16 %v1521, %v1519
    %v1558 = vpack.c.b16 %v1524, %v1522
    %v1559 = vpack.c.b16 %v1525, %v1523
    %v1560 = vpack.c.b16 %v1528, %v1526
    %v1561 = vpack.c.b16 %v1529, %v1527
    %1594 = vmatprep.subr.bf16.mxu0 %v1531
    %1595 = vmatpush1.bf16.msra.mxu0 %v1530
    %1596 = vmatprep.subr.bf16.mxu0 %v1533
    %1597 = vmatpush1.bf16.msra.mxu0 %v1532
    %1598 = vmatprep.subr.bf16.mxu0 %v1535
    %1599 = vmatpush1.bf16.msra.mxu0 %v1534
    %1600 = vmatprep.subr.bf16.mxu0 %v1537
    %1601 = vmatpush1.bf16.msra.mxu0 %v1536
    %1602 = vmatprep.subr.bf16.mxu0 %v1539
    %1603 = vmatpush1.bf16.msra.mxu0 %v1538
    %1604 = vmatprep.subr.bf16.mxu0 %v1541
    %1605 = vmatpush1.bf16.msra.mxu0 %v1540
    %1606 = vmatprep.subr.bf16.mxu0 %v1543
    %1607 = vmatpush1.bf16.msra.mxu0 %v1542
    %1608 = vmatprep.subr.bf16.mxu0 %v1545
    %1609 = vmatpush1.bf16.msra.mxu0 %v1544
    %1610 = vmatprep.subr.bf16.mxu0 %v1547
    %1611 = vmatpush1.bf16.msra.mxu0 %v1546
    %1612 = vmatprep.subr.bf16.mxu0 %v1549
    %1613 = vmatpush1.bf16.msra.mxu0 %v1548
    %1614 = vmatprep.subr.bf16.mxu0 %v1551
    %1615 = vmatpush1.bf16.msra.mxu0 %v1550
    %1616 = vmatprep.subr.bf16.mxu0 %v1553
    %1617 = vmatpush1.bf16.msra.mxu0 %v1552
    %1618 = vmatprep.subr.bf16.mxu0 %v1555
    %1619 = vmatpush1.bf16.msra.mxu0 %v1554
    %1620 = vmatprep.subr.bf16.mxu0 %v1557
    %1621 = vmatpush1.bf16.msra.mxu0 %v1556
    %1622 = vmatprep.subr.bf16.mxu0 %v1559
    %1623 = vmatpush1.bf16.msra.mxu0 %v1558
    %1624 = vmatprep.subr.bf16.mxu0 %v1561
    %1625 = vmatpush1.bf16.msra.mxu0 %v1560
    %1626 = vmatprep.mubr.bf16.mxu0 %v1386
    %1627 = vmatmul.mubr.bf16.gmra.mrb[0].mxu0 %v1385
    %v1628 = vpop.f32.mrb[0].mxu0
    %v1629 = vadd.f32 0.0, %v1628
    %v1630 = vpop.f32.mrb[0].mxu0
    %v1631 = vadd.f32 0.0, %v1630
    %v1632 = vpop.f32.mrb[0].mxu0
    %v1633 = vadd.f32 0.0, %v1632
    %v1634 = vpop.f32.mrb[0].mxu0
    %v1635 = vadd.f32 0.0, %v1634
    %1636 = vmatprep.mubr.bf16.mxu0 %v1388
    %1637 = vmatmul.mubr.bf16.gmra.mrb[0].mxu0 %v1387
    %v1638 = vpop.f32.mrb[0].mxu0
    %v1639 = vadd.f32 0.0, %v1638
    %v1640 = vpop.f32.mrb[0].mxu0
    %v1641 = vadd.f32 0.0, %v1640
    %v1642 = vpop.f32.mrb[0].mxu0
    %v1643 = vadd.f32 0.0, %v1642
    %v1644 = vpop.f32.mrb[0].mxu0
    %v1645 = vadd.f32 0.0, %v1644
    %1646 = vmatprep.mubr.bf16.mxu0 %v1390
    %1647 = vmatmul.mubr.bf16.gmra.mrb[0].mxu0 %v1389
    %v1648 = vpop.f32.mrb[0].mxu0
    %v1649 = vadd.f32 0.0, %v1648
    %v1650 = vpop.f32.mrb[0].mxu0
    %v1651 = vadd.f32 0.0, %v1650
    %v1652 = vpop.f32.mrb[0].mxu0
    %v1653 = vadd.f32 0.0, %v1652
    %v1654 = vpop.f32.mrb[0].mxu0
    %v1655 = vadd.f32 0.0, %v1654
    %1656 = vmatprep.mubr.bf16.mxu0 %v1392
    %1657 = vmatmul.mubr.bf16.gmra.mrb[0].mxu0 %v1391
    %v1658 = vpop.f32.mrb[0].mxu0
    %v1659 = vadd.f32 0.0, %v1658
    %v1660 = vpop.f32.mrb[0].mxu0
    %v1661 = vadd.f32 0.0, %v1660
    %v1662 = vpop.f32.mrb[0].mxu0
    %v1663 = vadd.f32 0.0, %v1662
    %v1664 = vpop.f32.mrb[0].mxu0
    %v1665 = vadd.f32 0.0, %v1664
    %1666 = vmatprep.mubr.bf16.mxu0 %v1394
    %1667 = vmatmul.mubr.bf16.gmra.mrb[0].mxu0 %v1393
    %v1668 = vpop.f32.mrb[0].mxu0
    %v1669 = vadd.f32 0.0, %v1668
    %v1670 = vpop.f32.mrb[0].mxu0
    %v1671 = vadd.f32 0.0, %v1670
    %v1672 = vpop.f32.mrb[0].mxu0
    %v1673 = vadd.f32 0.0, %v1672
    %v1674 = vpop.f32.mrb[0].mxu0
    %v1675 = vadd.f32 0.0, %v1674
    %1676 = vmatprep.mubr.bf16.mxu0 %v1396
    %1677 = vmatmul.mubr.bf16.gmra.mrb[0].mxu0 %v1395
    %v1678 = vpop.f32.mrb[0].mxu0
    %v1679 = vadd.f32 0.0, %v1678
    %v1680 = vpop.f32.mrb[0].mxu0
    %v1681 = vadd.f32 0.0, %v1680
    %v1682 = vpop.f32.mrb[0].mxu0
    %v1683 = vadd.f32 0.0, %v1682
    %v1684 = vpop.f32.mrb[0].mxu0
    %v1685 = vadd.f32 0.0, %v1684
    %1686 = vmatprep.mubr.bf16.mxu0 %v1398
    %1687 = vmatmul.mubr.bf16.gmra.mrb[0].mxu0 %v1397
    %v1688 = vpop.f32.mrb[0].mxu0
    %v1689 = vadd.f32 0.0, %v1688
    %v1690 = vpop.f32.mrb[0].mxu0
    %v1691 = vadd.f32 0.0, %v1690
    %v1692 = vpop.f32.mrb[0].mxu0
    %v1693 = vadd.f32 0.0, %v1692
    %v1694 = vpop.f32.mrb[0].mxu0
    %v1695 = vadd.f32 0.0, %v1694
    %1696 = vmatprep.mubr.bf16.mxu0 %v1400
    %1697 = vmatmul.mubr.bf16.gmra.mrb[0].mxu0 %v1399
    %v1698 = vpop.f32.mrb[0].mxu0
    %v1699 = vadd.f32 0.0, %v1698
    %v1700 = vpop.f32.mrb[0].mxu0
    %v1701 = vadd.f32 0.0, %v1700
    %v1702 = vpop.f32.mrb[0].mxu0
    %v1703 = vadd.f32 0.0, %v1702
    %v1704 = vpop.f32.mrb[0].mxu0
    %v1705 = vadd.f32 0.0, %v1704
    %1706 = vdwg.mxu0
    %v1739 = vunpack.c.l.b16 %v1161
    %v1740 = vunpack.c.h.b16 %v1161
    %v1741 = vunpack.c.l.b16 %v1162
    %v1742 = vunpack.c.h.b16 %v1162
    %v1743 = vunpack.c.l.b16 %v1163
    %v1744 = vunpack.c.h.b16 %v1163
    %v1745 = vunpack.c.l.b16 %v1164
    %v1746 = vunpack.c.h.b16 %v1164
    %v1747 = vunpack.c.l.b16 %v1165
    %v1748 = vunpack.c.h.b16 %v1165
    %v1749 = vunpack.c.l.b16 %v1166
    %v1750 = vunpack.c.h.b16 %v1166
    %v1751 = vunpack.c.l.b16 %v1167
    %v1752 = vunpack.c.h.b16 %v1167
    %v1753 = vunpack.c.l.b16 %v1168
    %v1754 = vunpack.c.h.b16 %v1168
    %v1755 = vunpack.c.l.b16 %v1169
    %v1756 = vunpack.c.h.b16 %v1169
    %v1757 = vunpack.c.l.b16 %v1170
    %v1758 = vunpack.c.h.b16 %v1170
    %v1759 = vunpack.c.l.b16 %v1171
    %v1760 = vunpack.c.h.b16 %v1171
    %v1761 = vunpack.c.l.b16 %v1172
    %v1762 = vunpack.c.h.b16 %v1172
    %v1763 = vunpack.c.l.b16 %v1173
    %v1764 = vunpack.c.h.b16 %v1173
    %v1765 = vunpack.c.l.b16 %v1174
    %v1766 = vunpack.c.h.b16 %v1174
    %v1767 = vunpack.c.l.b16 %v1175
    %v1768 = vunpack.c.h.b16 %v1175
    %v1769 = vunpack.c.l.b16 %v1176
    %v1770 = vunpack.c.h.b16 %v1176
    %v1771 = vunpack.c.l.b16 %v1177
    %v1772 = vunpack.c.h.b16 %v1177
    %v1773 = vunpack.c.l.b16 %v1178
    %v1774 = vunpack.c.h.b16 %v1178
    %v1775 = vunpack.c.l.b16 %v1179
    %v1776 = vunpack.c.h.b16 %v1179
    %v1777 = vunpack.c.l.b16 %v1180
    %v1778 = vunpack.c.h.b16 %v1180
    %v1779 = vunpack.c.l.b16 %v1181
    %v1780 = vunpack.c.h.b16 %v1181
    %v1781 = vunpack.c.l.b16 %v1182
    %v1782 = vunpack.c.h.b16 %v1182
    %v1783 = vunpack.c.l.b16 %v1183
    %v1784 = vunpack.c.h.b16 %v1183
    %v1785 = vunpack.c.l.b16 %v1184
    %v1786 = vunpack.c.h.b16 %v1184
    %v1787 = vunpack.c.l.b16 %v1185
    %v1788 = vunpack.c.h.b16 %v1185
    %v1789 = vunpack.c.l.b16 %v1186
    %v1790 = vunpack.c.h.b16 %v1186
    %v1791 = vunpack.c.l.b16 %v1187
    %v1792 = vunpack.c.h.b16 %v1187
    %v1793 = vunpack.c.l.b16 %v1188
    %v1794 = vunpack.c.h.b16 %v1188
    %v1795 = vunpack.c.l.b16 %v1189
    %v1796 = vunpack.c.h.b16 %v1189
    %v1797 = vunpack.c.l.b16 %v1190
    %v1798 = vunpack.c.h.b16 %v1190
    %v1799 = vunpack.c.l.b16 %v1191
    %v1800 = vunpack.c.h.b16 %v1191
    %v1801 = vunpack.c.l.b16 %v1192
    %v1802 = vunpack.c.h.b16 %v1192
    %v1803 = vpack.c.b16 %v1741, %v1739
    %v1804 = vpack.c.b16 %v1742, %v1740
    %v1805 = vpack.c.b16 %v1745, %v1743
    %v1806 = vpack.c.b16 %v1746, %v1744
    %v1807 = vpack.c.b16 %v1749, %v1747
    %v1808 = vpack.c.b16 %v1750, %v1748
    %v1809 = vpack.c.b16 %v1753, %v1751
    %v1810 = vpack.c.b16 %v1754, %v1752
    %v1811 = vpack.c.b16 %v1757, %v1755
    %v1812 = vpack.c.b16 %v1758, %v1756
    %v1813 = vpack.c.b16 %v1761, %v1759
    %v1814 = vpack.c.b16 %v1762, %v1760
    %v1815 = vpack.c.b16 %v1765, %v1763
    %v1816 = vpack.c.b16 %v1766, %v1764
    %v1817 = vpack.c.b16 %v1769, %v1767
    %v1818 = vpack.c.b16 %v1770, %v1768
    %v1819 = vpack.c.b16 %v1773, %v1771
    %v1820 = vpack.c.b16 %v1774, %v1772
    %v1821 = vpack.c.b16 %v1777, %v1775
    %v1822 = vpack.c.b16 %v1778, %v1776
    %v1823 = vpack.c.b16 %v1781, %v1779
    %v1824 = vpack.c.b16 %v1782, %v1780
    %v1825 = vpack.c.b16 %v1785, %v1783
    %v1826 = vpack.c.b16 %v1786, %v1784
    %v1827 = vpack.c.b16 %v1789, %v1787
    %v1828 = vpack.c.b16 %v1790, %v1788
    %v1829 = vpack.c.b16 %v1793, %v1791
    %v1830 = vpack.c.b16 %v1794, %v1792
    %v1831 = vpack.c.b16 %v1797, %v1795
    %v1832 = vpack.c.b16 %v1798, %v1796
    %v1833 = vpack.c.b16 %v1801, %v1799
    %v1834 = vpack.c.b16 %v1802, %v1800
    %1867 = vmatprep.subr.bf16.mxu0 %v1804
    %1868 = vmatpush1.bf16.msra.mxu0 %v1803
    %1869 = vmatprep.subr.bf16.mxu0 %v1806
    %1870 = vmatpush1.bf16.msra.mxu0 %v1805
    %1871 = vmatprep.subr.bf16.mxu0 %v1808
    %1872 = vmatpush1.bf16.msra.mxu0 %v1807
    %1873 = vmatprep.subr.bf16.mxu0 %v1810
    %1874 = vmatpush1.bf16.msra.mxu0 %v1809
    %1875 = vmatprep.subr.bf16.mxu0 %v1812
    %1876 = vmatpush1.bf16.msra.mxu0 %v1811
    %1877 = vmatprep.subr.bf16.mxu0 %v1814
    %1878 = vmatpush1.bf16.msra.mxu0 %v1813
    %1879 = vmatprep.subr.bf16.mxu0 %v1816
    %1880 = vmatpush1.bf16.msra.mxu0 %v1815
    %1881 = vmatprep.subr.bf16.mxu0 %v1818
    %1882 = vmatpush1.bf16.msra.mxu0 %v1817
    %1883 = vmatprep.subr.bf16.mxu0 %v1820
    %1884 = vmatpush1.bf16.msra.mxu0 %v1819
    %1885 = vmatprep.subr.bf16.mxu0 %v1822
    %1886 = vmatpush1.bf16.msra.mxu0 %v1821
    %1887 = vmatprep.subr.bf16.mxu0 %v1824
    %1888 = vmatpush1.bf16.msra.mxu0 %v1823
    %1889 = vmatprep.subr.bf16.mxu0 %v1826
    %1890 = vmatpush1.bf16.msra.mxu0 %v1825
    %1891 = vmatprep.subr.bf16.mxu0 %v1828
    %1892 = vmatpush1.bf16.msra.mxu0 %v1827
    %1893 = vmatprep.subr.bf16.mxu0 %v1830
    %1894 = vmatpush1.bf16.msra.mxu0 %v1829
    %1895 = vmatprep.subr.bf16.mxu0 %v1832
    %1896 = vmatpush1.bf16.msra.mxu0 %v1831
    %1897 = vmatprep.subr.bf16.mxu0 %v1834
    %1898 = vmatpush1.bf16.msra.mxu0 %v1833
    %1899 = vmatprep.mubr.bf16.mxu0 %v1146
    %1900 = vmatmul.mubr.bf16.gmra.mrb[0].mxu0 %v1145
    %v1901 = vpop.f32.mrb[0].mxu0
    %v1902 = vadd.f32 %v1629, %v1901
    %v1903 = vpop.f32.mrb[0].mxu0
    %v1904 = vadd.f32 %v1631, %v1903
    %v1905 = vpop.f32.mrb[0].mxu0
    %v1906 = vadd.f32 %v1633, %v1905
    %v1907 = vpop.f32.mrb[0].mxu0
    %v1908 = vadd.f32 %v1635, %v1907
    %1909 = vmatprep.mubr.bf16.mxu0 %v1148
    %1910 = vmatmul.mubr.bf16.gmra.mrb[0].mxu0 %v1147
    %v1911 = vpop.f32.mrb[0].mxu0
    %v1912 = vadd.f32 %v1639, %v1911
    %v1913 = vpop.f32.mrb[0].mxu0
    %v1914 = vadd.f32 %v1641, %v1913
    %v1915 = vpop.f32.mrb[0].mxu0
    %v1916 = vadd.f32 %v1643, %v1915
    %v1917 = vpop.f32.mrb[0].mxu0
    %v1918 = vadd.f32 %v1645, %v1917
    %1919 = vmatprep.mubr.bf16.mxu0 %v1150
    %1920 = vmatmul.mubr.bf16.gmra.mrb[0].mxu0 %v1149
    %v1921 = vpop.f32.mrb[0].mxu0
    %v1922 = vadd.f32 %v1649, %v1921
    %v1923 = vpop.f32.mrb[0].mxu0
    %v1924 = vadd.f32 %v1651, %v1923
    %v1925 = vpop.f32.mrb[0].mxu0
    %v1926 = vadd.f32 %v1653, %v1925
    %v1927 = vpop.f32.mrb[0].mxu0
    %v1928 = vadd.f32 %v1655, %v1927
    %1929 = vmatprep.mubr.bf16.mxu0 %v1152
    %1930 = vmatmul.mubr.bf16.gmra.mrb[0].mxu0 %v1151
    %v1931 = vpop.f32.mrb[0].mxu0
    %v1932 = vadd.f32 %v1659, %v1931
    %v1933 = vpop.f32.mrb[0].mxu0
    %v1934 = vadd.f32 %v1661, %v1933
    %v1935 = vpop.f32.mrb[0].mxu0
    %v1936 = vadd.f32 %v1663, %v1935
    %v1937 = vpop.f32.mrb[0].mxu0
    %v1938 = vadd.f32 %v1665, %v1937
    %1939 = vmatprep.mubr.bf16.mxu0 %v1154
    %1940 = vmatmul.mubr.bf16.gmra.mrb[0].mxu0 %v1153
    %v1941 = vpop.f32.mrb[0].mxu0
    %v1942 = vadd.f32 %v1669, %v1941
    %v1943 = vpop.f32.mrb[0].mxu0
    %v1944 = vadd.f32 %v1671, %v1943
    %v1945 = vpop.f32.mrb[0].mxu0
    %v1946 = vadd.f32 %v1673, %v1945
    %v1947 = vpop.f32.mrb[0].mxu0
    %v1948 = vadd.f32 %v1675, %v1947
    %1949 = vmatprep.mubr.bf16.mxu0 %v1156
    %1950 = vmatmul.mubr.bf16.gmra.mrb[0].mxu0 %v1155
    %v1951 = vpop.f32.mrb[0].mxu0
    %v1952 = vadd.f32 %v1679, %v1951
    %v1953 = vpop.f32.mrb[0].mxu0
    %v1954 = vadd.f32 %v1681, %v1953
    %v1955 = vpop.f32.mrb[0].mxu0
    %v1956 = vadd.f32 %v1683, %v1955
    %v1957 = vpop.f32.mrb[0].mxu0
    %v1958 = vadd.f32 %v1685, %v1957
    %1959 = vmatprep.mubr.bf16.mxu0 %v1158
    %1960 = vmatmul.mubr.bf16.gmra.mrb[0].mxu0 %v1157
    %v1961 = vpop.f32.mrb[0].mxu0
    %v1962 = vadd.f32 %v1689, %v1961
    %v1963 = vpop.f32.mrb[0].mxu0
    %v1964 = vadd.f32 %v1691, %v1963
    %v1965 = vpop.f32.mrb[0].mxu0
    %v1966 = vadd.f32 %v1693, %v1965
    %v1967 = vpop.f32.mrb[0].mxu0
    %v1968 = vadd.f32 %v1695, %v1967
    %1969 = vmatprep.mubr.bf16.mxu0 %v1160
    %1970 = vmatmul.mubr.bf16.gmra.mrb[0].mxu0 %v1159
    %v1971 = vpop.f32.mrb[0].mxu0
    %v1972 = vadd.f32 %v1699, %v1971
    %v1973 = vpop.f32.mrb[0].mxu0
    %v1974 = vadd.f32 %v1701, %v1973
    %v1975 = vpop.f32.mrb[0].mxu0
    %v1976 = vadd.f32 %v1703, %v1975
    %v1977 = vpop.f32.mrb[0].mxu0
    %v1978 = vadd.f32 %v1705, %v1977
    %1979 = vdwg.mxu0
    %v1980 = vrot.slane %v1081, 2
    %v1981 = vrot.slane %v1113, 2
    %v1982 = vsel %vm610, %v1980, %v1981
    %v1983 = vrot.slane %v1082, 2
    %v1984 = vrot.slane %v1114, 2
    %v1985 = vsel %vm610, %v1983, %v1984
    %v1986 = vrot.slane %v1083, 2
    %v1987 = vrot.slane %v1115, 2
    %v1988 = vsel %vm610, %v1986, %v1987
    %v1989 = vrot.slane %v1084, 2
    %v1990 = vrot.slane %v1116, 2
    %v1991 = vsel %vm610, %v1989, %v1990
    %v1992 = vrot.slane %v1085, 2
    %v1993 = vrot.slane %v1117, 2
    %v1994 = vsel %vm610, %v1992, %v1993
    %v1995 = vrot.slane %v1086, 2
    %v1996 = vrot.slane %v1118, 2
    %v1997 = vsel %vm610, %v1995, %v1996
    %v1998 = vrot.slane %v1087, 2
    %v1999 = vrot.slane %v1119, 2
    %v2000 = vsel %vm610, %v1998, %v1999
    %v2001 = vrot.slane %v1088, 2
    %v2002 = vrot.slane %v1120, 2
    %v2003 = vsel %vm610, %v2001, %v2002
    %v2004 = vrot.slane %v1089, 2
    %v2005 = vrot.slane %v1121, 2
    %v2006 = vsel %vm610, %v2004, %v2005
    %v2007 = vrot.slane %v1090, 2
    %v2008 = vrot.slane %v1122, 2
    %v2009 = vsel %vm610, %v2007, %v2008
    %v2010 = vrot.slane %v1091, 2
    %v2011 = vrot.slane %v1123, 2
    %v2012 = vsel %vm610, %v2010, %v2011
    %v2013 = vrot.slane %v1092, 2
    %v2014 = vrot.slane %v1124, 2
    %v2015 = vsel %vm610, %v2013, %v2014
    %v2016 = vrot.slane %v1093, 2
    %v2017 = vrot.slane %v1125, 2
    %v2018 = vsel %vm610, %v2016, %v2017
    %v2019 = vrot.slane %v1094, 2
    %v2020 = vrot.slane %v1126, 2
    %v2021 = vsel %vm610, %v2019, %v2020
    %v2022 = vrot.slane %v1095, 2
    %v2023 = vrot.slane %v1127, 2
    %v2024 = vsel %vm610, %v2022, %v2023
    %v2025 = vrot.slane %v1096, 2
    %v2026 = vrot.slane %v1128, 2
    %v2027 = vsel %vm610, %v2025, %v2026
    %v2028 = vrot.slane %v1097, 2
    %v2029 = vrot.slane %v1129, 2
    %v2030 = vsel %vm610, %v2028, %v2029
    %v2031 = vrot.slane %v1098, 2
    %v2032 = vrot.slane %v1130, 2
    %v2033 = vsel %vm610, %v2031, %v2032
    %v2034 = vrot.slane %v1099, 2
    %v2035 = vrot.slane %v1131, 2
    %v2036 = vsel %vm610, %v2034, %v2035
    %v2037 = vrot.slane %v1100, 2
    %v2038 = vrot.slane %v1132, 2
    %v2039 = vsel %vm610, %v2037, %v2038
    %v2040 = vrot.slane %v1101, 2
    %v2041 = vrot.slane %v1133, 2
    %v2042 = vsel %vm610, %v2040, %v2041
    %v2043 = vrot.slane %v1102, 2
    %v2044 = vrot.slane %v1134, 2
    %v2045 = vsel %vm610, %v2043, %v2044
    %v2046 = vrot.slane %v1103, 2
    %v2047 = vrot.slane %v1135, 2
    %v2048 = vsel %vm610, %v2046, %v2047
    %v2049 = vrot.slane %v1104, 2
    %v2050 = vrot.slane %v1136, 2
    %v2051 = vsel %vm610, %v2049, %v2050
    %v2052 = vrot.slane %v1105, 2
    %v2053 = vrot.slane %v1137, 2
    %v2054 = vsel %vm610, %v2052, %v2053
    %v2055 = vrot.slane %v1106, 2
    %v2056 = vrot.slane %v1138, 2
    %v2057 = vsel %vm610, %v2055, %v2056
    %v2058 = vrot.slane %v1107, 2
    %v2059 = vrot.slane %v1139, 2
    %v2060 = vsel %vm610, %v2058, %v2059
    %v2061 = vrot.slane %v1108, 2
    %v2062 = vrot.slane %v1140, 2
    %v2063 = vsel %vm610, %v2061, %v2062
    %v2064 = vrot.slane %v1109, 2
    %v2065 = vrot.slane %v1141, 2
    %v2066 = vsel %vm610, %v2064, %v2065
    %v2067 = vrot.slane %v1110, 2
    %v2068 = vrot.slane %v1142, 2
    %v2069 = vsel %vm610, %v2067, %v2068
    %v2070 = vrot.slane %v1111, 2
    %v2071 = vrot.slane %v1143, 2
    %v2072 = vsel %vm610, %v2070, %v2071
    %v2073 = vrot.slane %v1112, 2
    %v2074 = vrot.slane %v1144, 2
    %v2075 = vsel %vm610, %v2073, %v2074
    %v2108 = vpack.c.bf16 %v1988, %v1982
    %v2109 = vpack.c.bf16 %v1991, %v1985
    %v2110 = vpack.c.bf16 %v2000, %v1994
    %v2111 = vpack.c.bf16 %v2003, %v1997
    %v2112 = vpack.c.bf16 %v2012, %v2006
    %v2113 = vpack.c.bf16 %v2015, %v2009
    %v2114 = vpack.c.bf16 %v2024, %v2018
    %v2115 = vpack.c.bf16 %v2027, %v2021
    %v2116 = vpack.c.bf16 %v2036, %v2030
    %v2117 = vpack.c.bf16 %v2039, %v2033
    %v2118 = vpack.c.bf16 %v2048, %v2042
    %v2119 = vpack.c.bf16 %v2051, %v2045
    %v2120 = vpack.c.bf16 %v2060, %v2054
    %v2121 = vpack.c.bf16 %v2063, %v2057
    %v2122 = vpack.c.bf16 %v2072, %v2066
    %v2123 = vpack.c.bf16 %v2075, %v2069
    %s2124 = scalar_lea.vmem %s4, 512
    %v2125 = vld [vmem:[%s2124] sm:$0xff]
    %v2126 = vld [vmem:[%s2124 + $0x8] sm:$0xff]
    %v2127 = vld [vmem:[%s2124 + $0x10] sm:$0xff]
    %v2128 = vld [vmem:[%s2124 + $0x18] sm:$0xff]
    %v2129 = vld [vmem:[%s2124 + $0x20] sm:$0xff]
    %v2130 = vld [vmem:[%s2124 + $0x28] sm:$0xff]
    %v2131 = vld [vmem:[%s2124 + $0x30] sm:$0xff]
    %v2132 = vld [vmem:[%s2124 + $0x38] sm:$0xff]
    %v2133 = vld [vmem:[%s2124 + $0x40] sm:$0xff]
    %v2134 = vld [vmem:[%s2124 + $0x48] sm:$0xff]
    %v2135 = vld [vmem:[%s2124 + $0x50] sm:$0xff]
    %v2136 = vld [vmem:[%s2124 + $0x58] sm:$0xff]
    %v2137 = vld [vmem:[%s2124 + $0x60] sm:$0xff]
    %v2138 = vld [vmem:[%s2124 + $0x68] sm:$0xff]
    %v2139 = vld [vmem:[%s2124 + $0x70] sm:$0xff]
    %v2140 = vld [vmem:[%s2124 + $0x78] sm:$0xff]
    %v2141 = vld [vmem:[%s2124 + $0x80] sm:$0xff]
    %v2142 = vld [vmem:[%s2124 + $0x88] sm:$0xff]
    %v2143 = vld [vmem:[%s2124 + $0x90] sm:$0xff]
    %v2144 = vld [vmem:[%s2124 + $0x98] sm:$0xff]
    %v2145 = vld [vmem:[%s2124 + $0xa0] sm:$0xff]
    %v2146 = vld [vmem:[%s2124 + $0xa8] sm:$0xff]
    %v2147 = vld [vmem:[%s2124 + $0xb0] sm:$0xff]
    %v2148 = vld [vmem:[%s2124 + $0xb8] sm:$0xff]
    %v2149 = vld [vmem:[%s2124 + $0xc0] sm:$0xff]
    %v2150 = vld [vmem:[%s2124 + $0xc8] sm:$0xff]
    %v2151 = vld [vmem:[%s2124 + $0xd0] sm:$0xff]
    %v2152 = vld [vmem:[%s2124 + $0xd8] sm:$0xff]
    %v2153 = vld [vmem:[%s2124 + $0xe0] sm:$0xff]
    %v2154 = vld [vmem:[%s2124 + $0xe8] sm:$0xff]
    %v2155 = vld [vmem:[%s2124 + $0xf0] sm:$0xff]
    %v2156 = vld [vmem:[%s2124 + $0xf8] sm:$0xff]
    %v2189 = vunpack.c.l.b16 %v2125
    %v2190 = vunpack.c.h.b16 %v2125
    %v2191 = vunpack.c.l.b16 %v2126
    %v2192 = vunpack.c.h.b16 %v2126
    %v2193 = vunpack.c.l.b16 %v2127
    %v2194 = vunpack.c.h.b16 %v2127
    %v2195 = vunpack.c.l.b16 %v2128
    %v2196 = vunpack.c.h.b16 %v2128
    %v2197 = vunpack.c.l.b16 %v2129
    %v2198 = vunpack.c.h.b16 %v2129
    %v2199 = vunpack.c.l.b16 %v2130
    %v2200 = vunpack.c.h.b16 %v2130
    %v2201 = vunpack.c.l.b16 %v2131
    %v2202 = vunpack.c.h.b16 %v2131
    %v2203 = vunpack.c.l.b16 %v2132
    %v2204 = vunpack.c.h.b16 %v2132
    %v2205 = vunpack.c.l.b16 %v2133
    %v2206 = vunpack.c.h.b16 %v2133
    %v2207 = vunpack.c.l.b16 %v2134
    %v2208 = vunpack.c.h.b16 %v2134
    %v2209 = vunpack.c.l.b16 %v2135
    %v2210 = vunpack.c.h.b16 %v2135
    %v2211 = vunpack.c.l.b16 %v2136
    %v2212 = vunpack.c.h.b16 %v2136
    %v2213 = vunpack.c.l.b16 %v2137
    %v2214 = vunpack.c.h.b16 %v2137
    %v2215 = vunpack.c.l.b16 %v2138
    %v2216 = vunpack.c.h.b16 %v2138
    %v2217 = vunpack.c.l.b16 %v2139
    %v2218 = vunpack.c.h.b16 %v2139
    %v2219 = vunpack.c.l.b16 %v2140
    %v2220 = vunpack.c.h.b16 %v2140
    %v2221 = vunpack.c.l.b16 %v2141
    %v2222 = vunpack.c.h.b16 %v2141
    %v2223 = vunpack.c.l.b16 %v2142
    %v2224 = vunpack.c.h.b16 %v2142
    %v2225 = vunpack.c.l.b16 %v2143
    %v2226 = vunpack.c.h.b16 %v2143
    %v2227 = vunpack.c.l.b16 %v2144
    %v2228 = vunpack.c.h.b16 %v2144
    %v2229 = vunpack.c.l.b16 %v2145
    %v2230 = vunpack.c.h.b16 %v2145
    %v2231 = vunpack.c.l.b16 %v2146
    %v2232 = vunpack.c.h.b16 %v2146
    %v2233 = vunpack.c.l.b16 %v2147
    %v2234 = vunpack.c.h.b16 %v2147
    %v2235 = vunpack.c.l.b16 %v2148
    %v2236 = vunpack.c.h.b16 %v2148
    %v2237 = vunpack.c.l.b16 %v2149
    %v2238 = vunpack.c.h.b16 %v2149
    %v2239 = vunpack.c.l.b16 %v2150
    %v2240 = vunpack.c.h.b16 %v2150
    %v2241 = vunpack.c.l.b16 %v2151
    %v2242 = vunpack.c.h.b16 %v2151
    %v2243 = vunpack.c.l.b16 %v2152
    %v2244 = vunpack.c.h.b16 %v2152
    %v2245 = vunpack.c.l.b16 %v2153
    %v2246 = vunpack.c.h.b16 %v2153
    %v2247 = vunpack.c.l.b16 %v2154
    %v2248 = vunpack.c.h.b16 %v2154
    %v2249 = vunpack.c.l.b16 %v2155
    %v2250 = vunpack.c.h.b16 %v2155
    %v2251 = vunpack.c.l.b16 %v2156
    %v2252 = vunpack.c.h.b16 %v2156
    %v2253 = vpack.c.b16 %v2191, %v2189
    %v2254 = vpack.c.b16 %v2192, %v2190
    %v2255 = vpack.c.b16 %v2195, %v2193
    %v2256 = vpack.c.b16 %v2196, %v2194
    %v2257 = vpack.c.b16 %v2199, %v2197
    %v2258 = vpack.c.b16 %v2200, %v2198
    %v2259 = vpack.c.b16 %v2203, %v2201
    %v2260 = vpack.c.b16 %v2204, %v2202
    %v2261 = vpack.c.b16 %v2207, %v2205
    %v2262 = vpack.c.b16 %v2208, %v2206
    %v2263 = vpack.c.b16 %v2211, %v2209
    %v2264 = vpack.c.b16 %v2212, %v2210
    %v2265 = vpack.c.b16 %v2215, %v2213
    %v2266 = vpack.c.b16 %v2216, %v2214
    %v2267 = vpack.c.b16 %v2219, %v2217
    %v2268 = vpack.c.b16 %v2220, %v2218
    %v2269 = vpack.c.b16 %v2223, %v2221
    %v2270 = vpack.c.b16 %v2224, %v2222
    %v2271 = vpack.c.b16 %v2227, %v2225
    %v2272 = vpack.c.b16 %v2228, %v2226
    %v2273 = vpack.c.b16 %v2231, %v2229
    %v2274 = vpack.c.b16 %v2232, %v2230
    %v2275 = vpack.c.b16 %v2235, %v2233
    %v2276 = vpack.c.b16 %v2236, %v2234
    %v2277 = vpack.c.b16 %v2239, %v2237
    %v2278 = vpack.c.b16 %v2240, %v2238
    %v2279 = vpack.c.b16 %v2243, %v2241
    %v2280 = vpack.c.b16 %v2244, %v2242
    %v2281 = vpack.c.b16 %v2247, %v2245
    %v2282 = vpack.c.b16 %v2248, %v2246
    %v2283 = vpack.c.b16 %v2251, %v2249
    %v2284 = vpack.c.b16 %v2252, %v2250
    %2317 = vmatprep.subr.bf16.mxu0 %v2254
    %2318 = vmatpush1.bf16.msra.mxu0 %v2253
    %2319 = vmatprep.subr.bf16.mxu0 %v2256
    %2320 = vmatpush1.bf16.msra.mxu0 %v2255
    %2321 = vmatprep.subr.bf16.mxu0 %v2258
    %2322 = vmatpush1.bf16.msra.mxu0 %v2257
    %2323 = vmatprep.subr.bf16.mxu0 %v2260
    %2324 = vmatpush1.bf16.msra.mxu0 %v2259
    %2325 = vmatprep.subr.bf16.mxu0 %v2262
    %2326 = vmatpush1.bf16.msra.mxu0 %v2261
    %2327 = vmatprep.subr.bf16.mxu0 %v2264
    %2328 = vmatpush1.bf16.msra.mxu0 %v2263
    %2329 = vmatprep.subr.bf16.mxu0 %v2266
    %2330 = vmatpush1.bf16.msra.mxu0 %v2265
    %2331 = vmatprep.subr.bf16.mxu0 %v2268
    %2332 = vmatpush1.bf16.msra.mxu0 %v2267
    %2333 = vmatprep.subr.bf16.mxu0 %v2270
    %2334 = vmatpush1.bf16.msra.mxu0 %v2269
    %2335 = vmatprep.subr.bf16.mxu0 %v2272
    %2336 = vmatpush1.bf16.msra.mxu0 %v2271
    %2337 = vmatprep.subr.bf16.mxu0 %v2274
    %2338 = vmatpush1.bf16.msra.mxu0 %v2273
    %2339 = vmatprep.subr.bf16.mxu0 %v2276
    %2340 = vmatpush1.bf16.msra.mxu0 %v2275
    %2341 = vmatprep.subr.bf16.mxu0 %v2278
    %2342 = vmatpush1.bf16.msra.mxu0 %v2277
    %2343 = vmatprep.subr.bf16.mxu0 %v2280
    %2344 = vmatpush1.bf16.msra.mxu0 %v2279
    %2345 = vmatprep.subr.bf16.mxu0 %v2282
    %2346 = vmatpush1.bf16.msra.mxu0 %v2281
    %2347 = vmatprep.subr.bf16.mxu0 %v2284
    %2348 = vmatpush1.bf16.msra.mxu0 %v2283
    %2349 = vmatprep.mubr.bf16.mxu0 %v2109
    %2350 = vmatmul.mubr.bf16.gmra.mrb[0].mxu0 %v2108
    %v2351 = vpop.f32.mrb[0].mxu0
    %v2352 = vadd.f32 0.0, %v2351
    %v2353 = vpop.f32.mrb[0].mxu0
    %v2354 = vadd.f32 0.0, %v2353
    %v2355 = vpop.f32.mrb[0].mxu0
    %v2356 = vadd.f32 0.0, %v2355
    %v2357 = vpop.f32.mrb[0].mxu0
    %v2358 = vadd.f32 0.0, %v2357
    %2359 = vmatprep.mubr.bf16.mxu0 %v2111
    %2360 = vmatmul.mubr.bf16.gmra.mrb[0].mxu0 %v2110
    %v2361 = vpop.f32.mrb[0].mxu0
    %v2362 = vadd.f32 0.0, %v2361
    %v2363 = vpop.f32.mrb[0].mxu0
    %v2364 = vadd.f32 0.0, %v2363
    %v2365 = vpop.f32.mrb[0].mxu0
    %v2366 = vadd.f32 0.0, %v2365
    %v2367 = vpop.f32.mrb[0].mxu0
    %v2368 = vadd.f32 0.0, %v2367
    %2369 = vmatprep.mubr.bf16.mxu0 %v2113
    %2370 = vmatmul.mubr.bf16.gmra.mrb[0].mxu0 %v2112
    %v2371 = vpop.f32.mrb[0].mxu0
    %v2372 = vadd.f32 0.0, %v2371
    %v2373 = vpop.f32.mrb[0].mxu0
    %v2374 = vadd.f32 0.0, %v2373
    %v2375 = vpop.f32.mrb[0].mxu0
    %v2376 = vadd.f32 0.0, %v2375
    %v2377 = vpop.f32.mrb[0].mxu0
    %v2378 = vadd.f32 0.0, %v2377
    %2379 = vmatprep.mubr.bf16.mxu0 %v2115
    %2380 = vmatmul.mubr.bf16.gmra.mrb[0].mxu0 %v2114
    %v2381 = vpop.f32.mrb[0].mxu0
    %v2382 = vadd.f32 0.0, %v2381
    %v2383 = vpop.f32.mrb[0].mxu0
    %v2384 = vadd.f32 0.0, %v2383
    %v2385 = vpop.f32.mrb[0].mxu0
    %v2386 = vadd.f32 0.0, %v2385
    %v2387 = vpop.f32.mrb[0].mxu0
    %v2388 = vadd.f32 0.0, %v2387
    %2389 = vmatprep.mubr.bf16.mxu0 %v2117
    %2390 = vmatmul.mubr.bf16.gmra.mrb[0].mxu0 %v2116
    %v2391 = vpop.f32.mrb[0].mxu0
    %v2392 = vadd.f32 0.0, %v2391
    %v2393 = vpop.f32.mrb[0].mxu0
    %v2394 = vadd.f32 0.0, %v2393
    %v2395 = vpop.f32.mrb[0].mxu0
    %v2396 = vadd.f32 0.0, %v2395
    %v2397 = vpop.f32.mrb[0].mxu0
    %v2398 = vadd.f32 0.0, %v2397
    %2399 = vmatprep.mubr.bf16.mxu0 %v2119
    %2400 = vmatmul.mubr.bf16.gmra.mrb[0].mxu0 %v2118
    %v2401 = vpop.f32.mrb[0].mxu0
    %v2402 = vadd.f32 0.0, %v2401
    %v2403 = vpop.f32.mrb[0].mxu0
    %v2404 = vadd.f32 0.0, %v2403
    %v2405 = vpop.f32.mrb[0].mxu0
    %v2406 = vadd.f32 0.0, %v2405
    %v2407 = vpop.f32.mrb[0].mxu0
    %v2408 = vadd.f32 0.0, %v2407
    %2409 = vmatprep.mubr.bf16.mxu0 %v2121
    %2410 = vmatmul.mubr.bf16.gmra.mrb[0].mxu0 %v2120
    %v2411 = vpop.f32.mrb[0].mxu0
    %v2412 = vadd.f32 0.0, %v2411
    %v2413 = vpop.f32.mrb[0].mxu0
    %v2414 = vadd.f32 0.0, %v2413
    %v2415 = vpop.f32.mrb[0].mxu0
    %v2416 = vadd.f32 0.0, %v2415
    %v2417 = vpop.f32.mrb[0].mxu0
    %v2418 = vadd.f32 0.0, %v2417
    %2419 = vmatprep.mubr.bf16.mxu0 %v2123
    %2420 = vmatmul.mubr.bf16.gmra.mrb[0].mxu0 %v2122
    %v2421 = vpop.f32.mrb[0].mxu0
    %v2422 = vadd.f32 0.0, %v2421
    %v2423 = vpop.f32.mrb[0].mxu0
    %v2424 = vadd.f32 0.0, %v2423
    %v2425 = vpop.f32.mrb[0].mxu0
    %v2426 = vadd.f32 0.0, %v2425
    %v2427 = vpop.f32.mrb[0].mxu0
    %v2428 = vadd.f32 0.0, %v2427
    %2429 = vdwg.mxu0
    %v2430 = vadd.f32 %v1902, %v2352
    %v2431 = vadd.f32 %v1904, %v2354
    %v2432 = vadd.f32 %v1906, %v2356
    %v2433 = vadd.f32 %v1908, %v2358
    %v2434 = vadd.f32 %v1912, %v2362
    %v2435 = vadd.f32 %v1914, %v2364
    %v2436 = vadd.f32 %v1916, %v2366
    %v2437 = vadd.f32 %v1918, %v2368
    %v2438 = vadd.f32 %v1922, %v2372
    %v2439 = vadd.f32 %v1924, %v2374
    %v2440 = vadd.f32 %v1926, %v2376
    %v2441 = vadd.f32 %v1928, %v2378
    %v2442 = vadd.f32 %v1932, %v2382
    %v2443 = vadd.f32 %v1934, %v2384
    %v2444 = vadd.f32 %v1936, %v2386
    %v2445 = vadd.f32 %v1938, %v2388
    %v2446 = vadd.f32 %v1942, %v2392
    %v2447 = vadd.f32 %v1944, %v2394
    %v2448 = vadd.f32 %v1946, %v2396
    %v2449 = vadd.f32 %v1948, %v2398
    %v2450 = vadd.f32 %v1952, %v2402
    %v2451 = vadd.f32 %v1954, %v2404
    %v2452 = vadd.f32 %v1956, %v2406
    %v2453 = vadd.f32 %v1958, %v2408
    %v2454 = vadd.f32 %v1962, %v2412
    %v2455 = vadd.f32 %v1964, %v2414
    %v2456 = vadd.f32 %v1966, %v2416
    %v2457 = vadd.f32 %v1968, %v2418
    %v2458 = vadd.f32 %v1972, %v2422
    %v2459 = vadd.f32 %v1974, %v2424
    %v2460 = vadd.f32 %v1976, %v2426
    %v2461 = vadd.f32 %v1978, %v2428
    %v2462 = vld [vmem:[%s5] sm:$0x3]
    %v2464 = vlaneseq
    %v2465 = vshrl.u32 %v2464, 7
    %v2466 = vsub.s32 0, %v2465
    %v2467 = vrot.slane %v2462, %v2466
    %v2468 = vlaneseq
    %v2469 = vshrl.u32 %v2468, 7
    %v2470 = vsub.s32 1, %v2469
    %v2471 = vrot.slane %v2462, %v2470
    %v2474 = vmul.f32 %v2430, %v2467
    %v2475 = vmul.f32 %v2431, %v2471
    %v2476 = vmul.f32 %v2432, %v2467
    %v2477 = vmul.f32 %v2433, %v2471
    %v2478 = vmul.f32 %v2434, %v2467
    %v2479 = vmul.f32 %v2435, %v2471
    %v2480 = vmul.f32 %v2436, %v2467
    %v2481 = vmul.f32 %v2437, %v2471
    %v2482 = vmul.f32 %v2438, %v2467
    %v2483 = vmul.f32 %v2439, %v2471
    %v2484 = vmul.f32 %v2440, %v2467
    %v2485 = vmul.f32 %v2441, %v2471
    %v2486 = vmul.f32 %v2442, %v2467
    %v2487 = vmul.f32 %v2443, %v2471
    %v2488 = vmul.f32 %v2444, %v2467
    %v2489 = vmul.f32 %v2445, %v2471
    %v2490 = vmul.f32 %v2446, %v2467
    %v2491 = vmul.f32 %v2447, %v2471
    %v2492 = vmul.f32 %v2448, %v2467
    %v2493 = vmul.f32 %v2449, %v2471
    %v2494 = vmul.f32 %v2450, %v2467
    %v2495 = vmul.f32 %v2451, %v2471
    %v2496 = vmul.f32 %v2452, %v2467
    %v2497 = vmul.f32 %v2453, %v2471
    %v2498 = vmul.f32 %v2454, %v2467
    %v2499 = vmul.f32 %v2455, %v2471
    %v2500 = vmul.f32 %v2456, %v2467
    %v2501 = vmul.f32 %v2457, %v2471
    %v2502 = vmul.f32 %v2458, %v2467
    %v2503 = vmul.f32 %v2459, %v2471
    %v2504 = vmul.f32 %v2460, %v2467
    %v2505 = vmul.f32 %v2461, %v2471
    %v2506 = vld [vmem:[%s6] sm:$0x3]
    %v2508 = vlaneseq
    %v2509 = vshrl.u32 %v2508, 7
    %v2510 = vsub.s32 0, %v2509
    %v2511 = vrot.slane %v2506, %v2510
    %v2512 = vlaneseq
    %v2513 = vshrl.u32 %v2512, 7
    %v2514 = vsub.s32 1, %v2513
    %v2515 = vrot.slane %v2506, %v2514
    %v2518 = vadd.f32 %v2474, %v2511
    %v2519 = vadd.f32 %v2475, %v2515
    %v2520 = vadd.f32 %v2476, %v2511
    %v2521 = vadd.f32 %v2477, %v2515
    %v2522 = vadd.f32 %v2478, %v2511
    %v2523 = vadd.f32 %v2479, %v2515
    %v2524 = vadd.f32 %v2480, %v2511
    %v2525 = vadd.f32 %v2481, %v2515
    %v2526 = vadd.f32 %v2482, %v2511
    %v2527 = vadd.f32 %v2483, %v2515
    %v2528 = vadd.f32 %v2484, %v2511
    %v2529 = vadd.f32 %v2485, %v2515
    %v2530 = vadd.f32 %v2486, %v2511
    %v2531 = vadd.f32 %v2487, %v2515
    %v2532 = vadd.f32 %v2488, %v2511
    %v2533 = vadd.f32 %v2489, %v2515
    %v2534 = vadd.f32 %v2490, %v2511
    %v2535 = vadd.f32 %v2491, %v2515
    %v2536 = vadd.f32 %v2492, %v2511
    %v2537 = vadd.f32 %v2493, %v2515
    %v2538 = vadd.f32 %v2494, %v2511
    %v2539 = vadd.f32 %v2495, %v2515
    %v2540 = vadd.f32 %v2496, %v2511
    %v2541 = vadd.f32 %v2497, %v2515
    %v2542 = vadd.f32 %v2498, %v2511
    %v2543 = vadd.f32 %v2499, %v2515
    %v2544 = vadd.f32 %v2500, %v2511
    %v2545 = vadd.f32 %v2501, %v2515
    %v2546 = vadd.f32 %v2502, %v2511
    %v2547 = vadd.f32 %v2503, %v2515
    %v2548 = vadd.f32 %v2504, %v2511
    %v2549 = vadd.f32 %v2505, %v2515
    %v2550 = vmax.f32 %v2518, 0.0
    %v2551 = vmax.f32 %v2519, 0.0
    %v2552 = vmax.f32 %v2520, 0.0
    %v2553 = vmax.f32 %v2521, 0.0
    %v2554 = vmax.f32 %v2522, 0.0
    %v2555 = vmax.f32 %v2523, 0.0
    %v2556 = vmax.f32 %v2524, 0.0
    %v2557 = vmax.f32 %v2525, 0.0
    %v2558 = vmax.f32 %v2526, 0.0
    %v2559 = vmax.f32 %v2527, 0.0
    %v2560 = vmax.f32 %v2528, 0.0
    %v2561 = vmax.f32 %v2529, 0.0
    %v2562 = vmax.f32 %v2530, 0.0
    %v2563 = vmax.f32 %v2531, 0.0
    %v2564 = vmax.f32 %v2532, 0.0
    %v2565 = vmax.f32 %v2533, 0.0
    %v2566 = vmax.f32 %v2534, 0.0
    %v2567 = vmax.f32 %v2535, 0.0
    %v2568 = vmax.f32 %v2536, 0.0
    %v2569 = vmax.f32 %v2537, 0.0
    %v2570 = vmax.f32 %v2538, 0.0
    %v2571 = vmax.f32 %v2539, 0.0
    %v2572 = vmax.f32 %v2540, 0.0
    %v2573 = vmax.f32 %v2541, 0.0
    %v2574 = vmax.f32 %v2542, 0.0
    %v2575 = vmax.f32 %v2543, 0.0
    %v2576 = vmax.f32 %v2544, 0.0
    %v2577 = vmax.f32 %v2545, 0.0
    %v2578 = vmax.f32 %v2546, 0.0
    %v2579 = vmax.f32 %v2547, 0.0
    %v2580 = vmax.f32 %v2548, 0.0
    %v2581 = vmax.f32 %v2549, 0.0
    %v2582 = vpack.c.bf16 %v2552, %v2550
    %v2583 = vpack.c.bf16 %v2553, %v2551
    %v2584 = vpack.c.bf16 %v2556, %v2554
    %v2585 = vpack.c.bf16 %v2557, %v2555
    %v2586 = vpack.c.bf16 %v2560, %v2558
    %v2587 = vpack.c.bf16 %v2561, %v2559
    %v2588 = vpack.c.bf16 %v2564, %v2562
    %v2589 = vpack.c.bf16 %v2565, %v2563
    %v2590 = vpack.c.bf16 %v2568, %v2566
    %v2591 = vpack.c.bf16 %v2569, %v2567
    %v2592 = vpack.c.bf16 %v2572, %v2570
    %v2593 = vpack.c.bf16 %v2573, %v2571
    %v2594 = vpack.c.bf16 %v2576, %v2574
    %v2595 = vpack.c.bf16 %v2577, %v2575
    %v2596 = vpack.c.bf16 %v2580, %v2578
    %v2597 = vpack.c.bf16 %v2581, %v2579
    %v2598 = vld [vmem:[%s7] sm:$0xff]
    %v2599 = vld [vmem:[%s7 + $0x8] sm:$0xff]
    %v2600 = vld [vmem:[%s7 + $0x10] sm:$0xff]
    %v2601 = vld [vmem:[%s7 + $0x18] sm:$0xff]
    %v2602 = vld [vmem:[%s7 + $0x20] sm:$0xff]
    %v2603 = vld [vmem:[%s7 + $0x28] sm:$0xff]
    %v2604 = vld [vmem:[%s7 + $0x30] sm:$0xff]
    %v2605 = vld [vmem:[%s7 + $0x38] sm:$0xff]
    %v2606 = vld [vmem:[%s7 + $0x40] sm:$0xff]
    %v2607 = vld [vmem:[%s7 + $0x48] sm:$0xff]
    %v2608 = vld [vmem:[%s7 + $0x50] sm:$0xff]
    %v2609 = vld [vmem:[%s7 + $0x58] sm:$0xff]
    %v2610 = vld [vmem:[%s7 + $0x60] sm:$0xff]
    %v2611 = vld [vmem:[%s7 + $0x68] sm:$0xff]
    %v2612 = vld [vmem:[%s7 + $0x70] sm:$0xff]
    %v2613 = vld [vmem:[%s7 + $0x78] sm:$0xff]
    %v2614 = vld [vmem:[%s7 + $0x80] sm:$0xff]
    %v2615 = vld [vmem:[%s7 + $0x88] sm:$0xff]
    %v2616 = vld [vmem:[%s7 + $0x90] sm:$0xff]
    %v2617 = vld [vmem:[%s7 + $0x98] sm:$0xff]
    %v2618 = vld [vmem:[%s7 + $0xa0] sm:$0xff]
    %v2619 = vld [vmem:[%s7 + $0xa8] sm:$0xff]
    %v2620 = vld [vmem:[%s7 + $0xb0] sm:$0xff]
    %v2621 = vld [vmem:[%s7 + $0xb8] sm:$0xff]
    %v2622 = vld [vmem:[%s7 + $0xc0] sm:$0xff]
    %v2623 = vld [vmem:[%s7 + $0xc8] sm:$0xff]
    %v2624 = vld [vmem:[%s7 + $0xd0] sm:$0xff]
    %v2625 = vld [vmem:[%s7 + $0xd8] sm:$0xff]
    %v2626 = vld [vmem:[%s7 + $0xe0] sm:$0xff]
    %v2627 = vld [vmem:[%s7 + $0xe8] sm:$0xff]
    %v2628 = vld [vmem:[%s7 + $0xf0] sm:$0xff]
    %v2629 = vld [vmem:[%s7 + $0xf8] sm:$0xff]
    %v2663 = vrot.slane %v2550, 1
    %v2664 = vrot.slane 0.0, 1
    %v2665 = vsel %vm237, %v2663, %v2664
    %v2666 = vrot.slane %v2551, 1
    %v2667 = vsel %vm237, %v2666, %v2664
    %v2668 = vrot.slane %v2552, 1
    %v2669 = vsel %vm237, %v2668, %v2664
    %v2670 = vrot.slane %v2553, 1
    %v2671 = vsel %vm237, %v2670, %v2664
    %v2672 = vrot.slane %v2554, 1
    %v2673 = vsel %vm237, %v2672, %v2664
    %v2674 = vrot.slane %v2555, 1
    %v2675 = vsel %vm237, %v2674, %v2664
    %v2676 = vrot.slane %v2556, 1
    %v2677 = vsel %vm237, %v2676, %v2664
    %v2678 = vrot.slane %v2557, 1
    %v2679 = vsel %vm237, %v2678, %v2664
    %v2680 = vrot.slane %v2558, 1
    %v2681 = vsel %vm237, %v2680, %v2664
    %v2682 = vrot.slane %v2559, 1
    %v2683 = vsel %vm237, %v2682, %v2664
    %v2684 = vrot.slane %v2560, 1
    %v2685 = vsel %vm237, %v2684, %v2664
    %v2686 = vrot.slane %v2561, 1
    %v2687 = vsel %vm237, %v2686, %v2664
    %v2688 = vrot.slane %v2562, 1
    %v2689 = vsel %vm237, %v2688, %v2664
    %v2690 = vrot.slane %v2563, 1
    %v2691 = vsel %vm237, %v2690, %v2664
    %v2692 = vrot.slane %v2564, 1
    %v2693 = vsel %vm237, %v2692, %v2664
    %v2694 = vrot.slane %v2565, 1
    %v2695 = vsel %vm237, %v2694, %v2664
    %v2696 = vrot.slane %v2566, 1
    %v2697 = vsel %vm237, %v2696, %v2664
    %v2698 = vrot.slane %v2567, 1
    %v2699 = vsel %vm237, %v2698, %v2664
    %v2700 = vrot.slane %v2568, 1
    %v2701 = vsel %vm237, %v2700, %v2664
    %v2702 = vrot.slane %v2569, 1
    %v2703 = vsel %vm237, %v2702, %v2664
    %v2704 = vrot.slane %v2570, 1
    %v2705 = vsel %vm237, %v2704, %v2664
    %v2706 = vrot.slane %v2571, 1
    %v2707 = vsel %vm237, %v2706, %v2664
    %v2708 = vrot.slane %v2572, 1
    %v2709 = vsel %vm237, %v2708, %v2664
    %v2710 = vrot.slane %v2573, 1
    %v2711 = vsel %vm237, %v2710, %v2664
    %v2712 = vrot.slane %v2574, 1
    %v2713 = vsel %vm237, %v2712, %v2664
    %v2714 = vrot.slane %v2575, 1
    %v2715 = vsel %vm237, %v2714, %v2664
    %v2716 = vrot.slane %v2576, 1
    %v2717 = vsel %vm237, %v2716, %v2664
    %v2718 = vrot.slane %v2577, 1
    %v2719 = vsel %vm237, %v2718, %v2664
    %v2720 = vrot.slane %v2578, 1
    %v2721 = vsel %vm237, %v2720, %v2664
    %v2722 = vrot.slane %v2579, 1
    %v2723 = vsel %vm237, %v2722, %v2664
    %v2724 = vrot.slane %v2580, 1
    %v2725 = vsel %vm237, %v2724, %v2664
    %v2726 = vrot.slane %v2581, 1
    %v2727 = vsel %vm237, %v2726, %v2664
    %v2760 = vpack.c.bf16 %v2669, %v2665
    %v2761 = vpack.c.bf16 %v2671, %v2667
    %v2762 = vpack.c.bf16 %v2677, %v2673
    %v2763 = vpack.c.bf16 %v2679, %v2675
    %v2764 = vpack.c.bf16 %v2685, %v2681
    %v2765 = vpack.c.bf16 %v2687, %v2683
    %v2766 = vpack.c.bf16 %v2693, %v2689
    %v2767 = vpack.c.bf16 %v2695, %v2691
    %v2768 = vpack.c.bf16 %v2701, %v2697
    %v2769 = vpack.c.bf16 %v2703, %v2699
    %v2770 = vpack.c.bf16 %v2709, %v2705
    %v2771 = vpack.c.bf16 %v2711, %v2707
    %v2772 = vpack.c.bf16 %v2717, %v2713
    %v2773 = vpack.c.bf16 %v2719, %v2715
    %v2774 = vpack.c.bf16 %v2725, %v2721
    %v2775 = vpack.c.bf16 %v2727, %v2723
    %s2776 = scalar_lea.vmem %s7, 256
    %v2777 = vld [vmem:[%s2776] sm:$0xff]
    %v2778 = vld [vmem:[%s2776 + $0x8] sm:$0xff]
    %v2779 = vld [vmem:[%s2776 + $0x10] sm:$0xff]
    %v2780 = vld [vmem:[%s2776 + $0x18] sm:$0xff]
    %v2781 = vld [vmem:[%s2776 + $0x20] sm:$0xff]
    %v2782 = vld [vmem:[%s2776 + $0x28] sm:$0xff]
    %v2783 = vld [vmem:[%s2776 + $0x30] sm:$0xff]
    %v2784 = vld [vmem:[%s2776 + $0x38] sm:$0xff]
    %v2785 = vld [vmem:[%s2776 + $0x40] sm:$0xff]
    %v2786 = vld [vmem:[%s2776 + $0x48] sm:$0xff]
    %v2787 = vld [vmem:[%s2776 + $0x50] sm:$0xff]
    %v2788 = vld [vmem:[%s2776 + $0x58] sm:$0xff]
    %v2789 = vld [vmem:[%s2776 + $0x60] sm:$0xff]
    %v2790 = vld [vmem:[%s2776 + $0x68] sm:$0xff]
    %v2791 = vld [vmem:[%s2776 + $0x70] sm:$0xff]
    %v2792 = vld [vmem:[%s2776 + $0x78] sm:$0xff]
    %v2793 = vld [vmem:[%s2776 + $0x80] sm:$0xff]
    %v2794 = vld [vmem:[%s2776 + $0x88] sm:$0xff]
    %v2795 = vld [vmem:[%s2776 + $0x90] sm:$0xff]
    %v2796 = vld [vmem:[%s2776 + $0x98] sm:$0xff]
    %v2797 = vld [vmem:[%s2776 + $0xa0] sm:$0xff]
    %v2798 = vld [vmem:[%s2776 + $0xa8] sm:$0xff]
    %v2799 = vld [vmem:[%s2776 + $0xb0] sm:$0xff]
    %v2800 = vld [vmem:[%s2776 + $0xb8] sm:$0xff]
    %v2801 = vld [vmem:[%s2776 + $0xc0] sm:$0xff]
    %v2802 = vld [vmem:[%s2776 + $0xc8] sm:$0xff]
    %v2803 = vld [vmem:[%s2776 + $0xd0] sm:$0xff]
    %v2804 = vld [vmem:[%s2776 + $0xd8] sm:$0xff]
    %v2805 = vld [vmem:[%s2776 + $0xe0] sm:$0xff]
    %v2806 = vld [vmem:[%s2776 + $0xe8] sm:$0xff]
    %v2807 = vld [vmem:[%s2776 + $0xf0] sm:$0xff]
    %v2808 = vld [vmem:[%s2776 + $0xf8] sm:$0xff]
    %v2841 = vunpack.c.l.b16 %v2777
    %v2842 = vunpack.c.h.b16 %v2777
    %v2843 = vunpack.c.l.b16 %v2778
    %v2844 = vunpack.c.h.b16 %v2778
    %v2845 = vunpack.c.l.b16 %v2779
    %v2846 = vunpack.c.h.b16 %v2779
    %v2847 = vunpack.c.l.b16 %v2780
    %v2848 = vunpack.c.h.b16 %v2780
    %v2849 = vunpack.c.l.b16 %v2781
    %v2850 = vunpack.c.h.b16 %v2781
    %v2851 = vunpack.c.l.b16 %v2782
    %v2852 = vunpack.c.h.b16 %v2782
    %v2853 = vunpack.c.l.b16 %v2783
    %v2854 = vunpack.c.h.b16 %v2783
    %v2855 = vunpack.c.l.b16 %v2784
    %v2856 = vunpack.c.h.b16 %v2784
    %v2857 = vunpack.c.l.b16 %v2785
    %v2858 = vunpack.c.h.b16 %v2785
    %v2859 = vunpack.c.l.b16 %v2786
    %v2860 = vunpack.c.h.b16 %v2786
    %v2861 = vunpack.c.l.b16 %v2787
    %v2862 = vunpack.c.h.b16 %v2787
    %v2863 = vunpack.c.l.b16 %v2788
    %v2864 = vunpack.c.h.b16 %v2788
    %v2865 = vunpack.c.l.b16 %v2789
    %v2866 = vunpack.c.h.b16 %v2789
    %v2867 = vunpack.c.l.b16 %v2790
    %v2868 = vunpack.c.h.b16 %v2790
    %v2869 = vunpack.c.l.b16 %v2791
    %v2870 = vunpack.c.h.b16 %v2791
    %v2871 = vunpack.c.l.b16 %v2792
    %v2872 = vunpack.c.h.b16 %v2792
    %v2873 = vunpack.c.l.b16 %v2793
    %v2874 = vunpack.c.h.b16 %v2793
    %v2875 = vunpack.c.l.b16 %v2794
    %v2876 = vunpack.c.h.b16 %v2794
    %v2877 = vunpack.c.l.b16 %v2795
    %v2878 = vunpack.c.h.b16 %v2795
    %v2879 = vunpack.c.l.b16 %v2796
    %v2880 = vunpack.c.h.b16 %v2796
    %v2881 = vunpack.c.l.b16 %v2797
    %v2882 = vunpack.c.h.b16 %v2797
    %v2883 = vunpack.c.l.b16 %v2798
    %v2884 = vunpack.c.h.b16 %v2798
    %v2885 = vunpack.c.l.b16 %v2799
    %v2886 = vunpack.c.h.b16 %v2799
    %v2887 = vunpack.c.l.b16 %v2800
    %v2888 = vunpack.c.h.b16 %v2800
    %v2889 = vunpack.c.l.b16 %v2801
    %v2890 = vunpack.c.h.b16 %v2801
    %v2891 = vunpack.c.l.b16 %v2802
    %v2892 = vunpack.c.h.b16 %v2802
    %v2893 = vunpack.c.l.b16 %v2803
    %v2894 = vunpack.c.h.b16 %v2803
    %v2895 = vunpack.c.l.b16 %v2804
    %v2896 = vunpack.c.h.b16 %v2804
    %v2897 = vunpack.c.l.b16 %v2805
    %v2898 = vunpack.c.h.b16 %v2805
    %v2899 = vunpack.c.l.b16 %v2806
    %v2900 = vunpack.c.h.b16 %v2806
    %v2901 = vunpack.c.l.b16 %v2807
    %v2902 = vunpack.c.h.b16 %v2807
    %v2903 = vunpack.c.l.b16 %v2808
    %v2904 = vunpack.c.h.b16 %v2808
    %v2905 = vpack.c.b16 %v2843, %v2841
    %v2906 = vpack.c.b16 %v2844, %v2842
    %v2907 = vpack.c.b16 %v2847, %v2845
    %v2908 = vpack.c.b16 %v2848, %v2846
    %v2909 = vpack.c.b16 %v2851, %v2849
    %v2910 = vpack.c.b16 %v2852, %v2850
    %v2911 = vpack.c.b16 %v2855, %v2853
    %v2912 = vpack.c.b16 %v2856, %v2854
    %v2913 = vpack.c.b16 %v2859, %v2857
    %v2914 = vpack.c.b16 %v2860, %v2858
    %v2915 = vpack.c.b16 %v2863, %v2861
    %v2916 = vpack.c.b16 %v2864, %v2862
    %v2917 = vpack.c.b16 %v2867, %v2865
    %v2918 = vpack.c.b16 %v2868, %v2866
    %v2919 = vpack.c.b16 %v2871, %v2869
    %v2920 = vpack.c.b16 %v2872, %v2870
    %v2921 = vpack.c.b16 %v2875, %v2873
    %v2922 = vpack.c.b16 %v2876, %v2874
    %v2923 = vpack.c.b16 %v2879, %v2877
    %v2924 = vpack.c.b16 %v2880, %v2878
    %v2925 = vpack.c.b16 %v2883, %v2881
    %v2926 = vpack.c.b16 %v2884, %v2882
    %v2927 = vpack.c.b16 %v2887, %v2885
    %v2928 = vpack.c.b16 %v2888, %v2886
    %v2929 = vpack.c.b16 %v2891, %v2889
    %v2930 = vpack.c.b16 %v2892, %v2890
    %v2931 = vpack.c.b16 %v2895, %v2893
    %v2932 = vpack.c.b16 %v2896, %v2894
    %v2933 = vpack.c.b16 %v2899, %v2897
    %v2934 = vpack.c.b16 %v2900, %v2898
    %v2935 = vpack.c.b16 %v2903, %v2901
    %v2936 = vpack.c.b16 %v2904, %v2902
    %2969 = vmatprep.subr.bf16.mxu0 %v2906
    %2970 = vmatpush1.bf16.msra.mxu0 %v2905
    %2971 = vmatprep.subr.bf16.mxu0 %v2908
    %2972 = vmatpush1.bf16.msra.mxu0 %v2907
    %2973 = vmatprep.subr.bf16.mxu0 %v2910
    %2974 = vmatpush1.bf16.msra.mxu0 %v2909
    %2975 = vmatprep.subr.bf16.mxu0 %v2912
    %2976 = vmatpush1.bf16.msra.mxu0 %v2911
    %2977 = vmatprep.subr.bf16.mxu0 %v2914
    %2978 = vmatpush1.bf16.msra.mxu0 %v2913
    %2979 = vmatprep.subr.bf16.mxu0 %v2916
    %2980 = vmatpush1.bf16.msra.mxu0 %v2915
    %2981 = vmatprep.subr.bf16.mxu0 %v2918
    %2982 = vmatpush1.bf16.msra.mxu0 %v2917
    %2983 = vmatprep.subr.bf16.mxu0 %v2920
    %2984 = vmatpush1.bf16.msra.mxu0 %v2919
    %2985 = vmatprep.subr.bf16.mxu0 %v2922
    %2986 = vmatpush1.bf16.msra.mxu0 %v2921
    %2987 = vmatprep.subr.bf16.mxu0 %v2924
    %2988 = vmatpush1.bf16.msra.mxu0 %v2923
    %2989 = vmatprep.subr.bf16.mxu0 %v2926
    %2990 = vmatpush1.bf16.msra.mxu0 %v2925
    %2991 = vmatprep.subr.bf16.mxu0 %v2928
    %2992 = vmatpush1.bf16.msra.mxu0 %v2927
    %2993 = vmatprep.subr.bf16.mxu0 %v2930
    %2994 = vmatpush1.bf16.msra.mxu0 %v2929
    %2995 = vmatprep.subr.bf16.mxu0 %v2932
    %2996 = vmatpush1.bf16.msra.mxu0 %v2931
    %2997 = vmatprep.subr.bf16.mxu0 %v2934
    %2998 = vmatpush1.bf16.msra.mxu0 %v2933
    %2999 = vmatprep.subr.bf16.mxu0 %v2936
    %3000 = vmatpush1.bf16.msra.mxu0 %v2935
    %3001 = vmatprep.mubr.bf16.mxu0 %v2761
    %3002 = vmatmul.mubr.bf16.gmra.mrb[0].mxu0 %v2760
    %v3003 = vpop.f32.mrb[0].mxu0
    %v3004 = vadd.f32 0.0, %v3003
    %v3005 = vpop.f32.mrb[0].mxu0
    %v3006 = vadd.f32 0.0, %v3005
    %v3007 = vpop.f32.mrb[0].mxu0
    %v3008 = vadd.f32 0.0, %v3007
    %v3009 = vpop.f32.mrb[0].mxu0
    %v3010 = vadd.f32 0.0, %v3009
    %3011 = vmatprep.mubr.bf16.mxu0 %v2763
    %3012 = vmatmul.mubr.bf16.gmra.mrb[0].mxu0 %v2762
    %v3013 = vpop.f32.mrb[0].mxu0
    %v3014 = vadd.f32 0.0, %v3013
    %v3015 = vpop.f32.mrb[0].mxu0
    %v3016 = vadd.f32 0.0, %v3015
    %v3017 = vpop.f32.mrb[0].mxu0
    %v3018 = vadd.f32 0.0, %v3017
    %v3019 = vpop.f32.mrb[0].mxu0
    %v3020 = vadd.f32 0.0, %v3019
    %3021 = vmatprep.mubr.bf16.mxu0 %v2765
    %3022 = vmatmul.mubr.bf16.gmra.mrb[0].mxu0 %v2764
    %v3023 = vpop.f32.mrb[0].mxu0
    %v3024 = vadd.f32 0.0, %v3023
    %v3025 = vpop.f32.mrb[0].mxu0
    %v3026 = vadd.f32 0.0, %v3025
    %v3027 = vpop.f32.mrb[0].mxu0
    %v3028 = vadd.f32 0.0, %v3027
    %v3029 = vpop.f32.mrb[0].mxu0
    %v3030 = vadd.f32 0.0, %v3029
    %3031 = vmatprep.mubr.bf16.mxu0 %v2767
    %3032 = vmatmul.mubr.bf16.gmra.mrb[0].mxu0 %v2766
    %v3033 = vpop.f32.mrb[0].mxu0
    %v3034 = vadd.f32 0.0, %v3033
    %v3035 = vpop.f32.mrb[0].mxu0
    %v3036 = vadd.f32 0.0, %v3035
    %v3037 = vpop.f32.mrb[0].mxu0
    %v3038 = vadd.f32 0.0, %v3037
    %v3039 = vpop.f32.mrb[0].mxu0
    %v3040 = vadd.f32 0.0, %v3039
    %3041 = vmatprep.mubr.bf16.mxu0 %v2769
    %3042 = vmatmul.mubr.bf16.gmra.mrb[0].mxu0 %v2768
    %v3043 = vpop.f32.mrb[0].mxu0
    %v3044 = vadd.f32 0.0, %v3043
    %v3045 = vpop.f32.mrb[0].mxu0
    %v3046 = vadd.f32 0.0, %v3045
    %v3047 = vpop.f32.mrb[0].mxu0
    %v3048 = vadd.f32 0.0, %v3047
    %v3049 = vpop.f32.mrb[0].mxu0
    %v3050 = vadd.f32 0.0, %v3049
    %3051 = vmatprep.mubr.bf16.mxu0 %v2771
    %3052 = vmatmul.mubr.bf16.gmra.mrb[0].mxu0 %v2770
    %v3053 = vpop.f32.mrb[0].mxu0
    %v3054 = vadd.f32 0.0, %v3053
    %v3055 = vpop.f32.mrb[0].mxu0
    %v3056 = vadd.f32 0.0, %v3055
    %v3057 = vpop.f32.mrb[0].mxu0
    %v3058 = vadd.f32 0.0, %v3057
    %v3059 = vpop.f32.mrb[0].mxu0
    %v3060 = vadd.f32 0.0, %v3059
    %3061 = vmatprep.mubr.bf16.mxu0 %v2773
    %3062 = vmatmul.mubr.bf16.gmra.mrb[0].mxu0 %v2772
    %v3063 = vpop.f32.mrb[0].mxu0
    %v3064 = vadd.f32 0.0, %v3063
    %v3065 = vpop.f32.mrb[0].mxu0
    %v3066 = vadd.f32 0.0, %v3065
    %v3067 = vpop.f32.mrb[0].mxu0
    %v3068 = vadd.f32 0.0, %v3067
    %v3069 = vpop.f32.mrb[0].mxu0
    %v3070 = vadd.f32 0.0, %v3069
    %3071 = vmatprep.mubr.bf16.mxu0 %v2775
    %3072 = vmatmul.mubr.bf16.gmra.mrb[0].mxu0 %v2774
    %v3073 = vpop.f32.mrb[0].mxu0
    %v3074 = vadd.f32 0.0, %v3073
    %v3075 = vpop.f32.mrb[0].mxu0
    %v3076 = vadd.f32 0.0, %v3075
    %v3077 = vpop.f32.mrb[0].mxu0
    %v3078 = vadd.f32 0.0, %v3077
    %v3079 = vpop.f32.mrb[0].mxu0
    %v3080 = vadd.f32 0.0, %v3079
    %3081 = vdwg.mxu0
    %v3114 = vunpack.c.l.b16 %v2598
    %v3115 = vunpack.c.h.b16 %v2598
    %v3116 = vunpack.c.l.b16 %v2599
    %v3117 = vunpack.c.h.b16 %v2599
    %v3118 = vunpack.c.l.b16 %v2600
    %v3119 = vunpack.c.h.b16 %v2600
    %v3120 = vunpack.c.l.b16 %v2601
    %v3121 = vunpack.c.h.b16 %v2601
    %v3122 = vunpack.c.l.b16 %v2602
    %v3123 = vunpack.c.h.b16 %v2602
    %v3124 = vunpack.c.l.b16 %v2603
    %v3125 = vunpack.c.h.b16 %v2603
    %v3126 = vunpack.c.l.b16 %v2604
    %v3127 = vunpack.c.h.b16 %v2604
    %v3128 = vunpack.c.l.b16 %v2605
    %v3129 = vunpack.c.h.b16 %v2605
    %v3130 = vunpack.c.l.b16 %v2606
    %v3131 = vunpack.c.h.b16 %v2606
    %v3132 = vunpack.c.l.b16 %v2607
    %v3133 = vunpack.c.h.b16 %v2607
    %v3134 = vunpack.c.l.b16 %v2608
    %v3135 = vunpack.c.h.b16 %v2608
    %v3136 = vunpack.c.l.b16 %v2609
    %v3137 = vunpack.c.h.b16 %v2609
    %v3138 = vunpack.c.l.b16 %v2610
    %v3139 = vunpack.c.h.b16 %v2610
    %v3140 = vunpack.c.l.b16 %v2611
    %v3141 = vunpack.c.h.b16 %v2611
    %v3142 = vunpack.c.l.b16 %v2612
    %v3143 = vunpack.c.h.b16 %v2612
    %v3144 = vunpack.c.l.b16 %v2613
    %v3145 = vunpack.c.h.b16 %v2613
    %v3146 = vunpack.c.l.b16 %v2614
    %v3147 = vunpack.c.h.b16 %v2614
    %v3148 = vunpack.c.l.b16 %v2615
    %v3149 = vunpack.c.h.b16 %v2615
    %v3150 = vunpack.c.l.b16 %v2616
    %v3151 = vunpack.c.h.b16 %v2616
    %v3152 = vunpack.c.l.b16 %v2617
    %v3153 = vunpack.c.h.b16 %v2617
    %v3154 = vunpack.c.l.b16 %v2618
    %v3155 = vunpack.c.h.b16 %v2618
    %v3156 = vunpack.c.l.b16 %v2619
    %v3157 = vunpack.c.h.b16 %v2619
    %v3158 = vunpack.c.l.b16 %v2620
    %v3159 = vunpack.c.h.b16 %v2620
    %v3160 = vunpack.c.l.b16 %v2621
    %v3161 = vunpack.c.h.b16 %v2621
    %v3162 = vunpack.c.l.b16 %v2622
    %v3163 = vunpack.c.h.b16 %v2622
    %v3164 = vunpack.c.l.b16 %v2623
    %v3165 = vunpack.c.h.b16 %v2623
    %v3166 = vunpack.c.l.b16 %v2624
    %v3167 = vunpack.c.h.b16 %v2624
    %v3168 = vunpack.c.l.b16 %v2625
    %v3169 = vunpack.c.h.b16 %v2625
    %v3170 = vunpack.c.l.b16 %v2626
    %v3171 = vunpack.c.h.b16 %v2626
    %v3172 = vunpack.c.l.b16 %v2627
    %v3173 = vunpack.c.h.b16 %v2627
    %v3174 = vunpack.c.l.b16 %v2628
    %v3175 = vunpack.c.h.b16 %v2628
    %v3176 = vunpack.c.l.b16 %v2629
    %v3177 = vunpack.c.h.b16 %v2629
    %v3178 = vpack.c.b16 %v3116, %v3114
    %v3179 = vpack.c.b16 %v3117, %v3115
    %v3180 = vpack.c.b16 %v3120, %v3118
    %v3181 = vpack.c.b16 %v3121, %v3119
    %v3182 = vpack.c.b16 %v3124, %v3122
    %v3183 = vpack.c.b16 %v3125, %v3123
    %v3184 = vpack.c.b16 %v3128, %v3126
    %v3185 = vpack.c.b16 %v3129, %v3127
    %v3186 = vpack.c.b16 %v3132, %v3130
    %v3187 = vpack.c.b16 %v3133, %v3131
    %v3188 = vpack.c.b16 %v3136, %v3134
    %v3189 = vpack.c.b16 %v3137, %v3135
    %v3190 = vpack.c.b16 %v3140, %v3138
    %v3191 = vpack.c.b16 %v3141, %v3139
    %v3192 = vpack.c.b16 %v3144, %v3142
    %v3193 = vpack.c.b16 %v3145, %v3143
    %v3194 = vpack.c.b16 %v3148, %v3146
    %v3195 = vpack.c.b16 %v3149, %v3147
    %v3196 = vpack.c.b16 %v3152, %v3150
    %v3197 = vpack.c.b16 %v3153, %v3151
    %v3198 = vpack.c.b16 %v3156, %v3154
    %v3199 = vpack.c.b16 %v3157, %v3155
    %v3200 = vpack.c.b16 %v3160, %v3158
    %v3201 = vpack.c.b16 %v3161, %v3159
    %v3202 = vpack.c.b16 %v3164, %v3162
    %v3203 = vpack.c.b16 %v3165, %v3163
    %v3204 = vpack.c.b16 %v3168, %v3166
    %v3205 = vpack.c.b16 %v3169, %v3167
    %v3206 = vpack.c.b16 %v3172, %v3170
    %v3207 = vpack.c.b16 %v3173, %v3171
    %v3208 = vpack.c.b16 %v3176, %v3174
    %v3209 = vpack.c.b16 %v3177, %v3175
    %3242 = vmatprep.subr.bf16.mxu0 %v3179
    %3243 = vmatpush1.bf16.msra.mxu0 %v3178
    %3244 = vmatprep.subr.bf16.mxu0 %v3181
    %3245 = vmatpush1.bf16.msra.mxu0 %v3180
    %3246 = vmatprep.subr.bf16.mxu0 %v3183
    %3247 = vmatpush1.bf16.msra.mxu0 %v3182
    %3248 = vmatprep.subr.bf16.mxu0 %v3185
    %3249 = vmatpush1.bf16.msra.mxu0 %v3184
    %3250 = vmatprep.subr.bf16.mxu0 %v3187
    %3251 = vmatpush1.bf16.msra.mxu0 %v3186
    %3252 = vmatprep.subr.bf16.mxu0 %v3189
    %3253 = vmatpush1.bf16.msra.mxu0 %v3188
    %3254 = vmatprep.subr.bf16.mxu0 %v3191
    %3255 = vmatpush1.bf16.msra.mxu0 %v3190
    %3256 = vmatprep.subr.bf16.mxu0 %v3193
    %3257 = vmatpush1.bf16.msra.mxu0 %v3192
    %3258 = vmatprep.subr.bf16.mxu0 %v3195
    %3259 = vmatpush1.bf16.msra.mxu0 %v3194
    %3260 = vmatprep.subr.bf16.mxu0 %v3197
    %3261 = vmatpush1.bf16.msra.mxu0 %v3196
    %3262 = vmatprep.subr.bf16.mxu0 %v3199
    %3263 = vmatpush1.bf16.msra.mxu0 %v3198
    %3264 = vmatprep.subr.bf16.mxu0 %v3201
    %3265 = vmatpush1.bf16.msra.mxu0 %v3200
    %3266 = vmatprep.subr.bf16.mxu0 %v3203
    %3267 = vmatpush1.bf16.msra.mxu0 %v3202
    %3268 = vmatprep.subr.bf16.mxu0 %v3205
    %3269 = vmatpush1.bf16.msra.mxu0 %v3204
    %3270 = vmatprep.subr.bf16.mxu0 %v3207
    %3271 = vmatpush1.bf16.msra.mxu0 %v3206
    %3272 = vmatprep.subr.bf16.mxu0 %v3209
    %3273 = vmatpush1.bf16.msra.mxu0 %v3208
    %3274 = vmatprep.mubr.bf16.mxu0 %v2583
    %3275 = vmatmul.mubr.bf16.gmra.mrb[0].mxu0 %v2582
    %v3276 = vpop.f32.mrb[0].mxu0
    %v3277 = vadd.f32 %v3004, %v3276
    %v3278 = vpop.f32.mrb[0].mxu0
    %v3279 = vadd.f32 %v3006, %v3278
    %v3280 = vpop.f32.mrb[0].mxu0
    %v3281 = vadd.f32 %v3008, %v3280
    %v3282 = vpop.f32.mrb[0].mxu0
    %v3283 = vadd.f32 %v3010, %v3282
    %3284 = vmatprep.mubr.bf16.mxu0 %v2585
    %3285 = vmatmul.mubr.bf16.gmra.mrb[0].mxu0 %v2584
    %v3286 = vpop.f32.mrb[0].mxu0
    %v3287 = vadd.f32 %v3014, %v3286
    %v3288 = vpop.f32.mrb[0].mxu0
    %v3289 = vadd.f32 %v3016, %v3288
    %v3290 = vpop.f32.mrb[0].mxu0
    %v3291 = vadd.f32 %v3018, %v3290
    %v3292 = vpop.f32.mrb[0].mxu0
    %v3293 = vadd.f32 %v3020, %v3292
    %3294 = vmatprep.mubr.bf16.mxu0 %v2587
    %3295 = vmatmul.mubr.bf16.gmra.mrb[0].mxu0 %v2586
    %v3296 = vpop.f32.mrb[0].mxu0
    %v3297 = vadd.f32 %v3024, %v3296
    %v3298 = vpop.f32.mrb[0].mxu0
    %v3299 = vadd.f32 %v3026, %v3298
    %v3300 = vpop.f32.mrb[0].mxu0
    %v3301 = vadd.f32 %v3028, %v3300
    %v3302 = vpop.f32.mrb[0].mxu0
    %v3303 = vadd.f32 %v3030, %v3302
    %3304 = vmatprep.mubr.bf16.mxu0 %v2589
    %3305 = vmatmul.mubr.bf16.gmra.mrb[0].mxu0 %v2588
    %v3306 = vpop.f32.mrb[0].mxu0
    %v3307 = vadd.f32 %v3034, %v3306
    %v3308 = vpop.f32.mrb[0].mxu0
    %v3309 = vadd.f32 %v3036, %v3308
    %v3310 = vpop.f32.mrb[0].mxu0
    %v3311 = vadd.f32 %v3038, %v3310
    %v3312 = vpop.f32.mrb[0].mxu0
    %v3313 = vadd.f32 %v3040, %v3312
    %3314 = vmatprep.mubr.bf16.mxu0 %v2591
    %3315 = vmatmul.mubr.bf16.gmra.mrb[0].mxu0 %v2590
    %v3316 = vpop.f32.mrb[0].mxu0
    %v3317 = vadd.f32 %v3044, %v3316
    %v3318 = vpop.f32.mrb[0].mxu0
    %v3319 = vadd.f32 %v3046, %v3318
    %v3320 = vpop.f32.mrb[0].mxu0
    %v3321 = vadd.f32 %v3048, %v3320
    %v3322 = vpop.f32.mrb[0].mxu0
    %v3323 = vadd.f32 %v3050, %v3322
    %3324 = vmatprep.mubr.bf16.mxu0 %v2593
    %3325 = vmatmul.mubr.bf16.gmra.mrb[0].mxu0 %v2592
    %v3326 = vpop.f32.mrb[0].mxu0
    %v3327 = vadd.f32 %v3054, %v3326
    %v3328 = vpop.f32.mrb[0].mxu0
    %v3329 = vadd.f32 %v3056, %v3328
    %v3330 = vpop.f32.mrb[0].mxu0
    %v3331 = vadd.f32 %v3058, %v3330
    %v3332 = vpop.f32.mrb[0].mxu0
    %v3333 = vadd.f32 %v3060, %v3332
    %3334 = vmatprep.mubr.bf16.mxu0 %v2595
    %3335 = vmatmul.mubr.bf16.gmra.mrb[0].mxu0 %v2594
    %v3336 = vpop.f32.mrb[0].mxu0
    %v3337 = vadd.f32 %v3064, %v3336
    %v3338 = vpop.f32.mrb[0].mxu0
    %v3339 = vadd.f32 %v3066, %v3338
    %v3340 = vpop.f32.mrb[0].mxu0
    %v3341 = vadd.f32 %v3068, %v3340
    %v3342 = vpop.f32.mrb[0].mxu0
    %v3343 = vadd.f32 %v3070, %v3342
    %3344 = vmatprep.mubr.bf16.mxu0 %v2597
    %3345 = vmatmul.mubr.bf16.gmra.mrb[0].mxu0 %v2596
    %v3346 = vpop.f32.mrb[0].mxu0
    %v3347 = vadd.f32 %v3074, %v3346
    %v3348 = vpop.f32.mrb[0].mxu0
    %v3349 = vadd.f32 %v3076, %v3348
    %v3350 = vpop.f32.mrb[0].mxu0
    %v3351 = vadd.f32 %v3078, %v3350
    %v3352 = vpop.f32.mrb[0].mxu0
    %v3353 = vadd.f32 %v3080, %v3352
    %3354 = vdwg.mxu0
    %v3355 = vrot.slane %v2550, 2
    %v3356 = vrot.slane 0.0, 2
    %v3357 = vsel %vm610, %v3355, %v3356
    %v3358 = vrot.slane %v2551, 2
    %v3359 = vsel %vm610, %v3358, %v3356
    %v3360 = vrot.slane %v2552, 2
    %v3361 = vsel %vm610, %v3360, %v3356
    %v3362 = vrot.slane %v2553, 2
    %v3363 = vsel %vm610, %v3362, %v3356
    %v3364 = vrot.slane %v2554, 2
    %v3365 = vsel %vm610, %v3364, %v3356
    %v3366 = vrot.slane %v2555, 2
    %v3367 = vsel %vm610, %v3366, %v3356
    %v3368 = vrot.slane %v2556, 2
    %v3369 = vsel %vm610, %v3368, %v3356
    %v3370 = vrot.slane %v2557, 2
    %v3371 = vsel %vm610, %v3370, %v3356
    %v3372 = vrot.slane %v2558, 2
    %v3373 = vsel %vm610, %v3372, %v3356
    %v3374 = vrot.slane %v2559, 2
    %v3375 = vsel %vm610, %v3374, %v3356
    %v3376 = vrot.slane %v2560, 2
    %v3377 = vsel %vm610, %v3376, %v3356
    %v3378 = vrot.slane %v2561, 2
    %v3379 = vsel %vm610, %v3378, %v3356
    %v3380 = vrot.slane %v2562, 2
    %v3381 = vsel %vm610, %v3380, %v3356
    %v3382 = vrot.slane %v2563, 2
    %v3383 = vsel %vm610, %v3382, %v3356
    %v3384 = vrot.slane %v2564, 2
    %v3385 = vsel %vm610, %v3384, %v3356
    %v3386 = vrot.slane %v2565, 2
    %v3387 = vsel %vm610, %v3386, %v3356
    %v3388 = vrot.slane %v2566, 2
    %v3389 = vsel %vm610, %v3388, %v3356
    %v3390 = vrot.slane %v2567, 2
    %v3391 = vsel %vm610, %v3390, %v3356
    %v3392 = vrot.slane %v2568, 2
    %v3393 = vsel %vm610, %v3392, %v3356
    %v3394 = vrot.slane %v2569, 2
    %v3395 = vsel %vm610, %v3394, %v3356
    %v3396 = vrot.slane %v2570, 2
    %v3397 = vsel %vm610, %v3396, %v3356
    %v3398 = vrot.slane %v2571, 2
    %v3399 = vsel %vm610, %v3398, %v3356
    %v3400 = vrot.slane %v2572, 2
    %v3401 = vsel %vm610, %v3400, %v3356
    %v3402 = vrot.slane %v2573, 2
    %v3403 = vsel %vm610, %v3402, %v3356
    %v3404 = vrot.slane %v2574, 2
    %v3405 = vsel %vm610, %v3404, %v3356
    %v3406 = vrot.slane %v2575, 2
    %v3407 = vsel %vm610, %v3406, %v3356
    %v3408 = vrot.slane %v2576, 2
    %v3409 = vsel %vm610, %v3408, %v3356
    %v3410 = vrot.slane %v2577, 2
    %v3411 = vsel %vm610, %v3410, %v3356
    %v3412 = vrot.slane %v2578, 2
    %v3413 = vsel %vm610, %v3412, %v3356
    %v3414 = vrot.slane %v2579, 2
    %v3415 = vsel %vm610, %v3414, %v3356
    %v3416 = vrot.slane %v2580, 2
    %v3417 = vsel %vm610, %v3416, %v3356
    %v3418 = vrot.slane %v2581, 2
    %v3419 = vsel %vm610, %v3418, %v3356
    %v3452 = vpack.c.bf16 %v3361, %v3357
    %v3453 = vpack.c.bf16 %v3363, %v3359
    %v3454 = vpack.c.bf16 %v3369, %v3365
    %v3455 = vpack.c.bf16 %v3371, %v3367
    %v3456 = vpack.c.bf16 %v3377, %v3373
    %v3457 = vpack.c.bf16 %v3379, %v3375
    %v3458 = vpack.c.bf16 %v3385, %v3381
    %v3459 = vpack.c.bf16 %v3387, %v3383
    %v3460 = vpack.c.bf16 %v3393, %v3389
    %v3461 = vpack.c.bf16 %v3395, %v3391
    %v3462 = vpack.c.bf16 %v3401, %v3397
    %v3463 = vpack.c.bf16 %v3403, %v3399
    %v3464 = vpack.c.bf16 %v3409, %v3405
    %v3465 = vpack.c.bf16 %v3411, %v3407
    %v3466 = vpack.c.bf16 %v3417, %v3413
    %v3467 = vpack.c.bf16 %v3419, %v3415
    %s3468 = scalar_lea.vmem %s7, 512
    %v3469 = vld [vmem:[%s3468] sm:$0xff]
    %v3470 = vld [vmem:[%s3468 + $0x8] sm:$0xff]
    %v3471 = vld [vmem:[%s3468 + $0x10] sm:$0xff]
    %v3472 = vld [vmem:[%s3468 + $0x18] sm:$0xff]
    %v3473 = vld [vmem:[%s3468 + $0x20] sm:$0xff]
    %v3474 = vld [vmem:[%s3468 + $0x28] sm:$0xff]
    %v3475 = vld [vmem:[%s3468 + $0x30] sm:$0xff]
    %v3476 = vld [vmem:[%s3468 + $0x38] sm:$0xff]
    %v3477 = vld [vmem:[%s3468 + $0x40] sm:$0xff]
    %v3478 = vld [vmem:[%s3468 + $0x48] sm:$0xff]
    %v3479 = vld [vmem:[%s3468 + $0x50] sm:$0xff]
    %v3480 = vld [vmem:[%s3468 + $0x58] sm:$0xff]
    %v3481 = vld [vmem:[%s3468 + $0x60] sm:$0xff]
    %v3482 = vld [vmem:[%s3468 + $0x68] sm:$0xff]
    %v3483 = vld [vmem:[%s3468 + $0x70] sm:$0xff]
    %v3484 = vld [vmem:[%s3468 + $0x78] sm:$0xff]
    %v3485 = vld [vmem:[%s3468 + $0x80] sm:$0xff]
    %v3486 = vld [vmem:[%s3468 + $0x88] sm:$0xff]
    %v3487 = vld [vmem:[%s3468 + $0x90] sm:$0xff]
    %v3488 = vld [vmem:[%s3468 + $0x98] sm:$0xff]
    %v3489 = vld [vmem:[%s3468 + $0xa0] sm:$0xff]
    %v3490 = vld [vmem:[%s3468 + $0xa8] sm:$0xff]
    %v3491 = vld [vmem:[%s3468 + $0xb0] sm:$0xff]
    %v3492 = vld [vmem:[%s3468 + $0xb8] sm:$0xff]
    %v3493 = vld [vmem:[%s3468 + $0xc0] sm:$0xff]
    %v3494 = vld [vmem:[%s3468 + $0xc8] sm:$0xff]
    %v3495 = vld [vmem:[%s3468 + $0xd0] sm:$0xff]
    %v3496 = vld [vmem:[%s3468 + $0xd8] sm:$0xff]
    %v3497 = vld [vmem:[%s3468 + $0xe0] sm:$0xff]
    %v3498 = vld [vmem:[%s3468 + $0xe8] sm:$0xff]
    %v3499 = vld [vmem:[%s3468 + $0xf0] sm:$0xff]
    %v3500 = vld [vmem:[%s3468 + $0xf8] sm:$0xff]
    %v3533 = vunpack.c.l.b16 %v3469
    %v3534 = vunpack.c.h.b16 %v3469
    %v3535 = vunpack.c.l.b16 %v3470
    %v3536 = vunpack.c.h.b16 %v3470
    %v3537 = vunpack.c.l.b16 %v3471
    %v3538 = vunpack.c.h.b16 %v3471
    %v3539 = vunpack.c.l.b16 %v3472
    %v3540 = vunpack.c.h.b16 %v3472
    %v3541 = vunpack.c.l.b16 %v3473
    %v3542 = vunpack.c.h.b16 %v3473
    %v3543 = vunpack.c.l.b16 %v3474
    %v3544 = vunpack.c.h.b16 %v3474
    %v3545 = vunpack.c.l.b16 %v3475
    %v3546 = vunpack.c.h.b16 %v3475
    %v3547 = vunpack.c.l.b16 %v3476
    %v3548 = vunpack.c.h.b16 %v3476
    %v3549 = vunpack.c.l.b16 %v3477
    %v3550 = vunpack.c.h.b16 %v3477
    %v3551 = vunpack.c.l.b16 %v3478
    %v3552 = vunpack.c.h.b16 %v3478
    %v3553 = vunpack.c.l.b16 %v3479
    %v3554 = vunpack.c.h.b16 %v3479
    %v3555 = vunpack.c.l.b16 %v3480
    %v3556 = vunpack.c.h.b16 %v3480
    %v3557 = vunpack.c.l.b16 %v3481
    %v3558 = vunpack.c.h.b16 %v3481
    %v3559 = vunpack.c.l.b16 %v3482
    %v3560 = vunpack.c.h.b16 %v3482
    %v3561 = vunpack.c.l.b16 %v3483
    %v3562 = vunpack.c.h.b16 %v3483
    %v3563 = vunpack.c.l.b16 %v3484
    %v3564 = vunpack.c.h.b16 %v3484
    %v3565 = vunpack.c.l.b16 %v3485
    %v3566 = vunpack.c.h.b16 %v3485
    %v3567 = vunpack.c.l.b16 %v3486
    %v3568 = vunpack.c.h.b16 %v3486
    %v3569 = vunpack.c.l.b16 %v3487
    %v3570 = vunpack.c.h.b16 %v3487
    %v3571 = vunpack.c.l.b16 %v3488
    %v3572 = vunpack.c.h.b16 %v3488
    %v3573 = vunpack.c.l.b16 %v3489
    %v3574 = vunpack.c.h.b16 %v3489
    %v3575 = vunpack.c.l.b16 %v3490
    %v3576 = vunpack.c.h.b16 %v3490
    %v3577 = vunpack.c.l.b16 %v3491
    %v3578 = vunpack.c.h.b16 %v3491
    %v3579 = vunpack.c.l.b16 %v3492
    %v3580 = vunpack.c.h.b16 %v3492
    %v3581 = vunpack.c.l.b16 %v3493
    %v3582 = vunpack.c.h.b16 %v3493
    %v3583 = vunpack.c.l.b16 %v3494
    %v3584 = vunpack.c.h.b16 %v3494
    %v3585 = vunpack.c.l.b16 %v3495
    %v3586 = vunpack.c.h.b16 %v3495
    %v3587 = vunpack.c.l.b16 %v3496
    %v3588 = vunpack.c.h.b16 %v3496
    %v3589 = vunpack.c.l.b16 %v3497
    %v3590 = vunpack.c.h.b16 %v3497
    %v3591 = vunpack.c.l.b16 %v3498
    %v3592 = vunpack.c.h.b16 %v3498
    %v3593 = vunpack.c.l.b16 %v3499
    %v3594 = vunpack.c.h.b16 %v3499
    %v3595 = vunpack.c.l.b16 %v3500
    %v3596 = vunpack.c.h.b16 %v3500
    %v3597 = vpack.c.b16 %v3535, %v3533
    %v3598 = vpack.c.b16 %v3536, %v3534
    %v3599 = vpack.c.b16 %v3539, %v3537
    %v3600 = vpack.c.b16 %v3540, %v3538
    %v3601 = vpack.c.b16 %v3543, %v3541
    %v3602 = vpack.c.b16 %v3544, %v3542
    %v3603 = vpack.c.b16 %v3547, %v3545
    %v3604 = vpack.c.b16 %v3548, %v3546
    %v3605 = vpack.c.b16 %v3551, %v3549
    %v3606 = vpack.c.b16 %v3552, %v3550
    %v3607 = vpack.c.b16 %v3555, %v3553
    %v3608 = vpack.c.b16 %v3556, %v3554
    %v3609 = vpack.c.b16 %v3559, %v3557
    %v3610 = vpack.c.b16 %v3560, %v3558
    %v3611 = vpack.c.b16 %v3563, %v3561
    %v3612 = vpack.c.b16 %v3564, %v3562
    %v3613 = vpack.c.b16 %v3567, %v3565
    %v3614 = vpack.c.b16 %v3568, %v3566
    %v3615 = vpack.c.b16 %v3571, %v3569
    %v3616 = vpack.c.b16 %v3572, %v3570
    %v3617 = vpack.c.b16 %v3575, %v3573
    %v3618 = vpack.c.b16 %v3576, %v3574
    %v3619 = vpack.c.b16 %v3579, %v3577
    %v3620 = vpack.c.b16 %v3580, %v3578
    %v3621 = vpack.c.b16 %v3583, %v3581
    %v3622 = vpack.c.b16 %v3584, %v3582
    %v3623 = vpack.c.b16 %v3587, %v3585
    %v3624 = vpack.c.b16 %v3588, %v3586
    %v3625 = vpack.c.b16 %v3591, %v3589
    %v3626 = vpack.c.b16 %v3592, %v3590
    %v3627 = vpack.c.b16 %v3595, %v3593
    %v3628 = vpack.c.b16 %v3596, %v3594
    %3661 = vmatprep.subr.bf16.mxu0 %v3598
    %3662 = vmatpush1.bf16.msra.mxu0 %v3597
    %3663 = vmatprep.subr.bf16.mxu0 %v3600
    %3664 = vmatpush1.bf16.msra.mxu0 %v3599
    %3665 = vmatprep.subr.bf16.mxu0 %v3602
    %3666 = vmatpush1.bf16.msra.mxu0 %v3601
    %3667 = vmatprep.subr.bf16.mxu0 %v3604
    %3668 = vmatpush1.bf16.msra.mxu0 %v3603
    %3669 = vmatprep.subr.bf16.mxu0 %v3606
    %3670 = vmatpush1.bf16.msra.mxu0 %v3605
    %3671 = vmatprep.subr.bf16.mxu0 %v3608
    %3672 = vmatpush1.bf16.msra.mxu0 %v3607
    %3673 = vmatprep.subr.bf16.mxu0 %v3610
    %3674 = vmatpush1.bf16.msra.mxu0 %v3609
    %3675 = vmatprep.subr.bf16.mxu0 %v3612
    %3676 = vmatpush1.bf16.msra.mxu0 %v3611
    %3677 = vmatprep.subr.bf16.mxu0 %v3614
    %3678 = vmatpush1.bf16.msra.mxu0 %v3613
    %3679 = vmatprep.subr.bf16.mxu0 %v3616
    %3680 = vmatpush1.bf16.msra.mxu0 %v3615
    %3681 = vmatprep.subr.bf16.mxu0 %v3618
    %3682 = vmatpush1.bf16.msra.mxu0 %v3617
    %3683 = vmatprep.subr.bf16.mxu0 %v3620
    %3684 = vmatpush1.bf16.msra.mxu0 %v3619
    %3685 = vmatprep.subr.bf16.mxu0 %v3622
    %3686 = vmatpush1.bf16.msra.mxu0 %v3621
    %3687 = vmatprep.subr.bf16.mxu0 %v3624
    %3688 = vmatpush1.bf16.msra.mxu0 %v3623
    %3689 = vmatprep.subr.bf16.mxu0 %v3626
    %3690 = vmatpush1.bf16.msra.mxu0 %v3625
    %3691 = vmatprep.subr.bf16.mxu0 %v3628
    %3692 = vmatpush1.bf16.msra.mxu0 %v3627
    %3693 = vmatprep.mubr.bf16.mxu0 %v3453
    %3694 = vmatmul.mubr.bf16.gmra.mrb[0].mxu0 %v3452
    %v3695 = vpop.f32.mrb[0].mxu0
    %v3696 = vadd.f32 0.0, %v3695
    %v3697 = vpop.f32.mrb[0].mxu0
    %v3698 = vadd.f32 0.0, %v3697
    %v3699 = vpop.f32.mrb[0].mxu0
    %v3700 = vadd.f32 0.0, %v3699
    %v3701 = vpop.f32.mrb[0].mxu0
    %v3702 = vadd.f32 0.0, %v3701
    %3703 = vmatprep.mubr.bf16.mxu0 %v3455
    %3704 = vmatmul.mubr.bf16.gmra.mrb[0].mxu0 %v3454
    %v3705 = vpop.f32.mrb[0].mxu0
    %v3706 = vadd.f32 0.0, %v3705
    %v3707 = vpop.f32.mrb[0].mxu0
    %v3708 = vadd.f32 0.0, %v3707
    %v3709 = vpop.f32.mrb[0].mxu0
    %v3710 = vadd.f32 0.0, %v3709
    %v3711 = vpop.f32.mrb[0].mxu0
    %v3712 = vadd.f32 0.0, %v3711
    %3713 = vmatprep.mubr.bf16.mxu0 %v3457
    %3714 = vmatmul.mubr.bf16.gmra.mrb[0].mxu0 %v3456
    %v3715 = vpop.f32.mrb[0].mxu0
    %v3716 = vadd.f32 0.0, %v3715
    %v3717 = vpop.f32.mrb[0].mxu0
    %v3718 = vadd.f32 0.0, %v3717
    %v3719 = vpop.f32.mrb[0].mxu0
    %v3720 = vadd.f32 0.0, %v3719
    %v3721 = vpop.f32.mrb[0].mxu0
    %v3722 = vadd.f32 0.0, %v3721
    %3723 = vmatprep.mubr.bf16.mxu0 %v3459
    %3724 = vmatmul.mubr.bf16.gmra.mrb[0].mxu0 %v3458
    %v3725 = vpop.f32.mrb[0].mxu0
    %v3726 = vadd.f32 0.0, %v3725
    %v3727 = vpop.f32.mrb[0].mxu0
    %v3728 = vadd.f32 0.0, %v3727
    %v3729 = vpop.f32.mrb[0].mxu0
    %v3730 = vadd.f32 0.0, %v3729
    %v3731 = vpop.f32.mrb[0].mxu0
    %v3732 = vadd.f32 0.0, %v3731
    %3733 = vmatprep.mubr.bf16.mxu0 %v3461
    %3734 = vmatmul.mubr.bf16.gmra.mrb[0].mxu0 %v3460
    %v3735 = vpop.f32.mrb[0].mxu0
    %v3736 = vadd.f32 0.0, %v3735
    %v3737 = vpop.f32.mrb[0].mxu0
    %v3738 = vadd.f32 0.0, %v3737
    %v3739 = vpop.f32.mrb[0].mxu0
    %v3740 = vadd.f32 0.0, %v3739
    %v3741 = vpop.f32.mrb[0].mxu0
    %v3742 = vadd.f32 0.0, %v3741
    %3743 = vmatprep.mubr.bf16.mxu0 %v3463
    %3744 = vmatmul.mubr.bf16.gmra.mrb[0].mxu0 %v3462
    %v3745 = vpop.f32.mrb[0].mxu0
    %v3746 = vadd.f32 0.0, %v3745
    %v3747 = vpop.f32.mrb[0].mxu0
    %v3748 = vadd.f32 0.0, %v3747
    %v3749 = vpop.f32.mrb[0].mxu0
    %v3750 = vadd.f32 0.0, %v3749
    %v3751 = vpop.f32.mrb[0].mxu0
    %v3752 = vadd.f32 0.0, %v3751
    %3753 = vmatprep.mubr.bf16.mxu0 %v3465
    %3754 = vmatmul.mubr.bf16.gmra.mrb[0].mxu0 %v3464
    %v3755 = vpop.f32.mrb[0].mxu0
    %v3756 = vadd.f32 0.0, %v3755
    %v3757 = vpop.f32.mrb[0].mxu0
    %v3758 = vadd.f32 0.0, %v3757
    %v3759 = vpop.f32.mrb[0].mxu0
    %v3760 = vadd.f32 0.0, %v3759
    %v3761 = vpop.f32.mrb[0].mxu0
    %v3762 = vadd.f32 0.0, %v3761
    %3763 = vmatprep.mubr.bf16.mxu0 %v3467
    %3764 = vmatmul.mubr.bf16.gmra.mrb[0].mxu0 %v3466
    %v3765 = vpop.f32.mrb[0].mxu0
    %v3766 = vadd.f32 0.0, %v3765
    %v3767 = vpop.f32.mrb[0].mxu0
    %v3768 = vadd.f32 0.0, %v3767
    %v3769 = vpop.f32.mrb[0].mxu0
    %v3770 = vadd.f32 0.0, %v3769
    %v3771 = vpop.f32.mrb[0].mxu0
    %v3772 = vadd.f32 0.0, %v3771
    %3773 = vdwg.mxu0
    %v3774 = vadd.f32 %v3277, %v3696
    %v3775 = vadd.f32 %v3279, %v3698
    %v3776 = vadd.f32 %v3281, %v3700
    %v3777 = vadd.f32 %v3283, %v3702
    %v3778 = vadd.f32 %v3287, %v3706
    %v3779 = vadd.f32 %v3289, %v3708
    %v3780 = vadd.f32 %v3291, %v3710
    %v3781 = vadd.f32 %v3293, %v3712
    %v3782 = vadd.f32 %v3297, %v3716
    %v3783 = vadd.f32 %v3299, %v3718
    %v3784 = vadd.f32 %v3301, %v3720
    %v3785 = vadd.f32 %v3303, %v3722
    %v3786 = vadd.f32 %v3307, %v3726
    %v3787 = vadd.f32 %v3309, %v3728
    %v3788 = vadd.f32 %v3311, %v3730
    %v3789 = vadd.f32 %v3313, %v3732
    %v3790 = vadd.f32 %v3317, %v3736
    %v3791 = vadd.f32 %v3319, %v3738
    %v3792 = vadd.f32 %v3321, %v3740
    %v3793 = vadd.f32 %v3323, %v3742
    %v3794 = vadd.f32 %v3327, %v3746
    %v3795 = vadd.f32 %v3329, %v3748
    %v3796 = vadd.f32 %v3331, %v3750
    %v3797 = vadd.f32 %v3333, %v3752
    %v3798 = vadd.f32 %v3337, %v3756
    %v3799 = vadd.f32 %v3339, %v3758
    %v3800 = vadd.f32 %v3341, %v3760
    %v3801 = vadd.f32 %v3343, %v3762
    %v3802 = vadd.f32 %v3347, %v3766
    %v3803 = vadd.f32 %v3349, %v3768
    %v3804 = vadd.f32 %v3351, %v3770
    %v3805 = vadd.f32 %v3353, %v3772
    %v3806 = vld [vmem:[%s8] sm:$0x3]
    %v3808 = vlaneseq
    %v3809 = vshrl.u32 %v3808, 7
    %v3810 = vsub.s32 0, %v3809
    %v3811 = vrot.slane %v3806, %v3810
    %v3812 = vlaneseq
    %v3813 = vshrl.u32 %v3812, 7
    %v3814 = vsub.s32 1, %v3813
    %v3815 = vrot.slane %v3806, %v3814
    %v3818 = vmul.f32 %v3774, %v3811
    %v3819 = vmul.f32 %v3775, %v3815
    %v3820 = vmul.f32 %v3776, %v3811
    %v3821 = vmul.f32 %v3777, %v3815
    %v3822 = vmul.f32 %v3778, %v3811
    %v3823 = vmul.f32 %v3779, %v3815
    %v3824 = vmul.f32 %v3780, %v3811
    %v3825 = vmul.f32 %v3781, %v3815
    %v3826 = vmul.f32 %v3782, %v3811
    %v3827 = vmul.f32 %v3783, %v3815
    %v3828 = vmul.f32 %v3784, %v3811
    %v3829 = vmul.f32 %v3785, %v3815
    %v3830 = vmul.f32 %v3786, %v3811
    %v3831 = vmul.f32 %v3787, %v3815
    %v3832 = vmul.f32 %v3788, %v3811
    %v3833 = vmul.f32 %v3789, %v3815
    %v3834 = vmul.f32 %v3790, %v3811
    %v3835 = vmul.f32 %v3791, %v3815
    %v3836 = vmul.f32 %v3792, %v3811
    %v3837 = vmul.f32 %v3793, %v3815
    %v3838 = vmul.f32 %v3794, %v3811
    %v3839 = vmul.f32 %v3795, %v3815
    %v3840 = vmul.f32 %v3796, %v3811
    %v3841 = vmul.f32 %v3797, %v3815
    %v3842 = vmul.f32 %v3798, %v3811
    %v3843 = vmul.f32 %v3799, %v3815
    %v3844 = vmul.f32 %v3800, %v3811
    %v3845 = vmul.f32 %v3801, %v3815
    %v3846 = vmul.f32 %v3802, %v3811
    %v3847 = vmul.f32 %v3803, %v3815
    %v3848 = vmul.f32 %v3804, %v3811
    %v3849 = vmul.f32 %v3805, %v3815
    %v3850 = vld [vmem:[%s9] sm:$0x3]
    %v3852 = vlaneseq
    %v3853 = vshrl.u32 %v3852, 7
    %v3854 = vsub.s32 0, %v3853
    %v3855 = vrot.slane %v3850, %v3854
    %v3856 = vlaneseq
    %v3857 = vshrl.u32 %v3856, 7
    %v3858 = vsub.s32 1, %v3857
    %v3859 = vrot.slane %v3850, %v3858
    %v3862 = vadd.f32 %v3818, %v3855
    %v3863 = vadd.f32 %v3819, %v3859
    %v3864 = vadd.f32 %v3820, %v3855
    %v3865 = vadd.f32 %v3821, %v3859
    %v3866 = vadd.f32 %v3822, %v3855
    %v3867 = vadd.f32 %v3823, %v3859
    %v3868 = vadd.f32 %v3824, %v3855
    %v3869 = vadd.f32 %v3825, %v3859
    %v3870 = vadd.f32 %v3826, %v3855
    %v3871 = vadd.f32 %v3827, %v3859
    %v3872 = vadd.f32 %v3828, %v3855
    %v3873 = vadd.f32 %v3829, %v3859
    %v3874 = vadd.f32 %v3830, %v3855
    %v3875 = vadd.f32 %v3831, %v3859
    %v3876 = vadd.f32 %v3832, %v3855
    %v3877 = vadd.f32 %v3833, %v3859
    %v3878 = vadd.f32 %v3834, %v3855
    %v3879 = vadd.f32 %v3835, %v3859
    %v3880 = vadd.f32 %v3836, %v3855
    %v3881 = vadd.f32 %v3837, %v3859
    %v3882 = vadd.f32 %v3838, %v3855
    %v3883 = vadd.f32 %v3839, %v3859
    %v3884 = vadd.f32 %v3840, %v3855
    %v3885 = vadd.f32 %v3841, %v3859
    %v3886 = vadd.f32 %v3842, %v3855
    %v3887 = vadd.f32 %v3843, %v3859
    %v3888 = vadd.f32 %v3844, %v3855
    %v3889 = vadd.f32 %v3845, %v3859
    %v3890 = vadd.f32 %v3846, %v3855
    %v3891 = vadd.f32 %v3847, %v3859
    %v3892 = vadd.f32 %v3848, %v3855
    %v3893 = vadd.f32 %v3849, %v3859
    %v3894 = vmax.f32 %v3862, 0.0
    %v3895 = vmax.f32 %v3863, 0.0
    %v3896 = vmax.f32 %v3864, 0.0
    %v3897 = vmax.f32 %v3865, 0.0
    %v3898 = vmax.f32 %v3866, 0.0
    %v3899 = vmax.f32 %v3867, 0.0
    %v3900 = vmax.f32 %v3868, 0.0
    %v3901 = vmax.f32 %v3869, 0.0
    %v3902 = vmax.f32 %v3870, 0.0
    %v3903 = vmax.f32 %v3871, 0.0
    %v3904 = vmax.f32 %v3872, 0.0
    %v3905 = vmax.f32 %v3873, 0.0
    %v3906 = vmax.f32 %v3874, 0.0
    %v3907 = vmax.f32 %v3875, 0.0
    %v3908 = vmax.f32 %v3876, 0.0
    %v3909 = vmax.f32 %v3877, 0.0
    %v3910 = vmax.f32 %v3878, 0.0
    %v3911 = vmax.f32 %v3879, 0.0
    %v3912 = vmax.f32 %v3880, 0.0
    %v3913 = vmax.f32 %v3881, 0.0
    %v3914 = vmax.f32 %v3882, 0.0
    %v3915 = vmax.f32 %v3883, 0.0
    %v3916 = vmax.f32 %v3884, 0.0
    %v3917 = vmax.f32 %v3885, 0.0
    %v3918 = vmax.f32 %v3886, 0.0
    %v3919 = vmax.f32 %v3887, 0.0
    %v3920 = vmax.f32 %v3888, 0.0
    %v3921 = vmax.f32 %v3889, 0.0
    %v3922 = vmax.f32 %v3890, 0.0
    %v3923 = vmax.f32 %v3891, 0.0
    %v3924 = vmax.f32 %v3892, 0.0
    %v3925 = vmax.f32 %v3893, 0.0
    %v3926 = vpack.c.bf16 %v3896, %v3894
    %v3927 = vpack.c.bf16 %v3897, %v3895
    %v3928 = vpack.c.bf16 %v3900, %v3898
    %v3929 = vpack.c.bf16 %v3901, %v3899
    %v3930 = vpack.c.bf16 %v3904, %v3902
    %v3931 = vpack.c.bf16 %v3905, %v3903
    %v3932 = vpack.c.bf16 %v3908, %v3906
    %v3933 = vpack.c.bf16 %v3909, %v3907
    %v3934 = vpack.c.bf16 %v3912, %v3910
    %v3935 = vpack.c.bf16 %v3913, %v3911
    %v3936 = vpack.c.bf16 %v3916, %v3914
    %v3937 = vpack.c.bf16 %v3917, %v3915
    %v3938 = vpack.c.bf16 %v3920, %v3918
    %v3939 = vpack.c.bf16 %v3921, %v3919
    %v3940 = vpack.c.bf16 %v3924, %v3922
    %v3941 = vpack.c.bf16 %v3925, %v3923
    %v3942 = vld [vmem:[%s10] sm:$0xf]
    %v3943 = vld [vmem:[%s10 + $0x4] sm:$0xf]
    %v3944 = vld [vmem:[%s10 + $0x8] sm:$0xf]
    %v3945 = vld [vmem:[%s10 + $0xc] sm:$0xf]
    %v3946 = vld [vmem:[%s10 + $0x10] sm:$0xf]
    %v3947 = vld [vmem:[%s10 + $0x14] sm:$0xf]
    %v3948 = vld [vmem:[%s10 + $0x18] sm:$0xf]
    %v3949 = vld [vmem:[%s10 + $0x1c] sm:$0xf]
    %v3950 = vld [vmem:[%s10 + $0x20] sm:$0xf]
    %v3951 = vld [vmem:[%s10 + $0x24] sm:$0xf]
    %v3952 = vld [vmem:[%s10 + $0x28] sm:$0xf]
    %v3953 = vld [vmem:[%s10 + $0x2c] sm:$0xf]
    %v3954 = vld [vmem:[%s10 + $0x30] sm:$0xf]
    %v3955 = vld [vmem:[%s10 + $0x34] sm:$0xf]
    %v3956 = vld [vmem:[%s10 + $0x38] sm:$0xf]
    %v3957 = vld [vmem:[%s10 + $0x3c] sm:$0xf]
    %v3958 = vld [vmem:[%s10 + $0x40] sm:$0xf]
    %v3959 = vld [vmem:[%s10 + $0x44] sm:$0xf]
    %v3960 = vld [vmem:[%s10 + $0x48] sm:$0xf]
    %v3961 = vld [vmem:[%s10 + $0x4c] sm:$0xf]
    %v3962 = vld [vmem:[%s10 + $0x50] sm:$0xf]
    %v3963 = vld [vmem:[%s10 + $0x54] sm:$0xf]
    %v3964 = vld [vmem:[%s10 + $0x58] sm:$0xf]
    %v3965 = vld [vmem:[%s10 + $0x5c] sm:$0xf]
    %v3998 = vrot.slane %v3894, 1
    %v3999 = vsel %vm237, %v3998, %v2664
    %v4000 = vrot.slane %v3895, 1
    %v4001 = vsel %vm237, %v4000, %v2664
    %v4002 = vrot.slane %v3896, 1
    %v4003 = vsel %vm237, %v4002, %v2664
    %v4004 = vrot.slane %v3897, 1
    %v4005 = vsel %vm237, %v4004, %v2664
    %v4006 = vrot.slane %v3898, 1
    %v4007 = vsel %vm237, %v4006, %v2664
    %v4008 = vrot.slane %v3899, 1
    %v4009 = vsel %vm237, %v4008, %v2664
    %v4010 = vrot.slane %v3900, 1
    %v4011 = vsel %vm237, %v4010, %v2664
    %v4012 = vrot.slane %v3901, 1
    %v4013 = vsel %vm237, %v4012, %v2664
    %v4014 = vrot.slane %v3902, 1
    %v4015 = vsel %vm237, %v4014, %v2664
    %v4016 = vrot.slane %v3903, 1
    %v4017 = vsel %vm237, %v4016, %v2664
    %v4018 = vrot.slane %v3904, 1
    %v4019 = vsel %vm237, %v4018, %v2664
    %v4020 = vrot.slane %v3905, 1
    %v4021 = vsel %vm237, %v4020, %v2664
    %v4022 = vrot.slane %v3906, 1
    %v4023 = vsel %vm237, %v4022, %v2664
    %v4024 = vrot.slane %v3907, 1
    %v4025 = vsel %vm237, %v4024, %v2664
    %v4026 = vrot.slane %v3908, 1
    %v4027 = vsel %vm237, %v4026, %v2664
    %v4028 = vrot.slane %v3909, 1
    %v4029 = vsel %vm237, %v4028, %v2664
    %v4030 = vrot.slane %v3910, 1
    %v4031 = vsel %vm237, %v4030, %v2664
    %v4032 = vrot.slane %v3911, 1
    %v4033 = vsel %vm237, %v4032, %v2664
    %v4034 = vrot.slane %v3912, 1
    %v4035 = vsel %vm237, %v4034, %v2664
    %v4036 = vrot.slane %v3913, 1
    %v4037 = vsel %vm237, %v4036, %v2664
    %v4038 = vrot.slane %v3914, 1
    %v4039 = vsel %vm237, %v4038, %v2664
    %v4040 = vrot.slane %v3915, 1
    %v4041 = vsel %vm237, %v4040, %v2664
    %v4042 = vrot.slane %v3916, 1
    %v4043 = vsel %vm237, %v4042, %v2664
    %v4044 = vrot.slane %v3917, 1
    %v4045 = vsel %vm237, %v4044, %v2664
    %v4046 = vrot.slane %v3918, 1
    %v4047 = vsel %vm237, %v4046, %v2664
    %v4048 = vrot.slane %v3919, 1
    %v4049 = vsel %vm237, %v4048, %v2664
    %v4050 = vrot.slane %v3920, 1
    %v4051 = vsel %vm237, %v4050, %v2664
    %v4052 = vrot.slane %v3921, 1
    %v4053 = vsel %vm237, %v4052, %v2664
    %v4054 = vrot.slane %v3922, 1
    %v4055 = vsel %vm237, %v4054, %v2664
    %v4056 = vrot.slane %v3923, 1
    %v4057 = vsel %vm237, %v4056, %v2664
    %v4058 = vrot.slane %v3924, 1
    %v4059 = vsel %vm237, %v4058, %v2664
    %v4060 = vrot.slane %v3925, 1
    %v4061 = vsel %vm237, %v4060, %v2664
    %v4094 = vpack.c.bf16 %v4003, %v3999
    %v4095 = vpack.c.bf16 %v4005, %v4001
    %v4096 = vpack.c.bf16 %v4011, %v4007
    %v4097 = vpack.c.bf16 %v4013, %v4009
    %v4098 = vpack.c.bf16 %v4019, %v4015
    %v4099 = vpack.c.bf16 %v4021, %v4017
    %v4100 = vpack.c.bf16 %v4027, %v4023
    %v4101 = vpack.c.bf16 %v4029, %v4025
    %v4102 = vpack.c.bf16 %v4035, %v4031
    %v4103 = vpack.c.bf16 %v4037, %v4033
    %v4104 = vpack.c.bf16 %v4043, %v4039
    %v4105 = vpack.c.bf16 %v4045, %v4041
    %v4106 = vpack.c.bf16 %v4051, %v4047
    %v4107 = vpack.c.bf16 %v4053, %v4049
    %v4108 = vpack.c.bf16 %v4059, %v4055
    %v4109 = vpack.c.bf16 %v4061, %v4057
    %s4110 = scalar_lea.vmem %s10, 96
    %v4111 = vld [vmem:[%s4110] sm:$0xf]
    %v4112 = vld [vmem:[%s4110 + $0x4] sm:$0xf]
    %v4113 = vld [vmem:[%s4110 + $0x8] sm:$0xf]
    %v4114 = vld [vmem:[%s4110 + $0xc] sm:$0xf]
    %v4115 = vld [vmem:[%s4110 + $0x10] sm:$0xf]
    %v4116 = vld [vmem:[%s4110 + $0x14] sm:$0xf]
    %v4117 = vld [vmem:[%s4110 + $0x18] sm:$0xf]
    %v4118 = vld [vmem:[%s4110 + $0x1c] sm:$0xf]
    %v4119 = vld [vmem:[%s4110 + $0x20] sm:$0xf]
    %v4120 = vld [vmem:[%s4110 + $0x24] sm:$0xf]
    %v4121 = vld [vmem:[%s4110 + $0x28] sm:$0xf]
    %v4122 = vld [vmem:[%s4110 + $0x2c] sm:$0xf]
    %v4123 = vld [vmem:[%s4110 + $0x30] sm:$0xf]
    %v4124 = vld [vmem:[%s4110 + $0x34] sm:$0xf]
    %v4125 = vld [vmem:[%s4110 + $0x38] sm:$0xf]
    %v4126 = vld [vmem:[%s4110 + $0x3c] sm:$0xf]
    %v4127 = vld [vmem:[%s4110 + $0x40] sm:$0xf]
    %v4128 = vld [vmem:[%s4110 + $0x44] sm:$0xf]
    %v4129 = vld [vmem:[%s4110 + $0x48] sm:$0xf]
    %v4130 = vld [vmem:[%s4110 + $0x4c] sm:$0xf]
    %v4131 = vld [vmem:[%s4110 + $0x50] sm:$0xf]
    %v4132 = vld [vmem:[%s4110 + $0x54] sm:$0xf]
    %v4133 = vld [vmem:[%s4110 + $0x58] sm:$0xf]
    %v4134 = vld [vmem:[%s4110 + $0x5c] sm:$0xf]
    %v4159 = vunpack.c.l.b16 %v4111
    %v4160 = vunpack.c.l.b16 %v4112
    %v4161 = vunpack.c.l.b16 %v4113
    %v4162 = vunpack.c.l.b16 %v4114
    %v4163 = vunpack.c.l.b16 %v4115
    %v4164 = vunpack.c.l.b16 %v4116
    %v4165 = vunpack.c.l.b16 %v4117
    %v4166 = vunpack.c.l.b16 %v4118
    %v4167 = vunpack.c.l.b16 %v4119
    %v4168 = vunpack.c.l.b16 %v4120
    %v4169 = vunpack.c.l.b16 %v4121
    %v4170 = vunpack.c.l.b16 %v4122
    %v4171 = vunpack.c.l.b16 %v4123
    %v4172 = vunpack.c.l.b16 %v4124
    %v4173 = vunpack.c.l.b16 %v4125
    %v4174 = vunpack.c.l.b16 %v4126
    %v4175 = vunpack.c.l.b16 %v4127
    %v4176 = vunpack.c.l.b16 %v4128
    %v4177 = vunpack.c.l.b16 %v4129
    %v4178 = vunpack.c.l.b16 %v4130
    %v4179 = vunpack.c.l.b16 %v4131
    %v4180 = vunpack.c.l.b16 %v4132
    %v4181 = vunpack.c.l.b16 %v4133
    %v4182 = vunpack.c.l.b16 %v4134
    %v4183 = vpack.c.b16 %v4160, %v4159
    %v4184 = vpack.c.b16 %v4162, %v4161
    %v4185 = vpack.c.b16 %v4164, %v4163
    %v4186 = vpack.c.b16 %v4166, %v4165
    %v4187 = vpack.c.b16 %v4168, %v4167
    %v4188 = vpack.c.b16 %v4170, %v4169
    %v4189 = vpack.c.b16 %v4172, %v4171
    %v4190 = vpack.c.b16 %v4174, %v4173
    %v4191 = vpack.c.b16 %v4176, %v4175
    %v4192 = vpack.c.b16 %v4178, %v4177
    %v4193 = vpack.c.b16 %v4180, %v4179
    %v4194 = vpack.c.b16 %v4182, %v4181
    %vm4207 = vcmask 523264
    %v4209 = vsel %vm4207, %v4095, 0
    %v4212 = vsel %vm4207, %v4097, 0
    %v4215 = vsel %vm4207, %v4099, 0
    %v4218 = vsel %vm4207, %v4101, 0
    %v4221 = vsel %vm4207, %v4103, 0
    %v4224 = vsel %vm4207, %v4105, 0
    %v4227 = vsel %vm4207, %v4107, 0
    %v4230 = vsel %vm4207, %v4109, 0
    %4232 = vmatprep.subr.bf16.mxu0 0
    %4233 = vmatpush1.bf16.msra.mxu0 %v4183
    %4234 = vmatprep.subr.bf16.mxu0 0
    %4235 = vmatpush1.bf16.msra.mxu0 %v4184
    %4236 = vmatprep.subr.bf16.mxu0 0
    %4237 = vmatpush1.bf16.msra.mxu0 %v4185
    %4238 = vmatprep.subr.bf16.mxu0 0
    %4239 = vmatpush1.bf16.msra.mxu0 %v4186
    %4240 = vmatprep.subr.bf16.mxu0 0
    %4241 = vmatpush1.bf16.msra.mxu0 %v4187
    %4242 = vmatprep.subr.bf16.mxu0 0
    %4243 = vmatpush1.bf16.msra.mxu0 %v4188
    %4244 = vmatprep.subr.bf16.mxu0 0
    %4245 = vmatpush1.bf16.msra.mxu0 %v4189
    %4246 = vmatprep.subr.bf16.mxu0 0
    %4247 = vmatpush1.bf16.msra.mxu0 %v4190
    %4248 = vmatprep.subr.bf16.mxu0 0
    %4249 = vmatpush1.bf16.msra.mxu0 %v4191
    %4250 = vmatprep.subr.bf16.mxu0 0
    %4251 = vmatpush1.bf16.msra.mxu0 %v4192
    %4252 = vmatprep.subr.bf16.mxu0 0
    %4253 = vmatpush1.bf16.msra.mxu0 %v4193
    %4254 = vmatprep.subr.bf16.mxu0 0
    %4255 = vmatpush1.bf16.msra.mxu0 %v4194
    %4256 = vmatprep.subr.bf16.mxu0 0
    %4257 = vmatpush1.bf16.msra.mxu0 0
    %4258 = vmatprep.subr.bf16.mxu0 0
    %4259 = vmatpush1.bf16.msra.mxu0 0
    %4260 = vmatprep.subr.bf16.mxu0 0
    %4261 = vmatpush1.bf16.msra.mxu0 0
    %4262 = vmatprep.subr.bf16.mxu0 0
    %4263 = vmatpush1.bf16.msra.mxu0 0
    %4264 = vmatprep.mubr.bf16.mxu0 %v4209
    %4265 = vmatmul.mubr.bf16.gmra.mrb[0].mxu0 %v4094
    %v4266 = vpop.f32.mrb[0].mxu0
    %v4267 = vadd.f32 0.0, %v4266
    %v4268 = vpop.f32.mrb[0].mxu0
    %v4269 = vpop.f32.mrb[0].mxu0
    %v4270 = vadd.f32 0.0, %v4269
    %v4271 = vpop.f32.mrb[0].mxu0
    %4272 = vmatprep.mubr.bf16.mxu0 %v4212
    %4273 = vmatmul.mubr.bf16.gmra.mrb[0].mxu0 %v4096
    %v4274 = vpop.f32.mrb[0].mxu0
    %v4275 = vadd.f32 0.0, %v4274
    %v4276 = vpop.f32.mrb[0].mxu0
    %v4277 = vpop.f32.mrb[0].mxu0
    %v4278 = vadd.f32 0.0, %v4277
    %v4279 = vpop.f32.mrb[0].mxu0
    %4280 = vmatprep.mubr.bf16.mxu0 %v4215
    %4281 = vmatmul.mubr.bf16.gmra.mrb[0].mxu0 %v4098
    %v4282 = vpop.f32.mrb[0].mxu0
    %v4283 = vadd.f32 0.0, %v4282
    %v4284 = vpop.f32.mrb[0].mxu0
    %v4285 = vpop.f32.mrb[0].mxu0
    %v4286 = vadd.f32 0.0, %v4285
    %v4287 = vpop.f32.mrb[0].mxu0
    %4288 = vmatprep.mubr.bf16.mxu0 %v4218
    %4289 = vmatmul.mubr.bf16.gmra.mrb[0].mxu0 %v4100
    %v4290 = vpop.f32.mrb[0].mxu0
    %v4291 = vadd.f32 0.0, %v4290
    %v4292 = vpop.f32.mrb[0].mxu0
    %v4293 = vpop.f32.mrb[0].mxu0
    %v4294 = vadd.f32 0.0, %v4293
    %v4295 = vpop.f32.mrb[0].mxu0
    %4296 = vmatprep.mubr.bf16.mxu0 %v4221
    %4297 = vmatmul.mubr.bf16.gmra.mrb[0].mxu0 %v4102
    %v4298 = vpop.f32.mrb[0].mxu0
    %v4299 = vadd.f32 0.0, %v4298
    %v4300 = vpop.f32.mrb[0].mxu0
    %v4301 = vpop.f32.mrb[0].mxu0
    %v4302 = vadd.f32 0.0, %v4301
    %v4303 = vpop.f32.mrb[0].mxu0
    %4304 = vmatprep.mubr.bf16.mxu0 %v4224
    %4305 = vmatmul.mubr.bf16.gmra.mrb[0].mxu0 %v4104
    %v4306 = vpop.f32.mrb[0].mxu0
    %v4307 = vadd.f32 0.0, %v4306
    %v4308 = vpop.f32.mrb[0].mxu0
    %v4309 = vpop.f32.mrb[0].mxu0
    %v4310 = vadd.f32 0.0, %v4309
    %v4311 = vpop.f32.mrb[0].mxu0
    %4312 = vmatprep.mubr.bf16.mxu0 %v4227
    %4313 = vmatmul.mubr.bf16.gmra.mrb[0].mxu0 %v4106
    %v4314 = vpop.f32.mrb[0].mxu0
    %v4315 = vadd.f32 0.0, %v4314
    %v4316 = vpop.f32.mrb[0].mxu0
    %v4317 = vpop.f32.mrb[0].mxu0
    %v4318 = vadd.f32 0.0, %v4317
    %v4319 = vpop.f32.mrb[0].mxu0
    %4320 = vmatprep.mubr.bf16.mxu0 %v4230
    %4321 = vmatmul.mubr.bf16.gmra.mrb[0].mxu0 %v4108
    %v4322 = vpop.f32.mrb[0].mxu0
    %v4323 = vadd.f32 0.0, %v4322
    %v4324 = vpop.f32.mrb[0].mxu0
    %v4325 = vpop.f32.mrb[0].mxu0
    %v4326 = vadd.f32 0.0, %v4325
    %v4327 = vpop.f32.mrb[0].mxu0
    %4328 = vdwg.mxu0
    %v4353 = vunpack.c.l.b16 %v3942
    %v4354 = vunpack.c.l.b16 %v3943
    %v4355 = vunpack.c.l.b16 %v3944
    %v4356 = vunpack.c.l.b16 %v3945
    %v4357 = vunpack.c.l.b16 %v3946
    %v4358 = vunpack.c.l.b16 %v3947
    %v4359 = vunpack.c.l.b16 %v3948
    %v4360 = vunpack.c.l.b16 %v3949
    %v4361 = vunpack.c.l.b16 %v3950
    %v4362 = vunpack.c.l.b16 %v3951
    %v4363 = vunpack.c.l.b16 %v3952
    %v4364 = vunpack.c.l.b16 %v3953
    %v4365 = vunpack.c.l.b16 %v3954
    %v4366 = vunpack.c.l.b16 %v3955
    %v4367 = vunpack.c.l.b16 %v3956
    %v4368 = vunpack.c.l.b16 %v3957
    %v4369 = vunpack.c.l.b16 %v3958
    %v4370 = vunpack.c.l.b16 %v3959
    %v4371 = vunpack.c.l.b16 %v3960
    %v4372 = vunpack.c.l.b16 %v3961
    %v4373 = vunpack.c.l.b16 %v3962
    %v4374 = vunpack.c.l.b16 %v3963
    %v4375 = vunpack.c.l.b16 %v3964
    %v4376 = vunpack.c.l.b16 %v3965
    %v4377 = vpack.c.b16 %v4354, %v4353
    %v4378 = vpack.c.b16 %v4356, %v4355
    %v4379 = vpack.c.b16 %v4358, %v4357
    %v4380 = vpack.c.b16 %v4360, %v4359
    %v4381 = vpack.c.b16 %v4362, %v4361
    %v4382 = vpack.c.b16 %v4364, %v4363
    %v4383 = vpack.c.b16 %v4366, %v4365
    %v4384 = vpack.c.b16 %v4368, %v4367
    %v4385 = vpack.c.b16 %v4370, %v4369
    %v4386 = vpack.c.b16 %v4372, %v4371
    %v4387 = vpack.c.b16 %v4374, %v4373
    %v4388 = vpack.c.b16 %v4376, %v4375
    %v4402 = vsel %vm4207, %v3927, 0
    %v4405 = vsel %vm4207, %v3929, 0
    %v4408 = vsel %vm4207, %v3931, 0
    %v4411 = vsel %vm4207, %v3933, 0
    %v4414 = vsel %vm4207, %v3935, 0
    %v4417 = vsel %vm4207, %v3937, 0
    %v4420 = vsel %vm4207, %v3939, 0
    %v4423 = vsel %vm4207, %v3941, 0
    %4425 = vmatprep.subr.bf16.mxu0 0
    %4426 = vmatpush1.bf16.msra.mxu0 %v4377
    %4427 = vmatprep.subr.bf16.mxu0 0
    %4428 = vmatpush1.bf16.msra.mxu0 %v4378
    %4429 = vmatprep.subr.bf16.mxu0 0
    %4430 = vmatpush1.bf16.msra.mxu0 %v4379
    %4431 = vmatprep.subr.bf16.mxu0 0
    %4432 = vmatpush1.bf16.msra.mxu0 %v4380
    %4433 = vmatprep.subr.bf16.mxu0 0
    %4434 = vmatpush1.bf16.msra.mxu0 %v4381
    %4435 = vmatprep.subr.bf16.mxu0 0
    %4436 = vmatpush1.bf16.msra.mxu0 %v4382
    %4437 = vmatprep.subr.bf16.mxu0 0
    %4438 = vmatpush1.bf16.msra.mxu0 %v4383
    %4439 = vmatprep.subr.bf16.mxu0 0
    %4440 = vmatpush1.bf16.msra.mxu0 %v4384
    %4441 = vmatprep.subr.bf16.mxu0 0
    %4442 = vmatpush1.bf16.msra.mxu0 %v4385
    %4443 = vmatprep.subr.bf16.mxu0 0
    %4444 = vmatpush1.bf16.msra.mxu0 %v4386
    %4445 = vmatprep.subr.bf16.mxu0 0
    %4446 = vmatpush1.bf16.msra.mxu0 %v4387
    %4447 = vmatprep.subr.bf16.mxu0 0
    %4448 = vmatpush1.bf16.msra.mxu0 %v4388
    %4449 = vmatprep.subr.bf16.mxu0 0
    %4450 = vmatpush1.bf16.msra.mxu0 0
    %4451 = vmatprep.subr.bf16.mxu0 0
    %4452 = vmatpush1.bf16.msra.mxu0 0
    %4453 = vmatprep.subr.bf16.mxu0 0
    %4454 = vmatpush1.bf16.msra.mxu0 0
    %4455 = vmatprep.subr.bf16.mxu0 0
    %4456 = vmatpush1.bf16.msra.mxu0 0
    %4457 = vmatprep.mubr.bf16.mxu0 %v4402
    %4458 = vmatmul.mubr.bf16.gmra.mrb[0].mxu0 %v3926
    %v4459 = vpop.f32.mrb[0].mxu0
    %v4460 = vadd.f32 %v4267, %v4459
    %v4461 = vpop.f32.mrb[0].mxu0
    %v4462 = vpop.f32.mrb[0].mxu0
    %v4463 = vadd.f32 %v4270, %v4462
    %v4464 = vpop.f32.mrb[0].mxu0
    %4465 = vmatprep.mubr.bf16.mxu0 %v4405
    %4466 = vmatmul.mubr.bf16.gmra.mrb[0].mxu0 %v3928
    %v4467 = vpop.f32.mrb[0].mxu0
    %v4468 = vadd.f32 %v4275, %v4467
    %v4469 = vpop.f32.mrb[0].mxu0
    %v4470 = vpop.f32.mrb[0].mxu0
    %v4471 = vadd.f32 %v4278, %v4470
    %v4472 = vpop.f32.mrb[0].mxu0
    %4473 = vmatprep.mubr.bf16.mxu0 %v4408
    %4474 = vmatmul.mubr.bf16.gmra.mrb[0].mxu0 %v3930
    %v4475 = vpop.f32.mrb[0].mxu0
    %v4476 = vadd.f32 %v4283, %v4475
    %v4477 = vpop.f32.mrb[0].mxu0
    %v4478 = vpop.f32.mrb[0].mxu0
    %v4479 = vadd.f32 %v4286, %v4478
    %v4480 = vpop.f32.mrb[0].mxu0
    %4481 = vmatprep.mubr.bf16.mxu0 %v4411
    %4482 = vmatmul.mubr.bf16.gmra.mrb[0].mxu0 %v3932
    %v4483 = vpop.f32.mrb[0].mxu0
    %v4484 = vadd.f32 %v4291, %v4483
    %v4485 = vpop.f32.mrb[0].mxu0
    %v4486 = vpop.f32.mrb[0].mxu0
    %v4487 = vadd.f32 %v4294, %v4486
    %v4488 = vpop.f32.mrb[0].mxu0
    %4489 = vmatprep.mubr.bf16.mxu0 %v4414
    %4490 = vmatmul.mubr.bf16.gmra.mrb[0].mxu0 %v3934
    %v4491 = vpop.f32.mrb[0].mxu0
    %v4492 = vadd.f32 %v4299, %v4491
    %v4493 = vpop.f32.mrb[0].mxu0
    %v4494 = vpop.f32.mrb[0].mxu0
    %v4495 = vadd.f32 %v4302, %v4494
    %v4496 = vpop.f32.mrb[0].mxu0
    %4497 = vmatprep.mubr.bf16.mxu0 %v4417
    %4498 = vmatmul.mubr.bf16.gmra.mrb[0].mxu0 %v3936
    %v4499 = vpop.f32.mrb[0].mxu0
    %v4500 = vadd.f32 %v4307, %v4499
    %v4501 = vpop.f32.mrb[0].mxu0
    %v4502 = vpop.f32.mrb[0].mxu0
    %v4503 = vadd.f32 %v4310, %v4502
    %v4504 = vpop.f32.mrb[0].mxu0
    %4505 = vmatprep.mubr.bf16.mxu0 %v4420
    %4506 = vmatmul.mubr.bf16.gmra.mrb[0].mxu0 %v3938
    %v4507 = vpop.f32.mrb[0].mxu0
    %v4508 = vadd.f32 %v4315, %v4507
    %v4509 = vpop.f32.mrb[0].mxu0
    %v4510 = vpop.f32.mrb[0].mxu0
    %v4511 = vadd.f32 %v4318, %v4510
    %v4512 = vpop.f32.mrb[0].mxu0
    %4513 = vmatprep.mubr.bf16.mxu0 %v4423
    %4514 = vmatmul.mubr.bf16.gmra.mrb[0].mxu0 %v3940
    %v4515 = vpop.f32.mrb[0].mxu0
    %v4516 = vadd.f32 %v4323, %v4515
    %v4517 = vpop.f32.mrb[0].mxu0
    %v4518 = vpop.f32.mrb[0].mxu0
    %v4519 = vadd.f32 %v4326, %v4518
    %v4520 = vpop.f32.mrb[0].mxu0
    %4521 = vdwg.mxu0
    %v4522 = vrot.slane %v3894, 2
    %v4523 = vsel %vm610, %v4522, %v3356
    %v4524 = vrot.slane %v3895, 2
    %v4525 = vsel %vm610, %v4524, %v3356
    %v4526 = vrot.slane %v3896, 2
    %v4527 = vsel %vm610, %v4526, %v3356
    %v4528 = vrot.slane %v3897, 2
    %v4529 = vsel %vm610, %v4528, %v3356
    %v4530 = vrot.slane %v3898, 2
    %v4531 = vsel %vm610, %v4530, %v3356
    %v4532 = vrot.slane %v3899, 2
    %v4533 = vsel %vm610, %v4532, %v3356
    %v4534 = vrot.slane %v3900, 2
    %v4535 = vsel %vm610, %v4534, %v3356
    %v4536 = vrot.slane %v3901, 2
    %v4537 = vsel %vm610, %v4536, %v3356
    %v4538 = vrot.slane %v3902, 2
    %v4539 = vsel %vm610, %v4538, %v3356
    %v4540 = vrot.slane %v3903, 2
    %v4541 = vsel %vm610, %v4540, %v3356
    %v4542 = vrot.slane %v3904, 2
    %v4543 = vsel %vm610, %v4542, %v3356
    %v4544 = vrot.slane %v3905, 2
    %v4545 = vsel %vm610, %v4544, %v3356
    %v4546 = vrot.slane %v3906, 2
    %v4547 = vsel %vm610, %v4546, %v3356
    %v4548 = vrot.slane %v3907, 2
    %v4549 = vsel %vm610, %v4548, %v3356
    %v4550 = vrot.slane %v3908, 2
    %v4551 = vsel %vm610, %v4550, %v3356
    %v4552 = vrot.slane %v3909, 2
    %v4553 = vsel %vm610, %v4552, %v3356
    %v4554 = vrot.slane %v3910, 2
    %v4555 = vsel %vm610, %v4554, %v3356
    %v4556 = vrot.slane %v3911, 2
    %v4557 = vsel %vm610, %v4556, %v3356
    %v4558 = vrot.slane %v3912, 2
    %v4559 = vsel %vm610, %v4558, %v3356
    %v4560 = vrot.slane %v3913, 2
    %v4561 = vsel %vm610, %v4560, %v3356
    %v4562 = vrot.slane %v3914, 2
    %v4563 = vsel %vm610, %v4562, %v3356
    %v4564 = vrot.slane %v3915, 2
    %v4565 = vsel %vm610, %v4564, %v3356
    %v4566 = vrot.slane %v3916, 2
    %v4567 = vsel %vm610, %v4566, %v3356
    %v4568 = vrot.slane %v3917, 2
    %v4569 = vsel %vm610, %v4568, %v3356
    %v4570 = vrot.slane %v3918, 2
    %v4571 = vsel %vm610, %v4570, %v3356
    %v4572 = vrot.slane %v3919, 2
    %v4573 = vsel %vm610, %v4572, %v3356
    %v4574 = vrot.slane %v3920, 2
    %v4575 = vsel %vm610, %v4574, %v3356
    %v4576 = vrot.slane %v3921, 2
    %v4577 = vsel %vm610, %v4576, %v3356
    %v4578 = vrot.slane %v3922, 2
    %v4579 = vsel %vm610, %v4578, %v3356
    %v4580 = vrot.slane %v3923, 2
    %v4581 = vsel %vm610, %v4580, %v3356
    %v4582 = vrot.slane %v3924, 2
    %v4583 = vsel %vm610, %v4582, %v3356
    %v4584 = vrot.slane %v3925, 2
    %v4585 = vsel %vm610, %v4584, %v3356
    %v4618 = vpack.c.bf16 %v4527, %v4523
    %v4619 = vpack.c.bf16 %v4529, %v4525
    %v4620 = vpack.c.bf16 %v4535, %v4531
    %v4621 = vpack.c.bf16 %v4537, %v4533
    %v4622 = vpack.c.bf16 %v4543, %v4539
    %v4623 = vpack.c.bf16 %v4545, %v4541
    %v4624 = vpack.c.bf16 %v4551, %v4547
    %v4625 = vpack.c.bf16 %v4553, %v4549
    %v4626 = vpack.c.bf16 %v4559, %v4555
    %v4627 = vpack.c.bf16 %v4561, %v4557
    %v4628 = vpack.c.bf16 %v4567, %v4563
    %v4629 = vpack.c.bf16 %v4569, %v4565
    %v4630 = vpack.c.bf16 %v4575, %v4571
    %v4631 = vpack.c.bf16 %v4577, %v4573
    %v4632 = vpack.c.bf16 %v4583, %v4579
    %v4633 = vpack.c.bf16 %v4585, %v4581
    %s4634 = scalar_lea.vmem %s10, 192
    %v4635 = vld [vmem:[%s4634] sm:$0xf]
    %v4636 = vld [vmem:[%s4634 + $0x4] sm:$0xf]
    %v4637 = vld [vmem:[%s4634 + $0x8] sm:$0xf]
    %v4638 = vld [vmem:[%s4634 + $0xc] sm:$0xf]
    %v4639 = vld [vmem:[%s4634 + $0x10] sm:$0xf]
    %v4640 = vld [vmem:[%s4634 + $0x14] sm:$0xf]
    %v4641 = vld [vmem:[%s4634 + $0x18] sm:$0xf]
    %v4642 = vld [vmem:[%s4634 + $0x1c] sm:$0xf]
    %v4643 = vld [vmem:[%s4634 + $0x20] sm:$0xf]
    %v4644 = vld [vmem:[%s4634 + $0x24] sm:$0xf]
    %v4645 = vld [vmem:[%s4634 + $0x28] sm:$0xf]
    %v4646 = vld [vmem:[%s4634 + $0x2c] sm:$0xf]
    %v4647 = vld [vmem:[%s4634 + $0x30] sm:$0xf]
    %v4648 = vld [vmem:[%s4634 + $0x34] sm:$0xf]
    %v4649 = vld [vmem:[%s4634 + $0x38] sm:$0xf]
    %v4650 = vld [vmem:[%s4634 + $0x3c] sm:$0xf]
    %v4651 = vld [vmem:[%s4634 + $0x40] sm:$0xf]
    %v4652 = vld [vmem:[%s4634 + $0x44] sm:$0xf]
    %v4653 = vld [vmem:[%s4634 + $0x48] sm:$0xf]
    %v4654 = vld [vmem:[%s4634 + $0x4c] sm:$0xf]
    %v4655 = vld [vmem:[%s4634 + $0x50] sm:$0xf]
    %v4656 = vld [vmem:[%s4634 + $0x54] sm:$0xf]
    %v4657 = vld [vmem:[%s4634 + $0x58] sm:$0xf]
    %v4658 = vld [vmem:[%s4634 + $0x5c] sm:$0xf]
    %v4683 = vunpack.c.l.b16 %v4635
    %v4684 = vunpack.c.l.b16 %v4636
    %v4685 = vunpack.c.l.b16 %v4637
    %v4686 = vunpack.c.l.b16 %v4638
    %v4687 = vunpack.c.l.b16 %v4639
    %v4688 = vunpack.c.l.b16 %v4640
    %v4689 = vunpack.c.l.b16 %v4641
    %v4690 = vunpack.c.l.b16 %v4642
    %v4691 = vunpack.c.l.b16 %v4643
    %v4692 = vunpack.c.l.b16 %v4644
    %v4693 = vunpack.c.l.b16 %v4645
    %v4694 = vunpack.c.l.b16 %v4646
    %v4695 = vunpack.c.l.b16 %v4647
    %v4696 = vunpack.c.l.b16 %v4648
    %v4697 = vunpack.c.l.b16 %v4649
    %v4698 = vunpack.c.l.b16 %v4650
    %v4699 = vunpack.c.l.b16 %v4651
    %v4700 = vunpack.c.l.b16 %v4652
    %v4701 = vunpack.c.l.b16 %v4653
    %v4702 = vunpack.c.l.b16 %v4654
    %v4703 = vunpack.c.l.b16 %v4655
    %v4704 = vunpack.c.l.b16 %v4656
    %v4705 = vunpack.c.l.b16 %v4657
    %v4706 = vunpack.c.l.b16 %v4658
    %v4707 = vpack.c.b16 %v4684, %v4683
    %v4708 = vpack.c.b16 %v4686, %v4685
    %v4709 = vpack.c.b16 %v4688, %v4687
    %v4710 = vpack.c.b16 %v4690, %v4689
    %v4711 = vpack.c.b16 %v4692, %v4691
    %v4712 = vpack.c.b16 %v4694, %v4693
    %v4713 = vpack.c.b16 %v4696, %v4695
    %v4714 = vpack.c.b16 %v4698, %v4697
    %v4715 = vpack.c.b16 %v4700, %v4699
    %v4716 = vpack.c.b16 %v4702, %v4701
    %v4717 = vpack.c.b16 %v4704, %v4703
    %v4718 = vpack.c.b16 %v4706, %v4705
    %v4732 = vsel %vm4207, %v4619, 0
    %v4735 = vsel %vm4207, %v4621, 0
    %v4738 = vsel %vm4207, %v4623, 0
    %v4741 = vsel %vm4207, %v4625, 0
    %v4744 = vsel %vm4207, %v4627, 0
    %v4747 = vsel %vm4207, %v4629, 0
    %v4750 = vsel %vm4207, %v4631, 0
    %v4753 = vsel %vm4207, %v4633, 0
    %4755 = vmatprep.subr.bf16.mxu0 0
    %4756 = vmatpush1.bf16.msra.mxu0 %v4707
    %4757 = vmatprep.subr.bf16.mxu0 0
    %4758 = vmatpush1.bf16.msra.mxu0 %v4708
    %4759 = vmatprep.subr.bf16.mxu0 0
    %4760 = vmatpush1.bf16.msra.mxu0 %v4709
    %4761 = vmatprep.subr.bf16.mxu0 0
    %4762 = vmatpush1.bf16.msra.mxu0 %v4710
    %4763 = vmatprep.subr.bf16.mxu0 0
    %4764 = vmatpush1.bf16.msra.mxu0 %v4711
    %4765 = vmatprep.subr.bf16.mxu0 0
    %4766 = vmatpush1.bf16.msra.mxu0 %v4712
    %4767 = vmatprep.subr.bf16.mxu0 0
    %4768 = vmatpush1.bf16.msra.mxu0 %v4713
    %4769 = vmatprep.subr.bf16.mxu0 0
    %4770 = vmatpush1.bf16.msra.mxu0 %v4714
    %4771 = vmatprep.subr.bf16.mxu0 0
    %4772 = vmatpush1.bf16.msra.mxu0 %v4715
    %4773 = vmatprep.subr.bf16.mxu0 0
    %4774 = vmatpush1.bf16.msra.mxu0 %v4716
    %4775 = vmatprep.subr.bf16.mxu0 0
    %4776 = vmatpush1.bf16.msra.mxu0 %v4717
    %4777 = vmatprep.subr.bf16.mxu0 0
    %4778 = vmatpush1.bf16.msra.mxu0 %v4718
    %4779 = vmatprep.subr.bf16.mxu0 0
    %4780 = vmatpush1.bf16.msra.mxu0 0
    %4781 = vmatprep.subr.bf16.mxu0 0
    %4782 = vmatpush1.bf16.msra.mxu0 0
    %4783 = vmatprep.subr.bf16.mxu0 0
    %4784 = vmatpush1.bf16.msra.mxu0 0
    %4785 = vmatprep.subr.bf16.mxu0 0
    %4786 = vmatpush1.bf16.msra.mxu0 0
    %4787 = vmatprep.mubr.bf16.mxu0 %v4732
    %4788 = vmatmul.mubr.bf16.gmra.mrb[0].mxu0 %v4618
    %v4789 = vpop.f32.mrb[0].mxu0
    %v4790 = vadd.f32 0.0, %v4789
    %v4791 = vpop.f32.mrb[0].mxu0
    %v4792 = vpop.f32.mrb[0].mxu0
    %v4793 = vadd.f32 0.0, %v4792
    %v4794 = vpop.f32.mrb[0].mxu0
    %4795 = vmatprep.mubr.bf16.mxu0 %v4735
    %4796 = vmatmul.mubr.bf16.gmra.mrb[0].mxu0 %v4620
    %v4797 = vpop.f32.mrb[0].mxu0
    %v4798 = vadd.f32 0.0, %v4797
    %v4799 = vpop.f32.mrb[0].mxu0
    %v4800 = vpop.f32.mrb[0].mxu0
    %v4801 = vadd.f32 0.0, %v4800
    %v4802 = vpop.f32.mrb[0].mxu0
    %4803 = vmatprep.mubr.bf16.mxu0 %v4738
    %4804 = vmatmul.mubr.bf16.gmra.mrb[0].mxu0 %v4622
    %v4805 = vpop.f32.mrb[0].mxu0
    %v4806 = vadd.f32 0.0, %v4805
    %v4807 = vpop.f32.mrb[0].mxu0
    %v4808 = vpop.f32.mrb[0].mxu0
    %v4809 = vadd.f32 0.0, %v4808
    %v4810 = vpop.f32.mrb[0].mxu0
    %4811 = vmatprep.mubr.bf16.mxu0 %v4741
    %4812 = vmatmul.mubr.bf16.gmra.mrb[0].mxu0 %v4624
    %v4813 = vpop.f32.mrb[0].mxu0
    %v4814 = vadd.f32 0.0, %v4813
    %v4815 = vpop.f32.mrb[0].mxu0
    %v4816 = vpop.f32.mrb[0].mxu0
    %v4817 = vadd.f32 0.0, %v4816
    %v4818 = vpop.f32.mrb[0].mxu0
    %4819 = vmatprep.mubr.bf16.mxu0 %v4744
    %4820 = vmatmul.mubr.bf16.gmra.mrb[0].mxu0 %v4626
    %v4821 = vpop.f32.mrb[0].mxu0
    %v4822 = vadd.f32 0.0, %v4821
    %v4823 = vpop.f32.mrb[0].mxu0
    %v4824 = vpop.f32.mrb[0].mxu0
    %v4825 = vadd.f32 0.0, %v4824
    %v4826 = vpop.f32.mrb[0].mxu0
    %4827 = vmatprep.mubr.bf16.mxu0 %v4747
    %4828 = vmatmul.mubr.bf16.gmra.mrb[0].mxu0 %v4628
    %v4829 = vpop.f32.mrb[0].mxu0
    %v4830 = vadd.f32 0.0, %v4829
    %v4831 = vpop.f32.mrb[0].mxu0
    %v4832 = vpop.f32.mrb[0].mxu0
    %v4833 = vadd.f32 0.0, %v4832
    %v4834 = vpop.f32.mrb[0].mxu0
    %4835 = vmatprep.mubr.bf16.mxu0 %v4750
    %4836 = vmatmul.mubr.bf16.gmra.mrb[0].mxu0 %v4630
    %v4837 = vpop.f32.mrb[0].mxu0
    %v4838 = vadd.f32 0.0, %v4837
    %v4839 = vpop.f32.mrb[0].mxu0
    %v4840 = vpop.f32.mrb[0].mxu0
    %v4841 = vadd.f32 0.0, %v4840
    %v4842 = vpop.f32.mrb[0].mxu0
    %4843 = vmatprep.mubr.bf16.mxu0 %v4753
    %4844 = vmatmul.mubr.bf16.gmra.mrb[0].mxu0 %v4632
    %v4845 = vpop.f32.mrb[0].mxu0
    %v4846 = vadd.f32 0.0, %v4845
    %v4847 = vpop.f32.mrb[0].mxu0
    %v4848 = vpop.f32.mrb[0].mxu0
    %v4849 = vadd.f32 0.0, %v4848
    %v4850 = vpop.f32.mrb[0].mxu0
    %4851 = vdwg.mxu0
    %v4852 = vadd.f32 %v4460, %v4790
    %v4853 = vadd.f32 %v4463, %v4793
    %v4854 = vadd.f32 %v4468, %v4798
    %v4855 = vadd.f32 %v4471, %v4801
    %v4856 = vadd.f32 %v4476, %v4806
    %v4857 = vadd.f32 %v4479, %v4809
    %v4858 = vadd.f32 %v4484, %v4814
    %v4859 = vadd.f32 %v4487, %v4817
    %v4860 = vadd.f32 %v4492, %v4822
    %v4861 = vadd.f32 %v4495, %v4825
    %v4862 = vadd.f32 %v4500, %v4830
    %v4863 = vadd.f32 %v4503, %v4833
    %v4864 = vadd.f32 %v4508, %v4838
    %v4865 = vadd.f32 %v4511, %v4841
    %v4866 = vadd.f32 %v4516, %v4846
    %v4867 = vadd.f32 %v4519, %v4849
    %v4868 = vld [vmem:[%s11] sm:$0x1]
    %v4870 = vlaneseq
    %v4871 = vshrl.u32 %v4870, 7
    %v4872 = vsub.s32 0, %v4871
    %v4873 = vrot.slane %v4868, %v4872
    %v4875 = vmul.f32 %v4852, %v4873
    %v4876 = vmul.f32 %v4853, %v4873
    %v4877 = vmul.f32 %v4854, %v4873
    %v4878 = vmul.f32 %v4855, %v4873
    %v4879 = vmul.f32 %v4856, %v4873
    %v4880 = vmul.f32 %v4857, %v4873
    %v4881 = vmul.f32 %v4858, %v4873
    %v4882 = vmul.f32 %v4859, %v4873
    %v4883 = vmul.f32 %v4860, %v4873
    %v4884 = vmul.f32 %v4861, %v4873
    %v4885 = vmul.f32 %v4862, %v4873
    %v4886 = vmul.f32 %v4863, %v4873
    %v4887 = vmul.f32 %v4864, %v4873
    %v4888 = vmul.f32 %v4865, %v4873
    %v4889 = vmul.f32 %v4866, %v4873
    %v4890 = vmul.f32 %v4867, %v4873
    %v4891 = vld [vmem:[%s12] sm:$0x1]
    %v4893 = vlaneseq
    %v4894 = vshrl.u32 %v4893, 7
    %v4895 = vsub.s32 0, %v4894
    %v4896 = vrot.slane %v4891, %v4895
    %v4898 = vadd.f32 %v4875, %v4896
    %v4899 = vadd.f32 %v4876, %v4896
    %v4900 = vadd.f32 %v4877, %v4896
    %v4901 = vadd.f32 %v4878, %v4896
    %v4902 = vadd.f32 %v4879, %v4896
    %v4903 = vadd.f32 %v4880, %v4896
    %v4904 = vadd.f32 %v4881, %v4896
    %v4905 = vadd.f32 %v4882, %v4896
    %v4906 = vadd.f32 %v4883, %v4896
    %v4907 = vadd.f32 %v4884, %v4896
    %v4908 = vadd.f32 %v4885, %v4896
    %v4909 = vadd.f32 %v4886, %v4896
    %v4910 = vadd.f32 %v4887, %v4896
    %v4911 = vadd.f32 %v4888, %v4896
    %v4912 = vadd.f32 %v4889, %v4896
    %v4913 = vadd.f32 %v4890, %v4896
    %v4914 = vmax.f32 %v4898, 0.0
    %v4915 = vmax.f32 %v4899, 0.0
    %v4916 = vmax.f32 %v4900, 0.0
    %v4917 = vmax.f32 %v4901, 0.0
    %v4918 = vmax.f32 %v4902, 0.0
    %v4919 = vmax.f32 %v4903, 0.0
    %v4920 = vmax.f32 %v4904, 0.0
    %v4921 = vmax.f32 %v4905, 0.0
    %v4922 = vmax.f32 %v4906, 0.0
    %v4923 = vmax.f32 %v4907, 0.0
    %v4924 = vmax.f32 %v4908, 0.0
    %v4925 = vmax.f32 %v4909, 0.0
    %v4926 = vmax.f32 %v4910, 0.0
    %v4927 = vmax.f32 %v4911, 0.0
    %v4928 = vmax.f32 %v4912, 0.0
    %v4929 = vmax.f32 %v4913, 0.0
    %v4930 = vpack.c.bf16 %v4914, %v4914
    %v4931 = vpack.c.bf16 %v4915, %v4915
    %v4932 = vpack.c.bf16 %v4916, %v4916
    %v4933 = vpack.c.bf16 %v4917, %v4917
    %v4934 = vpack.c.bf16 %v4918, %v4918
    %v4935 = vpack.c.bf16 %v4919, %v4919
    %v4936 = vpack.c.bf16 %v4920, %v4920
    %v4937 = vpack.c.bf16 %v4921, %v4921
    %v4938 = vpack.c.bf16 %v4922, %v4922
    %v4939 = vpack.c.bf16 %v4923, %v4923
    %v4940 = vpack.c.bf16 %v4924, %v4924
    %v4941 = vpack.c.bf16 %v4925, %v4925
    %v4942 = vpack.c.bf16 %v4926, %v4926
    %v4943 = vpack.c.bf16 %v4927, %v4927
    %v4944 = vpack.c.bf16 %v4928, %v4928
    %v4945 = vpack.c.bf16 %v4929, %v4929
    %v4946 = vld [vmem:[#allocation3] sm:$0xff]
    %v4947 = vld [vmem:[#allocation3 + $0x8] sm:$0xff]
    %v4948 = vld [vmem:[#allocation3 + $0x10] sm:$0xff]
    %v4949 = vld [vmem:[#allocation3 + $0x18] sm:$0xff]
    %v4950 = vld [vmem:[#allocation3 + $0x20] sm:$0xff]
    %v4951 = vld [vmem:[#allocation3 + $0x28] sm:$0xff]
    %v4952 = vld [vmem:[#allocation3 + $0x30] sm:$0xff]
    %v4953 = vld [vmem:[#allocation3 + $0x38] sm:$0xff]
    %v4954 = vld [vmem:[#allocation3 + $0x40] sm:$0xff]
    %v4955 = vld [vmem:[#allocation3 + $0x48] sm:$0xff]
    %v4956 = vld [vmem:[#allocation3 + $0x50] sm:$0xff]
    %v4957 = vld [vmem:[#allocation3 + $0x58] sm:$0xff]
    %v4958 = vld [vmem:[#allocation3 + $0x60] sm:$0xff]
    %v4959 = vld [vmem:[#allocation3 + $0x68] sm:$0xff]
    %v4960 = vld [vmem:[#allocation3 + $0x70] sm:$0xff]
    %v4961 = vld [vmem:[#allocation3 + $0x78] sm:$0xff]
    %v4962 = vld [vmem:[#allocation3 + $0x80] sm:$0xff]
    %v4963 = vld [vmem:[#allocation3 + $0x88] sm:$0xff]
    %v4964 = vld [vmem:[#allocation3 + $0x90] sm:$0xff]
    %v4965 = vld [vmem:[#allocation3 + $0x98] sm:$0xff]
    %v4966 = vld [vmem:[#allocation3 + $0xa0] sm:$0xff]
    %v4967 = vld [vmem:[#allocation3 + $0xa8] sm:$0xff]
    %v4968 = vld [vmem:[#allocation3 + $0xb0] sm:$0xff]
    %v4969 = vld [vmem:[#allocation3 + $0xb8] sm:$0xff]
    %v4970 = vld [vmem:[#allocation3 + $0xc0] sm:$0xff]
    %v4971 = vld [vmem:[#allocation3 + $0xc8] sm:$0xff]
    %v4972 = vld [vmem:[#allocation3 + $0xd0] sm:$0xff]
    %v4973 = vld [vmem:[#allocation3 + $0xd8] sm:$0xff]
    %v4974 = vld [vmem:[#allocation3 + $0xe0] sm:$0xff]
    %v4975 = vld [vmem:[#allocation3 + $0xe8] sm:$0xff]
    %v4976 = vld [vmem:[#allocation3 + $0xf0] sm:$0xff]
    %v4977 = vld [vmem:[#allocation3 + $0xf8] sm:$0xff]
    %v4978 = vld [vmem:[#allocation3 + $0x100] sm:$0xff]
    %v4979 = vld [vmem:[#allocation3 + $0x108] sm:$0xff]
    %v4980 = vld [vmem:[#allocation3 + $0x110] sm:$0xff]
    %v4981 = vld [vmem:[#allocation3 + $0x118] sm:$0xff]
    %v4982 = vld [vmem:[#allocation3 + $0x120] sm:$0xff]
    %v4983 = vld [vmem:[#allocation3 + $0x128] sm:$0xff]
    %v4984 = vld [vmem:[#allocation3 + $0x130] sm:$0xff]
    %v4985 = vld [vmem:[#allocation3 + $0x138] sm:$0xff]
    %v4986 = vld [vmem:[#allocation3 + $0x140] sm:$0xff]
    %v4987 = vld [vmem:[#allocation3 + $0x148] sm:$0xff]
    %v4988 = vld [vmem:[#allocation3 + $0x150] sm:$0xff]
    %v4989 = vld [vmem:[#allocation3 + $0x158] sm:$0xff]
    %v4990 = vld [vmem:[#allocation3 + $0x160] sm:$0xff]
    %v4991 = vld [vmem:[#allocation3 + $0x168] sm:$0xff]
    %v4992 = vld [vmem:[#allocation3 + $0x170] sm:$0xff]
    %v4993 = vld [vmem:[#allocation3 + $0x178] sm:$0xff]
    %v4994 = vld [vmem:[#allocation3 + $0x180] sm:$0xff]
    %v4995 = vld [vmem:[#allocation3 + $0x188] sm:$0xff]
    %v4996 = vld [vmem:[#allocation3 + $0x190] sm:$0xff]
    %v4997 = vld [vmem:[#allocation3 + $0x198] sm:$0xff]
    %v4998 = vld [vmem:[#allocation3 + $0x1a0] sm:$0xff]
    %v4999 = vld [vmem:[#allocation3 + $0x1a8] sm:$0xff]
    %v5000 = vld [vmem:[#allocation3 + $0x1b0] sm:$0xff]
    %v5001 = vld [vmem:[#allocation3 + $0x1b8] sm:$0xff]
    %v5002 = vld [vmem:[#allocation3 + $0x1c0] sm:$0xff]
    %v5003 = vld [vmem:[#allocation3 + $0x1c8] sm:$0xff]
    %v5004 = vld [vmem:[#allocation3 + $0x1d0] sm:$0xff]
    %v5005 = vld [vmem:[#allocation3 + $0x1d8] sm:$0xff]
    %v5006 = vld [vmem:[#allocation3 + $0x1e0] sm:$0xff]
    %v5007 = vld [vmem:[#allocation3 + $0x1e8] sm:$0xff]
    %v5008 = vld [vmem:[#allocation3 + $0x1f0] sm:$0xff]
    %v5009 = vld [vmem:[#allocation3 + $0x1f8] sm:$0xff]
    %v5010 = vld [vmem:[#allocation3 + $0x200] sm:$0xff]
    %v5011 = vld [vmem:[#allocation3 + $0x208] sm:$0xff]
    %v5012 = vld [vmem:[#allocation3 + $0x210] sm:$0xff]
    %v5013 = vld [vmem:[#allocation3 + $0x218] sm:$0xff]
    %v5014 = vld [vmem:[#allocation3 + $0x220] sm:$0xff]
    %v5015 = vld [vmem:[#allocation3 + $0x228] sm:$0xff]
    %v5016 = vld [vmem:[#allocation3 + $0x230] sm:$0xff]
    %v5017 = vld [vmem:[#allocation3 + $0x238] sm:$0xff]
    %v5018 = vld [vmem:[#allocation3 + $0x240] sm:$0xff]
    %v5019 = vld [vmem:[#allocation3 + $0x248] sm:$0xff]
    %v5020 = vld [vmem:[#allocation3 + $0x250] sm:$0xff]
    %v5021 = vld [vmem:[#allocation3 + $0x258] sm:$0xff]
    %v5022 = vld [vmem:[#allocation3 + $0x260] sm:$0xff]
    %v5023 = vld [vmem:[#allocation3 + $0x268] sm:$0xff]
    %v5024 = vld [vmem:[#allocation3 + $0x270] sm:$0xff]
    %v5025 = vld [vmem:[#allocation3 + $0x278] sm:$0xff]
    %v5026 = vld [vmem:[#allocation3 + $0x280] sm:$0xff]
    %v5027 = vld [vmem:[#allocation3 + $0x288] sm:$0xff]
    %v5028 = vld [vmem:[#allocation3 + $0x290] sm:$0xff]
    %v5029 = vld [vmem:[#allocation3 + $0x298] sm:$0xff]
    %v5030 = vld [vmem:[#allocation3 + $0x2a0] sm:$0xff]
    %v5031 = vld [vmem:[#allocation3 + $0x2a8] sm:$0xff]
    %v5032 = vld [vmem:[#allocation3 + $0x2b0] sm:$0xff]
    %v5033 = vld [vmem:[#allocation3 + $0x2b8] sm:$0xff]
    %v5034 = vld [vmem:[#allocation3 + $0x2c0] sm:$0xff]
    %v5035 = vld [vmem:[#allocation3 + $0x2c8] sm:$0xff]
    %v5036 = vld [vmem:[#allocation3 + $0x2d0] sm:$0xff]
    %v5037 = vld [vmem:[#allocation3 + $0x2d8] sm:$0xff]
    %v5038 = vld [vmem:[#allocation3 + $0x2e0] sm:$0xff]
    %v5039 = vld [vmem:[#allocation3 + $0x2e8] sm:$0xff]
    %v5040 = vld [vmem:[#allocation3 + $0x2f0] sm:$0xff]
    %v5041 = vld [vmem:[#allocation3 + $0x2f8] sm:$0xff]
    %v5042 = vld [vmem:[#allocation3 + $0x300] sm:$0xff]
    %v5043 = vld [vmem:[#allocation3 + $0x308] sm:$0xff]
    %v5044 = vld [vmem:[#allocation3 + $0x310] sm:$0xff]
    %v5045 = vld [vmem:[#allocation3 + $0x318] sm:$0xff]
    %v5046 = vld [vmem:[#allocation3 + $0x320] sm:$0xff]
    %v5047 = vld [vmem:[#allocation3 + $0x328] sm:$0xff]
    %v5048 = vld [vmem:[#allocation3 + $0x330] sm:$0xff]
    %v5049 = vld [vmem:[#allocation3 + $0x338] sm:$0xff]
    %v5050 = vld [vmem:[#allocation3 + $0x340] sm:$0xff]
    %v5051 = vld [vmem:[#allocation3 + $0x348] sm:$0xff]
    %v5052 = vld [vmem:[#allocation3 + $0x350] sm:$0xff]
    %v5053 = vld [vmem:[#allocation3 + $0x358] sm:$0xff]
    %v5054 = vld [vmem:[#allocation3 + $0x360] sm:$0xff]
    %v5055 = vld [vmem:[#allocation3 + $0x368] sm:$0xff]
    %v5056 = vld [vmem:[#allocation3 + $0x370] sm:$0xff]
    %v5057 = vld [vmem:[#allocation3 + $0x378] sm:$0xff]
    %v5058 = vld [vmem:[#allocation3 + $0x380] sm:$0xff]
    %v5059 = vld [vmem:[#allocation3 + $0x388] sm:$0xff]
    %v5060 = vld [vmem:[#allocation3 + $0x390] sm:$0xff]
    %v5061 = vld [vmem:[#allocation3 + $0x398] sm:$0xff]
    %v5062 = vld [vmem:[#allocation3 + $0x3a0] sm:$0xff]
    %v5063 = vld [vmem:[#allocation3 + $0x3a8] sm:$0xff]
    %v5064 = vld [vmem:[#allocation3 + $0x3b0] sm:$0xff]
    %v5065 = vld [vmem:[#allocation3 + $0x3b8] sm:$0xff]
    %v5066 = vld [vmem:[#allocation3 + $0x3c0] sm:$0xff]
    %v5067 = vld [vmem:[#allocation3 + $0x3c8] sm:$0xff]
    %v5068 = vld [vmem:[#allocation3 + $0x3d0] sm:$0xff]
    %v5069 = vld [vmem:[#allocation3 + $0x3d8] sm:$0xff]
    %v5070 = vld [vmem:[#allocation3 + $0x3e0] sm:$0xff]
    %v5071 = vld [vmem:[#allocation3 + $0x3e8] sm:$0xff]
    %v5072 = vld [vmem:[#allocation3 + $0x3f0] sm:$0xff]
    %v5073 = vld [vmem:[#allocation3 + $0x3f8] sm:$0xff]
    %v5090 = vunpack.c.l.b16 %v4930
    %v5091 = vunpack.c.l.b16 %v4931
    %v5092 = vunpack.c.l.b16 %v4932
    %v5093 = vunpack.c.l.b16 %v4933
    %v5094 = vunpack.c.l.b16 %v4934
    %v5095 = vunpack.c.l.b16 %v4935
    %v5096 = vunpack.c.l.b16 %v4936
    %v5097 = vunpack.c.l.b16 %v4937
    %v5098 = vunpack.c.l.b16 %v4938
    %v5099 = vunpack.c.l.b16 %v4939
    %v5100 = vunpack.c.l.b16 %v4940
    %v5101 = vunpack.c.l.b16 %v4941
    %v5102 = vunpack.c.l.b16 %v4942
    %v5103 = vunpack.c.l.b16 %v4943
    %v5104 = vunpack.c.l.b16 %v4944
    %v5105 = vunpack.c.l.b16 %v4945
    %v5106 = vrot.slane %v5090, 1
    %vm5107 = vcmask 1041409
    %v5108 = vsel %vm5107, %v5091, %v5106
    %v5109 = vrot.slane %v5092, 7
    %vm5110 = vcmask 1042434
    %v5111 = vsel %vm5110, %v5109, %v5108
    %v5112 = vrot.slane %v5093, 6
    %vm5113 = vcmask 1043459
    %v5114 = vsel %vm5113, %v5112, %v5111
    %v5115 = vrot.slane %v5094, 5
    %vm5116 = vcmask 1044484
    %v5117 = vsel %vm5116, %v5115, %v5114
    %v5118 = vrot.slane %v5095, 4
    %vm5119 = vcmask 1045509
    %v5120 = vsel %vm5119, %v5118, %v5117
    %v5121 = vrot.slane %v5096, 3
    %vm5122 = vcmask 1046534
    %v5123 = vsel %vm5122, %v5121, %v5120
    %v5124 = vrot.slane %v5097, 2
    %vm5125 = vcmask 1047559
    %v5126 = vsel %vm5125, %v5124, %v5123
    %v5127 = vrot.slane %v5098, 1
    %v5128 = vsel %vm5107, %v5099, %v5127
    %v5129 = vrot.slane %v5100, 7
    %v5130 = vsel %vm5110, %v5129, %v5128
    %v5131 = vrot.slane %v5101, 6
    %v5132 = vsel %vm5113, %v5131, %v5130
    %v5133 = vrot.slane %v5102, 5
    %v5134 = vsel %vm5116, %v5133, %v5132
    %v5135 = vrot.slane %v5103, 4
    %v5136 = vsel %vm5119, %v5135, %v5134
    %v5137 = vrot.slane %v5104, 3
    %v5138 = vsel %vm5122, %v5137, %v5136
    %v5139 = vrot.slane %v5105, 2
    %v5140 = vsel %vm5125, %v5139, %v5138
    %v5141 = vpack.c.b16 %v5140, %v5126
    %v5207 = vunpack.c.l.b16 %v5010
    %v5208 = vunpack.c.h.b16 %v5010
    %v5209 = vunpack.c.l.b16 %v5011
    %v5210 = vunpack.c.h.b16 %v5011
    %v5211 = vunpack.c.l.b16 %v5012
    %v5212 = vunpack.c.h.b16 %v5012
    %v5213 = vunpack.c.l.b16 %v5013
    %v5214 = vunpack.c.h.b16 %v5013
    %v5215 = vunpack.c.l.b16 %v5014
    %v5216 = vunpack.c.h.b16 %v5014
    %v5217 = vunpack.c.l.b16 %v5015
    %v5218 = vunpack.c.h.b16 %v5015
    %v5219 = vunpack.c.l.b16 %v5016
    %v5220 = vunpack.c.h.b16 %v5016
    %v5221 = vunpack.c.l.b16 %v5017
    %v5222 = vunpack.c.h.b16 %v5017
    %v5223 = vunpack.c.l.b16 %v5018
    %v5224 = vunpack.c.h.b16 %v5018
    %v5225 = vunpack.c.l.b16 %v5019
    %v5226 = vunpack.c.h.b16 %v5019
    %v5227 = vunpack.c.l.b16 %v5020
    %v5228 = vunpack.c.h.b16 %v5020
    %v5229 = vunpack.c.l.b16 %v5021
    %v5230 = vunpack.c.h.b16 %v5021
    %v5231 = vunpack.c.l.b16 %v5022
    %v5232 = vunpack.c.h.b16 %v5022
    %v5233 = vunpack.c.l.b16 %v5023
    %v5234 = vunpack.c.h.b16 %v5023
    %v5235 = vunpack.c.l.b16 %v5024
    %v5236 = vunpack.c.h.b16 %v5024
    %v5237 = vunpack.c.l.b16 %v5025
    %v5238 = vunpack.c.h.b16 %v5025
    %v5239 = vunpack.c.l.b16 %v5026
    %v5240 = vunpack.c.h.b16 %v5026
    %v5241 = vunpack.c.l.b16 %v5027
    %v5242 = vunpack.c.h.b16 %v5027
    %v5243 = vunpack.c.l.b16 %v5028
    %v5244 = vunpack.c.h.b16 %v5028
    %v5245 = vunpack.c.l.b16 %v5029
    %v5246 = vunpack.c.h.b16 %v5029
    %v5247 = vunpack.c.l.b16 %v5030
    %v5248 = vunpack.c.h.b16 %v5030
    %v5249 = vunpack.c.l.b16 %v5031
    %v5250 = vunpack.c.h.b16 %v5031
    %v5251 = vunpack.c.l.b16 %v5032
    %v5252 = vunpack.c.h.b16 %v5032
    %v5253 = vunpack.c.l.b16 %v5033
    %v5254 = vunpack.c.h.b16 %v5033
    %v5255 = vunpack.c.l.b16 %v5034
    %v5256 = vunpack.c.h.b16 %v5034
    %v5257 = vunpack.c.l.b16 %v5035
    %v5258 = vunpack.c.h.b16 %v5035
    %v5259 = vunpack.c.l.b16 %v5036
    %v5260 = vunpack.c.h.b16 %v5036
    %v5261 = vunpack.c.l.b16 %v5037
    %v5262 = vunpack.c.h.b16 %v5037
    %v5263 = vunpack.c.l.b16 %v5038
    %v5264 = vunpack.c.h.b16 %v5038
    %v5265 = vunpack.c.l.b16 %v5039
    %v5266 = vunpack.c.h.b16 %v5039
    %v5267 = vunpack.c.l.b16 %v5040
    %v5268 = vunpack.c.h.b16 %v5040
    %v5269 = vunpack.c.l.b16 %v5041
    %v5270 = vunpack.c.h.b16 %v5041
    %v5271 = vunpack.c.l.b16 %v5042
    %v5272 = vunpack.c.h.b16 %v5042
    %v5273 = vunpack.c.l.b16 %v5043
    %v5274 = vunpack.c.h.b16 %v5043
    %v5275 = vunpack.c.l.b16 %v5044
    %v5276 = vunpack.c.h.b16 %v5044
    %v5277 = vunpack.c.l.b16 %v5045
    %v5278 = vunpack.c.h.b16 %v5045
    %v5279 = vunpack.c.l.b16 %v5046
    %v5280 = vunpack.c.h.b16 %v5046
    %v5281 = vunpack.c.l.b16 %v5047
    %v5282 = vunpack.c.h.b16 %v5047
    %v5283 = vunpack.c.l.b16 %v5048
    %v5284 = vunpack.c.h.b16 %v5048
    %v5285 = vunpack.c.l.b16 %v5049
    %v5286 = vunpack.c.h.b16 %v5049
    %v5287 = vunpack.c.l.b16 %v5050
    %v5288 = vunpack.c.h.b16 %v5050
    %v5289 = vunpack.c.l.b16 %v5051
    %v5290 = vunpack.c.h.b16 %v5051
    %v5291 = vunpack.c.l.b16 %v5052
    %v5292 = vunpack.c.h.b16 %v5052
    %v5293 = vunpack.c.l.b16 %v5053
    %v5294 = vunpack.c.h.b16 %v5053
    %v5295 = vunpack.c.l.b16 %v5054
    %v5296 = vunpack.c.h.b16 %v5054
    %v5297 = vunpack.c.l.b16 %v5055
    %v5298 = vunpack.c.h.b16 %v5055
    %v5299 = vunpack.c.l.b16 %v5056
    %v5300 = vunpack.c.h.b16 %v5056
    %v5301 = vunpack.c.l.b16 %v5057
    %v5302 = vunpack.c.h.b16 %v5057
    %v5303 = vunpack.c.l.b16 %v5058
    %v5304 = vunpack.c.h.b16 %v5058
    %v5305 = vunpack.c.l.b16 %v5059
    %v5306 = vunpack.c.h.b16 %v5059
    %v5307 = vunpack.c.l.b16 %v5060
    %v5308 = vunpack.c.h.b16 %v5060
    %v5309 = vunpack.c.l.b16 %v5061
    %v5310 = vunpack.c.h.b16 %v5061
    %v5311 = vunpack.c.l.b16 %v5062
    %v5312 = vunpack.c.h.b16 %v5062
    %v5313 = vunpack.c.l.b16 %v5063
    %v5314 = vunpack.c.h.b16 %v5063
    %v5315 = vunpack.c.l.b16 %v5064
    %v5316 = vunpack.c.h.b16 %v5064
    %v5317 = vunpack.c.l.b16 %v5065
    %v5318 = vunpack.c.h.b16 %v5065
    %v5319 = vunpack.c.l.b16 %v5066
    %v5320 = vunpack.c.h.b16 %v5066
    %v5321 = vunpack.c.l.b16 %v5067
    %v5322 = vunpack.c.h.b16 %v5067
    %v5323 = vunpack.c.l.b16 %v5068
    %v5324 = vunpack.c.h.b16 %v5068
    %v5325 = vunpack.c.l.b16 %v5069
    %v5326 = vunpack.c.h.b16 %v5069
    %v5327 = vunpack.c.l.b16 %v5070
    %v5328 = vunpack.c.h.b16 %v5070
    %v5329 = vunpack.c.l.b16 %v5071
    %v5330 = vunpack.c.h.b16 %v5071
    %v5331 = vunpack.c.l.b16 %v5072
    %v5332 = vunpack.c.h.b16 %v5072
    %v5333 = vunpack.c.l.b16 %v5073
    %v5334 = vunpack.c.h.b16 %v5073
    %v5335 = vpack.c.b16 %v5215, %v5207
    %v5336 = vpack.c.b16 %v5216, %v5208
    %v5337 = vpack.c.b16 %v5217, %v5209
    %v5338 = vpack.c.b16 %v5218, %v5210
    %v5339 = vpack.c.b16 %v5219, %v5211
    %v5340 = vpack.c.b16 %v5220, %v5212
    %v5341 = vpack.c.b16 %v5221, %v5213
    %v5342 = vpack.c.b16 %v5222, %v5214
    %v5343 = vpack.c.b16 %v5231, %v5223
    %v5344 = vpack.c.b16 %v5232, %v5224
    %v5345 = vpack.c.b16 %v5233, %v5225
    %v5346 = vpack.c.b16 %v5234, %v5226
    %v5347 = vpack.c.b16 %v5235, %v5227
    %v5348 = vpack.c.b16 %v5236, %v5228
    %v5349 = vpack.c.b16 %v5237, %v5229
    %v5350 = vpack.c.b16 %v5238, %v5230
    %v5351 = vpack.c.b16 %v5247, %v5239
    %v5352 = vpack.c.b16 %v5248, %v5240
    %v5353 = vpack.c.b16 %v5249, %v5241
    %v5354 = vpack.c.b16 %v5250, %v5242
    %v5355 = vpack.c.b16 %v5251, %v5243
    %v5356 = vpack.c.b16 %v5252, %v5244
    %v5357 = vpack.c.b16 %v5253, %v5245
    %v5358 = vpack.c.b16 %v5254, %v5246
    %v5359 = vpack.c.b16 %v5263, %v5255
    %v5360 = vpack.c.b16 %v5264, %v5256
    %v5361 = vpack.c.b16 %v5265, %v5257
    %v5362 = vpack.c.b16 %v5266, %v5258
    %v5363 = vpack.c.b16 %v5267, %v5259
    %v5364 = vpack.c.b16 %v5268, %v5260
    %v5365 = vpack.c.b16 %v5269, %v5261
    %v5366 = vpack.c.b16 %v5270, %v5262
    %v5367 = vpack.c.b16 %v5279, %v5271
    %v5368 = vpack.c.b16 %v5280, %v5272
    %v5369 = vpack.c.b16 %v5281, %v5273
    %v5370 = vpack.c.b16 %v5282, %v5274
    %v5371 = vpack.c.b16 %v5283, %v5275
    %v5372 = vpack.c.b16 %v5284, %v5276
    %v5373 = vpack.c.b16 %v5285, %v5277
    %v5374 = vpack.c.b16 %v5286, %v5278
    %v5375 = vpack.c.b16 %v5295, %v5287
    %v5376 = vpack.c.b16 %v5296, %v5288
    %v5377 = vpack.c.b16 %v5297, %v5289
    %v5378 = vpack.c.b16 %v5298, %v5290
    %v5379 = vpack.c.b16 %v5299, %v5291
    %v5380 = vpack.c.b16 %v5300, %v5292
    %v5381 = vpack.c.b16 %v5301, %v5293
    %v5382 = vpack.c.b16 %v5302, %v5294
    %v5383 = vpack.c.b16 %v5311, %v5303
    %v5384 = vpack.c.b16 %v5312, %v5304
    %v5385 = vpack.c.b16 %v5313, %v5305
    %v5386 = vpack.c.b16 %v5314, %v5306
    %v5387 = vpack.c.b16 %v5315, %v5307
    %v5388 = vpack.c.b16 %v5316, %v5308
    %v5389 = vpack.c.b16 %v5317, %v5309
    %v5390 = vpack.c.b16 %v5318, %v5310
    %v5391 = vpack.c.b16 %v5327, %v5319
    %v5392 = vpack.c.b16 %v5328, %v5320
    %v5393 = vpack.c.b16 %v5329, %v5321
    %v5394 = vpack.c.b16 %v5330, %v5322
    %v5395 = vpack.c.b16 %v5331, %v5323
    %v5396 = vpack.c.b16 %v5332, %v5324
    %v5397 = vpack.c.b16 %v5333, %v5325
    %v5398 = vpack.c.b16 %v5334, %v5326
    %5463 = vmatprep.subr.bf16.mxu0 %v5336
    %5464 = vmatpush1.bf16.msra.mxu0 %v5335
    %5465 = vmatprep.subr.bf16.mxu0 %v5344
    %5466 = vmatpush1.bf16.msra.mxu0 %v5343
    %5467 = vmatprep.subr.bf16.mxu0 %v5352
    %5468 = vmatpush1.bf16.msra.mxu0 %v5351
    %5469 = vmatprep.subr.bf16.mxu0 %v5360
    %5470 = vmatpush1.bf16.msra.mxu0 %v5359
    %5471 = vmatprep.subr.bf16.mxu0 %v5368
    %5472 = vmatpush1.bf16.msra.mxu0 %v5367
    %5473 = vmatprep.subr.bf16.mxu0 %v5376
    %5474 = vmatpush1.bf16.msra.mxu0 %v5375
    %5475 = vmatprep.subr.bf16.mxu0 %v5384
    %5476 = vmatpush1.bf16.msra.mxu0 %v5383
    %5477 = vmatprep.subr.bf16.mxu0 %v5392
    %5478 = vmatpush1.bf16.msra.mxu0 %v5391
    %5479 = vmatprep.subr.bf16.mxu0 0
    %5480 = vmatpush1.bf16.msra.mxu0 0
    %5481 = vmatprep.subr.bf16.mxu0 0
    %5482 = vmatpush1.bf16.msra.mxu0 0
    %5483 = vmatprep.subr.bf16.mxu0 0
    %5484 = vmatpush1.bf16.msra.mxu0 0
    %5485 = vmatprep.subr.bf16.mxu0 0
    %5486 = vmatpush1.bf16.msra.mxu0 0
    %5487 = vmatprep.subr.bf16.mxu0 0
    %5488 = vmatpush1.bf16.msra.mxu0 0
    %5489 = vmatprep.subr.bf16.mxu0 0
    %5490 = vmatpush1.bf16.msra.mxu0 0
    %5491 = vmatprep.subr.bf16.mxu0 0
    %5492 = vmatpush1.bf16.msra.mxu0 0
    %5493 = vmatprep.subr.bf16.mxu0 0
    %5494 = vmatpush1.bf16.msra.mxu0 0
    %5495 = vmatprep.mubr.bf16.mxu0 0
    %5496 = vmatmul.mubr.bf16.gmra.mrb[0].mxu0 %v5141
    %v5497 = vpop.f32.mrb[0].mxu0
    %v5498 = vadd.f32 0.0, %v5497
    %v5499 = vpop.f32.mrb[0].mxu0
    %v5500 = vadd.f32 0.0, %v5499
    %v5501 = vpop.f32.mrb[0].mxu0
    %v5502 = vadd.f32 0.0, %v5501
    %v5503 = vpop.f32.mrb[0].mxu0
    %v5504 = vadd.f32 0.0, %v5503
    %5505 = vdwg.mxu0
    %5506 = vmatprep.subr.bf16.mxu0 %v5338
    %5507 = vmatpush1.bf16.msra.mxu0 %v5337
    %5508 = vmatprep.subr.bf16.mxu0 %v5346
    %5509 = vmatpush1.bf16.msra.mxu0 %v5345
    %5510 = vmatprep.subr.bf16.mxu0 %v5354
    %5511 = vmatpush1.bf16.msra.mxu0 %v5353
    %5512 = vmatprep.subr.bf16.mxu0 %v5362
    %5513 = vmatpush1.bf16.msra.mxu0 %v5361
    %5514 = vmatprep.subr.bf16.mxu0 %v5370
    %5515 = vmatpush1.bf16.msra.mxu0 %v5369
    %5516 = vmatprep.subr.bf16.mxu0 %v5378
    %5517 = vmatpush1.bf16.msra.mxu0 %v5377
    %5518 = vmatprep.subr.bf16.mxu0 %v5386
    %5519 = vmatpush1.bf16.msra.mxu0 %v5385
    %5520 = vmatprep.subr.bf16.mxu0 %v5394
    %5521 = vmatpush1.bf16.msra.mxu0 %v5393
    %5522 = vmatprep.subr.bf16.mxu0 0
    %5523 = vmatpush1.bf16.msra.mxu0 0
    %5524 = vmatprep.subr.bf16.mxu0 0
    %5525 = vmatpush1.bf16.msra.mxu0 0
    %5526 = vmatprep.subr.bf16.mxu0 0
    %5527 = vmatpush1.bf16.msra.mxu0 0
    %5528 = vmatprep.subr.bf16.mxu0 0
    %5529 = vmatpush1.bf16.msra.mxu0 0
    %5530 = vmatprep.subr.bf16.mxu0 0
    %5531 = vmatpush1.bf16.msra.mxu0 0
    %5532 = vmatprep.subr.bf16.mxu0 0
    %5533 = vmatpush1.bf16.msra.mxu0 0
    %5534 = vmatprep.subr.bf16.mxu0 0
    %5535 = vmatpush1.bf16.msra.mxu0 0
    %5536 = vmatprep.subr.bf16.mxu0 0
    %5537 = vmatpush1.bf16.msra.mxu0 0
    %5538 = vmatprep.mubr.bf16.mxu0 0
    %5539 = vmatmul.mubr.bf16.gmra.mrb[0].mxu0 %v5141
    %v5540 = vpop.f32.mrb[0].mxu0
    %v5541 = vadd.f32 0.0, %v5540
    %v5542 = vpop.f32.mrb[0].mxu0
    %v5543 = vadd.f32 0.0, %v5542
    %v5544 = vpop.f32.mrb[0].mxu0
    %v5545 = vadd.f32 0.0, %v5544
    %v5546 = vpop.f32.mrb[0].mxu0
    %v5547 = vadd.f32 0.0, %v5546
    %5548 = vdwg.mxu0
    %5549 = vmatprep.subr.bf16.mxu0 %v5340
    %5550 = vmatpush1.bf16.msra.mxu0 %v5339
    %5551 = vmatprep.subr.bf16.mxu0 %v5348
    %5552 = vmatpush1.bf16.msra.mxu0 %v5347
    %5553 = vmatprep.subr.bf16.mxu0 %v5356
    %5554 = vmatpush1.bf16.msra.mxu0 %v5355
    %5555 = vmatprep.subr.bf16.mxu0 %v5364
    %5556 = vmatpush1.bf16.msra.mxu0 %v5363
    %5557 = vmatprep.subr.bf16.mxu0 %v5372
    %5558 = vmatpush1.bf16.msra.mxu0 %v5371
    %5559 = vmatprep.subr.bf16.mxu0 %v5380
    %5560 = vmatpush1.bf16.msra.mxu0 %v5379
    %5561 = vmatprep.subr.bf16.mxu0 %v5388
    %5562 = vmatpush1.bf16.msra.mxu0 %v5387
    %5563 = vmatprep.subr.bf16.mxu0 %v5396
    %5564 = vmatpush1.bf16.msra.mxu0 %v5395
    %5565 = vmatprep.subr.bf16.mxu0 0
    %5566 = vmatpush1.bf16.msra.mxu0 0
    %5567 = vmatprep.subr.bf16.mxu0 0
    %5568 = vmatpush1.bf16.msra.mxu0 0
    %5569 = vmatprep.subr.bf16.mxu0 0
    %5570 = vmatpush1.bf16.msra.mxu0 0
    %5571 = vmatprep.subr.bf16.mxu0 0
    %5572 = vmatpush1.bf16.msra.mxu0 0
    %5573 = vmatprep.subr.bf16.mxu0 0
    %5574 = vmatpush1.bf16.msra.mxu0 0
    %5575 = vmatprep.subr.bf16.mxu0 0
    %5576 = vmatpush1.bf16.msra.mxu0 0
    %5577 = vmatprep.subr.bf16.mxu0 0
    %5578 = vmatpush1.bf16.msra.mxu0 0
    %5579 = vmatprep.subr.bf16.mxu0 0
    %5580 = vmatpush1.bf16.msra.mxu0 0
    %5581 = vmatprep.mubr.bf16.mxu0 0
    %5582 = vmatmul.mubr.bf16.gmra.mrb[0].mxu0 %v5141
    %v5583 = vpop.f32.mrb[0].mxu0
    %v5584 = vadd.f32 0.0, %v5583
    %v5585 = vpop.f32.mrb[0].mxu0
    %v5586 = vadd.f32 0.0, %v5585
    %v5587 = vpop.f32.mrb[0].mxu0
    %v5588 = vadd.f32 0.0, %v5587
    %v5589 = vpop.f32.mrb[0].mxu0
    %v5590 = vadd.f32 0.0, %v5589
    %5591 = vdwg.mxu0
    %5592 = vmatprep.subr.bf16.mxu0 %v5342
    %5593 = vmatpush1.bf16.msra.mxu0 %v5341
    %5594 = vmatprep.subr.bf16.mxu0 %v5350
    %5595 = vmatpush1.bf16.msra.mxu0 %v5349
    %5596 = vmatprep.subr.bf16.mxu0 %v5358
    %5597 = vmatpush1.bf16.msra.mxu0 %v5357
    %5598 = vmatprep.subr.bf16.mxu0 %v5366
    %5599 = vmatpush1.bf16.msra.mxu0 %v5365
    %5600 = vmatprep.subr.bf16.mxu0 %v5374
    %5601 = vmatpush1.bf16.msra.mxu0 %v5373
    %5602 = vmatprep.subr.bf16.mxu0 %v5382
    %5603 = vmatpush1.bf16.msra.mxu0 %v5381
    %5604 = vmatprep.subr.bf16.mxu0 %v5390
    %5605 = vmatpush1.bf16.msra.mxu0 %v5389
    %5606 = vmatprep.subr.bf16.mxu0 %v5398
    %5607 = vmatpush1.bf16.msra.mxu0 %v5397
    %5608 = vmatprep.subr.bf16.mxu0 0
    %5609 = vmatpush1.bf16.msra.mxu0 0
    %5610 = vmatprep.subr.bf16.mxu0 0
    %5611 = vmatpush1.bf16.msra.mxu0 0
    %5612 = vmatprep.subr.bf16.mxu0 0
    %5613 = vmatpush1.bf16.msra.mxu0 0
    %5614 = vmatprep.subr.bf16.mxu0 0
    %5615 = vmatpush1.bf16.msra.mxu0 0
    %5616 = vmatprep.subr.bf16.mxu0 0
    %5617 = vmatpush1.bf16.msra.mxu0 0
    %5618 = vmatprep.subr.bf16.mxu0 0
    %5619 = vmatpush1.bf16.msra.mxu0 0
    %5620 = vmatprep.subr.bf16.mxu0 0
    %5621 = vmatpush1.bf16.msra.mxu0 0
    %5622 = vmatprep.subr.bf16.mxu0 0
    %5623 = vmatpush1.bf16.msra.mxu0 0
    %5624 = vmatprep.mubr.bf16.mxu0 0
    %5625 = vmatmul.mubr.bf16.gmra.mrb[0].mxu0 %v5141
    %v5626 = vpop.f32.mrb[0].mxu0
    %v5627 = vadd.f32 0.0, %v5626
    %v5628 = vpop.f32.mrb[0].mxu0
    %v5629 = vadd.f32 0.0, %v5628
    %v5630 = vpop.f32.mrb[0].mxu0
    %v5631 = vadd.f32 0.0, %v5630
    %v5632 = vpop.f32.mrb[0].mxu0
    %v5633 = vadd.f32 0.0, %v5632
    %5634 = vdwg.mxu0
    %v5635 = vrot.slane %v5091, 7
    %v5636 = vsel %vm5107, %v5635, %v5090
    %v5637 = vrot.slane %v5092, 6
    %v5638 = vsel %vm5110, %v5637, %v5636
    %v5639 = vrot.slane %v5093, 5
    %v5640 = vsel %vm5113, %v5639, %v5638
    %v5641 = vrot.slane %v5094, 4
    %v5642 = vsel %vm5116, %v5641, %v5640
    %v5643 = vrot.slane %v5095, 3
    %v5644 = vsel %vm5119, %v5643, %v5642
    %v5645 = vrot.slane %v5096, 2
    %v5646 = vsel %vm5122, %v5645, %v5644
    %v5647 = vrot.slane %v5097, 1
    %v5648 = vsel %vm5125, %v5647, %v5646
    %v5649 = vrot.slane %v5099, 7
    %v5650 = vsel %vm5107, %v5649, %v5098
    %v5651 = vrot.slane %v5100, 6
    %v5652 = vsel %vm5110, %v5651, %v5650
    %v5653 = vrot.slane %v5101, 5
    %v5654 = vsel %vm5113, %v5653, %v5652
    %v5655 = vrot.slane %v5102, 4
    %v5656 = vsel %vm5116, %v5655, %v5654
    %v5657 = vrot.slane %v5103, 3
    %v5658 = vsel %vm5119, %v5657, %v5656
    %v5659 = vrot.slane %v5104, 2
    %v5660 = vsel %vm5122, %v5659, %v5658
    %v5661 = vrot.slane %v5105, 1
    %v5662 = vsel %vm5125, %v5661, %v5660
    %v5663 = vpack.c.b16 %v5662, %v5648
    %v5729 = vunpack.c.l.b16 %v4946
    %v5730 = vunpack.c.h.b16 %v4946
    %v5731 = vunpack.c.l.b16 %v4947
    %v5732 = vunpack.c.h.b16 %v4947
    %v5733 = vunpack.c.l.b16 %v4948
    %v5734 = vunpack.c.h.b16 %v4948
    %v5735 = vunpack.c.l.b16 %v4949
    %v5736 = vunpack.c.h.b16 %v4949
    %v5737 = vunpack.c.l.b16 %v4950
    %v5738 = vunpack.c.h.b16 %v4950
    %v5739 = vunpack.c.l.b16 %v4951
    %v5740 = vunpack.c.h.b16 %v4951
    %v5741 = vunpack.c.l.b16 %v4952
    %v5742 = vunpack.c.h.b16 %v4952
    %v5743 = vunpack.c.l.b16 %v4953
    %v5744 = vunpack.c.h.b16 %v4953
    %v5745 = vunpack.c.l.b16 %v4954
    %v5746 = vunpack.c.h.b16 %v4954
    %v5747 = vunpack.c.l.b16 %v4955
    %v5748 = vunpack.c.h.b16 %v4955
    %v5749 = vunpack.c.l.b16 %v4956
    %v5750 = vunpack.c.h.b16 %v4956
    %v5751 = vunpack.c.l.b16 %v4957
    %v5752 = vunpack.c.h.b16 %v4957
    %v5753 = vunpack.c.l.b16 %v4958
    %v5754 = vunpack.c.h.b16 %v4958
    %v5755 = vunpack.c.l.b16 %v4959
    %v5756 = vunpack.c.h.b16 %v4959
    %v5757 = vunpack.c.l.b16 %v4960
    %v5758 = vunpack.c.h.b16 %v4960
    %v5759 = vunpack.c.l.b16 %v4961
    %v5760 = vunpack.c.h.b16 %v4961
    %v5761 = vunpack.c.l.b16 %v4962
    %v5762 = vunpack.c.h.b16 %v4962
    %v5763 = vunpack.c.l.b16 %v4963
    %v5764 = vunpack.c.h.b16 %v4963
    %v5765 = vunpack.c.l.b16 %v4964
    %v5766 = vunpack.c.h.b16 %v4964
    %v5767 = vunpack.c.l.b16 %v4965
    %v5768 = vunpack.c.h.b16 %v4965
    %v5769 = vunpack.c.l.b16 %v4966
    %v5770 = vunpack.c.h.b16 %v4966
    %v5771 = vunpack.c.l.b16 %v4967
    %v5772 = vunpack.c.h.b16 %v4967
    %v5773 = vunpack.c.l.b16 %v4968
    %v5774 = vunpack.c.h.b16 %v4968
    %v5775 = vunpack.c.l.b16 %v4969
    %v5776 = vunpack.c.h.b16 %v4969
    %v5777 = vunpack.c.l.b16 %v4970
    %v5778 = vunpack.c.h.b16 %v4970
    %v5779 = vunpack.c.l.b16 %v4971
    %v5780 = vunpack.c.h.b16 %v4971
    %v5781 = vunpack.c.l.b16 %v4972
    %v5782 = vunpack.c.h.b16 %v4972
    %v5783 = vunpack.c.l.b16 %v4973
    %v5784 = vunpack.c.h.b16 %v4973
    %v5785 = vunpack.c.l.b16 %v4974
    %v5786 = vunpack.c.h.b16 %v4974
    %v5787 = vunpack.c.l.b16 %v4975
    %v5788 = vunpack.c.h.b16 %v4975
    %v5789 = vunpack.c.l.b16 %v4976
    %v5790 = vunpack.c.h.b16 %v4976
    %v5791 = vunpack.c.l.b16 %v4977
    %v5792 = vunpack.c.h.b16 %v4977
    %v5793 = vunpack.c.l.b16 %v4978
    %v5794 = vunpack.c.h.b16 %v4978
    %v5795 = vunpack.c.l.b16 %v4979
    %v5796 = vunpack.c.h.b16 %v4979
    %v5797 = vunpack.c.l.b16 %v4980
    %v5798 = vunpack.c.h.b16 %v4980
    %v5799 = vunpack.c.l.b16 %v4981
    %v5800 = vunpack.c.h.b16 %v4981
    %v5801 = vunpack.c.l.b16 %v4982
    %v5802 = vunpack.c.h.b16 %v4982
    %v5803 = vunpack.c.l.b16 %v4983
    %v5804 = vunpack.c.h.b16 %v4983
    %v5805 = vunpack.c.l.b16 %v4984
    %v5806 = vunpack.c.h.b16 %v4984
    %v5807 = vunpack.c.l.b16 %v4985
    %v5808 = vunpack.c.h.b16 %v4985
    %v5809 = vunpack.c.l.b16 %v4986
    %v5810 = vunpack.c.h.b16 %v4986
    %v5811 = vunpack.c.l.b16 %v4987
    %v5812 = vunpack.c.h.b16 %v4987
    %v5813 = vunpack.c.l.b16 %v4988
    %v5814 = vunpack.c.h.b16 %v4988
    %v5815 = vunpack.c.l.b16 %v4989
    %v5816 = vunpack.c.h.b16 %v4989
    %v5817 = vunpack.c.l.b16 %v4990
    %v5818 = vunpack.c.h.b16 %v4990
    %v5819 = vunpack.c.l.b16 %v4991
    %v5820 = vunpack.c.h.b16 %v4991
    %v5821 = vunpack.c.l.b16 %v4992
    %v5822 = vunpack.c.h.b16 %v4992
    %v5823 = vunpack.c.l.b16 %v4993
    %v5824 = vunpack.c.h.b16 %v4993
    %v5825 = vunpack.c.l.b16 %v4994
    %v5826 = vunpack.c.h.b16 %v4994
    %v5827 = vunpack.c.l.b16 %v4995
    %v5828 = vunpack.c.h.b16 %v4995
    %v5829 = vunpack.c.l.b16 %v4996
    %v5830 = vunpack.c.h.b16 %v4996
    %v5831 = vunpack.c.l.b16 %v4997
    %v5832 = vunpack.c.h.b16 %v4997
    %v5833 = vunpack.c.l.b16 %v4998
    %v5834 = vunpack.c.h.b16 %v4998
    %v5835 = vunpack.c.l.b16 %v4999
    %v5836 = vunpack.c.h.b16 %v4999
    %v5837 = vunpack.c.l.b16 %v5000
    %v5838 = vunpack.c.h.b16 %v5000
    %v5839 = vunpack.c.l.b16 %v5001
    %v5840 = vunpack.c.h.b16 %v5001
    %v5841 = vunpack.c.l.b16 %v5002
    %v5842 = vunpack.c.h.b16 %v5002
    %v5843 = vunpack.c.l.b16 %v5003
    %v5844 = vunpack.c.h.b16 %v5003
    %v5845 = vunpack.c.l.b16 %v5004
    %v5846 = vunpack.c.h.b16 %v5004
    %v5847 = vunpack.c.l.b16 %v5005
    %v5848 = vunpack.c.h.b16 %v5005
    %v5849 = vunpack.c.l.b16 %v5006
    %v5850 = vunpack.c.h.b16 %v5006
    %v5851 = vunpack.c.l.b16 %v5007
    %v5852 = vunpack.c.h.b16 %v5007
    %v5853 = vunpack.c.l.b16 %v5008
    %v5854 = vunpack.c.h.b16 %v5008
    %v5855 = vunpack.c.l.b16 %v5009
    %v5856 = vunpack.c.h.b16 %v5009
    %v5857 = vpack.c.b16 %v5737, %v5729
    %v5858 = vpack.c.b16 %v5738, %v5730
    %v5859 = vpack.c.b16 %v5739, %v5731
    %v5860 = vpack.c.b16 %v5740, %v5732
    %v5861 = vpack.c.b16 %v5741, %v5733
    %v5862 = vpack.c.b16 %v5742, %v5734
    %v5863 = vpack.c.b16 %v5743, %v5735
    %v5864 = vpack.c.b16 %v5744, %v5736
    %v5865 = vpack.c.b16 %v5753, %v5745
    %v5866 = vpack.c.b16 %v5754, %v5746
    %v5867 = vpack.c.b16 %v5755, %v5747
    %v5868 = vpack.c.b16 %v5756, %v5748
    %v5869 = vpack.c.b16 %v5757, %v5749
    %v5870 = vpack.c.b16 %v5758, %v5750
    %v5871 = vpack.c.b16 %v5759, %v5751
    %v5872 = vpack.c.b16 %v5760, %v5752
    %v5873 = vpack.c.b16 %v5769, %v5761
    %v5874 = vpack.c.b16 %v5770, %v5762
    %v5875 = vpack.c.b16 %v5771, %v5763
    %v5876 = vpack.c.b16 %v5772, %v5764
    %v5877 = vpack.c.b16 %v5773, %v5765
    %v5878 = vpack.c.b16 %v5774, %v5766
    %v5879 = vpack.c.b16 %v5775, %v5767
    %v5880 = vpack.c.b16 %v5776, %v5768
    %v5881 = vpack.c.b16 %v5785, %v5777
    %v5882 = vpack.c.b16 %v5786, %v5778
    %v5883 = vpack.c.b16 %v5787, %v5779
    %v5884 = vpack.c.b16 %v5788, %v5780
    %v5885 = vpack.c.b16 %v5789, %v5781
    %v5886 = vpack.c.b16 %v5790, %v5782
    %v5887 = vpack.c.b16 %v5791, %v5783
    %v5888 = vpack.c.b16 %v5792, %v5784
    %v5889 = vpack.c.b16 %v5801, %v5793
    %v5890 = vpack.c.b16 %v5802, %v5794
    %v5891 = vpack.c.b16 %v5803, %v5795
    %v5892 = vpack.c.b16 %v5804, %v5796
    %v5893 = vpack.c.b16 %v5805, %v5797
    %v5894 = vpack.c.b16 %v5806, %v5798
    %v5895 = vpack.c.b16 %v5807, %v5799
    %v5896 = vpack.c.b16 %v5808, %v5800
    %v5897 = vpack.c.b16 %v5817, %v5809
    %v5898 = vpack.c.b16 %v5818, %v5810
    %v5899 = vpack.c.b16 %v5819, %v5811
    %v5900 = vpack.c.b16 %v5820, %v5812
    %v5901 = vpack.c.b16 %v5821, %v5813
    %v5902 = vpack.c.b16 %v5822, %v5814
    %v5903 = vpack.c.b16 %v5823, %v5815
    %v5904 = vpack.c.b16 %v5824, %v5816
    %v5905 = vpack.c.b16 %v5833, %v5825
    %v5906 = vpack.c.b16 %v5834, %v5826
    %v5907 = vpack.c.b16 %v5835, %v5827
    %v5908 = vpack.c.b16 %v5836, %v5828
    %v5909 = vpack.c.b16 %v5837, %v5829
    %v5910 = vpack.c.b16 %v5838, %v5830
    %v5911 = vpack.c.b16 %v5839, %v5831
    %v5912 = vpack.c.b16 %v5840, %v5832
    %v5913 = vpack.c.b16 %v5849, %v5841
    %v5914 = vpack.c.b16 %v5850, %v5842
    %v5915 = vpack.c.b16 %v5851, %v5843
    %v5916 = vpack.c.b16 %v5852, %v5844
    %v5917 = vpack.c.b16 %v5853, %v5845
    %v5918 = vpack.c.b16 %v5854, %v5846
    %v5919 = vpack.c.b16 %v5855, %v5847
    %v5920 = vpack.c.b16 %v5856, %v5848
    %5985 = vmatprep.subr.bf16.mxu0 %v5858
    %5986 = vmatpush1.bf16.msra.mxu0 %v5857
    %5987 = vmatprep.subr.bf16.mxu0 %v5866
    %5988 = vmatpush1.bf16.msra.mxu0 %v5865
    %5989 = vmatprep.subr.bf16.mxu0 %v5874
    %5990 = vmatpush1.bf16.msra.mxu0 %v5873
    %5991 = vmatprep.subr.bf16.mxu0 %v5882
    %5992 = vmatpush1.bf16.msra.mxu0 %v5881
    %5993 = vmatprep.subr.bf16.mxu0 %v5890
    %5994 = vmatpush1.bf16.msra.mxu0 %v5889
    %5995 = vmatprep.subr.bf16.mxu0 %v5898
    %5996 = vmatpush1.bf16.msra.mxu0 %v5897
    %5997 = vmatprep.subr.bf16.mxu0 %v5906
    %5998 = vmatpush1.bf16.msra.mxu0 %v5905
    %5999 = vmatprep.subr.bf16.mxu0 %v5914
    %6000 = vmatpush1.bf16.msra.mxu0 %v5913
    %6001 = vmatprep.subr.bf16.mxu0 0
    %6002 = vmatpush1.bf16.msra.mxu0 0
    %6003 = vmatprep.subr.bf16.mxu0 0
    %6004 = vmatpush1.bf16.msra.mxu0 0
    %6005 = vmatprep.subr.bf16.mxu0 0
    %6006 = vmatpush1.bf16.msra.mxu0 0
    %6007 = vmatprep.subr.bf16.mxu0 0
    %6008 = vmatpush1.bf16.msra.mxu0 0
    %6009 = vmatprep.subr.bf16.mxu0 0
    %6010 = vmatpush1.bf16.msra.mxu0 0
    %6011 = vmatprep.subr.bf16.mxu0 0
    %6012 = vmatpush1.bf16.msra.mxu0 0
    %6013 = vmatprep.subr.bf16.mxu0 0
    %6014 = vmatpush1.bf16.msra.mxu0 0
    %6015 = vmatprep.subr.bf16.mxu0 0
    %6016 = vmatpush1.bf16.msra.mxu0 0
    %6017 = vmatprep.mubr.bf16.mxu0 0
    %6018 = vmatmul.mubr.bf16.gmra.mrb[0].mxu0 %v5663
    %v6019 = vpop.f32.mrb[0].mxu0
    %v6020 = vadd.f32 %v5498, %v6019
    %v6021 = vpop.f32.mrb[0].mxu0
    %v6022 = vadd.f32 %v5500, %v6021
    %v6023 = vpop.f32.mrb[0].mxu0
    %v6024 = vadd.f32 %v5502, %v6023
    %v6025 = vpop.f32.mrb[0].mxu0
    %v6026 = vadd.f32 %v5504, %v6025
    %6027 = vdwg.mxu0
    %6028 = vmatprep.subr.bf16.mxu0 %v5860
    %6029 = vmatpush1.bf16.msra.mxu0 %v5859
    %6030 = vmatprep.subr.bf16.mxu0 %v5868
    %6031 = vmatpush1.bf16.msra.mxu0 %v5867
    %6032 = vmatprep.subr.bf16.mxu0 %v5876
    %6033 = vmatpush1.bf16.msra.mxu0 %v5875
    %6034 = vmatprep.subr.bf16.mxu0 %v5884
    %6035 = vmatpush1.bf16.msra.mxu0 %v5883
    %6036 = vmatprep.subr.bf16.mxu0 %v5892
    %6037 = vmatpush1.bf16.msra.mxu0 %v5891
    %6038 = vmatprep.subr.bf16.mxu0 %v5900
    %6039 = vmatpush1.bf16.msra.mxu0 %v5899
    %6040 = vmatprep.subr.bf16.mxu0 %v5908
    %6041 = vmatpush1.bf16.msra.mxu0 %v5907
    %6042 = vmatprep.subr.bf16.mxu0 %v5916
    %6043 = vmatpush1.bf16.msra.mxu0 %v5915
    %6044 = vmatprep.subr.bf16.mxu0 0
    %6045 = vmatpush1.bf16.msra.mxu0 0
    %6046 = vmatprep.subr.bf16.mxu0 0
    %6047 = vmatpush1.bf16.msra.mxu0 0
    %6048 = vmatprep.subr.bf16.mxu0 0
    %6049 = vmatpush1.bf16.msra.mxu0 0
    %6050 = vmatprep.subr.bf16.mxu0 0
    %6051 = vmatpush1.bf16.msra.mxu0 0
    %6052 = vmatprep.subr.bf16.mxu0 0
    %6053 = vmatpush1.bf16.msra.mxu0 0
    %6054 = vmatprep.subr.bf16.mxu0 0
    %6055 = vmatpush1.bf16.msra.mxu0 0
    %6056 = vmatprep.subr.bf16.mxu0 0
    %6057 = vmatpush1.bf16.msra.mxu0 0
    %6058 = vmatprep.subr.bf16.mxu0 0
    %6059 = vmatpush1.bf16.msra.mxu0 0
    %6060 = vmatprep.mubr.bf16.mxu0 0
    %6061 = vmatmul.mubr.bf16.gmra.mrb[0].mxu0 %v5663
    %v6062 = vpop.f32.mrb[0].mxu0
    %v6063 = vadd.f32 %v5541, %v6062
    %v6064 = vpop.f32.mrb[0].mxu0
    %v6065 = vadd.f32 %v5543, %v6064
    %v6066 = vpop.f32.mrb[0].mxu0
    %v6067 = vadd.f32 %v5545, %v6066
    %v6068 = vpop.f32.mrb[0].mxu0
    %v6069 = vadd.f32 %v5547, %v6068
    %6070 = vdwg.mxu0
    %6071 = vmatprep.subr.bf16.mxu0 %v5862
    %6072 = vmatpush1.bf16.msra.mxu0 %v5861
    %6073 = vmatprep.subr.bf16.mxu0 %v5870
    %6074 = vmatpush1.bf16.msra.mxu0 %v5869
    %6075 = vmatprep.subr.bf16.mxu0 %v5878
    %6076 = vmatpush1.bf16.msra.mxu0 %v5877
    %6077 = vmatprep.subr.bf16.mxu0 %v5886
    %6078 = vmatpush1.bf16.msra.mxu0 %v5885
    %6079 = vmatprep.subr.bf16.mxu0 %v5894
    %6080 = vmatpush1.bf16.msra.mxu0 %v5893
    %6081 = vmatprep.subr.bf16.mxu0 %v5902
    %6082 = vmatpush1.bf16.msra.mxu0 %v5901
    %6083 = vmatprep.subr.bf16.mxu0 %v5910
    %6084 = vmatpush1.bf16.msra.mxu0 %v5909
    %6085 = vmatprep.subr.bf16.mxu0 %v5918
    %6086 = vmatpush1.bf16.msra.mxu0 %v5917
    %6087 = vmatprep.subr.bf16.mxu0 0
    %6088 = vmatpush1.bf16.msra.mxu0 0
    %6089 = vmatprep.subr.bf16.mxu0 0
    %6090 = vmatpush1.bf16.msra.mxu0 0
    %6091 = vmatprep.subr.bf16.mxu0 0
    %6092 = vmatpush1.bf16.msra.mxu0 0
    %6093 = vmatprep.subr.bf16.mxu0 0
    %6094 = vmatpush1.bf16.msra.mxu0 0
    %6095 = vmatprep.subr.bf16.mxu0 0
    %6096 = vmatpush1.bf16.msra.mxu0 0
    %6097 = vmatprep.subr.bf16.mxu0 0
    %6098 = vmatpush1.bf16.msra.mxu0 0
    %6099 = vmatprep.subr.bf16.mxu0 0
    %6100 = vmatpush1.bf16.msra.mxu0 0
    %6101 = vmatprep.subr.bf16.mxu0 0
    %6102 = vmatpush1.bf16.msra.mxu0 0
    %6103 = vmatprep.mubr.bf16.mxu0 0
    %6104 = vmatmul.mubr.bf16.gmra.mrb[0].mxu0 %v5663
    %v6105 = vpop.f32.mrb[0].mxu0
    %v6106 = vadd.f32 %v5584, %v6105
    %v6107 = vpop.f32.mrb[0].mxu0
    %v6108 = vadd.f32 %v5586, %v6107
    %v6109 = vpop.f32.mrb[0].mxu0
    %v6110 = vadd.f32 %v5588, %v6109
    %v6111 = vpop.f32.mrb[0].mxu0
    %v6112 = vadd.f32 %v5590, %v6111
    %6113 = vdwg.mxu0
    %6114 = vmatprep.subr.bf16.mxu0 %v5864
    %6115 = vmatpush1.bf16.msra.mxu0 %v5863
    %6116 = vmatprep.subr.bf16.mxu0 %v5872
    %6117 = vmatpush1.bf16.msra.mxu0 %v5871
    %6118 = vmatprep.subr.bf16.mxu0 %v5880
    %6119 = vmatpush1.bf16.msra.mxu0 %v5879
    %6120 = vmatprep.subr.bf16.mxu0 %v5888
    %6121 = vmatpush1.bf16.msra.mxu0 %v5887
    %6122 = vmatprep.subr.bf16.mxu0 %v5896
    %6123 = vmatpush1.bf16.msra.mxu0 %v5895
    %6124 = vmatprep.subr.bf16.mxu0 %v5904
    %6125 = vmatpush1.bf16.msra.mxu0 %v5903
    %6126 = vmatprep.subr.bf16.mxu0 %v5912
    %6127 = vmatpush1.bf16.msra.mxu0 %v5911
    %6128 = vmatprep.subr.bf16.mxu0 %v5920
    %6129 = vmatpush1.bf16.msra.mxu0 %v5919
    %6130 = vmatprep.subr.bf16.mxu0 0
    %6131 = vmatpush1.bf16.msra.mxu0 0
    %6132 = vmatprep.subr.bf16.mxu0 0
    %6133 = vmatpush1.bf16.msra.mxu0 0
    %6134 = vmatprep.subr.bf16.mxu0 0
    %6135 = vmatpush1.bf16.msra.mxu0 0
    %6136 = vmatprep.subr.bf16.mxu0 0
    %6137 = vmatpush1.bf16.msra.mxu0 0
    %6138 = vmatprep.subr.bf16.mxu0 0
    %6139 = vmatpush1.bf16.msra.mxu0 0
    %6140 = vmatprep.subr.bf16.mxu0 0
    %6141 = vmatpush1.bf16.msra.mxu0 0
    %6142 = vmatprep.subr.bf16.mxu0 0
    %6143 = vmatpush1.bf16.msra.mxu0 0
    %6144 = vmatprep.subr.bf16.mxu0 0
    %6145 = vmatpush1.bf16.msra.mxu0 0
    %6146 = vmatprep.mubr.bf16.mxu0 0
    %6147 = vmatmul.mubr.bf16.gmra.mrb[0].mxu0 %v5663
    %v6148 = vpop.f32.mrb[0].mxu0
    %v6149 = vadd.f32 %v5627, %v6148
    %v6150 = vpop.f32.mrb[0].mxu0
    %v6151 = vadd.f32 %v5629, %v6150
    %v6152 = vpop.f32.mrb[0].mxu0
    %v6153 = vadd.f32 %v5631, %v6152
    %v6154 = vpop.f32.mrb[0].mxu0
    %v6155 = vadd.f32 %v5633, %v6154
    %6156 = vdwg.mxu0
    %v6157 = vld [vmem:[#allocation3 + $0x400] sm:$0xff]
    %v6158 = vld [vmem:[#allocation3 + $0x408] sm:$0xff]
    %v6159 = vld [vmem:[#allocation3 + $0x410] sm:$0xff]
    %v6160 = vld [vmem:[#allocation3 + $0x418] sm:$0xff]
    %v6161 = vld [vmem:[#allocation3 + $0x420] sm:$0xff]
    %v6162 = vld [vmem:[#allocation3 + $0x428] sm:$0xff]
    %v6163 = vld [vmem:[#allocation3 + $0x430] sm:$0xff]
    %v6164 = vld [vmem:[#allocation3 + $0x438] sm:$0xff]
    %v6165 = vld [vmem:[#allocation3 + $0x440] sm:$0xff]
    %v6166 = vld [vmem:[#allocation3 + $0x448] sm:$0xff]
    %v6167 = vld [vmem:[#allocation3 + $0x450] sm:$0xff]
    %v6168 = vld [vmem:[#allocation3 + $0x458] sm:$0xff]
    %v6169 = vld [vmem:[#allocation3 + $0x460] sm:$0xff]
    %v6170 = vld [vmem:[#allocation3 + $0x468] sm:$0xff]
    %v6171 = vld [vmem:[#allocation3 + $0x470] sm:$0xff]
    %v6172 = vld [vmem:[#allocation3 + $0x478] sm:$0xff]
    %v6173 = vld [vmem:[#allocation3 + $0x480] sm:$0xff]
    %v6174 = vld [vmem:[#allocation3 + $0x488] sm:$0xff]
    %v6175 = vld [vmem:[#allocation3 + $0x490] sm:$0xff]
    %v6176 = vld [vmem:[#allocation3 + $0x498] sm:$0xff]
    %v6177 = vld [vmem:[#allocation3 + $0x4a0] sm:$0xff]
    %v6178 = vld [vmem:[#allocation3 + $0x4a8] sm:$0xff]
    %v6179 = vld [vmem:[#allocation3 + $0x4b0] sm:$0xff]
    %v6180 = vld [vmem:[#allocation3 + $0x4b8] sm:$0xff]
    %v6181 = vld [vmem:[#allocation3 + $0x4c0] sm:$0xff]
    %v6182 = vld [vmem:[#allocation3 + $0x4c8] sm:$0xff]
    %v6183 = vld [vmem:[#allocation3 + $0x4d0] sm:$0xff]
    %v6184 = vld [vmem:[#allocation3 + $0x4d8] sm:$0xff]
    %v6185 = vld [vmem:[#allocation3 + $0x4e0] sm:$0xff]
    %v6186 = vld [vmem:[#allocation3 + $0x4e8] sm:$0xff]
    %v6187 = vld [vmem:[#allocation3 + $0x4f0] sm:$0xff]
    %v6188 = vld [vmem:[#allocation3 + $0x4f8] sm:$0xff]
    %v6189 = vld [vmem:[#allocation3 + $0x500] sm:$0xff]
    %v6190 = vld [vmem:[#allocation3 + $0x508] sm:$0xff]
    %v6191 = vld [vmem:[#allocation3 + $0x510] sm:$0xff]
    %v6192 = vld [vmem:[#allocation3 + $0x518] sm:$0xff]
    %v6193 = vld [vmem:[#allocation3 + $0x520] sm:$0xff]
    %v6194 = vld [vmem:[#allocation3 + $0x528] sm:$0xff]
    %v6195 = vld [vmem:[#allocation3 + $0x530] sm:$0xff]
    %v6196 = vld [vmem:[#allocation3 + $0x538] sm:$0xff]
    %v6197 = vld [vmem:[#allocation3 + $0x540] sm:$0xff]
    %v6198 = vld [vmem:[#allocation3 + $0x548] sm:$0xff]
    %v6199 = vld [vmem:[#allocation3 + $0x550] sm:$0xff]
    %v6200 = vld [vmem:[#allocation3 + $0x558] sm:$0xff]
    %v6201 = vld [vmem:[#allocation3 + $0x560] sm:$0xff]
    %v6202 = vld [vmem:[#allocation3 + $0x568] sm:$0xff]
    %v6203 = vld [vmem:[#allocation3 + $0x570] sm:$0xff]
    %v6204 = vld [vmem:[#allocation3 + $0x578] sm:$0xff]
    %v6205 = vld [vmem:[#allocation3 + $0x580] sm:$0xff]
    %v6206 = vld [vmem:[#allocation3 + $0x588] sm:$0xff]
    %v6207 = vld [vmem:[#allocation3 + $0x590] sm:$0xff]
    %v6208 = vld [vmem:[#allocation3 + $0x598] sm:$0xff]
    %v6209 = vld [vmem:[#allocation3 + $0x5a0] sm:$0xff]
    %v6210 = vld [vmem:[#allocation3 + $0x5a8] sm:$0xff]
    %v6211 = vld [vmem:[#allocation3 + $0x5b0] sm:$0xff]
    %v6212 = vld [vmem:[#allocation3 + $0x5b8] sm:$0xff]
    %v6213 = vld [vmem:[#allocation3 + $0x5c0] sm:$0xff]
    %v6214 = vld [vmem:[#allocation3 + $0x5c8] sm:$0xff]
    %v6215 = vld [vmem:[#allocation3 + $0x5d0] sm:$0xff]
    %v6216 = vld [vmem:[#allocation3 + $0x5d8] sm:$0xff]
    %v6217 = vld [vmem:[#allocation3 + $0x5e0] sm:$0xff]
    %v6218 = vld [vmem:[#allocation3 + $0x5e8] sm:$0xff]
    %v6219 = vld [vmem:[#allocation3 + $0x5f0] sm:$0xff]
    %v6220 = vld [vmem:[#allocation3 + $0x5f8] sm:$0xff]
    %v6221 = vrot.slane %v5090, 2
    %v6222 = vrot.slane %v5091, 1
    %v6223 = vsel %vm5107, %v6222, %v6221
    %v6224 = vsel %vm5110, %v5092, %v6223
    %v6225 = vrot.slane %v5093, 7
    %v6226 = vsel %vm5113, %v6225, %v6224
    %v6227 = vrot.slane %v5094, 6
    %v6228 = vsel %vm5116, %v6227, %v6226
    %v6229 = vrot.slane %v5095, 5
    %v6230 = vsel %vm5119, %v6229, %v6228
    %v6231 = vrot.slane %v5096, 4
    %v6232 = vsel %vm5122, %v6231, %v6230
    %v6233 = vrot.slane %v5097, 3
    %v6234 = vsel %vm5125, %v6233, %v6232
    %v6235 = vrot.slane %v5098, 2
    %v6236 = vrot.slane %v5099, 1
    %v6237 = vsel %vm5107, %v6236, %v6235
    %v6238 = vsel %vm5110, %v5100, %v6237
    %v6239 = vrot.slane %v5101, 7
    %v6240 = vsel %vm5113, %v6239, %v6238
    %v6241 = vrot.slane %v5102, 6
    %v6242 = vsel %vm5116, %v6241, %v6240
    %v6243 = vrot.slane %v5103, 5
    %v6244 = vsel %vm5119, %v6243, %v6242
    %v6245 = vrot.slane %v5104, 4
    %v6246 = vsel %vm5122, %v6245, %v6244
    %v6247 = vrot.slane %v5105, 3
    %v6248 = vsel %vm5125, %v6247, %v6246
    %v6249 = vpack.c.b16 %v6248, %v6234
    %v6315 = vunpack.c.l.b16 %v6157
    %v6316 = vunpack.c.h.b16 %v6157
    %v6317 = vunpack.c.l.b16 %v6158
    %v6318 = vunpack.c.h.b16 %v6158
    %v6319 = vunpack.c.l.b16 %v6159
    %v6320 = vunpack.c.h.b16 %v6159
    %v6321 = vunpack.c.l.b16 %v6160
    %v6322 = vunpack.c.h.b16 %v6160
    %v6323 = vunpack.c.l.b16 %v6161
    %v6324 = vunpack.c.h.b16 %v6161
    %v6325 = vunpack.c.l.b16 %v6162
    %v6326 = vunpack.c.h.b16 %v6162
    %v6327 = vunpack.c.l.b16 %v6163
    %v6328 = vunpack.c.h.b16 %v6163
    %v6329 = vunpack.c.l.b16 %v6164
    %v6330 = vunpack.c.h.b16 %v6164
    %v6331 = vunpack.c.l.b16 %v6165
    %v6332 = vunpack.c.h.b16 %v6165
    %v6333 = vunpack.c.l.b16 %v6166
    %v6334 = vunpack.c.h.b16 %v6166
    %v6335 = vunpack.c.l.b16 %v6167
    %v6336 = vunpack.c.h.b16 %v6167
    %v6337 = vunpack.c.l.b16 %v6168
    %v6338 = vunpack.c.h.b16 %v6168
    %v6339 = vunpack.c.l.b16 %v6169
    %v6340 = vunpack.c.h.b16 %v6169
    %v6341 = vunpack.c.l.b16 %v6170
    %v6342 = vunpack.c.h.b16 %v6170
    %v6343 = vunpack.c.l.b16 %v6171
    %v6344 = vunpack.c.h.b16 %v6171
    %v6345 = vunpack.c.l.b16 %v6172
    %v6346 = vunpack.c.h.b16 %v6172
    %v6347 = vunpack.c.l.b16 %v6173
    %v6348 = vunpack.c.h.b16 %v6173
    %v6349 = vunpack.c.l.b16 %v6174
    %v6350 = vunpack.c.h.b16 %v6174
    %v6351 = vunpack.c.l.b16 %v6175
    %v6352 = vunpack.c.h.b16 %v6175
    %v6353 = vunpack.c.l.b16 %v6176
    %v6354 = vunpack.c.h.b16 %v6176
    %v6355 = vunpack.c.l.b16 %v6177
    %v6356 = vunpack.c.h.b16 %v6177
    %v6357 = vunpack.c.l.b16 %v6178
    %v6358 = vunpack.c.h.b16 %v6178
    %v6359 = vunpack.c.l.b16 %v6179
    %v6360 = vunpack.c.h.b16 %v6179
    %v6361 = vunpack.c.l.b16 %v6180
    %v6362 = vunpack.c.h.b16 %v6180
    %v6363 = vunpack.c.l.b16 %v6181
    %v6364 = vunpack.c.h.b16 %v6181
    %v6365 = vunpack.c.l.b16 %v6182
    %v6366 = vunpack.c.h.b16 %v6182
    %v6367 = vunpack.c.l.b16 %v6183
    %v6368 = vunpack.c.h.b16 %v6183
    %v6369 = vunpack.c.l.b16 %v6184
    %v6370 = vunpack.c.h.b16 %v6184
    %v6371 = vunpack.c.l.b16 %v6185
    %v6372 = vunpack.c.h.b16 %v6185
    %v6373 = vunpack.c.l.b16 %v6186
    %v6374 = vunpack.c.h.b16 %v6186
    %v6375 = vunpack.c.l.b16 %v6187
    %v6376 = vunpack.c.h.b16 %v6187
    %v6377 = vunpack.c.l.b16 %v6188
    %v6378 = vunpack.c.h.b16 %v6188
    %v6379 = vunpack.c.l.b16 %v6189
    %v6380 = vunpack.c.h.b16 %v6189
    %v6381 = vunpack.c.l.b16 %v6190
    %v6382 = vunpack.c.h.b16 %v6190
    %v6383 = vunpack.c.l.b16 %v6191
    %v6384 = vunpack.c.h.b16 %v6191
    %v6385 = vunpack.c.l.b16 %v6192
    %v6386 = vunpack.c.h.b16 %v6192
    %v6387 = vunpack.c.l.b16 %v6193
    %v6388 = vunpack.c.h.b16 %v6193
    %v6389 = vunpack.c.l.b16 %v6194
    %v6390 = vunpack.c.h.b16 %v6194
    %v6391 = vunpack.c.l.b16 %v6195
    %v6392 = vunpack.c.h.b16 %v6195
    %v6393 = vunpack.c.l.b16 %v6196
    %v6394 = vunpack.c.h.b16 %v6196
    %v6395 = vunpack.c.l.b16 %v6197
    %v6396 = vunpack.c.h.b16 %v6197
    %v6397 = vunpack.c.l.b16 %v6198
    %v6398 = vunpack.c.h.b16 %v6198
    %v6399 = vunpack.c.l.b16 %v6199
    %v6400 = vunpack.c.h.b16 %v6199
    %v6401 = vunpack.c.l.b16 %v6200
    %v6402 = vunpack.c.h.b16 %v6200
    %v6403 = vunpack.c.l.b16 %v6201
    %v6404 = vunpack.c.h.b16 %v6201
    %v6405 = vunpack.c.l.b16 %v6202
    %v6406 = vunpack.c.h.b16 %v6202
    %v6407 = vunpack.c.l.b16 %v6203
    %v6408 = vunpack.c.h.b16 %v6203
    %v6409 = vunpack.c.l.b16 %v6204
    %v6410 = vunpack.c.h.b16 %v6204
    %v6411 = vunpack.c.l.b16 %v6205
    %v6412 = vunpack.c.h.b16 %v6205
    %v6413 = vunpack.c.l.b16 %v6206
    %v6414 = vunpack.c.h.b16 %v6206
    %v6415 = vunpack.c.l.b16 %v6207
    %v6416 = vunpack.c.h.b16 %v6207
    %v6417 = vunpack.c.l.b16 %v6208
    %v6418 = vunpack.c.h.b16 %v6208
    %v6419 = vunpack.c.l.b16 %v6209
    %v6420 = vunpack.c.h.b16 %v6209
    %v6421 = vunpack.c.l.b16 %v6210
    %v6422 = vunpack.c.h.b16 %v6210
    %v6423 = vunpack.c.l.b16 %v6211
    %v6424 = vunpack.c.h.b16 %v6211
    %v6425 = vunpack.c.l.b16 %v6212
    %v6426 = vunpack.c.h.b16 %v6212
    %v6427 = vunpack.c.l.b16 %v6213
    %v6428 = vunpack.c.h.b16 %v6213
    %v6429 = vunpack.c.l.b16 %v6214
    %v6430 = vunpack.c.h.b16 %v6214
    %v6431 = vunpack.c.l.b16 %v6215
    %v6432 = vunpack.c.h.b16 %v6215
    %v6433 = vunpack.c.l.b16 %v6216
    %v6434 = vunpack.c.h.b16 %v6216
    %v6435 = vunpack.c.l.b16 %v6217
    %v6436 = vunpack.c.h.b16 %v6217
    %v6437 = vunpack.c.l.b16 %v6218
    %v6438 = vunpack.c.h.b16 %v6218
    %v6439 = vunpack.c.l.b16 %v6219
    %v6440 = vunpack.c.h.b16 %v6219
    %v6441 = vunpack.c.l.b16 %v6220
    %v6442 = vunpack.c.h.b16 %v6220
    %v6443 = vpack.c.b16 %v6323, %v6315
    %v6444 = vpack.c.b16 %v6324, %v6316
    %v6445 = vpack.c.b16 %v6325, %v6317
    %v6446 = vpack.c.b16 %v6326, %v6318
    %v6447 = vpack.c.b16 %v6327, %v6319
    %v6448 = vpack.c.b16 %v6328, %v6320
    %v6449 = vpack.c.b16 %v6329, %v6321
    %v6450 = vpack.c.b16 %v6330, %v6322
    %v6451 = vpack.c.b16 %v6339, %v6331
    %v6452 = vpack.c.b16 %v6340, %v6332
    %v6453 = vpack.c.b16 %v6341, %v6333
    %v6454 = vpack.c.b16 %v6342, %v6334
    %v6455 = vpack.c.b16 %v6343, %v6335
    %v6456 = vpack.c.b16 %v6344, %v6336
    %v6457 = vpack.c.b16 %v6345, %v6337
    %v6458 = vpack.c.b16 %v6346, %v6338
    %v6459 = vpack.c.b16 %v6355, %v6347
    %v6460 = vpack.c.b16 %v6356, %v6348
    %v6461 = vpack.c.b16 %v6357, %v6349
    %v6462 = vpack.c.b16 %v6358, %v6350
    %v6463 = vpack.c.b16 %v6359, %v6351
    %v6464 = vpack.c.b16 %v6360, %v6352
    %v6465 = vpack.c.b16 %v6361, %v6353
    %v6466 = vpack.c.b16 %v6362, %v6354
    %v6467 = vpack.c.b16 %v6371, %v6363
    %v6468 = vpack.c.b16 %v6372, %v6364
    %v6469 = vpack.c.b16 %v6373, %v6365
    %v6470 = vpack.c.b16 %v6374, %v6366
    %v6471 = vpack.c.b16 %v6375, %v6367
    %v6472 = vpack.c.b16 %v6376, %v6368
    %v6473 = vpack.c.b16 %v6377, %v6369
    %v6474 = vpack.c.b16 %v6378, %v6370
    %v6475 = vpack.c.b16 %v6387, %v6379
    %v6476 = vpack.c.b16 %v6388, %v6380
    %v6477 = vpack.c.b16 %v6389, %v6381
    %v6478 = vpack.c.b16 %v6390, %v6382
    %v6479 = vpack.c.b16 %v6391, %v6383
    %v6480 = vpack.c.b16 %v6392, %v6384
    %v6481 = vpack.c.b16 %v6393, %v6385
    %v6482 = vpack.c.b16 %v6394, %v6386
    %v6483 = vpack.c.b16 %v6403, %v6395
    %v6484 = vpack.c.b16 %v6404, %v6396
    %v6485 = vpack.c.b16 %v6405, %v6397
    %v6486 = vpack.c.b16 %v6406, %v6398
    %v6487 = vpack.c.b16 %v6407, %v6399
    %v6488 = vpack.c.b16 %v6408, %v6400
    %v6489 = vpack.c.b16 %v6409, %v6401
    %v6490 = vpack.c.b16 %v6410, %v6402
    %v6491 = vpack.c.b16 %v6419, %v6411
    %v6492 = vpack.c.b16 %v6420, %v6412
    %v6493 = vpack.c.b16 %v6421, %v6413
    %v6494 = vpack.c.b16 %v6422, %v6414
    %v6495 = vpack.c.b16 %v6423, %v6415
    %v6496 = vpack.c.b16 %v6424, %v6416
    %v6497 = vpack.c.b16 %v6425, %v6417
    %v6498 = vpack.c.b16 %v6426, %v6418
    %v6499 = vpack.c.b16 %v6435, %v6427
    %v6500 = vpack.c.b16 %v6436, %v6428
    %v6501 = vpack.c.b16 %v6437, %v6429
    %v6502 = vpack.c.b16 %v6438, %v6430
    %v6503 = vpack.c.b16 %v6439, %v6431
    %v6504 = vpack.c.b16 %v6440, %v6432
    %v6505 = vpack.c.b16 %v6441, %v6433
    %v6506 = vpack.c.b16 %v6442, %v6434
    %6571 = vmatprep.subr.bf16.mxu0 %v6444
    %6572 = vmatpush1.bf16.msra.mxu0 %v6443
    %6573 = vmatprep.subr.bf16.mxu0 %v6452
    %6574 = vmatpush1.bf16.msra.mxu0 %v6451
    %6575 = vmatprep.subr.bf16.mxu0 %v6460
    %6576 = vmatpush1.bf16.msra.mxu0 %v6459
    %6577 = vmatprep.subr.bf16.mxu0 %v6468
    %6578 = vmatpush1.bf16.msra.mxu0 %v6467
    %6579 = vmatprep.subr.bf16.mxu0 %v6476
    %6580 = vmatpush1.bf16.msra.mxu0 %v6475
    %6581 = vmatprep.subr.bf16.mxu0 %v6484
    %6582 = vmatpush1.bf16.msra.mxu0 %v6483
    %6583 = vmatprep.subr.bf16.mxu0 %v6492
    %6584 = vmatpush1.bf16.msra.mxu0 %v6491
    %6585 = vmatprep.subr.bf16.mxu0 %v6500
    %6586 = vmatpush1.bf16.msra.mxu0 %v6499
    %6587 = vmatprep.subr.bf16.mxu0 0
    %6588 = vmatpush1.bf16.msra.mxu0 0
    %6589 = vmatprep.subr.bf16.mxu0 0
    %6590 = vmatpush1.bf16.msra.mxu0 0
    %6591 = vmatprep.subr.bf16.mxu0 0
    %6592 = vmatpush1.bf16.msra.mxu0 0
    %6593 = vmatprep.subr.bf16.mxu0 0
    %6594 = vmatpush1.bf16.msra.mxu0 0
    %6595 = vmatprep.subr.bf16.mxu0 0
    %6596 = vmatpush1.bf16.msra.mxu0 0
    %6597 = vmatprep.subr.bf16.mxu0 0
    %6598 = vmatpush1.bf16.msra.mxu0 0
    %6599 = vmatprep.subr.bf16.mxu0 0
    %6600 = vmatpush1.bf16.msra.mxu0 0
    %6601 = vmatprep.subr.bf16.mxu0 0
    %6602 = vmatpush1.bf16.msra.mxu0 0
    %6603 = vmatprep.mubr.bf16.mxu0 0
    %6604 = vmatmul.mubr.bf16.gmra.mrb[0].mxu0 %v6249
    %v6605 = vpop.f32.mrb[0].mxu0
    %v6606 = vadd.f32 0.0, %v6605
    %v6607 = vpop.f32.mrb[0].mxu0
    %v6608 = vadd.f32 0.0, %v6607
    %v6609 = vpop.f32.mrb[0].mxu0
    %v6610 = vadd.f32 0.0, %v6609
    %v6611 = vpop.f32.mrb[0].mxu0
    %v6612 = vadd.f32 0.0, %v6611
    %6613 = vdwg.mxu0
    %6614 = vmatprep.subr.bf16.mxu0 %v6446
    %6615 = vmatpush1.bf16.msra.mxu0 %v6445
    %6616 = vmatprep.subr.bf16.mxu0 %v6454
    %6617 = vmatpush1.bf16.msra.mxu0 %v6453
    %6618 = vmatprep.subr.bf16.mxu0 %v6462
    %6619 = vmatpush1.bf16.msra.mxu0 %v6461
    %6620 = vmatprep.subr.bf16.mxu0 %v6470
    %6621 = vmatpush1.bf16.msra.mxu0 %v6469
    %6622 = vmatprep.subr.bf16.mxu0 %v6478
    %6623 = vmatpush1.bf16.msra.mxu0 %v6477
    %6624 = vmatprep.subr.bf16.mxu0 %v6486
    %6625 = vmatpush1.bf16.msra.mxu0 %v6485
    %6626 = vmatprep.subr.bf16.mxu0 %v6494
    %6627 = vmatpush1.bf16.msra.mxu0 %v6493
    %6628 = vmatprep.subr.bf16.mxu0 %v6502
    %6629 = vmatpush1.bf16.msra.mxu0 %v6501
    %6630 = vmatprep.subr.bf16.mxu0 0
    %6631 = vmatpush1.bf16.msra.mxu0 0
    %6632 = vmatprep.subr.bf16.mxu0 0
    %6633 = vmatpush1.bf16.msra.mxu0 0
    %6634 = vmatprep.subr.bf16.mxu0 0
    %6635 = vmatpush1.bf16.msra.mxu0 0
    %6636 = vmatprep.subr.bf16.mxu0 0
    %6637 = vmatpush1.bf16.msra.mxu0 0
    %6638 = vmatprep.subr.bf16.mxu0 0
    %6639 = vmatpush1.bf16.msra.mxu0 0
    %6640 = vmatprep.subr.bf16.mxu0 0
    %6641 = vmatpush1.bf16.msra.mxu0 0
    %6642 = vmatprep.subr.bf16.mxu0 0
    %6643 = vmatpush1.bf16.msra.mxu0 0
    %6644 = vmatprep.subr.bf16.mxu0 0
    %6645 = vmatpush1.bf16.msra.mxu0 0
    %6646 = vmatprep.mubr.bf16.mxu0 0
    %6647 = vmatmul.mubr.bf16.gmra.mrb[0].mxu0 %v6249
    %v6648 = vpop.f32.mrb[0].mxu0
    %v6649 = vadd.f32 0.0, %v6648
    %v6650 = vpop.f32.mrb[0].mxu0
    %v6651 = vadd.f32 0.0, %v6650
    %v6652 = vpop.f32.mrb[0].mxu0
    %v6653 = vadd.f32 0.0, %v6652
    %v6654 = vpop.f32.mrb[0].mxu0
    %v6655 = vadd.f32 0.0, %v6654
    %6656 = vdwg.mxu0
    %6657 = vmatprep.subr.bf16.mxu0 %v6448
    %6658 = vmatpush1.bf16.msra.mxu0 %v6447
    %6659 = vmatprep.subr.bf16.mxu0 %v6456
    %6660 = vmatpush1.bf16.msra.mxu0 %v6455
    %6661 = vmatprep.subr.bf16.mxu0 %v6464
    %6662 = vmatpush1.bf16.msra.mxu0 %v6463
    %6663 = vmatprep.subr.bf16.mxu0 %v6472
    %6664 = vmatpush1.bf16.msra.mxu0 %v6471
    %6665 = vmatprep.subr.bf16.mxu0 %v6480
    %6666 = vmatpush1.bf16.msra.mxu0 %v6479
    %6667 = vmatprep.subr.bf16.mxu0 %v6488
    %6668 = vmatpush1.bf16.msra.mxu0 %v6487
    %6669 = vmatprep.subr.bf16.mxu0 %v6496
    %6670 = vmatpush1.bf16.msra.mxu0 %v6495
    %6671 = vmatprep.subr.bf16.mxu0 %v6504
    %6672 = vmatpush1.bf16.msra.mxu0 %v6503
    %6673 = vmatprep.subr.bf16.mxu0 0
    %6674 = vmatpush1.bf16.msra.mxu0 0
    %6675 = vmatprep.subr.bf16.mxu0 0
    %6676 = vmatpush1.bf16.msra.mxu0 0
    %6677 = vmatprep.subr.bf16.mxu0 0
    %6678 = vmatpush1.bf16.msra.mxu0 0
    %6679 = vmatprep.subr.bf16.mxu0 0
    %6680 = vmatpush1.bf16.msra.mxu0 0
    %6681 = vmatprep.subr.bf16.mxu0 0
    %6682 = vmatpush1.bf16.msra.mxu0 0
    %6683 = vmatprep.subr.bf16.mxu0 0
    %6684 = vmatpush1.bf16.msra.mxu0 0
    %6685 = vmatprep.subr.bf16.mxu0 0
    %6686 = vmatpush1.bf16.msra.mxu0 0
    %6687 = vmatprep.subr.bf16.mxu0 0
    %6688 = vmatpush1.bf16.msra.mxu0 0
    %6689 = vmatprep.mubr.bf16.mxu0 0
    %6690 = vmatmul.mubr.bf16.gmra.mrb[0].mxu0 %v6249
    %v6691 = vpop.f32.mrb[0].mxu0
    %v6692 = vadd.f32 0.0, %v6691
    %v6693 = vpop.f32.mrb[0].mxu0
    %v6694 = vadd.f32 0.0, %v6693
    %v6695 = vpop.f32.mrb[0].mxu0
    %v6696 = vadd.f32 0.0, %v6695
    %v6697 = vpop.f32.mrb[0].mxu0
    %v6698 = vadd.f32 0.0, %v6697
    %6699 = vdwg.mxu0
    %6700 = vmatprep.subr.bf16.mxu0 %v6450
    %6701 = vmatpush1.bf16.msra.mxu0 %v6449
    %6702 = vmatprep.subr.bf16.mxu0 %v6458
    %6703 = vmatpush1.bf16.msra.mxu0 %v6457
    %6704 = vmatprep.subr.bf16.mxu0 %v6466
    %6705 = vmatpush1.bf16.msra.mxu0 %v6465
    %6706 = vmatprep.subr.bf16.mxu0 %v6474
    %6707 = vmatpush1.bf16.msra.mxu0 %v6473
    %6708 = vmatprep.subr.bf16.mxu0 %v6482
    %6709 = vmatpush1.bf16.msra.mxu0 %v6481
    %6710 = vmatprep.subr.bf16.mxu0 %v6490
    %6711 = vmatpush1.bf16.msra.mxu0 %v6489
    %6712 = vmatprep.subr.bf16.mxu0 %v6498
    %6713 = vmatpush1.bf16.msra.mxu0 %v6497
    %6714 = vmatprep.subr.bf16.mxu0 %v6506
    %6715 = vmatpush1.bf16.msra.mxu0 %v6505
    %6716 = vmatprep.subr.bf16.mxu0 0
    %6717 = vmatpush1.bf16.msra.mxu0 0
    %6718 = vmatprep.subr.bf16.mxu0 0
    %6719 = vmatpush1.bf16.msra.mxu0 0
    %6720 = vmatprep.subr.bf16.mxu0 0
    %6721 = vmatpush1.bf16.msra.mxu0 0
    %6722 = vmatprep.subr.bf16.mxu0 0
    %6723 = vmatpush1.bf16.msra.mxu0 0
    %6724 = vmatprep.subr.bf16.mxu0 0
    %6725 = vmatpush1.bf16.msra.mxu0 0
    %6726 = vmatprep.subr.bf16.mxu0 0
    %6727 = vmatpush1.bf16.msra.mxu0 0
    %6728 = vmatprep.subr.bf16.mxu0 0
    %6729 = vmatpush1.bf16.msra.mxu0 0
    %6730 = vmatprep.subr.bf16.mxu0 0
    %6731 = vmatpush1.bf16.msra.mxu0 0
    %6732 = vmatprep.mubr.bf16.mxu0 0
    %6733 = vmatmul.mubr.bf16.gmra.mrb[0].mxu0 %v6249
    %v6734 = vpop.f32.mrb[0].mxu0
    %v6735 = vadd.f32 0.0, %v6734
    %v6736 = vpop.f32.mrb[0].mxu0
    %v6737 = vadd.f32 0.0, %v6736
    %v6738 = vpop.f32.mrb[0].mxu0
    %v6739 = vadd.f32 0.0, %v6738
    %v6740 = vpop.f32.mrb[0].mxu0
    %v6741 = vadd.f32 0.0, %v6740
    %6742 = vdwg.mxu0
    %v6743 = vadd.f32 %v6020, %v6606
    %v6744 = vadd.f32 %v6022, %v6608
    %v6745 = vadd.f32 %v6063, %v6649
    %v6746 = vadd.f32 %v6065, %v6651
    %v6747 = vadd.f32 %v6106, %v6692
    %v6748 = vadd.f32 %v6108, %v6694
    %v6749 = vadd.f32 %v6149, %v6735
    %v6750 = vadd.f32 %v6151, %v6737
    %v6751 = vadd.f32 %v6024, %v6610
    %v6752 = vadd.f32 %v6026, %v6612
    %v6753 = vadd.f32 %v6067, %v6653
    %v6754 = vadd.f32 %v6069, %v6655
    %v6755 = vadd.f32 %v6110, %v6696
    %v6756 = vadd.f32 %v6112, %v6698
    %v6757 = vadd.f32 %v6153, %v6739
    %v6758 = vadd.f32 %v6155, %v6741
    %v6759 = vld [vmem:[#allocation3 + $0x600] sm:$0xff]
    %v6760 = vld [vmem:[#allocation3 + $0x608] sm:$0xff]
    %v6761 = vld [vmem:[#allocation3 + $0x610] sm:$0xff]
    %v6762 = vld [vmem:[#allocation3 + $0x618] sm:$0xff]
    %v6763 = vld [vmem:[#allocation3 + $0x620] sm:$0xff]
    %v6764 = vld [vmem:[#allocation3 + $0x628] sm:$0xff]
    %v6765 = vld [vmem:[#allocation3 + $0x630] sm:$0xff]
    %v6766 = vld [vmem:[#allocation3 + $0x638] sm:$0xff]
    %v6767 = vld [vmem:[#allocation3 + $0x640] sm:$0xff]
    %v6768 = vld [vmem:[#allocation3 + $0x648] sm:$0xff]
    %v6769 = vld [vmem:[#allocation3 + $0x650] sm:$0xff]
    %v6770 = vld [vmem:[#allocation3 + $0x658] sm:$0xff]
    %v6771 = vld [vmem:[#allocation3 + $0x660] sm:$0xff]
    %v6772 = vld [vmem:[#allocation3 + $0x668] sm:$0xff]
    %v6773 = vld [vmem:[#allocation3 + $0x670] sm:$0xff]
    %v6774 = vld [vmem:[#allocation3 + $0x678] sm:$0xff]
    %v6775 = vld [vmem:[#allocation3 + $0x680] sm:$0xff]
    %v6776 = vld [vmem:[#allocation3 + $0x688] sm:$0xff]
    %v6777 = vld [vmem:[#allocation3 + $0x690] sm:$0xff]
    %v6778 = vld [vmem:[#allocation3 + $0x698] sm:$0xff]
    %v6779 = vld [vmem:[#allocation3 + $0x6a0] sm:$0xff]
    %v6780 = vld [vmem:[#allocation3 + $0x6a8] sm:$0xff]
    %v6781 = vld [vmem:[#allocation3 + $0x6b0] sm:$0xff]
    %v6782 = vld [vmem:[#allocation3 + $0x6b8] sm:$0xff]
    %v6783 = vld [vmem:[#allocation3 + $0x6c0] sm:$0xff]
    %v6784 = vld [vmem:[#allocation3 + $0x6c8] sm:$0xff]
    %v6785 = vld [vmem:[#allocation3 + $0x6d0] sm:$0xff]
    %v6786 = vld [vmem:[#allocation3 + $0x6d8] sm:$0xff]
    %v6787 = vld [vmem:[#allocation3 + $0x6e0] sm:$0xff]
    %v6788 = vld [vmem:[#allocation3 + $0x6e8] sm:$0xff]
    %v6789 = vld [vmem:[#allocation3 + $0x6f0] sm:$0xff]
    %v6790 = vld [vmem:[#allocation3 + $0x6f8] sm:$0xff]
    %v6791 = vld [vmem:[#allocation3 + $0x700] sm:$0xff]
    %v6792 = vld [vmem:[#allocation3 + $0x708] sm:$0xff]
    %v6793 = vld [vmem:[#allocation3 + $0x710] sm:$0xff]
    %v6794 = vld [vmem:[#allocation3 + $0x718] sm:$0xff]
    %v6795 = vld [vmem:[#allocation3 + $0x720] sm:$0xff]
    %v6796 = vld [vmem:[#allocation3 + $0x728] sm:$0xff]
    %v6797 = vld [vmem:[#allocation3 + $0x730] sm:$0xff]
    %v6798 = vld [vmem:[#allocation3 + $0x738] sm:$0xff]
    %v6799 = vld [vmem:[#allocation3 + $0x740] sm:$0xff]
    %v6800 = vld [vmem:[#allocation3 + $0x748] sm:$0xff]
    %v6801 = vld [vmem:[#allocation3 + $0x750] sm:$0xff]
    %v6802 = vld [vmem:[#allocation3 + $0x758] sm:$0xff]
    %v6803 = vld [vmem:[#allocation3 + $0x760] sm:$0xff]
    %v6804 = vld [vmem:[#allocation3 + $0x768] sm:$0xff]
    %v6805 = vld [vmem:[#allocation3 + $0x770] sm:$0xff]
    %v6806 = vld [vmem:[#allocation3 + $0x778] sm:$0xff]
    %v6807 = vld [vmem:[#allocation3 + $0x780] sm:$0xff]
    %v6808 = vld [vmem:[#allocation3 + $0x788] sm:$0xff]
    %v6809 = vld [vmem:[#allocation3 + $0x790] sm:$0xff]
    %v6810 = vld [vmem:[#allocation3 + $0x798] sm:$0xff]
    %v6811 = vld [vmem:[#allocation3 + $0x7a0] sm:$0xff]
    %v6812 = vld [vmem:[#allocation3 + $0x7a8] sm:$0xff]
    %v6813 = vld [vmem:[#allocation3 + $0x7b0] sm:$0xff]
    %v6814 = vld [vmem:[#allocation3 + $0x7b8] sm:$0xff]
    %v6815 = vld [vmem:[#allocation3 + $0x7c0] sm:$0xff]
    %v6816 = vld [vmem:[#allocation3 + $0x7c8] sm:$0xff]
    %v6817 = vld [vmem:[#allocation3 + $0x7d0] sm:$0xff]
    %v6818 = vld [vmem:[#allocation3 + $0x7d8] sm:$0xff]
    %v6819 = vld [vmem:[#allocation3 + $0x7e0] sm:$0xff]
    %v6820 = vld [vmem:[#allocation3 + $0x7e8] sm:$0xff]
    %v6821 = vld [vmem:[#allocation3 + $0x7f0] sm:$0xff]
    %v6822 = vld [vmem:[#allocation3 + $0x7f8] sm:$0xff]
    %v6823 = vrot.slane %v5090, 3
    %v6824 = vrot.slane %v5091, 2
    %v6825 = vsel %vm5107, %v6824, %v6823
    %v6826 = vrot.slane %v5092, 1
    %v6827 = vsel %vm5110, %v6826, %v6825
    %v6828 = vsel %vm5113, %v5093, %v6827
    %v6829 = vrot.slane %v5094, 7
    %v6830 = vsel %vm5116, %v6829, %v6828
    %v6831 = vrot.slane %v5095, 6
    %v6832 = vsel %vm5119, %v6831, %v6830
    %v6833 = vrot.slane %v5096, 5
    %v6834 = vsel %vm5122, %v6833, %v6832
    %v6835 = vrot.slane %v5097, 4
    %v6836 = vsel %vm5125, %v6835, %v6834
    %v6837 = vrot.slane %v5098, 3
    %v6838 = vrot.slane %v5099, 2
    %v6839 = vsel %vm5107, %v6838, %v6837
    %v6840 = vrot.slane %v5100, 1
    %v6841 = vsel %vm5110, %v6840, %v6839
    %v6842 = vsel %vm5113, %v5101, %v6841
    %v6843 = vrot.slane %v5102, 7
    %v6844 = vsel %vm5116, %v6843, %v6842
    %v6845 = vrot.slane %v5103, 6
    %v6846 = vsel %vm5119, %v6845, %v6844
    %v6847 = vrot.slane %v5104, 5
    %v6848 = vsel %vm5122, %v6847, %v6846
    %v6849 = vrot.slane %v5105, 4
    %v6850 = vsel %vm5125, %v6849, %v6848
    %v6851 = vpack.c.b16 %v6850, %v6836
    %v6917 = vunpack.c.l.b16 %v6759
    %v6918 = vunpack.c.h.b16 %v6759
    %v6919 = vunpack.c.l.b16 %v6760
    %v6920 = vunpack.c.h.b16 %v6760
    %v6921 = vunpack.c.l.b16 %v6761
    %v6922 = vunpack.c.h.b16 %v6761
    %v6923 = vunpack.c.l.b16 %v6762
    %v6924 = vunpack.c.h.b16 %v6762
    %v6925 = vunpack.c.l.b16 %v6763
    %v6926 = vunpack.c.h.b16 %v6763
    %v6927 = vunpack.c.l.b16 %v6764
    %v6928 = vunpack.c.h.b16 %v6764
    %v6929 = vunpack.c.l.b16 %v6765
    %v6930 = vunpack.c.h.b16 %v6765
    %v6931 = vunpack.c.l.b16 %v6766
    %v6932 = vunpack.c.h.b16 %v6766
    %v6933 = vunpack.c.l.b16 %v6767
    %v6934 = vunpack.c.h.b16 %v6767
    %v6935 = vunpack.c.l.b16 %v6768
    %v6936 = vunpack.c.h.b16 %v6768
    %v6937 = vunpack.c.l.b16 %v6769
    %v6938 = vunpack.c.h.b16 %v6769
    %v6939 = vunpack.c.l.b16 %v6770
    %v6940 = vunpack.c.h.b16 %v6770
    %v6941 = vunpack.c.l.b16 %v6771
    %v6942 = vunpack.c.h.b16 %v6771
    %v6943 = vunpack.c.l.b16 %v6772
    %v6944 = vunpack.c.h.b16 %v6772
    %v6945 = vunpack.c.l.b16 %v6773
    %v6946 = vunpack.c.h.b16 %v6773
    %v6947 = vunpack.c.l.b16 %v6774
    %v6948 = vunpack.c.h.b16 %v6774
    %v6949 = vunpack.c.l.b16 %v6775
    %v6950 = vunpack.c.h.b16 %v6775
    %v6951 = vunpack.c.l.b16 %v6776
    %v6952 = vunpack.c.h.b16 %v6776
    %v6953 = vunpack.c.l.b16 %v6777
    %v6954 = vunpack.c.h.b16 %v6777
    %v6955 = vunpack.c.l.b16 %v6778
    %v6956 = vunpack.c.h.b16 %v6778
    %v6957 = vunpack.c.l.b16 %v6779
    %v6958 = vunpack.c.h.b16 %v6779
    %v6959 = vunpack.c.l.b16 %v6780
    %v6960 = vunpack.c.h.b16 %v6780
    %v6961 = vunpack.c.l.b16 %v6781
    %v6962 = vunpack.c.h.b16 %v6781
    %v6963 = vunpack.c.l.b16 %v6782
    %v6964 = vunpack.c.h.b16 %v6782
    %v6965 = vunpack.c.l.b16 %v6783
    %v6966 = vunpack.c.h.b16 %v6783
    %v6967 = vunpack.c.l.b16 %v6784
    %v6968 = vunpack.c.h.b16 %v6784
    %v6969 = vunpack.c.l.b16 %v6785
    %v6970 = vunpack.c.h.b16 %v6785
    %v6971 = vunpack.c.l.b16 %v6786
    %v6972 = vunpack.c.h.b16 %v6786
    %v6973 = vunpack.c.l.b16 %v6787
    %v6974 = vunpack.c.h.b16 %v6787
    %v6975 = vunpack.c.l.b16 %v6788
    %v6976 = vunpack.c.h.b16 %v6788
    %v6977 = vunpack.c.l.b16 %v6789
    %v6978 = vunpack.c.h.b16 %v6789
    %v6979 = vunpack.c.l.b16 %v6790
    %v6980 = vunpack.c.h.b16 %v6790
    %v6981 = vunpack.c.l.b16 %v6791
    %v6982 = vunpack.c.h.b16 %v6791
    %v6983 = vunpack.c.l.b16 %v6792
    %v6984 = vunpack.c.h.b16 %v6792
    %v6985 = vunpack.c.l.b16 %v6793
    %v6986 = vunpack.c.h.b16 %v6793
    %v6987 = vunpack.c.l.b16 %v6794
    %v6988 = vunpack.c.h.b16 %v6794
    %v6989 = vunpack.c.l.b16 %v6795
    %v6990 = vunpack.c.h.b16 %v6795
    %v6991 = vunpack.c.l.b16 %v6796
    %v6992 = vunpack.c.h.b16 %v6796
    %v6993 = vunpack.c.l.b16 %v6797
    %v6994 = vunpack.c.h.b16 %v6797
    %v6995 = vunpack.c.l.b16 %v6798
    %v6996 = vunpack.c.h.b16 %v6798
    %v6997 = vunpack.c.l.b16 %v6799
    %v6998 = vunpack.c.h.b16 %v6799
    %v6999 = vunpack.c.l.b16 %v6800
    %v7000 = vunpack.c.h.b16 %v6800
    %v7001 = vunpack.c.l.b16 %v6801
    %v7002 = vunpack.c.h.b16 %v6801
    %v7003 = vunpack.c.l.b16 %v6802
    %v7004 = vunpack.c.h.b16 %v6802
    %v7005 = vunpack.c.l.b16 %v6803
    %v7006 = vunpack.c.h.b16 %v6803
    %v7007 = vunpack.c.l.b16 %v6804
    %v7008 = vunpack.c.h.b16 %v6804
    %v7009 = vunpack.c.l.b16 %v6805
    %v7010 = vunpack.c.h.b16 %v6805
    %v7011 = vunpack.c.l.b16 %v6806
    %v7012 = vunpack.c.h.b16 %v6806
    %v7013 = vunpack.c.l.b16 %v6807
    %v7014 = vunpack.c.h.b16 %v6807
    %v7015 = vunpack.c.l.b16 %v6808
    %v7016 = vunpack.c.h.b16 %v6808
    %v7017 = vunpack.c.l.b16 %v6809
    %v7018 = vunpack.c.h.b16 %v6809
    %v7019 = vunpack.c.l.b16 %v6810
    %v7020 = vunpack.c.h.b16 %v6810
    %v7021 = vunpack.c.l.b16 %v6811
    %v7022 = vunpack.c.h.b16 %v6811
    %v7023 = vunpack.c.l.b16 %v6812
    %v7024 = vunpack.c.h.b16 %v6812
    %v7025 = vunpack.c.l.b16 %v6813
    %v7026 = vunpack.c.h.b16 %v6813
    %v7027 = vunpack.c.l.b16 %v6814
    %v7028 = vunpack.c.h.b16 %v6814
    %v7029 = vunpack.c.l.b16 %v6815
    %v7030 = vunpack.c.h.b16 %v6815
    %v7031 = vunpack.c.l.b16 %v6816
    %v7032 = vunpack.c.h.b16 %v6816
    %v7033 = vunpack.c.l.b16 %v6817
    %v7034 = vunpack.c.h.b16 %v6817
    %v7035 = vunpack.c.l.b16 %v6818
    %v7036 = vunpack.c.h.b16 %v6818
    %v7037 = vunpack.c.l.b16 %v6819
    %v7038 = vunpack.c.h.b16 %v6819
    %v7039 = vunpack.c.l.b16 %v6820
    %v7040 = vunpack.c.h.b16 %v6820
    %v7041 = vunpack.c.l.b16 %v6821
    %v7042 = vunpack.c.h.b16 %v6821
    %v7043 = vunpack.c.l.b16 %v6822
    %v7044 = vunpack.c.h.b16 %v6822
    %v7045 = vpack.c.b16 %v6925, %v6917
    %v7046 = vpack.c.b16 %v6926, %v6918
    %v7047 = vpack.c.b16 %v6927, %v6919
    %v7048 = vpack.c.b16 %v6928, %v6920
    %v7049 = vpack.c.b16 %v6929, %v6921
    %v7050 = vpack.c.b16 %v6930, %v6922
    %v7051 = vpack.c.b16 %v6931, %v6923
    %v7052 = vpack.c.b16 %v6932, %v6924
    %v7053 = vpack.c.b16 %v6941, %v6933
    %v7054 = vpack.c.b16 %v6942, %v6934
    %v7055 = vpack.c.b16 %v6943, %v6935
    %v7056 = vpack.c.b16 %v6944, %v6936
    %v7057 = vpack.c.b16 %v6945, %v6937
    %v7058 = vpack.c.b16 %v6946, %v6938
    %v7059 = vpack.c.b16 %v6947, %v6939
    %v7060 = vpack.c.b16 %v6948, %v6940
    %v7061 = vpack.c.b16 %v6957, %v6949
    %v7062 = vpack.c.b16 %v6958, %v6950
    %v7063 = vpack.c.b16 %v6959, %v6951
    %v7064 = vpack.c.b16 %v6960, %v6952
    %v7065 = vpack.c.b16 %v6961, %v6953
    %v7066 = vpack.c.b16 %v6962, %v6954
    %v7067 = vpack.c.b16 %v6963, %v6955
    %v7068 = vpack.c.b16 %v6964, %v6956
    %v7069 = vpack.c.b16 %v6973, %v6965
    %v7070 = vpack.c.b16 %v6974, %v6966
    %v7071 = vpack.c.b16 %v6975, %v6967
    %v7072 = vpack.c.b16 %v6976, %v6968
    %v7073 = vpack.c.b16 %v6977, %v6969
    %v7074 = vpack.c.b16 %v6978, %v6970
    %v7075 = vpack.c.b16 %v6979, %v6971
    %v7076 = vpack.c.b16 %v6980, %v6972
    %v7077 = vpack.c.b16 %v6989, %v6981
    %v7078 = vpack.c.b16 %v6990, %v6982
    %v7079 = vpack.c.b16 %v6991, %v6983
    %v7080 = vpack.c.b16 %v6992, %v6984
    %v7081 = vpack.c.b16 %v6993, %v6985
    %v7082 = vpack.c.b16 %v6994, %v6986
    %v7083 = vpack.c.b16 %v6995, %v6987
    %v7084 = vpack.c.b16 %v6996, %v6988
    %v7085 = vpack.c.b16 %v7005, %v6997
    %v7086 = vpack.c.b16 %v7006, %v6998
    %v7087 = vpack.c.b16 %v7007, %v6999
    %v7088 = vpack.c.b16 %v7008, %v7000
    %v7089 = vpack.c.b16 %v7009, %v7001
    %v7090 = vpack.c.b16 %v7010, %v7002
    %v7091 = vpack.c.b16 %v7011, %v7003
    %v7092 = vpack.c.b16 %v7012, %v7004
    %v7093 = vpack.c.b16 %v7021, %v7013
    %v7094 = vpack.c.b16 %v7022, %v7014
    %v7095 = vpack.c.b16 %v7023, %v7015
    %v7096 = vpack.c.b16 %v7024, %v7016
    %v7097 = vpack.c.b16 %v7025, %v7017
    %v7098 = vpack.c.b16 %v7026, %v7018
    %v7099 = vpack.c.b16 %v7027, %v7019
    %v7100 = vpack.c.b16 %v7028, %v7020
    %v7101 = vpack.c.b16 %v7037, %v7029
    %v7102 = vpack.c.b16 %v7038, %v7030
    %v7103 = vpack.c.b16 %v7039, %v7031
    %v7104 = vpack.c.b16 %v7040, %v7032
    %v7105 = vpack.c.b16 %v7041, %v7033
    %v7106 = vpack.c.b16 %v7042, %v7034
    %v7107 = vpack.c.b16 %v7043, %v7035
    %v7108 = vpack.c.b16 %v7044, %v7036
    %7173 = vmatprep.subr.bf16.mxu0 %v7046
    %7174 = vmatpush1.bf16.msra.mxu0 %v7045
    %7175 = vmatprep.subr.bf16.mxu0 %v7054
    %7176 = vmatpush1.bf16.msra.mxu0 %v7053
    %7177 = vmatprep.subr.bf16.mxu0 %v7062
    %7178 = vmatpush1.bf16.msra.mxu0 %v7061
    %7179 = vmatprep.subr.bf16.mxu0 %v7070
    %7180 = vmatpush1.bf16.msra.mxu0 %v7069
    %7181 = vmatprep.subr.bf16.mxu0 %v7078
    %7182 = vmatpush1.bf16.msra.mxu0 %v7077
    %7183 = vmatprep.subr.bf16.mxu0 %v7086
    %7184 = vmatpush1.bf16.msra.mxu0 %v7085
    %7185 = vmatprep.subr.bf16.mxu0 %v7094
    %7186 = vmatpush1.bf16.msra.mxu0 %v7093
    %7187 = vmatprep.subr.bf16.mxu0 %v7102
    %7188 = vmatpush1.bf16.msra.mxu0 %v7101
    %7189 = vmatprep.subr.bf16.mxu0 0
    %7190 = vmatpush1.bf16.msra.mxu0 0
    %7191 = vmatprep.subr.bf16.mxu0 0
    %7192 = vmatpush1.bf16.msra.mxu0 0
    %7193 = vmatprep.subr.bf16.mxu0 0
    %7194 = vmatpush1.bf16.msra.mxu0 0
    %7195 = vmatprep.subr.bf16.mxu0 0
    %7196 = vmatpush1.bf16.msra.mxu0 0
    %7197 = vmatprep.subr.bf16.mxu0 0
    %7198 = vmatpush1.bf16.msra.mxu0 0
    %7199 = vmatprep.subr.bf16.mxu0 0
    %7200 = vmatpush1.bf16.msra.mxu0 0
    %7201 = vmatprep.subr.bf16.mxu0 0
    %7202 = vmatpush1.bf16.msra.mxu0 0
    %7203 = vmatprep.subr.bf16.mxu0 0
    %7204 = vmatpush1.bf16.msra.mxu0 0
    %7205 = vmatprep.mubr.bf16.mxu0 0
    %7206 = vmatmul.mubr.bf16.gmra.mrb[0].mxu0 %v6851
    %v7207 = vpop.f32.mrb[0].mxu0
    %v7208 = vadd.f32 0.0, %v7207
    %v7209 = vpop.f32.mrb[0].mxu0
    %v7210 = vadd.f32 0.0, %v7209
    %v7211 = vpop.f32.mrb[0].mxu0
    %v7212 = vadd.f32 0.0, %v7211
    %v7213 = vpop.f32.mrb[0].mxu0
    %v7214 = vadd.f32 0.0, %v7213
    %7215 = vdwg.mxu0
    %7216 = vmatprep.subr.bf16.mxu0 %v7048
    %7217 = vmatpush1.bf16.msra.mxu0 %v7047
    %7218 = vmatprep.subr.bf16.mxu0 %v7056
    %7219 = vmatpush1.bf16.msra.mxu0 %v7055
    %7220 = vmatprep.subr.bf16.mxu0 %v7064
    %7221 = vmatpush1.bf16.msra.mxu0 %v7063
    %7222 = vmatprep.subr.bf16.mxu0 %v7072
    %7223 = vmatpush1.bf16.msra.mxu0 %v7071
    %7224 = vmatprep.subr.bf16.mxu0 %v7080
    %7225 = vmatpush1.bf16.msra.mxu0 %v7079
    %7226 = vmatprep.subr.bf16.mxu0 %v7088
    %7227 = vmatpush1.bf16.msra.mxu0 %v7087
    %7228 = vmatprep.subr.bf16.mxu0 %v7096
    %7229 = vmatpush1.bf16.msra.mxu0 %v7095
    %7230 = vmatprep.subr.bf16.mxu0 %v7104
    %7231 = vmatpush1.bf16.msra.mxu0 %v7103
    %7232 = vmatprep.subr.bf16.mxu0 0
    %7233 = vmatpush1.bf16.msra.mxu0 0
    %7234 = vmatprep.subr.bf16.mxu0 0
    %7235 = vmatpush1.bf16.msra.mxu0 0
    %7236 = vmatprep.subr.bf16.mxu0 0
    %7237 = vmatpush1.bf16.msra.mxu0 0
    %7238 = vmatprep.subr.bf16.mxu0 0
    %7239 = vmatpush1.bf16.msra.mxu0 0
    %7240 = vmatprep.subr.bf16.mxu0 0
    %7241 = vmatpush1.bf16.msra.mxu0 0
    %7242 = vmatprep.subr.bf16.mxu0 0
    %7243 = vmatpush1.bf16.msra.mxu0 0
    %7244 = vmatprep.subr.bf16.mxu0 0
    %7245 = vmatpush1.bf16.msra.mxu0 0
    %7246 = vmatprep.subr.bf16.mxu0 0
    %7247 = vmatpush1.bf16.msra.mxu0 0
    %7248 = vmatprep.mubr.bf16.mxu0 0
    %7249 = vmatmul.mubr.bf16.gmra.mrb[0].mxu0 %v6851
    %v7250 = vpop.f32.mrb[0].mxu0
    %v7251 = vadd.f32 0.0, %v7250
    %v7252 = vpop.f32.mrb[0].mxu0
    %v7253 = vadd.f32 0.0, %v7252
    %v7254 = vpop.f32.mrb[0].mxu0
    %v7255 = vadd.f32 0.0, %v7254
    %v7256 = vpop.f32.mrb[0].mxu0
    %v7257 = vadd.f32 0.0, %v7256
    %7258 = vdwg.mxu0
    %7259 = vmatprep.subr.bf16.mxu0 %v7050
    %7260 = vmatpush1.bf16.msra.mxu0 %v7049
    %7261 = vmatprep.subr.bf16.mxu0 %v7058
    %7262 = vmatpush1.bf16.msra.mxu0 %v7057
    %7263 = vmatprep.subr.bf16.mxu0 %v7066
    %7264 = vmatpush1.bf16.msra.mxu0 %v7065
    %7265 = vmatprep.subr.bf16.mxu0 %v7074
    %7266 = vmatpush1.bf16.msra.mxu0 %v7073
    %7267 = vmatprep.subr.bf16.mxu0 %v7082
    %7268 = vmatpush1.bf16.msra.mxu0 %v7081
    %7269 = vmatprep.subr.bf16.mxu0 %v7090
    %7270 = vmatpush1.bf16.msra.mxu0 %v7089
    %7271 = vmatprep.subr.bf16.mxu0 %v7098
    %7272 = vmatpush1.bf16.msra.mxu0 %v7097
    %7273 = vmatprep.subr.bf16.mxu0 %v7106
    %7274 = vmatpush1.bf16.msra.mxu0 %v7105
    %7275 = vmatprep.subr.bf16.mxu0 0
    %7276 = vmatpush1.bf16.msra.mxu0 0
    %7277 = vmatprep.subr.bf16.mxu0 0
    %7278 = vmatpush1.bf16.msra.mxu0 0
    %7279 = vmatprep.subr.bf16.mxu0 0
    %7280 = vmatpush1.bf16.msra.mxu0 0
    %7281 = vmatprep.subr.bf16.mxu0 0
    %7282 = vmatpush1.bf16.msra.mxu0 0
    %7283 = vmatprep.subr.bf16.mxu0 0
    %7284 = vmatpush1.bf16.msra.mxu0 0
    %7285 = vmatprep.subr.bf16.mxu0 0
    %7286 = vmatpush1.bf16.msra.mxu0 0
    %7287 = vmatprep.subr.bf16.mxu0 0
    %7288 = vmatpush1.bf16.msra.mxu0 0
    %7289 = vmatprep.subr.bf16.mxu0 0
    %7290 = vmatpush1.bf16.msra.mxu0 0
    %7291 = vmatprep.mubr.bf16.mxu0 0
    %7292 = vmatmul.mubr.bf16.gmra.mrb[0].mxu0 %v6851
    %v7293 = vpop.f32.mrb[0].mxu0
    %v7294 = vadd.f32 0.0, %v7293
    %v7295 = vpop.f32.mrb[0].mxu0
    %v7296 = vadd.f32 0.0, %v7295
    %v7297 = vpop.f32.mrb[0].mxu0
    %v7298 = vadd.f32 0.0, %v7297
    %v7299 = vpop.f32.mrb[0].mxu0
    %v7300 = vadd.f32 0.0, %v7299
    %7301 = vdwg.mxu0
    %7302 = vmatprep.subr.bf16.mxu0 %v7052
    %7303 = vmatpush1.bf16.msra.mxu0 %v7051
    %7304 = vmatprep.subr.bf16.mxu0 %v7060
    %7305 = vmatpush1.bf16.msra.mxu0 %v7059
    %7306 = vmatprep.subr.bf16.mxu0 %v7068
    %7307 = vmatpush1.bf16.msra.mxu0 %v7067
    %7308 = vmatprep.subr.bf16.mxu0 %v7076
    %7309 = vmatpush1.bf16.msra.mxu0 %v7075
    %7310 = vmatprep.subr.bf16.mxu0 %v7084
    %7311 = vmatpush1.bf16.msra.mxu0 %v7083
    %7312 = vmatprep.subr.bf16.mxu0 %v7092
    %7313 = vmatpush1.bf16.msra.mxu0 %v7091
    %7314 = vmatprep.subr.bf16.mxu0 %v7100
    %7315 = vmatpush1.bf16.msra.mxu0 %v7099
    %7316 = vmatprep.subr.bf16.mxu0 %v7108
    %7317 = vmatpush1.bf16.msra.mxu0 %v7107
    %7318 = vmatprep.subr.bf16.mxu0 0
    %7319 = vmatpush1.bf16.msra.mxu0 0
    %7320 = vmatprep.subr.bf16.mxu0 0
    %7321 = vmatpush1.bf16.msra.mxu0 0
    %7322 = vmatprep.subr.bf16.mxu0 0
    %7323 = vmatpush1.bf16.msra.mxu0 0
    %7324 = vmatprep.subr.bf16.mxu0 0
    %7325 = vmatpush1.bf16.msra.mxu0 0
    %7326 = vmatprep.subr.bf16.mxu0 0
    %7327 = vmatpush1.bf16.msra.mxu0 0
    %7328 = vmatprep.subr.bf16.mxu0 0
    %7329 = vmatpush1.bf16.msra.mxu0 0
    %7330 = vmatprep.subr.bf16.mxu0 0
    %7331 = vmatpush1.bf16.msra.mxu0 0
    %7332 = vmatprep.subr.bf16.mxu0 0
    %7333 = vmatpush1.bf16.msra.mxu0 0
    %7334 = vmatprep.mubr.bf16.mxu0 0
    %7335 = vmatmul.mubr.bf16.gmra.mrb[0].mxu0 %v6851
    %v7336 = vpop.f32.mrb[0].mxu0
    %v7337 = vadd.f32 0.0, %v7336
    %v7338 = vpop.f32.mrb[0].mxu0
    %v7339 = vadd.f32 0.0, %v7338
    %v7340 = vpop.f32.mrb[0].mxu0
    %v7341 = vadd.f32 0.0, %v7340
    %v7342 = vpop.f32.mrb[0].mxu0
    %v7343 = vadd.f32 0.0, %v7342
    %7344 = vdwg.mxu0
    %v7345 = vadd.f32 %v6743, %v7208
    %v7346 = vadd.f32 %v6744, %v7210
    %v7347 = vadd.f32 %v6745, %v7251
    %v7348 = vadd.f32 %v6746, %v7253
    %v7349 = vadd.f32 %v6747, %v7294
    %v7350 = vadd.f32 %v6748, %v7296
    %v7351 = vadd.f32 %v6749, %v7337
    %v7352 = vadd.f32 %v6750, %v7339
    %v7353 = vadd.f32 %v6751, %v7212
    %v7354 = vadd.f32 %v6752, %v7214
    %v7355 = vadd.f32 %v6753, %v7255
    %v7356 = vadd.f32 %v6754, %v7257
    %v7357 = vadd.f32 %v6755, %v7298
    %v7358 = vadd.f32 %v6756, %v7300
    %v7359 = vadd.f32 %v6757, %v7341
    %v7360 = vadd.f32 %v6758, %v7343
    %v7361 = vld [vmem:[%s14] sm:$0xff]
    %v7363 = vlaneseq
    %v7364 = vshrl.u32 %v7363, 7
    %v7365 = vsub.s32 0, %v7364
    %v7366 = vrot.slane %v7361, %v7365
    %v7367 = vlaneseq
    %v7368 = vshrl.u32 %v7367, 7
    %v7369 = vsub.s32 1, %v7368
    %v7370 = vrot.slane %v7361, %v7369
    %v7371 = vlaneseq
    %v7372 = vshrl.u32 %v7371, 7
    %v7373 = vsub.s32 2, %v7372
    %v7374 = vrot.slane %v7361, %v7373
    %v7375 = vlaneseq
    %v7376 = vshrl.u32 %v7375, 7
    %v7377 = vsub.s32 3, %v7376
    %v7378 = vrot.slane %v7361, %v7377
    %v7379 = vlaneseq
    %v7380 = vshrl.u32 %v7379, 7
    %v7381 = vsub.s32 4, %v7380
    %v7382 = vrot.slane %v7361, %v7381
    %v7383 = vlaneseq
    %v7384 = vshrl.u32 %v7383, 7
    %v7385 = vsub.s32 5, %v7384
    %v7386 = vrot.slane %v7361, %v7385
    %v7387 = vlaneseq
    %v7388 = vshrl.u32 %v7387, 7
    %v7389 = vsub.s32 6, %v7388
    %v7390 = vrot.slane %v7361, %v7389
    %v7391 = vlaneseq
    %v7392 = vshrl.u32 %v7391, 7
    %v7393 = vsub.s32 7, %v7392
    %v7394 = vrot.slane %v7361, %v7393
    %v7403 = vmul.f32 %v7345, %v7366
    %v7404 = vmul.f32 %v7346, %v7370
    %v7405 = vmul.f32 %v7347, %v7374
    %v7406 = vmul.f32 %v7348, %v7378
    %v7407 = vmul.f32 %v7349, %v7382
    %v7408 = vmul.f32 %v7350, %v7386
    %v7409 = vmul.f32 %v7351, %v7390
    %v7410 = vmul.f32 %v7352, %v7394
    %v7411 = vmul.f32 %v7353, %v7366
    %v7412 = vmul.f32 %v7354, %v7370
    %v7413 = vmul.f32 %v7355, %v7374
    %v7414 = vmul.f32 %v7356, %v7378
    %v7415 = vmul.f32 %v7357, %v7382
    %v7416 = vmul.f32 %v7358, %v7386
    %v7417 = vmul.f32 %v7359, %v7390
    %v7418 = vmul.f32 %v7360, %v7394
    %v7419 = vld [vmem:[%s15] sm:$0xff]
    %v7421 = vlaneseq
    %v7422 = vshrl.u32 %v7421, 7
    %v7423 = vsub.s32 0, %v7422
    %v7424 = vrot.slane %v7419, %v7423
    %v7425 = vlaneseq
    %v7426 = vshrl.u32 %v7425, 7
    %v7427 = vsub.s32 1, %v7426
    %v7428 = vrot.slane %v7419, %v7427
    %v7429 = vlaneseq
    %v7430 = vshrl.u32 %v7429, 7
    %v7431 = vsub.s32 2, %v7430
    %v7432 = vrot.slane %v7419, %v7431
    %v7433 = vlaneseq
    %v7434 = vshrl.u32 %v7433, 7
    %v7435 = vsub.s32 3, %v7434
    %v7436 = vrot.slane %v7419, %v7435
    %v7437 = vlaneseq
    %v7438 = vshrl.u32 %v7437, 7
    %v7439 = vsub.s32 4, %v7438
    %v7440 = vrot.slane %v7419, %v7439
    %v7441 = vlaneseq
    %v7442 = vshrl.u32 %v7441, 7
    %v7443 = vsub.s32 5, %v7442
    %v7444 = vrot.slane %v7419, %v7443
    %v7445 = vlaneseq
    %v7446 = vshrl.u32 %v7445, 7
    %v7447 = vsub.s32 6, %v7446
    %v7448 = vrot.slane %v7419, %v7447
    %v7449 = vlaneseq
    %v7450 = vshrl.u32 %v7449, 7
    %v7451 = vsub.s32 7, %v7450
    %v7452 = vrot.slane %v7419, %v7451
    %v7461 = vadd.f32 %v7403, %v7424
    %v7462 = vadd.f32 %v7404, %v7428
    %v7463 = vadd.f32 %v7405, %v7432
    %v7464 = vadd.f32 %v7406, %v7436
    %v7465 = vadd.f32 %v7407, %v7440
    %v7466 = vadd.f32 %v7408, %v7444
    %v7467 = vadd.f32 %v7409, %v7448
    %v7468 = vadd.f32 %v7410, %v7452
    %v7469 = vadd.f32 %v7411, %v7424
    %v7470 = vadd.f32 %v7412, %v7428
    %v7471 = vadd.f32 %v7413, %v7432
    %v7472 = vadd.f32 %v7414, %v7436
    %v7473 = vadd.f32 %v7415, %v7440
    %v7474 = vadd.f32 %v7416, %v7444
    %v7475 = vadd.f32 %v7417, %v7448
    %v7476 = vadd.f32 %v7418, %v7452
    %v7477 = vpack.c.bf16 %v7469, %v7461
    %v7478 = vpack.c.bf16 %v7470, %v7462
    %v7479 = vpack.c.bf16 %v7471, %v7463
    %v7480 = vpack.c.bf16 %v7472, %v7464
    %v7481 = vpack.c.bf16 %v7473, %v7465
    %v7482 = vpack.c.bf16 %v7474, %v7466
    %v7483 = vpack.c.bf16 %v7475, %v7467
    %v7484 = vpack.c.bf16 %v7476, %v7468
    %v7485 = vld [vmem:[#allocation5] sm:$0xff]
    %v7486 = vld [vmem:[#allocation5 + $0x8] sm:$0xff]
    %v7487 = vld [vmem:[#allocation5 + $0x10] sm:$0xff]
    %v7488 = vld [vmem:[#allocation5 + $0x18] sm:$0xff]
    %v7489 = vld [vmem:[#allocation5 + $0x20] sm:$0xff]
    %v7490 = vld [vmem:[#allocation5 + $0x28] sm:$0xff]
    %v7491 = vld [vmem:[#allocation5 + $0x30] sm:$0xff]
    %v7492 = vld [vmem:[#allocation5 + $0x38] sm:$0xff]
    %v7493 = vld [vmem:[#allocation5 + $0x40] sm:$0xff]
    %v7494 = vld [vmem:[#allocation5 + $0x48] sm:$0xff]
    %v7495 = vld [vmem:[#allocation5 + $0x50] sm:$0xff]
    %v7496 = vld [vmem:[#allocation5 + $0x58] sm:$0xff]
    %v7497 = vld [vmem:[#allocation5 + $0x60] sm:$0xff]
    %v7498 = vld [vmem:[#allocation5 + $0x68] sm:$0xff]
    %v7499 = vld [vmem:[#allocation5 + $0x70] sm:$0xff]
    %v7500 = vld [vmem:[#allocation5 + $0x78] sm:$0xff]
    %v7501 = vld [vmem:[#allocation5 + $0x80] sm:$0xff]
    %v7502 = vld [vmem:[#allocation5 + $0x88] sm:$0xff]
    %v7503 = vld [vmem:[#allocation5 + $0x90] sm:$0xff]
    %v7504 = vld [vmem:[#allocation5 + $0x98] sm:$0xff]
    %v7505 = vld [vmem:[#allocation5 + $0xa0] sm:$0xff]
    %v7506 = vld [vmem:[#allocation5 + $0xa8] sm:$0xff]
    %v7507 = vld [vmem:[#allocation5 + $0xb0] sm:$0xff]
    %v7508 = vld [vmem:[#allocation5 + $0xb8] sm:$0xff]
    %v7509 = vld [vmem:[#allocation5 + $0xc0] sm:$0xff]
    %v7510 = vld [vmem:[#allocation5 + $0xc8] sm:$0xff]
    %v7511 = vld [vmem:[#allocation5 + $0xd0] sm:$0xff]
    %v7512 = vld [vmem:[#allocation5 + $0xd8] sm:$0xff]
    %v7513 = vld [vmem:[#allocation5 + $0xe0] sm:$0xff]
    %v7514 = vld [vmem:[#allocation5 + $0xe8] sm:$0xff]
    %v7515 = vld [vmem:[#allocation5 + $0xf0] sm:$0xff]
    %v7516 = vld [vmem:[#allocation5 + $0xf8] sm:$0xff]
    %v7517 = vld [vmem:[#allocation5 + $0x100] sm:$0xff]
    %v7518 = vld [vmem:[#allocation5 + $0x108] sm:$0xff]
    %v7519 = vld [vmem:[#allocation5 + $0x110] sm:$0xff]
    %v7520 = vld [vmem:[#allocation5 + $0x118] sm:$0xff]
    %v7521 = vld [vmem:[#allocation5 + $0x120] sm:$0xff]
    %v7522 = vld [vmem:[#allocation5 + $0x128] sm:$0xff]
    %v7523 = vld [vmem:[#allocation5 + $0x130] sm:$0xff]
    %v7524 = vld [vmem:[#allocation5 + $0x138] sm:$0xff]
    %v7525 = vld [vmem:[#allocation5 + $0x140] sm:$0xff]
    %v7526 = vld [vmem:[#allocation5 + $0x148] sm:$0xff]
    %v7527 = vld [vmem:[#allocation5 + $0x150] sm:$0xff]
    %v7528 = vld [vmem:[#allocation5 + $0x158] sm:$0xff]
    %v7529 = vld [vmem:[#allocation5 + $0x160] sm:$0xff]
    %v7530 = vld [vmem:[#allocation5 + $0x168] sm:$0xff]
    %v7531 = vld [vmem:[#allocation5 + $0x170] sm:$0xff]
    %v7532 = vld [vmem:[#allocation5 + $0x178] sm:$0xff]
    %v7533 = vld [vmem:[#allocation5 + $0x180] sm:$0xff]
    %v7534 = vld [vmem:[#allocation5 + $0x188] sm:$0xff]
    %v7535 = vld [vmem:[#allocation5 + $0x190] sm:$0xff]
    %v7536 = vld [vmem:[#allocation5 + $0x198] sm:$0xff]
    %v7537 = vld [vmem:[#allocation5 + $0x1a0] sm:$0xff]
    %v7538 = vld [vmem:[#allocation5 + $0x1a8] sm:$0xff]
    %v7539 = vld [vmem:[#allocation5 + $0x1b0] sm:$0xff]
    %v7540 = vld [vmem:[#allocation5 + $0x1b8] sm:$0xff]
    %v7541 = vld [vmem:[#allocation5 + $0x1c0] sm:$0xff]
    %v7542 = vld [vmem:[#allocation5 + $0x1c8] sm:$0xff]
    %v7543 = vld [vmem:[#allocation5 + $0x1d0] sm:$0xff]
    %v7544 = vld [vmem:[#allocation5 + $0x1d8] sm:$0xff]
    %v7545 = vld [vmem:[#allocation5 + $0x1e0] sm:$0xff]
    %v7546 = vld [vmem:[#allocation5 + $0x1e8] sm:$0xff]
    %v7547 = vld [vmem:[#allocation5 + $0x1f0] sm:$0xff]
    %v7548 = vld [vmem:[#allocation5 + $0x1f8] sm:$0xff]
    %v7549 = vld [vmem:[#allocation5 + $0x200] sm:$0xff]
    %v7550 = vld [vmem:[#allocation5 + $0x208] sm:$0xff]
    %v7551 = vld [vmem:[#allocation5 + $0x210] sm:$0xff]
    %v7552 = vld [vmem:[#allocation5 + $0x218] sm:$0xff]
    %v7553 = vld [vmem:[#allocation5 + $0x220] sm:$0xff]
    %v7554 = vld [vmem:[#allocation5 + $0x228] sm:$0xff]
    %v7555 = vld [vmem:[#allocation5 + $0x230] sm:$0xff]
    %v7556 = vld [vmem:[#allocation5 + $0x238] sm:$0xff]
    %v7557 = vld [vmem:[#allocation5 + $0x240] sm:$0xff]
    %v7558 = vld [vmem:[#allocation5 + $0x248] sm:$0xff]
    %v7559 = vld [vmem:[#allocation5 + $0x250] sm:$0xff]
    %v7560 = vld [vmem:[#allocation5 + $0x258] sm:$0xff]
    %v7561 = vld [vmem:[#allocation5 + $0x260] sm:$0xff]
    %v7562 = vld [vmem:[#allocation5 + $0x268] sm:$0xff]
    %v7563 = vld [vmem:[#allocation5 + $0x270] sm:$0xff]
    %v7564 = vld [vmem:[#allocation5 + $0x278] sm:$0xff]
    %v7565 = vld [vmem:[#allocation5 + $0x280] sm:$0xff]
    %v7566 = vld [vmem:[#allocation5 + $0x288] sm:$0xff]
    %v7567 = vld [vmem:[#allocation5 + $0x290] sm:$0xff]
    %v7568 = vld [vmem:[#allocation5 + $0x298] sm:$0xff]
    %v7569 = vld [vmem:[#allocation5 + $0x2a0] sm:$0xff]
    %v7570 = vld [vmem:[#allocation5 + $0x2a8] sm:$0xff]
    %v7571 = vld [vmem:[#allocation5 + $0x2b0] sm:$0xff]
    %v7572 = vld [vmem:[#allocation5 + $0x2b8] sm:$0xff]
    %v7573 = vld [vmem:[#allocation5 + $0x2c0] sm:$0xff]
    %v7574 = vld [vmem:[#allocation5 + $0x2c8] sm:$0xff]
    %v7575 = vld [vmem:[#allocation5 + $0x2d0] sm:$0xff]
    %v7576 = vld [vmem:[#allocation5 + $0x2d8] sm:$0xff]
    %v7577 = vld [vmem:[#allocation5 + $0x2e0] sm:$0xff]
    %v7578 = vld [vmem:[#allocation5 + $0x2e8] sm:$0xff]
    %v7579 = vld [vmem:[#allocation5 + $0x2f0] sm:$0xff]
    %v7580 = vld [vmem:[#allocation5 + $0x2f8] sm:$0xff]
    %v7581 = vld [vmem:[#allocation5 + $0x300] sm:$0xff]
    %v7582 = vld [vmem:[#allocation5 + $0x308] sm:$0xff]
    %v7583 = vld [vmem:[#allocation5 + $0x310] sm:$0xff]
    %v7584 = vld [vmem:[#allocation5 + $0x318] sm:$0xff]
    %v7585 = vld [vmem:[#allocation5 + $0x320] sm:$0xff]
    %v7586 = vld [vmem:[#allocation5 + $0x328] sm:$0xff]
    %v7587 = vld [vmem:[#allocation5 + $0x330] sm:$0xff]
    %v7588 = vld [vmem:[#allocation5 + $0x338] sm:$0xff]
    %v7589 = vld [vmem:[#allocation5 + $0x340] sm:$0xff]
    %v7590 = vld [vmem:[#allocation5 + $0x348] sm:$0xff]
    %v7591 = vld [vmem:[#allocation5 + $0x350] sm:$0xff]
    %v7592 = vld [vmem:[#allocation5 + $0x358] sm:$0xff]
    %v7593 = vld [vmem:[#allocation5 + $0x360] sm:$0xff]
    %v7594 = vld [vmem:[#allocation5 + $0x368] sm:$0xff]
    %v7595 = vld [vmem:[#allocation5 + $0x370] sm:$0xff]
    %v7596 = vld [vmem:[#allocation5 + $0x378] sm:$0xff]
    %v7597 = vld [vmem:[#allocation5 + $0x380] sm:$0xff]
    %v7598 = vld [vmem:[#allocation5 + $0x388] sm:$0xff]
    %v7599 = vld [vmem:[#allocation5 + $0x390] sm:$0xff]
    %v7600 = vld [vmem:[#allocation5 + $0x398] sm:$0xff]
    %v7601 = vld [vmem:[#allocation5 + $0x3a0] sm:$0xff]
    %v7602 = vld [vmem:[#allocation5 + $0x3a8] sm:$0xff]
    %v7603 = vld [vmem:[#allocation5 + $0x3b0] sm:$0xff]
    %v7604 = vld [vmem:[#allocation5 + $0x3b8] sm:$0xff]
    %v7605 = vld [vmem:[#allocation5 + $0x3c0] sm:$0xff]
    %v7606 = vld [vmem:[#allocation5 + $0x3c8] sm:$0xff]
    %v7607 = vld [vmem:[#allocation5 + $0x3d0] sm:$0xff]
    %v7608 = vld [vmem:[#allocation5 + $0x3d8] sm:$0xff]
    %v7609 = vld [vmem:[#allocation5 + $0x3e0] sm:$0xff]
    %v7610 = vld [vmem:[#allocation5 + $0x3e8] sm:$0xff]
    %v7611 = vld [vmem:[#allocation5 + $0x3f0] sm:$0xff]
    %v7612 = vld [vmem:[#allocation5 + $0x3f8] sm:$0xff]
    %v7613 = vld [vmem:[#allocation5 + $0x400] sm:$0xff]
    %v7614 = vld [vmem:[#allocation5 + $0x408] sm:$0xff]
    %v7615 = vld [vmem:[#allocation5 + $0x410] sm:$0xff]
    %v7616 = vld [vmem:[#allocation5 + $0x418] sm:$0xff]
    %v7617 = vld [vmem:[#allocation5 + $0x420] sm:$0xff]
    %v7618 = vld [vmem:[#allocation5 + $0x428] sm:$0xff]
    %v7619 = vld [vmem:[#allocation5 + $0x430] sm:$0xff]
    %v7620 = vld [vmem:[#allocation5 + $0x438] sm:$0xff]
    %v7621 = vld [vmem:[#allocation5 + $0x440] sm:$0xff]
    %v7622 = vld [vmem:[#allocation5 + $0x448] sm:$0xff]
    %v7623 = vld [vmem:[#allocation5 + $0x450] sm:$0xff]
    %v7624 = vld [vmem:[#allocation5 + $0x458] sm:$0xff]
    %v7625 = vld [vmem:[#allocation5 + $0x460] sm:$0xff]
    %v7626 = vld [vmem:[#allocation5 + $0x468] sm:$0xff]
    %v7627 = vld [vmem:[#allocation5 + $0x470] sm:$0xff]
    %v7628 = vld [vmem:[#allocation5 + $0x478] sm:$0xff]
    %v7629 = vld [vmem:[#allocation5 + $0x480] sm:$0xff]
    %v7630 = vld [vmem:[#allocation5 + $0x488] sm:$0xff]
    %v7631 = vld [vmem:[#allocation5 + $0x490] sm:$0xff]
    %v7632 = vld [vmem:[#allocation5 + $0x498] sm:$0xff]
    %v7633 = vld [vmem:[#allocation5 + $0x4a0] sm:$0xff]
    %v7634 = vld [vmem:[#allocation5 + $0x4a8] sm:$0xff]
    %v7635 = vld [vmem:[#allocation5 + $0x4b0] sm:$0xff]
    %v7636 = vld [vmem:[#allocation5 + $0x4b8] sm:$0xff]
    %v7637 = vld [vmem:[#allocation5 + $0x4c0] sm:$0xff]
    %v7638 = vld [vmem:[#allocation5 + $0x4c8] sm:$0xff]
    %v7639 = vld [vmem:[#allocation5 + $0x4d0] sm:$0xff]
    %v7640 = vld [vmem:[#allocation5 + $0x4d8] sm:$0xff]
    %v7641 = vld [vmem:[#allocation5 + $0x4e0] sm:$0xff]
    %v7642 = vld [vmem:[#allocation5 + $0x4e8] sm:$0xff]
    %v7643 = vld [vmem:[#allocation5 + $0x4f0] sm:$0xff]
    %v7644 = vld [vmem:[#allocation5 + $0x4f8] sm:$0xff]
    %v7645 = vld [vmem:[#allocation5 + $0x500] sm:$0xff]
    %v7646 = vld [vmem:[#allocation5 + $0x508] sm:$0xff]
    %v7647 = vld [vmem:[#allocation5 + $0x510] sm:$0xff]
    %v7648 = vld [vmem:[#allocation5 + $0x518] sm:$0xff]
    %v7649 = vld [vmem:[#allocation5 + $0x520] sm:$0xff]
    %v7650 = vld [vmem:[#allocation5 + $0x528] sm:$0xff]
    %v7651 = vld [vmem:[#allocation5 + $0x530] sm:$0xff]
    %v7652 = vld [vmem:[#allocation5 + $0x538] sm:$0xff]
    %v7653 = vld [vmem:[#allocation5 + $0x540] sm:$0xff]
    %v7654 = vld [vmem:[#allocation5 + $0x548] sm:$0xff]
    %v7655 = vld [vmem:[#allocation5 + $0x550] sm:$0xff]
    %v7656 = vld [vmem:[#allocation5 + $0x558] sm:$0xff]
    %v7657 = vld [vmem:[#allocation5 + $0x560] sm:$0xff]
    %v7658 = vld [vmem:[#allocation5 + $0x568] sm:$0xff]
    %v7659 = vld [vmem:[#allocation5 + $0x570] sm:$0xff]
    %v7660 = vld [vmem:[#allocation5 + $0x578] sm:$0xff]
    %v7661 = vld [vmem:[#allocation5 + $0x580] sm:$0xff]
    %v7662 = vld [vmem:[#allocation5 + $0x588] sm:$0xff]
    %v7663 = vld [vmem:[#allocation5 + $0x590] sm:$0xff]
    %v7664 = vld [vmem:[#allocation5 + $0x598] sm:$0xff]
    %v7665 = vld [vmem:[#allocation5 + $0x5a0] sm:$0xff]
    %v7666 = vld [vmem:[#allocation5 + $0x5a8] sm:$0xff]
    %v7667 = vld [vmem:[#allocation5 + $0x5b0] sm:$0xff]
    %v7668 = vld [vmem:[#allocation5 + $0x5b8] sm:$0xff]
    %v7669 = vld [vmem:[#allocation5 + $0x5c0] sm:$0xff]
    %v7670 = vld [vmem:[#allocation5 + $0x5c8] sm:$0xff]
    %v7671 = vld [vmem:[#allocation5 + $0x5d0] sm:$0xff]
    %v7672 = vld [vmem:[#allocation5 + $0x5d8] sm:$0xff]
    %v7673 = vld [vmem:[#allocation5 + $0x5e0] sm:$0xff]
    %v7674 = vld [vmem:[#allocation5 + $0x5e8] sm:$0xff]
    %v7675 = vld [vmem:[#allocation5 + $0x5f0] sm:$0xff]
    %v7676 = vld [vmem:[#allocation5 + $0x5f8] sm:$0xff]
    %v7677 = vld [vmem:[#allocation5 + $0x600] sm:$0xff]
    %v7678 = vld [vmem:[#allocation5 + $0x608] sm:$0xff]
    %v7679 = vld [vmem:[#allocation5 + $0x610] sm:$0xff]
    %v7680 = vld [vmem:[#allocation5 + $0x618] sm:$0xff]
    %v7681 = vld [vmem:[#allocation5 + $0x620] sm:$0xff]
    %v7682 = vld [vmem:[#allocation5 + $0x628] sm:$0xff]
    %v7683 = vld [vmem:[#allocation5 + $0x630] sm:$0xff]
    %v7684 = vld [vmem:[#allocation5 + $0x638] sm:$0xff]
    %v7685 = vld [vmem:[#allocation5 + $0x640] sm:$0xff]
    %v7686 = vld [vmem:[#allocation5 + $0x648] sm:$0xff]
    %v7687 = vld [vmem:[#allocation5 + $0x650] sm:$0xff]
    %v7688 = vld [vmem:[#allocation5 + $0x658] sm:$0xff]
    %v7689 = vld [vmem:[#allocation5 + $0x660] sm:$0xff]
    %v7690 = vld [vmem:[#allocation5 + $0x668] sm:$0xff]
    %v7691 = vld [vmem:[#allocation5 + $0x670] sm:$0xff]
    %v7692 = vld [vmem:[#allocation5 + $0x678] sm:$0xff]
    %v7693 = vld [vmem:[#allocation5 + $0x680] sm:$0xff]
    %v7694 = vld [vmem:[#allocation5 + $0x688] sm:$0xff]
    %v7695 = vld [vmem:[#allocation5 + $0x690] sm:$0xff]
    %v7696 = vld [vmem:[#allocation5 + $0x698] sm:$0xff]
    %v7697 = vld [vmem:[#allocation5 + $0x6a0] sm:$0xff]
    %v7698 = vld [vmem:[#allocation5 + $0x6a8] sm:$0xff]
    %v7699 = vld [vmem:[#allocation5 + $0x6b0] sm:$0xff]
    %v7700 = vld [vmem:[#allocation5 + $0x6b8] sm:$0xff]
    %v7701 = vld [vmem:[#allocation5 + $0x6c0] sm:$0xff]
    %v7702 = vld [vmem:[#allocation5 + $0x6c8] sm:$0xff]
    %v7703 = vld [vmem:[#allocation5 + $0x6d0] sm:$0xff]
    %v7704 = vld [vmem:[#allocation5 + $0x6d8] sm:$0xff]
    %v7705 = vld [vmem:[#allocation5 + $0x6e0] sm:$0xff]
    %v7706 = vld [vmem:[#allocation5 + $0x6e8] sm:$0xff]
    %v7707 = vld [vmem:[#allocation5 + $0x6f0] sm:$0xff]
    %v7708 = vld [vmem:[#allocation5 + $0x6f8] sm:$0xff]
    %v7709 = vld [vmem:[#allocation5 + $0x700] sm:$0xff]
    %v7710 = vld [vmem:[#allocation5 + $0x708] sm:$0xff]
    %v7711 = vld [vmem:[#allocation5 + $0x710] sm:$0xff]
    %v7712 = vld [vmem:[#allocation5 + $0x718] sm:$0xff]
    %v7713 = vld [vmem:[#allocation5 + $0x720] sm:$0xff]
    %v7714 = vld [vmem:[#allocation5 + $0x728] sm:$0xff]
    %v7715 = vld [vmem:[#allocation5 + $0x730] sm:$0xff]
    %v7716 = vld [vmem:[#allocation5 + $0x738] sm:$0xff]
    %v7717 = vld [vmem:[#allocation5 + $0x740] sm:$0xff]
    %v7718 = vld [vmem:[#allocation5 + $0x748] sm:$0xff]
    %v7719 = vld [vmem:[#allocation5 + $0x750] sm:$0xff]
    %v7720 = vld [vmem:[#allocation5 + $0x758] sm:$0xff]
    %v7721 = vld [vmem:[#allocation5 + $0x760] sm:$0xff]
    %v7722 = vld [vmem:[#allocation5 + $0x768] sm:$0xff]
    %v7723 = vld [vmem:[#allocation5 + $0x770] sm:$0xff]
    %v7724 = vld [vmem:[#allocation5 + $0x778] sm:$0xff]
    %v7725 = vld [vmem:[#allocation5 + $0x780] sm:$0xff]
    %v7726 = vld [vmem:[#allocation5 + $0x788] sm:$0xff]
    %v7727 = vld [vmem:[#allocation5 + $0x790] sm:$0xff]
    %v7728 = vld [vmem:[#allocation5 + $0x798] sm:$0xff]
    %v7729 = vld [vmem:[#allocation5 + $0x7a0] sm:$0xff]
    %v7730 = vld [vmem:[#allocation5 + $0x7a8] sm:$0xff]
    %v7731 = vld [vmem:[#allocation5 + $0x7b0] sm:$0xff]
    %v7732 = vld [vmem:[#allocation5 + $0x7b8] sm:$0xff]
    %v7733 = vld [vmem:[#allocation5 + $0x7c0] sm:$0xff]
    %v7734 = vld [vmem:[#allocation5 + $0x7c8] sm:$0xff]
    %v7735 = vld [vmem:[#allocation5 + $0x7d0] sm:$0xff]
    %v7736 = vld [vmem:[#allocation5 + $0x7d8] sm:$0xff]
    %v7737 = vld [vmem:[#allocation5 + $0x7e0] sm:$0xff]
    %v7738 = vld [vmem:[#allocation5 + $0x7e8] sm:$0xff]
    %v7739 = vld [vmem:[#allocation5 + $0x7f0] sm:$0xff]
    %v7740 = vld [vmem:[#allocation5 + $0x7f8] sm:$0xff]
    %v7997 = vunpack.c.l.b16 %v7485
    %v7998 = vunpack.c.h.b16 %v7485
    %v7999 = vunpack.c.l.b16 %v7486
    %v8000 = vunpack.c.h.b16 %v7486
    %v8001 = vunpack.c.l.b16 %v7487
    %v8002 = vunpack.c.h.b16 %v7487
    %v8003 = vunpack.c.l.b16 %v7488
    %v8004 = vunpack.c.h.b16 %v7488
    %v8005 = vunpack.c.l.b16 %v7489
    %v8006 = vunpack.c.h.b16 %v7489
    %v8007 = vunpack.c.l.b16 %v7490
    %v8008 = vunpack.c.h.b16 %v7490
    %v8009 = vunpack.c.l.b16 %v7491
    %v8010 = vunpack.c.h.b16 %v7491
    %v8011 = vunpack.c.l.b16 %v7492
    %v8012 = vunpack.c.h.b16 %v7492
    %v8013 = vunpack.c.l.b16 %v7493
    %v8014 = vunpack.c.h.b16 %v7493
    %v8015 = vunpack.c.l.b16 %v7494
    %v8016 = vunpack.c.h.b16 %v7494
    %v8017 = vunpack.c.l.b16 %v7495
    %v8018 = vunpack.c.h.b16 %v7495
    %v8019 = vunpack.c.l.b16 %v7496
    %v8020 = vunpack.c.h.b16 %v7496
    %v8021 = vunpack.c.l.b16 %v7497
    %v8022 = vunpack.c.h.b16 %v7497
    %v8023 = vunpack.c.l.b16 %v7498
    %v8024 = vunpack.c.h.b16 %v7498
    %v8025 = vunpack.c.l.b16 %v7499
    %v8026 = vunpack.c.h.b16 %v7499
    %v8027 = vunpack.c.l.b16 %v7500
    %v8028 = vunpack.c.h.b16 %v7500
    %v8029 = vunpack.c.l.b16 %v7501
    %v8030 = vunpack.c.h.b16 %v7501
    %v8031 = vunpack.c.l.b16 %v7502
    %v8032 = vunpack.c.h.b16 %v7502
    %v8033 = vunpack.c.l.b16 %v7503
    %v8034 = vunpack.c.h.b16 %v7503
    %v8035 = vunpack.c.l.b16 %v7504
    %v8036 = vunpack.c.h.b16 %v7504
    %v8037 = vunpack.c.l.b16 %v7505
    %v8038 = vunpack.c.h.b16 %v7505
    %v8039 = vunpack.c.l.b16 %v7506
    %v8040 = vunpack.c.h.b16 %v7506
    %v8041 = vunpack.c.l.b16 %v7507
    %v8042 = vunpack.c.h.b16 %v7507
    %v8043 = vunpack.c.l.b16 %v7508
    %v8044 = vunpack.c.h.b16 %v7508
    %v8045 = vunpack.c.l.b16 %v7509
    %v8046 = vunpack.c.h.b16 %v7509
    %v8047 = vunpack.c.l.b16 %v7510
    %v8048 = vunpack.c.h.b16 %v7510
    %v8049 = vunpack.c.l.b16 %v7511
    %v8050 = vunpack.c.h.b16 %v7511
    %v8051 = vunpack.c.l.b16 %v7512
    %v8052 = vunpack.c.h.b16 %v7512
    %v8053 = vunpack.c.l.b16 %v7513
    %v8054 = vunpack.c.h.b16 %v7513
    %v8055 = vunpack.c.l.b16 %v7514
    %v8056 = vunpack.c.h.b16 %v7514
    %v8057 = vunpack.c.l.b16 %v7515
    %v8058 = vunpack.c.h.b16 %v7515
    %v8059 = vunpack.c.l.b16 %v7516
    %v8060 = vunpack.c.h.b16 %v7516
    %v8061 = vunpack.c.l.b16 %v7517
    %v8062 = vunpack.c.h.b16 %v7517
    %v8063 = vunpack.c.l.b16 %v7518
    %v8064 = vunpack.c.h.b16 %v7518
    %v8065 = vunpack.c.l.b16 %v7519
    %v8066 = vunpack.c.h.b16 %v7519
    %v8067 = vunpack.c.l.b16 %v7520
    %v8068 = vunpack.c.h.b16 %v7520
    %v8069 = vunpack.c.l.b16 %v7521
    %v8070 = vunpack.c.h.b16 %v7521
    %v8071 = vunpack.c.l.b16 %v7522
    %v8072 = vunpack.c.h.b16 %v7522
    %v8073 = vunpack.c.l.b16 %v7523
    %v8074 = vunpack.c.h.b16 %v7523
    %v8075 = vunpack.c.l.b16 %v7524
    %v8076 = vunpack.c.h.b16 %v7524
    %v8077 = vunpack.c.l.b16 %v7525
    %v8078 = vunpack.c.h.b16 %v7525
    %v8079 = vunpack.c.l.b16 %v7526
    %v8080 = vunpack.c.h.b16 %v7526
    %v8081 = vunpack.c.l.b16 %v7527
    %v8082 = vunpack.c.h.b16 %v7527
    %v8083 = vunpack.c.l.b16 %v7528
    %v8084 = vunpack.c.h.b16 %v7528
    %v8085 = vunpack.c.l.b16 %v7529
    %v8086 = vunpack.c.h.b16 %v7529
    %v8087 = vunpack.c.l.b16 %v7530
    %v8088 = vunpack.c.h.b16 %v7530
    %v8089 = vunpack.c.l.b16 %v7531
    %v8090 = vunpack.c.h.b16 %v7531
    %v8091 = vunpack.c.l.b16 %v7532
    %v8092 = vunpack.c.h.b16 %v7532
    %v8093 = vunpack.c.l.b16 %v7533
    %v8094 = vunpack.c.h.b16 %v7533
    %v8095 = vunpack.c.l.b16 %v7534
    %v8096 = vunpack.c.h.b16 %v7534
    %v8097 = vunpack.c.l.b16 %v7535
    %v8098 = vunpack.c.h.b16 %v7535
    %v8099 = vunpack.c.l.b16 %v7536
    %v8100 = vunpack.c.h.b16 %v7536
    %v8101 = vunpack.c.l.b16 %v7537
    %v8102 = vunpack.c.h.b16 %v7537
    %v8103 = vunpack.c.l.b16 %v7538
    %v8104 = vunpack.c.h.b16 %v7538
    %v8105 = vunpack.c.l.b16 %v7539
    %v8106 = vunpack.c.h.b16 %v7539
    %v8107 = vunpack.c.l.b16 %v7540
    %v8108 = vunpack.c.h.b16 %v7540
    %v8109 = vunpack.c.l.b16 %v7541
    %v8110 = vunpack.c.h.b16 %v7541
    %v8111 = vunpack.c.l.b16 %v7542
    %v8112 = vunpack.c.h.b16 %v7542
    %v8113 = vunpack.c.l.b16 %v7543
    %v8114 = vunpack.c.h.b16 %v7543
    %v8115 = vunpack.c.l.b16 %v7544
    %v8116 = vunpack.c.h.b16 %v7544
    %v8117 = vunpack.c.l.b16 %v7545
    %v8118 = vunpack.c.h.b16 %v7545
    %v8119 = vunpack.c.l.b16 %v7546
    %v8120 = vunpack.c.h.b16 %v7546
    %v8121 = vunpack.c.l.b16 %v7547
    %v8122 = vunpack.c.h.b16 %v7547
    %v8123 = vunpack.c.l.b16 %v7548
    %v8124 = vunpack.c.h.b16 %v7548
    %v8125 = vunpack.c.l.b16 %v7549
    %v8126 = vunpack.c.h.b16 %v7549
    %v8127 = vunpack.c.l.b16 %v7550
    %v8128 = vunpack.c.h.b16 %v7550
    %v8129 = vunpack.c.l.b16 %v7551
    %v8130 = vunpack.c.h.b16 %v7551
    %v8131 = vunpack.c.l.b16 %v7552
    %v8132 = vunpack.c.h.b16 %v7552
    %v8133 = vunpack.c.l.b16 %v7553
    %v8134 = vunpack.c.h.b16 %v7553
    %v8135 = vunpack.c.l.b16 %v7554
    %v8136 = vunpack.c.h.b16 %v7554
    %v8137 = vunpack.c.l.b16 %v7555
    %v8138 = vunpack.c.h.b16 %v7555
    %v8139 = vunpack.c.l.b16 %v7556
    %v8140 = vunpack.c.h.b16 %v7556
    %v8141 = vunpack.c.l.b16 %v7557
    %v8142 = vunpack.c.h.b16 %v7557
    %v8143 = vunpack.c.l.b16 %v7558
    %v8144 = vunpack.c.h.b16 %v7558
    %v8145 = vunpack.c.l.b16 %v7559
    %v8146 = vunpack.c.h.b16 %v7559
    %v8147 = vunpack.c.l.b16 %v7560
    %v8148 = vunpack.c.h.b16 %v7560
    %v8149 = vunpack.c.l.b16 %v7561
    %v8150 = vunpack.c.h.b16 %v7561
    %v8151 = vunpack.c.l.b16 %v7562
    %v8152 = vunpack.c.h.b16 %v7562
    %v8153 = vunpack.c.l.b16 %v7563
    %v8154 = vunpack.c.h.b16 %v7563
    %v8155 = vunpack.c.l.b16 %v7564
    %v8156 = vunpack.c.h.b16 %v7564
    %v8157 = vunpack.c.l.b16 %v7565
    %v8158 = vunpack.c.h.b16 %v7565
    %v8159 = vunpack.c.l.b16 %v7566
    %v8160 = vunpack.c.h.b16 %v7566
    %v8161 = vunpack.c.l.b16 %v7567
    %v8162 = vunpack.c.h.b16 %v7567
    %v8163 = vunpack.c.l.b16 %v7568
    %v8164 = vunpack.c.h.b16 %v7568
    %v8165 = vunpack.c.l.b16 %v7569
    %v8166 = vunpack.c.h.b16 %v7569
    %v8167 = vunpack.c.l.b16 %v7570
    %v8168 = vunpack.c.h.b16 %v7570
    %v8169 = vunpack.c.l.b16 %v7571
    %v8170 = vunpack.c.h.b16 %v7571
    %v8171 = vunpack.c.l.b16 %v7572
    %v8172 = vunpack.c.h.b16 %v7572
    %v8173 = vunpack.c.l.b16 %v7573
    %v8174 = vunpack.c.h.b16 %v7573
    %v8175 = vunpack.c.l.b16 %v7574
    %v8176 = vunpack.c.h.b16 %v7574
    %v8177 = vunpack.c.l.b16 %v7575
    %v8178 = vunpack.c.h.b16 %v7575
    %v8179 = vunpack.c.l.b16 %v7576
    %v8180 = vunpack.c.h.b16 %v7576
    %v8181 = vunpack.c.l.b16 %v7577
    %v8182 = vunpack.c.h.b16 %v7577
    %v8183 = vunpack.c.l.b16 %v7578
    %v8184 = vunpack.c.h.b16 %v7578
    %v8185 = vunpack.c.l.b16 %v7579
    %v8186 = vunpack.c.h.b16 %v7579
    %v8187 = vunpack.c.l.b16 %v7580
    %v8188 = vunpack.c.h.b16 %v7580
    %v8189 = vunpack.c.l.b16 %v7581
    %v8190 = vunpack.c.h.b16 %v7581
    %v8191 = vunpack.c.l.b16 %v7582
    %v8192 = vunpack.c.h.b16 %v7582
    %v8193 = vunpack.c.l.b16 %v7583
    %v8194 = vunpack.c.h.b16 %v7583
    %v8195 = vunpack.c.l.b16 %v7584
    %v8196 = vunpack.c.h.b16 %v7584
    %v8197 = vunpack.c.l.b16 %v7585
    %v8198 = vunpack.c.h.b16 %v7585
    %v8199 = vunpack.c.l.b16 %v7586
    %v8200 = vunpack.c.h.b16 %v7586
    %v8201 = vunpack.c.l.b16 %v7587
    %v8202 = vunpack.c.h.b16 %v7587
    %v8203 = vunpack.c.l.b16 %v7588
    %v8204 = vunpack.c.h.b16 %v7588
    %v8205 = vunpack.c.l.b16 %v7589
    %v8206 = vunpack.c.h.b16 %v7589
    %v8207 = vunpack.c.l.b16 %v7590
    %v8208 = vunpack.c.h.b16 %v7590
    %v8209 = vunpack.c.l.b16 %v7591
    %v8210 = vunpack.c.h.b16 %v7591
    %v8211 = vunpack.c.l.b16 %v7592
    %v8212 = vunpack.c.h.b16 %v7592
    %v8213 = vunpack.c.l.b16 %v7593
    %v8214 = vunpack.c.h.b16 %v7593
    %v8215 = vunpack.c.l.b16 %v7594
    %v8216 = vunpack.c.h.b16 %v7594
    %v8217 = vunpack.c.l.b16 %v7595
    %v8218 = vunpack.c.h.b16 %v7595
    %v8219 = vunpack.c.l.b16 %v7596
    %v8220 = vunpack.c.h.b16 %v7596
    %v8221 = vunpack.c.l.b16 %v7597
    %v8222 = vunpack.c.h.b16 %v7597
    %v8223 = vunpack.c.l.b16 %v7598
    %v8224 = vunpack.c.h.b16 %v7598
    %v8225 = vunpack.c.l.b16 %v7599
    %v8226 = vunpack.c.h.b16 %v7599
    %v8227 = vunpack.c.l.b16 %v7600
    %v8228 = vunpack.c.h.b16 %v7600
    %v8229 = vunpack.c.l.b16 %v7601
    %v8230 = vunpack.c.h.b16 %v7601
    %v8231 = vunpack.c.l.b16 %v7602
    %v8232 = vunpack.c.h.b16 %v7602
    %v8233 = vunpack.c.l.b16 %v7603
    %v8234 = vunpack.c.h.b16 %v7603
    %v8235 = vunpack.c.l.b16 %v7604
    %v8236 = vunpack.c.h.b16 %v7604
    %v8237 = vunpack.c.l.b16 %v7605
    %v8238 = vunpack.c.h.b16 %v7605
    %v8239 = vunpack.c.l.b16 %v7606
    %v8240 = vunpack.c.h.b16 %v7606
    %v8241 = vunpack.c.l.b16 %v7607
    %v8242 = vunpack.c.h.b16 %v7607
    %v8243 = vunpack.c.l.b16 %v7608
    %v8244 = vunpack.c.h.b16 %v7608
    %v8245 = vunpack.c.l.b16 %v7609
    %v8246 = vunpack.c.h.b16 %v7609
    %v8247 = vunpack.c.l.b16 %v7610
    %v8248 = vunpack.c.h.b16 %v7610
    %v8249 = vunpack.c.l.b16 %v7611
    %v8250 = vunpack.c.h.b16 %v7611
    %v8251 = vunpack.c.l.b16 %v7612
    %v8252 = vunpack.c.h.b16 %v7612
    %v8253 = vunpack.c.l.b16 %v7613
    %v8254 = vunpack.c.h.b16 %v7613
    %v8255 = vunpack.c.l.b16 %v7614
    %v8256 = vunpack.c.h.b16 %v7614
    %v8257 = vunpack.c.l.b16 %v7615
    %v8258 = vunpack.c.h.b16 %v7615
    %v8259 = vunpack.c.l.b16 %v7616
    %v8260 = vunpack.c.h.b16 %v7616
    %v8261 = vunpack.c.l.b16 %v7617
    %v8262 = vunpack.c.h.b16 %v7617
    %v8263 = vunpack.c.l.b16 %v7618
    %v8264 = vunpack.c.h.b16 %v7618
    %v8265 = vunpack.c.l.b16 %v7619
    %v8266 = vunpack.c.h.b16 %v7619
    %v8267 = vunpack.c.l.b16 %v7620
    %v8268 = vunpack.c.h.b16 %v7620
    %v8269 = vunpack.c.l.b16 %v7621
    %v8270 = vunpack.c.h.b16 %v7621
    %v8271 = vunpack.c.l.b16 %v7622
    %v8272 = vunpack.c.h.b16 %v7622
    %v8273 = vunpack.c.l.b16 %v7623
    %v8274 = vunpack.c.h.b16 %v7623
    %v8275 = vunpack.c.l.b16 %v7624
    %v8276 = vunpack.c.h.b16 %v7624
    %v8277 = vunpack.c.l.b16 %v7625
    %v8278 = vunpack.c.h.b16 %v7625
    %v8279 = vunpack.c.l.b16 %v7626
    %v8280 = vunpack.c.h.b16 %v7626
    %v8281 = vunpack.c.l.b16 %v7627
    %v8282 = vunpack.c.h.b16 %v7627
    %v8283 = vunpack.c.l.b16 %v7628
    %v8284 = vunpack.c.h.b16 %v7628
    %v8285 = vunpack.c.l.b16 %v7629
    %v8286 = vunpack.c.h.b16 %v7629
    %v8287 = vunpack.c.l.b16 %v7630
    %v8288 = vunpack.c.h.b16 %v7630
    %v8289 = vunpack.c.l.b16 %v7631
    %v8290 = vunpack.c.h.b16 %v7631
    %v8291 = vunpack.c.l.b16 %v7632
    %v8292 = vunpack.c.h.b16 %v7632
    %v8293 = vunpack.c.l.b16 %v7633
    %v8294 = vunpack.c.h.b16 %v7633
    %v8295 = vunpack.c.l.b16 %v7634
    %v8296 = vunpack.c.h.b16 %v7634
    %v8297 = vunpack.c.l.b16 %v7635
    %v8298 = vunpack.c.h.b16 %v7635
    %v8299 = vunpack.c.l.b16 %v7636
    %v8300 = vunpack.c.h.b16 %v7636
    %v8301 = vunpack.c.l.b16 %v7637
    %v8302 = vunpack.c.h.b16 %v7637
    %v8303 = vunpack.c.l.b16 %v7638
    %v8304 = vunpack.c.h.b16 %v7638
    %v8305 = vunpack.c.l.b16 %v7639
    %v8306 = vunpack.c.h.b16 %v7639
    %v8307 = vunpack.c.l.b16 %v7640
    %v8308 = vunpack.c.h.b16 %v7640
    %v8309 = vunpack.c.l.b16 %v7641
    %v8310 = vunpack.c.h.b16 %v7641
    %v8311 = vunpack.c.l.b16 %v7642
    %v8312 = vunpack.c.h.b16 %v7642
    %v8313 = vunpack.c.l.b16 %v7643
    %v8314 = vunpack.c.h.b16 %v7643
    %v8315 = vunpack.c.l.b16 %v7644
    %v8316 = vunpack.c.h.b16 %v7644
    %v8317 = vunpack.c.l.b16 %v7645
    %v8318 = vunpack.c.h.b16 %v7645
    %v8319 = vunpack.c.l.b16 %v7646
    %v8320 = vunpack.c.h.b16 %v7646
    %v8321 = vunpack.c.l.b16 %v7647
    %v8322 = vunpack.c.h.b16 %v7647
    %v8323 = vunpack.c.l.b16 %v7648
    %v8324 = vunpack.c.h.b16 %v7648
    %v8325 = vunpack.c.l.b16 %v7649
    %v8326 = vunpack.c.h.b16 %v7649
    %v8327 = vunpack.c.l.b16 %v7650
    %v8328 = vunpack.c.h.b16 %v7650
    %v8329 = vunpack.c.l.b16 %v7651
    %v8330 = vunpack.c.h.b16 %v7651
    %v8331 = vunpack.c.l.b16 %v7652
    %v8332 = vunpack.c.h.b16 %v7652
    %v8333 = vunpack.c.l.b16 %v7653
    %v8334 = vunpack.c.h.b16 %v7653
    %v8335 = vunpack.c.l.b16 %v7654
    %v8336 = vunpack.c.h.b16 %v7654
    %v8337 = vunpack.c.l.b16 %v7655
    %v8338 = vunpack.c.h.b16 %v7655
    %v8339 = vunpack.c.l.b16 %v7656
    %v8340 = vunpack.c.h.b16 %v7656
    %v8341 = vunpack.c.l.b16 %v7657
    %v8342 = vunpack.c.h.b16 %v7657
    %v8343 = vunpack.c.l.b16 %v7658
    %v8344 = vunpack.c.h.b16 %v7658
    %v8345 = vunpack.c.l.b16 %v7659
    %v8346 = vunpack.c.h.b16 %v7659
    %v8347 = vunpack.c.l.b16 %v7660
    %v8348 = vunpack.c.h.b16 %v7660
    %v8349 = vunpack.c.l.b16 %v7661
    %v8350 = vunpack.c.h.b16 %v7661
    %v8351 = vunpack.c.l.b16 %v7662
    %v8352 = vunpack.c.h.b16 %v7662
    %v8353 = vunpack.c.l.b16 %v7663
    %v8354 = vunpack.c.h.b16 %v7663
    %v8355 = vunpack.c.l.b16 %v7664
    %v8356 = vunpack.c.h.b16 %v7664
    %v8357 = vunpack.c.l.b16 %v7665
    %v8358 = vunpack.c.h.b16 %v7665
    %v8359 = vunpack.c.l.b16 %v7666
    %v8360 = vunpack.c.h.b16 %v7666
    %v8361 = vunpack.c.l.b16 %v7667
    %v8362 = vunpack.c.h.b16 %v7667
    %v8363 = vunpack.c.l.b16 %v7668
    %v8364 = vunpack.c.h.b16 %v7668
    %v8365 = vunpack.c.l.b16 %v7669
    %v8366 = vunpack.c.h.b16 %v7669
    %v8367 = vunpack.c.l.b16 %v7670
    %v8368 = vunpack.c.h.b16 %v7670
    %v8369 = vunpack.c.l.b16 %v7671
    %v8370 = vunpack.c.h.b16 %v7671
    %v8371 = vunpack.c.l.b16 %v7672
    %v8372 = vunpack.c.h.b16 %v7672
    %v8373 = vunpack.c.l.b16 %v7673
    %v8374 = vunpack.c.h.b16 %v7673
    %v8375 = vunpack.c.l.b16 %v7674
    %v8376 = vunpack.c.h.b16 %v7674
    %v8377 = vunpack.c.l.b16 %v7675
    %v8378 = vunpack.c.h.b16 %v7675
    %v8379 = vunpack.c.l.b16 %v7676
    %v8380 = vunpack.c.h.b16 %v7676
    %v8381 = vunpack.c.l.b16 %v7677
    %v8382 = vunpack.c.h.b16 %v7677
    %v8383 = vunpack.c.l.b16 %v7678
    %v8384 = vunpack.c.h.b16 %v7678
    %v8385 = vunpack.c.l.b16 %v7679
    %v8386 = vunpack.c.h.b16 %v7679
    %v8387 = vunpack.c.l.b16 %v7680
    %v8388 = vunpack.c.h.b16 %v7680
    %v8389 = vunpack.c.l.b16 %v7681
    %v8390 = vunpack.c.h.b16 %v7681
    %v8391 = vunpack.c.l.b16 %v7682
    %v8392 = vunpack.c.h.b16 %v7682
    %v8393 = vunpack.c.l.b16 %v7683
    %v8394 = vunpack.c.h.b16 %v7683
    %v8395 = vunpack.c.l.b16 %v7684
    %v8396 = vunpack.c.h.b16 %v7684
    %v8397 = vunpack.c.l.b16 %v7685
    %v8398 = vunpack.c.h.b16 %v7685
    %v8399 = vunpack.c.l.b16 %v7686
    %v8400 = vunpack.c.h.b16 %v7686
    %v8401 = vunpack.c.l.b16 %v7687
    %v8402 = vunpack.c.h.b16 %v7687
    %v8403 = vunpack.c.l.b16 %v7688
    %v8404 = vunpack.c.h.b16 %v7688
    %v8405 = vunpack.c.l.b16 %v7689
    %v8406 = vunpack.c.h.b16 %v7689
    %v8407 = vunpack.c.l.b16 %v7690
    %v8408 = vunpack.c.h.b16 %v7690
    %v8409 = vunpack.c.l.b16 %v7691
    %v8410 = vunpack.c.h.b16 %v7691
    %v8411 = vunpack.c.l.b16 %v7692
    %v8412 = vunpack.c.h.b16 %v7692
    %v8413 = vunpack.c.l.b16 %v7693
    %v8414 = vunpack.c.h.b16 %v7693
    %v8415 = vunpack.c.l.b16 %v7694
    %v8416 = vunpack.c.h.b16 %v7694
    %v8417 = vunpack.c.l.b16 %v7695
    %v8418 = vunpack.c.h.b16 %v7695
    %v8419 = vunpack.c.l.b16 %v7696
    %v8420 = vunpack.c.h.b16 %v7696
    %v8421 = vunpack.c.l.b16 %v7697
    %v8422 = vunpack.c.h.b16 %v7697
    %v8423 = vunpack.c.l.b16 %v7698
    %v8424 = vunpack.c.h.b16 %v7698
    %v8425 = vunpack.c.l.b16 %v7699
    %v8426 = vunpack.c.h.b16 %v7699
    %v8427 = vunpack.c.l.b16 %v7700
    %v8428 = vunpack.c.h.b16 %v7700
    %v8429 = vunpack.c.l.b16 %v7701
    %v8430 = vunpack.c.h.b16 %v7701
    %v8431 = vunpack.c.l.b16 %v7702
    %v8432 = vunpack.c.h.b16 %v7702
    %v8433 = vunpack.c.l.b16 %v7703
    %v8434 = vunpack.c.h.b16 %v7703
    %v8435 = vunpack.c.l.b16 %v7704
    %v8436 = vunpack.c.h.b16 %v7704
    %v8437 = vunpack.c.l.b16 %v7705
    %v8438 = vunpack.c.h.b16 %v7705
    %v8439 = vunpack.c.l.b16 %v7706
    %v8440 = vunpack.c.h.b16 %v7706
    %v8441 = vunpack.c.l.b16 %v7707
    %v8442 = vunpack.c.h.b16 %v7707
    %v8443 = vunpack.c.l.b16 %v7708
    %v8444 = vunpack.c.h.b16 %v7708
    %v8445 = vunpack.c.l.b16 %v7709
    %v8446 = vunpack.c.h.b16 %v7709
    %v8447 = vunpack.c.l.b16 %v7710
    %v8448 = vunpack.c.h.b16 %v7710
    %v8449 = vunpack.c.l.b16 %v7711
    %v8450 = vunpack.c.h.b16 %v7711
    %v8451 = vunpack.c.l.b16 %v7712
    %v8452 = vunpack.c.h.b16 %v7712
    %v8453 = vunpack.c.l.b16 %v7713
    %v8454 = vunpack.c.h.b16 %v7713
    %v8455 = vunpack.c.l.b16 %v7714
    %v8456 = vunpack.c.h.b16 %v7714
    %v8457 = vunpack.c.l.b16 %v7715
    %v8458 = vunpack.c.h.b16 %v7715
    %v8459 = vunpack.c.l.b16 %v7716
    %v8460 = vunpack.c.h.b16 %v7716
    %v8461 = vunpack.c.l.b16 %v7717
    %v8462 = vunpack.c.h.b16 %v7717
    %v8463 = vunpack.c.l.b16 %v7718
    %v8464 = vunpack.c.h.b16 %v7718
    %v8465 = vunpack.c.l.b16 %v7719
    %v8466 = vunpack.c.h.b16 %v7719
    %v8467 = vunpack.c.l.b16 %v7720
    %v8468 = vunpack.c.h.b16 %v7720
    %v8469 = vunpack.c.l.b16 %v7721
    %v8470 = vunpack.c.h.b16 %v7721
    %v8471 = vunpack.c.l.b16 %v7722
    %v8472 = vunpack.c.h.b16 %v7722
    %v8473 = vunpack.c.l.b16 %v7723
    %v8474 = vunpack.c.h.b16 %v7723
    %v8475 = vunpack.c.l.b16 %v7724
    %v8476 = vunpack.c.h.b16 %v7724
    %v8477 = vunpack.c.l.b16 %v7725
    %v8478 = vunpack.c.h.b16 %v7725
    %v8479 = vunpack.c.l.b16 %v7726
    %v8480 = vunpack.c.h.b16 %v7726
    %v8481 = vunpack.c.l.b16 %v7727
    %v8482 = vunpack.c.h.b16 %v7727
    %v8483 = vunpack.c.l.b16 %v7728
    %v8484 = vunpack.c.h.b16 %v7728
    %v8485 = vunpack.c.l.b16 %v7729
    %v8486 = vunpack.c.h.b16 %v7729
    %v8487 = vunpack.c.l.b16 %v7730
    %v8488 = vunpack.c.h.b16 %v7730
    %v8489 = vunpack.c.l.b16 %v7731
    %v8490 = vunpack.c.h.b16 %v7731
    %v8491 = vunpack.c.l.b16 %v7732
    %v8492 = vunpack.c.h.b16 %v7732
    %v8493 = vunpack.c.l.b16 %v7733
    %v8494 = vunpack.c.h.b16 %v7733
    %v8495 = vunpack.c.l.b16 %v7734
    %v8496 = vunpack.c.h.b16 %v7734
    %v8497 = vunpack.c.l.b16 %v7735
    %v8498 = vunpack.c.h.b16 %v7735
    %v8499 = vunpack.c.l.b16 %v7736
    %v8500 = vunpack.c.h.b16 %v7736
    %v8501 = vunpack.c.l.b16 %v7737
    %v8502 = vunpack.c.h.b16 %v7737
    %v8503 = vunpack.c.l.b16 %v7738
    %v8504 = vunpack.c.h.b16 %v7738
    %v8505 = vunpack.c.l.b16 %v7739
    %v8506 = vunpack.c.h.b16 %v7739
    %v8507 = vunpack.c.l.b16 %v7740
    %v8508 = vunpack.c.h.b16 %v7740
    %v8509 = vpack.c.b16 %v8001, %v7997
    %v8510 = vpack.c.b16 %v8002, %v7998
    %v8511 = vpack.c.b16 %v8003, %v7999
    %v8512 = vpack.c.b16 %v8004, %v8000
    %v8513 = vpack.c.b16 %v8009, %v8005
    %v8514 = vpack.c.b16 %v8010, %v8006
    %v8515 = vpack.c.b16 %v8011, %v8007
    %v8516 = vpack.c.b16 %v8012, %v8008
    %v8517 = vpack.c.b16 %v8017, %v8013
    %v8518 = vpack.c.b16 %v8018, %v8014
    %v8519 = vpack.c.b16 %v8019, %v8015
    %v8520 = vpack.c.b16 %v8020, %v8016
    %v8521 = vpack.c.b16 %v8025, %v8021
    %v8522 = vpack.c.b16 %v8026, %v8022
    %v8523 = vpack.c.b16 %v8027, %v8023
    %v8524 = vpack.c.b16 %v8028, %v8024
    %v8525 = vpack.c.b16 %v8033, %v8029
    %v8526 = vpack.c.b16 %v8034, %v8030
    %v8527 = vpack.c.b16 %v8035, %v8031
    %v8528 = vpack.c.b16 %v8036, %v8032
    %v8529 = vpack.c.b16 %v8041, %v8037
    %v8530 = vpack.c.b16 %v8042, %v8038
    %v8531 = vpack.c.b16 %v8043, %v8039
    %v8532 = vpack.c.b16 %v8044, %v8040
    %v8533 = vpack.c.b16 %v8049, %v8045
    %v8534 = vpack.c.b16 %v8050, %v8046
    %v8535 = vpack.c.b16 %v8051, %v8047
    %v8536 = vpack.c.b16 %v8052, %v8048
    %v8537 = vpack.c.b16 %v8057, %v8053
    %v8538 = vpack.c.b16 %v8058, %v8054
    %v8539 = vpack.c.b16 %v8059, %v8055
    %v8540 = vpack.c.b16 %v8060, %v8056
    %v8541 = vpack.c.b16 %v8065, %v8061
    %v8542 = vpack.c.b16 %v8066, %v8062
    %v8543 = vpack.c.b16 %v8067, %v8063
    %v8544 = vpack.c.b16 %v8068, %v8064
    %v8545 = vpack.c.b16 %v8073, %v8069
    %v8546 = vpack.c.b16 %v8074, %v8070
    %v8547 = vpack.c.b16 %v8075, %v8071
    %v8548 = vpack.c.b16 %v8076, %v8072
    %v8549 = vpack.c.b16 %v8081, %v8077
    %v8550 = vpack.c.b16 %v8082, %v8078
    %v8551 = vpack.c.b16 %v8083, %v8079
    %v8552 = vpack.c.b16 %v8084, %v8080
    %v8553 = vpack.c.b16 %v8089, %v8085
    %v8554 = vpack.c.b16 %v8090, %v8086
    %v8555 = vpack.c.b16 %v8091, %v8087
    %v8556 = vpack.c.b16 %v8092, %v8088
    %v8557 = vpack.c.b16 %v8097, %v8093
    %v8558 = vpack.c.b16 %v8098, %v8094
    %v8559 = vpack.c.b16 %v8099, %v8095
    %v8560 = vpack.c.b16 %v8100, %v8096
    %v8561 = vpack.c.b16 %v8105, %v8101
    %v8562 = vpack.c.b16 %v8106, %v8102
    %v8563 = vpack.c.b16 %v8107, %v8103
    %v8564 = vpack.c.b16 %v8108, %v8104
    %v8565 = vpack.c.b16 %v8113, %v8109
    %v8566 = vpack.c.b16 %v8114, %v8110
    %v8567 = vpack.c.b16 %v8115, %v8111
    %v8568 = vpack.c.b16 %v8116, %v8112
    %v8569 = vpack.c.b16 %v8121, %v8117
    %v8570 = vpack.c.b16 %v8122, %v8118
    %v8571 = vpack.c.b16 %v8123, %v8119
    %v8572 = vpack.c.b16 %v8124, %v8120
    %v8573 = vpack.c.b16 %v8129, %v8125
    %v8574 = vpack.c.b16 %v8130, %v8126
    %v8575 = vpack.c.b16 %v8131, %v8127
    %v8576 = vpack.c.b16 %v8132, %v8128
    %v8577 = vpack.c.b16 %v8137, %v8133
    %v8578 = vpack.c.b16 %v8138, %v8134
    %v8579 = vpack.c.b16 %v8139, %v8135
    %v8580 = vpack.c.b16 %v8140, %v8136
    %v8581 = vpack.c.b16 %v8145, %v8141
    %v8582 = vpack.c.b16 %v8146, %v8142
    %v8583 = vpack.c.b16 %v8147, %v8143
    %v8584 = vpack.c.b16 %v8148, %v8144
    %v8585 = vpack.c.b16 %v8153, %v8149
    %v8586 = vpack.c.b16 %v8154, %v8150
    %v8587 = vpack.c.b16 %v8155, %v8151
    %v8588 = vpack.c.b16 %v8156, %v8152
    %v8589 = vpack.c.b16 %v8161, %v8157
    %v8590 = vpack.c.b16 %v8162, %v8158
    %v8591 = vpack.c.b16 %v8163, %v8159
    %v8592 = vpack.c.b16 %v8164, %v8160
    %v8593 = vpack.c.b16 %v8169, %v8165
    %v8594 = vpack.c.b16 %v8170, %v8166
    %v8595 = vpack.c.b16 %v8171, %v8167
    %v8596 = vpack.c.b16 %v8172, %v8168
    %v8597 = vpack.c.b16 %v8177, %v8173
    %v8598 = vpack.c.b16 %v8178, %v8174
    %v8599 = vpack.c.b16 %v8179, %v8175
    %v8600 = vpack.c.b16 %v8180, %v8176
    %v8601 = vpack.c.b16 %v8185, %v8181
    %v8602 = vpack.c.b16 %v8186, %v8182
    %v8603 = vpack.c.b16 %v8187, %v8183
    %v8604 = vpack.c.b16 %v8188, %v8184
    %v8605 = vpack.c.b16 %v8193, %v8189
    %v8606 = vpack.c.b16 %v8194, %v8190
    %v8607 = vpack.c.b16 %v8195, %v8191
    %v8608 = vpack.c.b16 %v8196, %v8192
    %v8609 = vpack.c.b16 %v8201, %v8197
    %v8610 = vpack.c.b16 %v8202, %v8198
    %v8611 = vpack.c.b16 %v8203, %v8199
    %v8612 = vpack.c.b16 %v8204, %v8200
    %v8613 = vpack.c.b16 %v8209, %v8205
    %v8614 = vpack.c.b16 %v8210, %v8206
    %v8615 = vpack.c.b16 %v8211, %v8207
    %v8616 = vpack.c.b16 %v8212, %v8208
    %v8617 = vpack.c.b16 %v8217, %v8213
    %v8618 = vpack.c.b16 %v8218, %v8214
    %v8619 = vpack.c.b16 %v8219, %v8215
    %v8620 = vpack.c.b16 %v8220, %v8216
    %v8621 = vpack.c.b16 %v8225, %v8221
    %v8622 = vpack.c.b16 %v8226, %v8222
    %v8623 = vpack.c.b16 %v8227, %v8223
    %v8624 = vpack.c.b16 %v8228, %v8224
    %v8625 = vpack.c.b16 %v8233, %v8229
    %v8626 = vpack.c.b16 %v8234, %v8230
    %v8627 = vpack.c.b16 %v8235, %v8231
    %v8628 = vpack.c.b16 %v8236, %v8232
    %v8629 = vpack.c.b16 %v8241, %v8237
    %v8630 = vpack.c.b16 %v8242, %v8238
    %v8631 = vpack.c.b16 %v8243, %v8239
    %v8632 = vpack.c.b16 %v8244, %v8240
    %v8633 = vpack.c.b16 %v8249, %v8245
    %v8634 = vpack.c.b16 %v8250, %v8246
    %v8635 = vpack.c.b16 %v8251, %v8247
    %v8636 = vpack.c.b16 %v8252, %v8248
    %v8637 = vpack.c.b16 %v8257, %v8253
    %v8638 = vpack.c.b16 %v8258, %v8254
    %v8639 = vpack.c.b16 %v8259, %v8255
    %v8640 = vpack.c.b16 %v8260, %v8256
    %v8641 = vpack.c.b16 %v8265, %v8261
    %v8642 = vpack.c.b16 %v8266, %v8262
    %v8643 = vpack.c.b16 %v8267, %v8263
    %v8644 = vpack.c.b16 %v8268, %v8264
    %v8645 = vpack.c.b16 %v8273, %v8269
    %v8646 = vpack.c.b16 %v8274, %v8270
    %v8647 = vpack.c.b16 %v8275, %v8271
    %v8648 = vpack.c.b16 %v8276, %v8272
    %v8649 = vpack.c.b16 %v8281, %v8277
    %v8650 = vpack.c.b16 %v8282, %v8278
    %v8651 = vpack.c.b16 %v8283, %v8279
    %v8652 = vpack.c.b16 %v8284, %v8280
    %v8653 = vpack.c.b16 %v8289, %v8285
    %v8654 = vpack.c.b16 %v8290, %v8286
    %v8655 = vpack.c.b16 %v8291, %v8287
    %v8656 = vpack.c.b16 %v8292, %v8288
    %v8657 = vpack.c.b16 %v8297, %v8293
    %v8658 = vpack.c.b16 %v8298, %v8294
    %v8659 = vpack.c.b16 %v8299, %v8295
    %v8660 = vpack.c.b16 %v8300, %v8296
    %v8661 = vpack.c.b16 %v8305, %v8301
    %v8662 = vpack.c.b16 %v8306, %v8302
    %v8663 = vpack.c.b16 %v8307, %v8303
    %v8664 = vpack.c.b16 %v8308, %v8304
    %v8665 = vpack.c.b16 %v8313, %v8309
    %v8666 = vpack.c.b16 %v8314, %v8310
    %v8667 = vpack.c.b16 %v8315, %v8311
    %v8668 = vpack.c.b16 %v8316, %v8312
    %v8669 = vpack.c.b16 %v8321, %v8317
    %v8670 = vpack.c.b16 %v8322, %v8318
    %v8671 = vpack.c.b16 %v8323, %v8319
    %v8672 = vpack.c.b16 %v8324, %v8320
    %v8673 = vpack.c.b16 %v8329, %v8325
    %v8674 = vpack.c.b16 %v8330, %v8326
    %v8675 = vpack.c.b16 %v8331, %v8327
    %v8676 = vpack.c.b16 %v8332, %v8328
    %v8677 = vpack.c.b16 %v8337, %v8333
    %v8678 = vpack.c.b16 %v8338, %v8334
    %v8679 = vpack.c.b16 %v8339, %v8335
    %v8680 = vpack.c.b16 %v8340, %v8336
    %v8681 = vpack.c.b16 %v8345, %v8341
    %v8682 = vpack.c.b16 %v8346, %v8342
    %v8683 = vpack.c.b16 %v8347, %v8343
    %v8684 = vpack.c.b16 %v8348, %v8344
    %v8685 = vpack.c.b16 %v8353, %v8349
    %v8686 = vpack.c.b16 %v8354, %v8350
    %v8687 = vpack.c.b16 %v8355, %v8351
    %v8688 = vpack.c.b16 %v8356, %v8352
    %v8689 = vpack.c.b16 %v8361, %v8357
    %v8690 = vpack.c.b16 %v8362, %v8358
    %v8691 = vpack.c.b16 %v8363, %v8359
    %v8692 = vpack.c.b16 %v8364, %v8360
    %v8693 = vpack.c.b16 %v8369, %v8365
    %v8694 = vpack.c.b16 %v8370, %v8366
    %v8695 = vpack.c.b16 %v8371, %v8367
    %v8696 = vpack.c.b16 %v8372, %v8368
    %v8697 = vpack.c.b16 %v8377, %v8373
    %v8698 = vpack.c.b16 %v8378, %v8374
    %v8699 = vpack.c.b16 %v8379, %v8375
    %v8700 = vpack.c.b16 %v8380, %v8376
    %v8701 = vpack.c.b16 %v8385, %v8381
    %v8702 = vpack.c.b16 %v8386, %v8382
    %v8703 = vpack.c.b16 %v8387, %v8383
    %v8704 = vpack.c.b16 %v8388, %v8384
    %v8705 = vpack.c.b16 %v8393, %v8389
    %v8706 = vpack.c.b16 %v8394, %v8390
    %v8707 = vpack.c.b16 %v8395, %v8391
    %v8708 = vpack.c.b16 %v8396, %v8392
    %v8709 = vpack.c.b16 %v8401, %v8397
    %v8710 = vpack.c.b16 %v8402, %v8398
    %v8711 = vpack.c.b16 %v8403, %v8399
    %v8712 = vpack.c.b16 %v8404, %v8400
    %v8713 = vpack.c.b16 %v8409, %v8405
    %v8714 = vpack.c.b16 %v8410, %v8406
    %v8715 = vpack.c.b16 %v8411, %v8407
    %v8716 = vpack.c.b16 %v8412, %v8408
    %v8717 = vpack.c.b16 %v8417, %v8413
    %v8718 = vpack.c.b16 %v8418, %v8414
    %v8719 = vpack.c.b16 %v8419, %v8415
    %v8720 = vpack.c.b16 %v8420, %v8416
    %v8721 = vpack.c.b16 %v8425, %v8421
    %v8722 = vpack.c.b16 %v8426, %v8422
    %v8723 = vpack.c.b16 %v8427, %v8423
    %v8724 = vpack.c.b16 %v8428, %v8424
    %v8725 = vpack.c.b16 %v8433, %v8429
    %v8726 = vpack.c.b16 %v8434, %v8430
    %v8727 = vpack.c.b16 %v8435, %v8431
    %v8728 = vpack.c.b16 %v8436, %v8432
    %v8729 = vpack.c.b16 %v8441, %v8437
    %v8730 = vpack.c.b16 %v8442, %v8438
    %v8731 = vpack.c.b16 %v8443, %v8439
    %v8732 = vpack.c.b16 %v8444, %v8440
    %v8733 = vpack.c.b16 %v8449, %v8445
    %v8734 = vpack.c.b16 %v8450, %v8446
    %v8735 = vpack.c.b16 %v8451, %v8447
    %v8736 = vpack.c.b16 %v8452, %v8448
    %v8737 = vpack.c.b16 %v8457, %v8453
    %v8738 = vpack.c.b16 %v8458, %v8454
    %v8739 = vpack.c.b16 %v8459, %v8455
    %v8740 = vpack.c.b16 %v8460, %v8456
    %v8741 = vpack.c.b16 %v8465, %v8461
    %v8742 = vpack.c.b16 %v8466, %v8462
    %v8743 = vpack.c.b16 %v8467, %v8463
    %v8744 = vpack.c.b16 %v8468, %v8464
    %v8745 = vpack.c.b16 %v8473, %v8469
    %v8746 = vpack.c.b16 %v8474, %v8470
    %v8747 = vpack.c.b16 %v8475, %v8471
    %v8748 = vpack.c.b16 %v8476, %v8472
    %v8749 = vpack.c.b16 %v8481, %v8477
    %v8750 = vpack.c.b16 %v8482, %v8478
    %v8751 = vpack.c.b16 %v8483, %v8479
    %v8752 = vpack.c.b16 %v8484, %v8480
    %v8753 = vpack.c.b16 %v8489, %v8485
    %v8754 = vpack.c.b16 %v8490, %v8486
    %v8755 = vpack.c.b16 %v8491, %v8487
    %v8756 = vpack.c.b16 %v8492, %v8488
    %v8757 = vpack.c.b16 %v8497, %v8493
    %v8758 = vpack.c.b16 %v8498, %v8494
    %v8759 = vpack.c.b16 %v8499, %v8495
    %v8760 = vpack.c.b16 %v8500, %v8496
    %v8761 = vpack.c.b16 %v8505, %v8501
    %v8762 = vpack.c.b16 %v8506, %v8502
    %v8763 = vpack.c.b16 %v8507, %v8503
    %v8764 = vpack.c.b16 %v8508, %v8504
    %9021 = vmatprep.subr.bf16.mxu0 %v8510
    %9022 = vmatpush1.bf16.msra.mxu0 %v8509
    %9023 = vmatprep.subr.bf16.mxu0 %v8514
    %9024 = vmatpush1.bf16.msra.mxu0 %v8513
    %9025 = vmatprep.subr.bf16.mxu0 %v8518
    %9026 = vmatpush1.bf16.msra.mxu0 %v8517
    %9027 = vmatprep.subr.bf16.mxu0 %v8522
    %9028 = vmatpush1.bf16.msra.mxu0 %v8521
    %9029 = vmatprep.subr.bf16.mxu0 %v8526
    %9030 = vmatpush1.bf16.msra.mxu0 %v8525
    %9031 = vmatprep.subr.bf16.mxu0 %v8530
    %9032 = vmatpush1.bf16.msra.mxu0 %v8529
    %9033 = vmatprep.subr.bf16.mxu0 %v8534
    %9034 = vmatpush1.bf16.msra.mxu0 %v8533
    %9035 = vmatprep.subr.bf16.mxu0 %v8538
    %9036 = vmatpush1.bf16.msra.mxu0 %v8537
    %9037 = vmatprep.subr.bf16.mxu0 %v8542
    %9038 = vmatpush1.bf16.msra.mxu0 %v8541
    %9039 = vmatprep.subr.bf16.mxu0 %v8546
    %9040 = vmatpush1.bf16.msra.mxu0 %v8545
    %9041 = vmatprep.subr.bf16.mxu0 %v8550
    %9042 = vmatpush1.bf16.msra.mxu0 %v8549
    %9043 = vmatprep.subr.bf16.mxu0 %v8554
    %9044 = vmatpush1.bf16.msra.mxu0 %v8553
    %9045 = vmatprep.subr.bf16.mxu0 %v8558
    %9046 = vmatpush1.bf16.msra.mxu0 %v8557
    %9047 = vmatprep.subr.bf16.mxu0 %v8562
    %9048 = vmatpush1.bf16.msra.mxu0 %v8561
    %9049 = vmatprep.subr.bf16.mxu0 %v8566
    %9050 = vmatpush1.bf16.msra.mxu0 %v8565
    %9051 = vmatprep.subr.bf16.mxu0 %v8570
    %9052 = vmatpush1.bf16.msra.mxu0 %v8569
    %9053 = vmatprep.mubr.bf16.mxu0 %v7478
    %9054 = vmatmul.mubr.bf16.gmra.mrb[0].mxu0 %v7477
    %v9055 = vpop.f32.mrb[0].mxu0
    %v9056 = vadd.f32 0.0, %v9055
    %v9057 = vpop.f32.mrb[0].mxu0
    %v9058 = vadd.f32 0.0, %v9057
    %v9059 = vpop.f32.mrb[0].mxu0
    %v9060 = vadd.f32 0.0, %v9059
    %v9061 = vpop.f32.mrb[0].mxu0
    %v9062 = vadd.f32 0.0, %v9061
    %9063 = vdwg.mxu0
    %9064 = vmatprep.subr.bf16.mxu0 %v8574
    %9065 = vmatpush1.bf16.msra.mxu0 %v8573
    %9066 = vmatprep.subr.bf16.mxu0 %v8578
    %9067 = vmatpush1.bf16.msra.mxu0 %v8577
    %9068 = vmatprep.subr.bf16.mxu0 %v8582
    %9069 = vmatpush1.bf16.msra.mxu0 %v8581
    %9070 = vmatprep.subr.bf16.mxu0 %v8586
    %9071 = vmatpush1.bf16.msra.mxu0 %v8585
    %9072 = vmatprep.subr.bf16.mxu0 %v8590
    %9073 = vmatpush1.bf16.msra.mxu0 %v8589
    %9074 = vmatprep.subr.bf16.mxu0 %v8594
    %9075 = vmatpush1.bf16.msra.mxu0 %v8593
    %9076 = vmatprep.subr.bf16.mxu0 %v8598
    %9077 = vmatpush1.bf16.msra.mxu0 %v8597
    %9078 = vmatprep.subr.bf16.mxu0 %v8602
    %9079 = vmatpush1.bf16.msra.mxu0 %v8601
    %9080 = vmatprep.subr.bf16.mxu0 %v8606
    %9081 = vmatpush1.bf16.msra.mxu0 %v8605
    %9082 = vmatprep.subr.bf16.mxu0 %v8610
    %9083 = vmatpush1.bf16.msra.mxu0 %v8609
    %9084 = vmatprep.subr.bf16.mxu0 %v8614
    %9085 = vmatpush1.bf16.msra.mxu0 %v8613
    %9086 = vmatprep.subr.bf16.mxu0 %v8618
    %9087 = vmatpush1.bf16.msra.mxu0 %v8617
    %9088 = vmatprep.subr.bf16.mxu0 %v8622
    %9089 = vmatpush1.bf16.msra.mxu0 %v8621
    %9090 = vmatprep.subr.bf16.mxu0 %v8626
    %9091 = vmatpush1.bf16.msra.mxu0 %v8625
    %9092 = vmatprep.subr.bf16.mxu0 %v8630
    %9093 = vmatpush1.bf16.msra.mxu0 %v8629
    %9094 = vmatprep.subr.bf16.mxu0 %v8634
    %9095 = vmatpush1.bf16.msra.mxu0 %v8633
    %9096 = vmatprep.mubr.bf16.mxu0 %v7480
    %9097 = vmatmul.mubr.bf16.gmra.mrb[0].mxu0 %v7479
    %v9098 = vpop.f32.mrb[0].mxu0
    %v9099 = vadd.f32 %v9056, %v9098
    %v9100 = vpop.f32.mrb[0].mxu0
    %v9101 = vadd.f32 %v9058, %v9100
    %v9102 = vpop.f32.mrb[0].mxu0
    %v9103 = vadd.f32 %v9060, %v9102
    %v9104 = vpop.f32.mrb[0].mxu0
    %v9105 = vadd.f32 %v9062, %v9104
    %9106 = vdwg.mxu0
    %9107 = vmatprep.subr.bf16.mxu0 %v8638
    %9108 = vmatpush1.bf16.msra.mxu0 %v8637
    %9109 = vmatprep.subr.bf16.mxu0 %v8642
    %9110 = vmatpush1.bf16.msra.mxu0 %v8641
    %9111 = vmatprep.subr.bf16.mxu0 %v8646
    %9112 = vmatpush1.bf16.msra.mxu0 %v8645
    %9113 = vmatprep.subr.bf16.mxu0 %v8650
    %9114 = vmatpush1.bf16.msra.mxu0 %v8649
    %9115 = vmatprep.subr.bf16.mxu0 %v8654
    %9116 = vmatpush1.bf16.msra.mxu0 %v8653
    %9117 = vmatprep.subr.bf16.mxu0 %v8658
    %9118 = vmatpush1.bf16.msra.mxu0 %v8657
    %9119 = vmatprep.subr.bf16.mxu0 %v8662
    %9120 = vmatpush1.bf16.msra.mxu0 %v8661
    %9121 = vmatprep.subr.bf16.mxu0 %v8666
    %9122 = vmatpush1.bf16.msra.mxu0 %v8665
    %9123 = vmatprep.subr.bf16.mxu0 %v8670
    %9124 = vmatpush1.bf16.msra.mxu0 %v8669
    %9125 = vmatprep.subr.bf16.mxu0 %v8674
    %9126 = vmatpush1.bf16.msra.mxu0 %v8673
    %9127 = vmatprep.subr.bf16.mxu0 %v8678
    %9128 = vmatpush1.bf16.msra.mxu0 %v8677
    %9129 = vmatprep.subr.bf16.mxu0 %v8682
    %9130 = vmatpush1.bf16.msra.mxu0 %v8681
    %9131 = vmatprep.subr.bf16.mxu0 %v8686
    %9132 = vmatpush1.bf16.msra.mxu0 %v8685
    %9133 = vmatprep.subr.bf16.mxu0 %v8690
    %9134 = vmatpush1.bf16.msra.mxu0 %v8689
    %9135 = vmatprep.subr.bf16.mxu0 %v8694
    %9136 = vmatpush1.bf16.msra.mxu0 %v8693
    %9137 = vmatprep.subr.bf16.mxu0 %v8698
    %9138 = vmatpush1.bf16.msra.mxu0 %v8697
    %9139 = vmatprep.mubr.bf16.mxu0 %v7482
    %9140 = vmatmul.mubr.bf16.gmra.mrb[0].mxu0 %v7481
    %v9141 = vpop.f32.mrb[0].mxu0
    %v9142 = vadd.f32 %v9099, %v9141
    %v9143 = vpop.f32.mrb[0].mxu0
    %v9144 = vadd.f32 %v9101, %v9143
    %v9145 = vpop.f32.mrb[0].mxu0
    %v9146 = vadd.f32 %v9103, %v9145
    %v9147 = vpop.f32.mrb[0].mxu0
    %v9148 = vadd.f32 %v9105, %v9147
    %9149 = vdwg.mxu0
    %9150 = vmatprep.subr.bf16.mxu0 %v8702
    %9151 = vmatpush1.bf16.msra.mxu0 %v8701
    %9152 = vmatprep.subr.bf16.mxu0 %v8706
    %9153 = vmatpush1.bf16.msra.mxu0 %v8705
    %9154 = vmatprep.subr.bf16.mxu0 %v8710
    %9155 = vmatpush1.bf16.msra.mxu0 %v8709
    %9156 = vmatprep.subr.bf16.mxu0 %v8714
    %9157 = vmatpush1.bf16.msra.mxu0 %v8713
    %9158 = vmatprep.subr.bf16.mxu0 %v8718
    %9159 = vmatpush1.bf16.msra.mxu0 %v8717
    %9160 = vmatprep.subr.bf16.mxu0 %v8722
    %9161 = vmatpush1.bf16.msra.mxu0 %v8721
    %9162 = vmatprep.subr.bf16.mxu0 %v8726
    %9163 = vmatpush1.bf16.msra.mxu0 %v8725
    %9164 = vmatprep.subr.bf16.mxu0 %v8730
    %9165 = vmatpush1.bf16.msra.mxu0 %v8729
    %9166 = vmatprep.subr.bf16.mxu0 %v8734
    %9167 = vmatpush1.bf16.msra.mxu0 %v8733
    %9168 = vmatprep.subr.bf16.mxu0 %v8738
    %9169 = vmatpush1.bf16.msra.mxu0 %v8737
    %9170 = vmatprep.subr.bf16.mxu0 %v8742
    %9171 = vmatpush1.bf16.msra.mxu0 %v8741
    %9172 = vmatprep.subr.bf16.mxu0 %v8746
    %9173 = vmatpush1.bf16.msra.mxu0 %v8745
    %9174 = vmatprep.subr.bf16.mxu0 %v8750
    %9175 = vmatpush1.bf16.msra.mxu0 %v8749
    %9176 = vmatprep.subr.bf16.mxu0 %v8754
    %9177 = vmatpush1.bf16.msra.mxu0 %v8753
    %9178 = vmatprep.subr.bf16.mxu0 %v8758
    %9179 = vmatpush1.bf16.msra.mxu0 %v8757
    %9180 = vmatprep.subr.bf16.mxu0 %v8762
    %9181 = vmatpush1.bf16.msra.mxu0 %v8761
    %9182 = vmatprep.mubr.bf16.mxu0 %v7484
    %9183 = vmatmul.mubr.bf16.gmra.mrb[0].mxu0 %v7483
    %v9184 = vpop.f32.mrb[0].mxu0
    %v9185 = vadd.f32 %v9142, %v9184
    %v9186 = vpop.f32.mrb[0].mxu0
    %v9187 = vadd.f32 %v9144, %v9186
    %v9188 = vpop.f32.mrb[0].mxu0
    %v9189 = vadd.f32 %v9146, %v9188
    %v9190 = vpop.f32.mrb[0].mxu0
    %v9191 = vadd.f32 %v9148, %v9190
    %9192 = vdwg.mxu0
    %9193 = vmatprep.subr.bf16.mxu0 %v8512
    %9194 = vmatpush1.bf16.msra.mxu0 %v8511
    %9195 = vmatprep.subr.bf16.mxu0 %v8516
    %9196 = vmatpush1.bf16.msra.mxu0 %v8515
    %9197 = vmatprep.subr.bf16.mxu0 %v8520
    %9198 = vmatpush1.bf16.msra.mxu0 %v8519
    %9199 = vmatprep.subr.bf16.mxu0 %v8524
    %9200 = vmatpush1.bf16.msra.mxu0 %v8523
    %9201 = vmatprep.subr.bf16.mxu0 %v8528
    %9202 = vmatpush1.bf16.msra.mxu0 %v8527
    %9203 = vmatprep.subr.bf16.mxu0 %v8532
    %9204 = vmatpush1.bf16.msra.mxu0 %v8531
    %9205 = vmatprep.subr.bf16.mxu0 %v8536
    %9206 = vmatpush1.bf16.msra.mxu0 %v8535
    %9207 = vmatprep.subr.bf16.mxu0 %v8540
    %9208 = vmatpush1.bf16.msra.mxu0 %v8539
    %9209 = vmatprep.subr.bf16.mxu0 %v8544
    %9210 = vmatpush1.bf16.msra.mxu0 %v8543
    %9211 = vmatprep.subr.bf16.mxu0 %v8548
    %9212 = vmatpush1.bf16.msra.mxu0 %v8547
    %9213 = vmatprep.subr.bf16.mxu0 %v8552
    %9214 = vmatpush1.bf16.msra.mxu0 %v8551
    %9215 = vmatprep.subr.bf16.mxu0 %v8556
    %9216 = vmatpush1.bf16.msra.mxu0 %v8555
    %9217 = vmatprep.subr.bf16.mxu0 %v8560
    %9218 = vmatpush1.bf16.msra.mxu0 %v8559
    %9219 = vmatprep.subr.bf16.mxu0 %v8564
    %9220 = vmatpush1.bf16.msra.mxu0 %v8563
    %9221 = vmatprep.subr.bf16.mxu0 %v8568
    %9222 = vmatpush1.bf16.msra.mxu0 %v8567
    %9223 = vmatprep.subr.bf16.mxu0 %v8572
    %9224 = vmatpush1.bf16.msra.mxu0 %v8571
    %9225 = vmatprep.mubr.bf16.mxu0 %v7478
    %9226 = vmatmul.mubr.bf16.gmra.mrb[0].mxu0 %v7477
    %v9227 = vpop.f32.mrb[0].mxu0
    %v9228 = vadd.f32 0.0, %v9227
    %v9229 = vpop.f32.mrb[0].mxu0
    %v9230 = vadd.f32 0.0, %v9229
    %v9231 = vpop.f32.mrb[0].mxu0
    %v9232 = vadd.f32 0.0, %v9231
    %v9233 = vpop.f32.mrb[0].mxu0
    %v9234 = vadd.f32 0.0, %v9233
    %9235 = vdwg.mxu0
    %9236 = vmatprep.subr.bf16.mxu0 %v8576
    %9237 = vmatpush1.bf16.msra.mxu0 %v8575
    %9238 = vmatprep.subr.bf16.mxu0 %v8580
    %9239 = vmatpush1.bf16.msra.mxu0 %v8579
    %9240 = vmatprep.subr.bf16.mxu0 %v8584
    %9241 = vmatpush1.bf16.msra.mxu0 %v8583
    %9242 = vmatprep.subr.bf16.mxu0 %v8588
    %9243 = vmatpush1.bf16.msra.mxu0 %v8587
    %9244 = vmatprep.subr.bf16.mxu0 %v8592
    %9245 = vmatpush1.bf16.msra.mxu0 %v8591
    %9246 = vmatprep.subr.bf16.mxu0 %v8596
    %9247 = vmatpush1.bf16.msra.mxu0 %v8595
    %9248 = vmatprep.subr.bf16.mxu0 %v8600
    %9249 = vmatpush1.bf16.msra.mxu0 %v8599
    %9250 = vmatprep.subr.bf16.mxu0 %v8604
    %9251 = vmatpush1.bf16.msra.mxu0 %v8603
    %9252 = vmatprep.subr.bf16.mxu0 %v8608
    %9253 = vmatpush1.bf16.msra.mxu0 %v8607
    %9254 = vmatprep.subr.bf16.mxu0 %v8612
    %9255 = vmatpush1.bf16.msra.mxu0 %v8611
    %9256 = vmatprep.subr.bf16.mxu0 %v8616
    %9257 = vmatpush1.bf16.msra.mxu0 %v8615
    %9258 = vmatprep.subr.bf16.mxu0 %v8620
    %9259 = vmatpush1.bf16.msra.mxu0 %v8619
    %9260 = vmatprep.subr.bf16.mxu0 %v8624
    %9261 = vmatpush1.bf16.msra.mxu0 %v8623
    %9262 = vmatprep.subr.bf16.mxu0 %v8628
    %9263 = vmatpush1.bf16.msra.mxu0 %v8627
    %9264 = vmatprep.subr.bf16.mxu0 %v8632
    %9265 = vmatpush1.bf16.msra.mxu0 %v8631
    %9266 = vmatprep.subr.bf16.mxu0 %v8636
    %9267 = vmatpush1.bf16.msra.mxu0 %v8635
    %9268 = vmatprep.mubr.bf16.mxu0 %v7480
    %9269 = vmatmul.mubr.bf16.gmra.mrb[0].mxu0 %v7479
    %v9270 = vpop.f32.mrb[0].mxu0
    %v9271 = vadd.f32 %v9228, %v9270
    %v9272 = vpop.f32.mrb[0].mxu0
    %v9273 = vadd.f32 %v9230, %v9272
    %v9274 = vpop.f32.mrb[0].mxu0
    %v9275 = vadd.f32 %v9232, %v9274
    %v9276 = vpop.f32.mrb[0].mxu0
    %v9277 = vadd.f32 %v9234, %v9276
    %9278 = vdwg.mxu0
    %9279 = vmatprep.subr.bf16.mxu0 %v8640
    %9280 = vmatpush1.bf16.msra.mxu0 %v8639
    %9281 = vmatprep.subr.bf16.mxu0 %v8644
    %9282 = vmatpush1.bf16.msra.mxu0 %v8643
    %9283 = vmatprep.subr.bf16.mxu0 %v8648
    %9284 = vmatpush1.bf16.msra.mxu0 %v8647
    %9285 = vmatprep.subr.bf16.mxu0 %v8652
    %9286 = vmatpush1.bf16.msra.mxu0 %v8651
    %9287 = vmatprep.subr.bf16.mxu0 %v8656
    %9288 = vmatpush1.bf16.msra.mxu0 %v8655
    %9289 = vmatprep.subr.bf16.mxu0 %v8660
    %9290 = vmatpush1.bf16.msra.mxu0 %v8659
    %9291 = vmatprep.subr.bf16.mxu0 %v8664
    %9292 = vmatpush1.bf16.msra.mxu0 %v8663
    %9293 = vmatprep.subr.bf16.mxu0 %v8668
    %9294 = vmatpush1.bf16.msra.mxu0 %v8667
    %9295 = vmatprep.subr.bf16.mxu0 %v8672
    %9296 = vmatpush1.bf16.msra.mxu0 %v8671
    %9297 = vmatprep.subr.bf16.mxu0 %v8676
    %9298 = vmatpush1.bf16.msra.mxu0 %v8675
    %9299 = vmatprep.subr.bf16.mxu0 %v8680
    %9300 = vmatpush1.bf16.msra.mxu0 %v8679
    %9301 = vmatprep.subr.bf16.mxu0 %v8684
    %9302 = vmatpush1.bf16.msra.mxu0 %v8683
    %9303 = vmatprep.subr.bf16.mxu0 %v8688
    %9304 = vmatpush1.bf16.msra.mxu0 %v8687
    %9305 = vmatprep.subr.bf16.mxu0 %v8692
    %9306 = vmatpush1.bf16.msra.mxu0 %v8691
    %9307 = vmatprep.subr.bf16.mxu0 %v8696
    %9308 = vmatpush1.bf16.msra.mxu0 %v8695
    %9309 = vmatprep.subr.bf16.mxu0 %v8700
    %9310 = vmatpush1.bf16.msra.mxu0 %v8699
    %9311 = vmatprep.mubr.bf16.mxu0 %v7482
    %9312 = vmatmul.mubr.bf16.gmra.mrb[0].mxu0 %v7481
    %v9313 = vpop.f32.mrb[0].mxu0
    %v9314 = vadd.f32 %v9271, %v9313
    %v9315 = vpop.f32.mrb[0].mxu0
    %v9316 = vadd.f32 %v9273, %v9315
    %v9317 = vpop.f32.mrb[0].mxu0
    %v9318 = vadd.f32 %v9275, %v9317
    %v9319 = vpop.f32.mrb[0].mxu0
    %v9320 = vadd.f32 %v9277, %v9319
    %9321 = vdwg.mxu0
    %9322 = vmatprep.subr.bf16.mxu0 %v8704
    %9323 = vmatpush1.bf16.msra.mxu0 %v8703
    %9324 = vmatprep.subr.bf16.mxu0 %v8708
    %9325 = vmatpush1.bf16.msra.mxu0 %v8707
    %9326 = vmatprep.subr.bf16.mxu0 %v8712
    %9327 = vmatpush1.bf16.msra.mxu0 %v8711
    %9328 = vmatprep.subr.bf16.mxu0 %v8716
    %9329 = vmatpush1.bf16.msra.mxu0 %v8715
    %9330 = vmatprep.subr.bf16.mxu0 %v8720
    %9331 = vmatpush1.bf16.msra.mxu0 %v8719
    %9332 = vmatprep.subr.bf16.mxu0 %v8724
    %9333 = vmatpush1.bf16.msra.mxu0 %v8723
    %9334 = vmatprep.subr.bf16.mxu0 %v8728
    %9335 = vmatpush1.bf16.msra.mxu0 %v8727
    %9336 = vmatprep.subr.bf16.mxu0 %v8732
    %9337 = vmatpush1.bf16.msra.mxu0 %v8731
    %9338 = vmatprep.subr.bf16.mxu0 %v8736
    %9339 = vmatpush1.bf16.msra.mxu0 %v8735
    %9340 = vmatprep.subr.bf16.mxu0 %v8740
    %9341 = vmatpush1.bf16.msra.mxu0 %v8739
    %9342 = vmatprep.subr.bf16.mxu0 %v8744
    %9343 = vmatpush1.bf16.msra.mxu0 %v8743
    %9344 = vmatprep.subr.bf16.mxu0 %v8748
    %9345 = vmatpush1.bf16.msra.mxu0 %v8747
    %9346 = vmatprep.subr.bf16.mxu0 %v8752
    %9347 = vmatpush1.bf16.msra.mxu0 %v8751
    %9348 = vmatprep.subr.bf16.mxu0 %v8756
    %9349 = vmatpush1.bf16.msra.mxu0 %v8755
    %9350 = vmatprep.subr.bf16.mxu0 %v8760
    %9351 = vmatpush1.bf16.msra.mxu0 %v8759
    %9352 = vmatprep.subr.bf16.mxu0 %v8764
    %9353 = vmatpush1.bf16.msra.mxu0 %v8763
    %9354 = vmatprep.mubr.bf16.mxu0 %v7484
    %9355 = vmatmul.mubr.bf16.gmra.mrb[0].mxu0 %v7483
    %v9356 = vpop.f32.mrb[0].mxu0
    %v9357 = vadd.f32 %v9314, %v9356
    %v9358 = vpop.f32.mrb[0].mxu0
    %v9359 = vadd.f32 %v9316, %v9358
    %v9360 = vpop.f32.mrb[0].mxu0
    %v9361 = vadd.f32 %v9318, %v9360
    %v9362 = vpop.f32.mrb[0].mxu0
    %v9363 = vadd.f32 %v9320, %v9362
    %9364 = vdwg.mxu0
    %v9365 = vpack.c.bf16 %v9189, %v9185
    %v9366 = vpack.c.bf16 %v9191, %v9187
    %v9367 = vpack.c.bf16 %v9361, %v9357
    %v9368 = vpack.c.bf16 %v9363, %v9359
    %v9369 = vld [vmem:[%s17] sm:$0xf]
    %v9370 = vld [vmem:[%s17 + $0x4] sm:$0xf]
    %v9371 = vld [vmem:[%s17 + $0x8] sm:$0xf]
    %v9372 = vld [vmem:[%s17 + $0xc] sm:$0xf]
    %v9373 = vld [vmem:[%s17 + $0x10] sm:$0xf]
    %v9374 = vld [vmem:[%s17 + $0x14] sm:$0xf]
    %v9375 = vld [vmem:[%s17 + $0x18] sm:$0xf]
    %v9376 = vld [vmem:[%s17 + $0x1c] sm:$0xf]
    %v9377 = vld [vmem:[%s17 + $0x20] sm:$0xf]
    %v9378 = vld [vmem:[%s17 + $0x24] sm:$0xf]
    %v9379 = vld [vmem:[%s17 + $0x28] sm:$0xf]
    %v9380 = vld [vmem:[%s17 + $0x2c] sm:$0xf]
    %v9381 = vld [vmem:[%s17 + $0x30] sm:$0xf]
    %v9382 = vld [vmem:[%s17 + $0x34] sm:$0xf]
    %v9383 = vld [vmem:[%s17 + $0x38] sm:$0xf]
    %v9384 = vld [vmem:[%s17 + $0x3c] sm:$0xf]
    %v9385 = vld [vmem:[%s17 + $0x40] sm:$0xf]
    %v9386 = vld [vmem:[%s17 + $0x44] sm:$0xf]
    %v9387 = vld [vmem:[%s17 + $0x48] sm:$0xf]
    %v9388 = vld [vmem:[%s17 + $0x4c] sm:$0xf]
    %v9389 = vld [vmem:[%s17 + $0x50] sm:$0xf]
    %v9390 = vld [vmem:[%s17 + $0x54] sm:$0xf]
    %v9391 = vld [vmem:[%s17 + $0x58] sm:$0xf]
    %v9392 = vld [vmem:[%s17 + $0x5c] sm:$0xf]
    %v9393 = vld [vmem:[%s17 + $0x60] sm:$0xf]
    %v9394 = vld [vmem:[%s17 + $0x64] sm:$0xf]
    %v9395 = vld [vmem:[%s17 + $0x68] sm:$0xf]
    %v9396 = vld [vmem:[%s17 + $0x6c] sm:$0xf]
    %v9397 = vld [vmem:[%s17 + $0x70] sm:$0xf]
    %v9398 = vld [vmem:[%s17 + $0x74] sm:$0xf]
    %v9399 = vld [vmem:[%s17 + $0x78] sm:$0xf]
    %v9400 = vld [vmem:[%s17 + $0x7c] sm:$0xf]
    %v9401 = vld [vmem:[%s17 + $0x80] sm:$0xf]
    %v9402 = vld [vmem:[%s17 + $0x84] sm:$0xf]
    %v9403 = vld [vmem:[%s17 + $0x88] sm:$0xf]
    %v9404 = vld [vmem:[%s17 + $0x8c] sm:$0xf]
    %v9405 = vld [vmem:[%s17 + $0x90] sm:$0xf]
    %v9406 = vld [vmem:[%s17 + $0x94] sm:$0xf]
    %v9407 = vld [vmem:[%s17 + $0x98] sm:$0xf]
    %v9408 = vld [vmem:[%s17 + $0x9c] sm:$0xf]
    %v9409 = vld [vmem:[%s17 + $0xa0] sm:$0xf]
    %v9410 = vld [vmem:[%s17 + $0xa4] sm:$0xf]
    %v9411 = vld [vmem:[%s17 + $0xa8] sm:$0xf]
    %v9412 = vld [vmem:[%s17 + $0xac] sm:$0xf]
    %v9413 = vld [vmem:[%s17 + $0xb0] sm:$0xf]
    %v9414 = vld [vmem:[%s17 + $0xb4] sm:$0xf]
    %v9415 = vld [vmem:[%s17 + $0xb8] sm:$0xf]
    %v9416 = vld [vmem:[%s17 + $0xbc] sm:$0xf]
    %v9417 = vld [vmem:[%s17 + $0xc0] sm:$0xf]
    %v9418 = vld [vmem:[%s17 + $0xc4] sm:$0xf]
    %v9419 = vld [vmem:[%s17 + $0xc8] sm:$0xf]
    %v9420 = vld [vmem:[%s17 + $0xcc] sm:$0xf]
    %v9421 = vld [vmem:[%s17 + $0xd0] sm:$0xf]
    %v9422 = vld [vmem:[%s17 + $0xd4] sm:$0xf]
    %v9423 = vld [vmem:[%s17 + $0xd8] sm:$0xf]
    %v9424 = vld [vmem:[%s17 + $0xdc] sm:$0xf]
    %v9425 = vld [vmem:[%s17 + $0xe0] sm:$0xf]
    %v9426 = vld [vmem:[%s17 + $0xe4] sm:$0xf]
    %v9427 = vld [vmem:[%s17 + $0xe8] sm:$0xf]
    %v9428 = vld [vmem:[%s17 + $0xec] sm:$0xf]
    %v9429 = vld [vmem:[%s17 + $0xf0] sm:$0xf]
    %v9430 = vld [vmem:[%s17 + $0xf4] sm:$0xf]
    %v9431 = vld [vmem:[%s17 + $0xf8] sm:$0xf]
    %v9432 = vld [vmem:[%s17 + $0xfc] sm:$0xf]
    %v9433 = vld [vmem:[%s18] sm:$0x1]
    %v9435 = vlaneseq
    %v9436 = vshrl.u32 %v9435, 7
    %v9437 = vsub.s32 0, %v9436
    %v9438 = vrot.slane %v9433, %v9437
    %v9504 = vunpack.c.l.b16 %v9369
    %v9505 = vunpack.c.l.b16 %v9370
    %v9506 = vunpack.c.l.b16 %v9371
    %v9507 = vunpack.c.l.b16 %v9372
    %v9508 = vunpack.c.l.b16 %v9373
    %v9509 = vunpack.c.l.b16 %v9374
    %v9510 = vunpack.c.l.b16 %v9375
    %v9511 = vunpack.c.l.b16 %v9376
    %v9512 = vunpack.c.l.b16 %v9377
    %v9513 = vunpack.c.l.b16 %v9378
    %v9514 = vunpack.c.l.b16 %v9379
    %v9515 = vunpack.c.l.b16 %v9380
    %v9516 = vunpack.c.l.b16 %v9381
    %v9517 = vunpack.c.l.b16 %v9382
    %v9518 = vunpack.c.l.b16 %v9383
    %v9519 = vunpack.c.l.b16 %v9384
    %v9520 = vunpack.c.l.b16 %v9385
    %v9521 = vunpack.c.l.b16 %v9386
    %v9522 = vunpack.c.l.b16 %v9387
    %v9523 = vunpack.c.l.b16 %v9388
    %v9524 = vunpack.c.l.b16 %v9389
    %v9525 = vunpack.c.l.b16 %v9390
    %v9526 = vunpack.c.l.b16 %v9391
    %v9527 = vunpack.c.l.b16 %v9392
    %v9528 = vunpack.c.l.b16 %v9393
    %v9529 = vunpack.c.l.b16 %v9394
    %v9530 = vunpack.c.l.b16 %v9395
    %v9531 = vunpack.c.l.b16 %v9396
    %v9532 = vunpack.c.l.b16 %v9397
    %v9533 = vunpack.c.l.b16 %v9398
    %v9534 = vunpack.c.l.b16 %v9399
    %v9535 = vunpack.c.l.b16 %v9400
    %v9536 = vunpack.c.l.b16 %v9401
    %v9537 = vunpack.c.l.b16 %v9402
    %v9538 = vunpack.c.l.b16 %v9403
    %v9539 = vunpack.c.l.b16 %v9404
    %v9540 = vunpack.c.l.b16 %v9405
    %v9541 = vunpack.c.l.b16 %v9406
    %v9542 = vunpack.c.l.b16 %v9407
    %v9543 = vunpack.c.l.b16 %v9408
    %v9544 = vunpack.c.l.b16 %v9409
    %v9545 = vunpack.c.l.b16 %v9410
    %v9546 = vunpack.c.l.b16 %v9411
    %v9547 = vunpack.c.l.b16 %v9412
    %v9548 = vunpack.c.l.b16 %v9413
    %v9549 = vunpack.c.l.b16 %v9414
    %v9550 = vunpack.c.l.b16 %v9415
    %v9551 = vunpack.c.l.b16 %v9416
    %v9552 = vunpack.c.l.b16 %v9417
    %v9553 = vunpack.c.l.b16 %v9418
    %v9554 = vunpack.c.l.b16 %v9419
    %v9555 = vunpack.c.l.b16 %v9420
    %v9556 = vunpack.c.l.b16 %v9421
    %v9557 = vunpack.c.l.b16 %v9422
    %v9558 = vunpack.c.l.b16 %v9423
    %v9559 = vunpack.c.l.b16 %v9424
    %v9560 = vunpack.c.l.b16 %v9425
    %v9561 = vunpack.c.l.b16 %v9426
    %v9562 = vunpack.c.l.b16 %v9427
    %v9563 = vunpack.c.l.b16 %v9428
    %v9564 = vunpack.c.l.b16 %v9429
    %v9565 = vunpack.c.l.b16 %v9430
    %v9566 = vunpack.c.l.b16 %v9431
    %v9567 = vunpack.c.l.b16 %v9432
    %v9568 = vpack.c.b16 %v9505, %v9504
    %v9569 = vpack.c.b16 %v9507, %v9506
    %v9570 = vpack.c.b16 %v9509, %v9508
    %v9571 = vpack.c.b16 %v9511, %v9510
    %v9572 = vpack.c.b16 %v9513, %v9512
    %v9573 = vpack.c.b16 %v9515, %v9514
    %v9574 = vpack.c.b16 %v9517, %v9516
    %v9575 = vpack.c.b16 %v9519, %v9518
    %v9576 = vpack.c.b16 %v9521, %v9520
    %v9577 = vpack.c.b16 %v9523, %v9522
    %v9578 = vpack.c.b16 %v9525, %v9524
    %v9579 = vpack.c.b16 %v9527, %v9526
    %v9580 = vpack.c.b16 %v9529, %v9528
    %v9581 = vpack.c.b16 %v9531, %v9530
    %v9582 = vpack.c.b16 %v9533, %v9532
    %v9583 = vpack.c.b16 %v9535, %v9534
    %v9584 = vpack.c.b16 %v9537, %v9536
    %v9585 = vpack.c.b16 %v9539, %v9538
    %v9586 = vpack.c.b16 %v9541, %v9540
    %v9587 = vpack.c.b16 %v9543, %v9542
    %v9588 = vpack.c.b16 %v9545, %v9544
    %v9589 = vpack.c.b16 %v9547, %v9546
    %v9590 = vpack.c.b16 %v9549, %v9548
    %v9591 = vpack.c.b16 %v9551, %v9550
    %v9592 = vpack.c.b16 %v9553, %v9552
    %v9593 = vpack.c.b16 %v9555, %v9554
    %v9594 = vpack.c.b16 %v9557, %v9556
    %v9595 = vpack.c.b16 %v9559, %v9558
    %v9596 = vpack.c.b16 %v9561, %v9560
    %v9597 = vpack.c.b16 %v9563, %v9562
    %v9598 = vpack.c.b16 %v9565, %v9564
    %v9599 = vpack.c.b16 %v9567, %v9566
    %9632 = vmatprep.subr.bf16.mxu0 0
    %9633 = vmatpush1.bf16.msra.mxu0 %v9568
    %9634 = vmatprep.subr.bf16.mxu0 0
    %9635 = vmatpush1.bf16.msra.mxu0 %v9569
    %9636 = vmatprep.subr.bf16.mxu0 0
    %9637 = vmatpush1.bf16.msra.mxu0 %v9570
    %9638 = vmatprep.subr.bf16.mxu0 0
    %9639 = vmatpush1.bf16.msra.mxu0 %v9571
    %9640 = vmatprep.subr.bf16.mxu0 0
    %9641 = vmatpush1.bf16.msra.mxu0 %v9572
    %9642 = vmatprep.subr.bf16.mxu0 0
    %9643 = vmatpush1.bf16.msra.mxu0 %v9573
    %9644 = vmatprep.subr.bf16.mxu0 0
    %9645 = vmatpush1.bf16.msra.mxu0 %v9574
    %9646 = vmatprep.subr.bf16.mxu0 0
    %9647 = vmatpush1.bf16.msra.mxu0 %v9575
    %9648 = vmatprep.subr.bf16.mxu0 0
    %9649 = vmatpush1.bf16.msra.mxu0 %v9576
    %9650 = vmatprep.subr.bf16.mxu0 0
    %9651 = vmatpush1.bf16.msra.mxu0 %v9577
    %9652 = vmatprep.subr.bf16.mxu0 0
    %9653 = vmatpush1.bf16.msra.mxu0 %v9578
    %9654 = vmatprep.subr.bf16.mxu0 0
    %9655 = vmatpush1.bf16.msra.mxu0 %v9579
    %9656 = vmatprep.subr.bf16.mxu0 0
    %9657 = vmatpush1.bf16.msra.mxu0 %v9580
    %9658 = vmatprep.subr.bf16.mxu0 0
    %9659 = vmatpush1.bf16.msra.mxu0 %v9581
    %9660 = vmatprep.subr.bf16.mxu0 0
    %9661 = vmatpush1.bf16.msra.mxu0 %v9582
    %9662 = vmatprep.subr.bf16.mxu0 0
    %9663 = vmatpush1.bf16.msra.mxu0 %v9583
    %9664 = vmatprep.mubr.bf16.mxu0 %v9366
    %9665 = vmatmul.mubr.bf16.gmra.mrb[0].mxu0 %v9365
    %v9666 = vpop.f32.mrb[0].mxu0
    %v9667 = vadd.f32 %v9438, %v9666
    %v9668 = vpop.f32.mrb[0].mxu0
    %v9669 = vpop.f32.mrb[0].mxu0
    %v9670 = vadd.f32 %v9438, %v9669
    %v9671 = vpop.f32.mrb[0].mxu0
    %9672 = vdwg.mxu0
    %9673 = vmatprep.subr.bf16.mxu0 0
    %9674 = vmatpush1.bf16.msra.mxu0 %v9584
    %9675 = vmatprep.subr.bf16.mxu0 0
    %9676 = vmatpush1.bf16.msra.mxu0 %v9585
    %9677 = vmatprep.subr.bf16.mxu0 0
    %9678 = vmatpush1.bf16.msra.mxu0 %v9586
    %9679 = vmatprep.subr.bf16.mxu0 0
    %9680 = vmatpush1.bf16.msra.mxu0 %v9587
    %9681 = vmatprep.subr.bf16.mxu0 0
    %9682 = vmatpush1.bf16.msra.mxu0 %v9588
    %9683 = vmatprep.subr.bf16.mxu0 0
    %9684 = vmatpush1.bf16.msra.mxu0 %v9589
    %9685 = vmatprep.subr.bf16.mxu0 0
    %9686 = vmatpush1.bf16.msra.mxu0 %v9590
    %9687 = vmatprep.subr.bf16.mxu0 0
    %9688 = vmatpush1.bf16.msra.mxu0 %v9591
    %9689 = vmatprep.subr.bf16.mxu0 0
    %9690 = vmatpush1.bf16.msra.mxu0 %v9592
    %9691 = vmatprep.subr.bf16.mxu0 0
    %9692 = vmatpush1.bf16.msra.mxu0 %v9593
    %9693 = vmatprep.subr.bf16.mxu0 0
    %9694 = vmatpush1.bf16.msra.mxu0 %v9594
    %9695 = vmatprep.subr.bf16.mxu0 0
    %9696 = vmatpush1.bf16.msra.mxu0 %v9595
    %9697 = vmatprep.subr.bf16.mxu0 0
    %9698 = vmatpush1.bf16.msra.mxu0 %v9596
    %9699 = vmatprep.subr.bf16.mxu0 0
    %9700 = vmatpush1.bf16.msra.mxu0 %v9597
    %9701 = vmatprep.subr.bf16.mxu0 0
    %9702 = vmatpush1.bf16.msra.mxu0 %v9598
    %9703 = vmatprep.subr.bf16.mxu0 0
    %9704 = vmatpush1.bf16.msra.mxu0 %v9599
    %9705 = vmatprep.mubr.bf16.mxu0 %v9368
    %9706 = vmatmul.mubr.bf16.gmra.mrb[0].mxu0 %v9367
    %v9707 = vpop.f32.mrb[0].mxu0
    %v9708 = vadd.f32 %v9667, %v9707
    %v9709 = vpop.f32.mrb[0].mxu0
    %v9710 = vpop.f32.mrb[0].mxu0
    %v9711 = vadd.f32 %v9670, %v9710
    %v9712 = vpop.f32.mrb[0].mxu0
    %9713 = vdwg.mxu0
    %v9714 = vld [vmem:[%s19] sm:$0x1]
    %v9716 = vlaneseq
    %v9717 = vshrl.u32 %v9716, 7
    %v9718 = vsub.s32 0, %v9717
    %v9719 = vrot.slane %v9714, %v9718
    %v9721 = vmul.f32 %v9708, %v9719
    %v9722 = vmul.f32 %v9711, %v9719
    %9723 = vadd.xlane.f32.xlu0 %v9721
    %v9724 = vpop.xlane.xlu0 %9723
    %9725 = vadd.xlane.f32.xlu0 %v9722
    %v9726 = vpop.xlane.xlu0 %9725
    %v9727 = vld [vmem:[#allocation2] sm:$0x1]
    %v9729 = vlaneseq
    %v9730 = vshrl.u32 %v9729, 7
    %v9731 = vsub.s32 0, %v9730
    %v9732 = vrot.slane %v9727, %v9731
    %v9734 = vadd.f32 %v9724, %v9732
    %v9735 = vadd.f32 %v9726, %v9732
    %v9736 = vtanh.pop %v9734
    %v9737 = vtanh.pop %v9735
    %9738 = vmax.xlane.f32.xlu0 %v9708
    %v9739 = vpop.xlane.xlu0 %9738
    %9740 = vmax.xlane.f32.xlu0 %v9711
    %v9741 = vpop.xlane.xlu0 %9740
    %v9742 = vsub.f32 %v9708, %v9739
    %v9743 = vsub.f32 %v9711, %v9741
    %v9744 = vmul.f32 %v9742, 1.442695
    %v9745 = vpow.pop %v9744
    %v9746 = vmul.f32 %v9743, 1.442695
    %v9747 = vpow.pop %v9746
    %9748 = vadd.xlane.f32.xlu0 %v9745
    %v9749 = vpop.xlane.xlu0 %9748
    %9750 = vadd.xlane.f32.xlu0 %v9747
    %v9751 = vpop.xlane.xlu0 %9750
    %v9752 = vlog2.pop %v9749
    %v9753 = vmul.f32 %v9752, 0.6931472
    %v9754 = vlog2.pop %v9751
    %v9755 = vmul.f32 %v9754, 0.6931472
    %v9756 = vadd.f32 %v9753, %v9739
    %v9757 = vadd.f32 %v9755, %v9741
    %v9758 = vsub.f32 %v9708, %v9756
    %v9759 = vsub.f32 %v9711, %v9757
    %v9760 = vlaneseq
    %v9761 = vand.u32 %v9760, 127
    %vm9762 = vcmp.eq.s32.totalorder %v9761, 65
    %9764 = vset.pattern.permute.xlu0 0
    %9765 = vperm.xlu0 %9764, %v9736
    %v9766 = vpop.permute.xlu0 %9765
    %9769 = vset.pattern.permute.xlu0 0
    %9770 = vperm.xlu0 %9769, %v9737
    %v9771 = vpop.permute.xlu0 %9770
    %v9773 = vsel %vm9762, %v9766, %v9758
    %v9774 = vsel %vm9762, %v9771, %v9759
    %9775 = vst [vmem:[%s21] sm:$0xff] %v9773
    %9776 = vst [vmem:[%s21 + $0x8] sm:$0xff] %v9774
    // Predicated region
    $region94: #{othello_forward.1} parent=1 // pred_check
      _
    $region95: #{othello_forward.1} parent=1 // pred_check_branch
      %9778 = sbr.rel (0) target = $region97
    $region96: #{othello_forward.1} parent=1 // pred_region
      _
    $region97: #{othello_forward.1} parent=1 // pred_fallthru
      _
    // Predicated region
    $region98: #{othello_forward.1} parent=1 // pred_check
      _
    $region99: #{othello_forward.1} parent=1 // pred_check_branch
      %9780 = sbr.rel (0) target = $region101
    $region100: #{othello_forward.1} parent=1 // pred_region
      _
    $region101: #{othello_forward.1} parent=1 // pred_fallthru
      _
    %9781 = vsyncpa [#allocation4], 1
    %9782 = vsyncpa [#allocation6], 1

</llo_original>
